<compile_context>
chip_gen: v7x
topology: tpu7x:2x2x1
jax: 0.10.0
libtpu: 0.0.40
codegen_flags: <defaults>
</compile_context>

<pallas_src>
import jax
import jax.numpy as jnp
from jax import lax
from jax.experimental import pallas as pl
from jax.experimental.pallas import tpu as pltpu

HIDDEN = 1024
_KC = 256            # hidden-dim chunk for the fused lin1->lin2 loop

# Lazily probed: does this JAX build accept pl.Buffered(1) (single-buffered
# resident weights)?  None = unknown, True/False after the first call.
_single_buffer_ok = None


def _round_up(n, m):
    return ((n + m - 1) // m) * m


def _dense_kernel(x_ref, w1_ref, b1_ref, w2_ref, b2_ref, woh_ref, wox_ref, out_ref):
    x = x_ref[...]                                   # (TB, D) f32 (kept f32: PyTorch fidelity)
    tb = x.shape[0]

    # ---- lin1 + ReLU fused into the lin2 accumulation, chunked over the hidden dim.
    # Each chunk: f32 matmul (K=D, tiny) -> bias/ReLU/bf16 cast -> bf16 matmul into the
    # f32 accumulator, so the VPU epilogue overlaps MXU pushes and the live f32 `h`
    # footprint is TB*KC instead of TB*1024.
    acc = jnp.zeros((tb, HIDDEN), jnp.float32)
    for c in range(HIDDEN // _KC):                   # static unrolled; slices are free
        lo, hi = c * _KC, (c + 1) * _KC
        h1 = jnp.dot(x, w1_ref[:, lo:hi], preferred_element_type=jnp.float32)
        h1 = jnp.maximum(h1 + b1_ref[:, lo:hi], 0.0).astype(jnp.bfloat16)
        acc = acc + jnp.dot(h1, w2_ref[lo:hi, :], preferred_element_type=jnp.float32)

    h2 = jnp.maximum(acc + b2_ref[...], 0.0)         # (TB, 1024) f32

    # ---- output layer over cat([h, x]) == h @ Woh^T + x @ Wox^T + bout.
    # N=1 matvec done on the VPU; 1024 lanes are folded to 128 lane-partials with
    # lane-aligned adds so the store is lane-dense (unmasked vst).  The wrapper
    # finishes the 128-lane sum and adds bout.
    s = h2 * woh_ref[...]                            # (TB, 1024)
    part = s[:, 0:128]
    for j in range(1, HIDDEN // 128):
        part = part + s[:, j * 128:(j + 1) * 128]

    sx = jnp.sum(x * wox_ref[...], axis=-1, keepdims=True)       # (TB, 1)
    lane = lax.broadcasted_iota(jnp.int32, part.shape, 1)
    out_ref[...] = part + jnp.where(lane == 0, sx, 0.0)


def _build_and_call(x, w1, b1, w2, b2, woh, wox, *, TB, nb, single_buffer):
    D = x.shape[1]

    def const(shape):
        if single_buffer:
            return pl.BlockSpec(shape, lambda i: (0, 0), pipeline_mode=pl.Buffered(1))
        return pl.BlockSpec(shape, lambda i: (0, 0))

    return pl.pallas_call(
        _dense_kernel,
        out_shape=jax.ShapeDtypeStruct((TB * nb, 128), jnp.float32),
        grid=(nb,),
        in_specs=[
            pl.BlockSpec((TB, D), lambda i: (i, 0)),   # x tile (rows)
            const((D, HIDDEN)),                        # w1  (f32, resident)
            const((1, HIDDEN)),                        # b1  (f32)
            const((HIDDEN, HIDDEN)),                   # w2  (bf16, resident)
            const((1, HIDDEN)),                        # b2  (f32)
            const((1, HIDDEN)),                        # woh (f32, lane-dense)
            const((1, D)),                             # wox (f32, lane-dense)
        ],
        out_specs=pl.BlockSpec((TB, 128), lambda i: (i, 0)),
        compiler_params=pltpu.CompilerParams(
            dimension_semantics=("parallel",),
            vmem_limit_bytes=48 * 1024 * 1024,         # explicit per-TC budget (v7x: 64 MiB phys)
        ),
    )(x, w1, b1, w2, b2, woh, wox)


def dense_forward(x, params, *, block_b=512):
    """x: (B, D) f32. params: dict (see init_params). Returns (B,) f32."""
    global _single_buffer_ok
    B, D = x.shape

    # Batch tiling: multiples of 16 (bf16 sublane packing); aim for >= 2 grid steps
    # when the batch allows it so megacore sharding has work for both TensorCores.
    block_b = max(16, _round_up(block_b, 16))
    TB = min(block_b, max(16, _round_up(pl.cdiv(B, 2), 16)))
    Bp = _round_up(B, TB)
    xp = jnp.pad(x, ((0, Bp - B), (0, 0))) if Bp != B else x
    nb = Bp // TB

    args = (xp, params["w1"], params["b1"], params["w2"], params["b2"],
            params["woh"], params["wox"])

    if _single_buffer_ok is None:
        try:
            part = _build_and_call(*args, TB=TB, nb=nb, single_buffer=True)
            _single_buffer_ok = True
        except Exception:
            _single_buffer_ok = False
            part = _build_and_call(*args, TB=TB, nb=nb, single_buffer=False)
    else:
        part = _build_and_call(*args, TB=TB, nb=nb, single_buffer=_single_buffer_ok)

    # Finish the 128-lane partial reduction and add the output bias.
    return part.sum(axis=-1)[:B] + params["bo"]


def init_params(key, input_size):
    """Deterministic synthetic init matching the PyTorch module's parameter shapes."""
    ks = jax.random.split(key, 6)
    # nn.Linear(input_size, 1024): weight (1024, D), bias (1024,)
    W1 = jax.random.normal(ks[0], (HIDDEN, input_size), jnp.float32) * 0.05
    b1 = jax.random.normal(ks[1], (HIDDEN,), jnp.float32) * 0.05
    # nn.Linear(1024, 1024)
    W2 = jax.random.normal(ks[2], (HIDDEN, HIDDEN), jnp.float32) * 0.02
    b2 = jax.random.normal(ks[3], (HIDDEN,), jnp.float32) * 0.02
    # nn.Linear(input_size + 1024, 1): weight (1, D+1024), bias (1,)
    Wout = jax.random.normal(ks[4], (1, input_size + HIDDEN), jnp.float32) * 0.02
    bout = jax.random.normal(ks[5], (1,), jnp.float32) * 0.02

    # TODO(synk): on v7x store w2 as fp8 (int8 on v5e/v6e) with per-output-channel
    # scales folded into the b2 epilogue to halve the resident-weight VMEM / load time.
    return {
        "w1": W1.T,                                # (D, 1024) f32  (lin1 stays f32, tiny)
        "b1": b1.reshape(1, HIDDEN),               # (1, 1024) f32
        "w2": W2.T.astype(jnp.bfloat16),           # (1024, 1024) bf16 (dominant matmul)
        "b2": b2.reshape(1, HIDDEN),               # (1, 1024) f32
        "woh": Wout[:, :HIDDEN],                   # (1, 1024) f32, lane-dense
        "wox": Wout[:, HIDDEN:],                   # (1, D)    f32, lane-dense
        "bo": bout[0],                             # scalar f32 (added in wrapper)
    }


def reference_forward(x, params):
    """Pure-JAX reference with the same f32-lin1 / bf16-lin2 recipe as the kernel."""
    h = jnp.dot(x, params["w1"], preferred_element_type=jnp.float32,
                precision=lax.Precision.HIGHEST) + params["b1"]
    h = jnp.maximum(h, 0.0)
    h = jnp.dot(h.astype(jnp.bfloat16), params["w2"],
                preferred_element_type=jnp.float32) + params["b2"]
    h = jnp.maximum(h, 0.0)
    return (jnp.sum(h * params["woh"], axis=-1)
            + jnp.sum(x * params["wox"], axis=-1) + params["bo"])


def reference_forward_f32(x, params):
    """Full-f32 reference (matches the PyTorch module's arithmetic)."""
    h = jnp.maximum(jnp.dot(x, params["w1"], precision=lax.Precision.HIGHEST)
                    + params["b1"], 0.0)
    h = jnp.maximum(jnp.dot(h, params["w2"].astype(jnp.float32),
                            precision=lax.Precision.HIGHEST) + params["b2"], 0.0)
    return (jnp.sum(h * params["woh"], axis=-1)
            + jnp.sum(x * params["wox"], axis=-1) + params["bo"])


if __name__ == "__main__":
    key = jax.random.PRNGKey(0)
    kx, kx2, kp = jax.random.split(key, 3)

    B, D = 8, 32                        # small batch, input_size=32
    params = init_params(kp, D)

    # Single-tile path (TB=16, 1 grid step).
    x = jax.random.normal(kx, (B, D), jnp.float32)
    y = dense_forward(x, params)
    jax.block_until_ready(y)
    assert y.shape == (B,), y.shape
    y_ref = reference_forward(x, params)
    y_f32 = reference_forward_f32(x, params)
    assert jnp.allclose(y, y_ref, atol=5e-3, rtol=5e-3), (y, y_ref)
    assert jnp.allclose(y, y_f32, atol=3e-2, rtol=3e-2), (y, y_f32)

    # Default-block path: B=40 -> TB=32, 2 grid steps (pads 40 -> 64).
    B2 = 40
    x2 = jax.random.normal(kx2, (B2, D), jnp.float32)
    y2 = dense_forward(x2, params)
    jax.block_until_ready(y2)
    y2_ref = reference_forward(x2, params)
    assert y2.shape == (B2,), y2.shape
    assert jnp.allclose(y2, y2_ref, atol=5e-3, rtol=5e-3), (y2, y2_ref)

    # Forced small block: 3 grid steps (pads 40 -> 48).
    y3 = dense_forward(x2, params, block_b=16)
    jax.block_until_ready(y3)
    assert jnp.allclose(y3, y2_ref, atol=5e-3, rtol=5e-3), (y3, y2_ref)

    print("KERNEL_OK")
</pallas_src>

<mosaic_0001>
module attributes {stable_mosaic.version = 11 : i64} {
  func.func @_dense_kernel(%arg0: i32, %arg1: memref<16x32xf32, #tpu.memory_space<vmem>>, %arg2: memref<32x1024xf32, #tpu.memory_space<vmem>>, %arg3: memref<1x1024xf32, #tpu.memory_space<vmem>>, %arg4: memref<1024x1024xbf16, #tpu.memory_space<vmem>>, %arg5: memref<1x1024xf32, #tpu.memory_space<vmem>>, %arg6: memref<1x1024xf32, #tpu.memory_space<vmem>>, %arg7: memref<1x32xf32, #tpu.memory_space<vmem>>, %arg8: memref<16x128xf32, #tpu.memory_space<vmem>>) attributes {dimension_semantics = [#tpu.dimension_semantics<parallel>], iteration_bounds = array<i64: 1>, scalar_prefetch = 0 : i64, scratch_operands = 0 : i64, tpu.core_type = #tpu.core_type<tc>, window_params = [{transform_indices = @transform_0, window_bounds = array<i64: 16, 32>}, {pipeline_mode = #tpu.pipeline_mode<synchronous>, transform_indices = @transform_1, window_bounds = array<i64: 32, 1024>}, {pipeline_mode = #tpu.pipeline_mode<synchronous>, transform_indices = @transform_2, window_bounds = array<i64: 1, 1024>}, {pipeline_mode = #tpu.pipeline_mode<synchronous>, transform_indices = @transform_3, window_bounds = array<i64: 1024, 1024>}, {pipeline_mode = #tpu.pipeline_mode<synchronous>, transform_indices = @transform_4, window_bounds = array<i64: 1, 1024>}, {pipeline_mode = #tpu.pipeline_mode<synchronous>, transform_indices = @transform_5, window_bounds = array<i64: 1, 1024>}, {pipeline_mode = #tpu.pipeline_mode<synchronous>, transform_indices = @transform_6, window_bounds = array<i64: 1, 32>}, {transform_indices = @transform_7, window_bounds = array<i64: 16, 128>}]} {
    %c0 = arith.constant 0 : index
    %c0_0 = arith.constant 0 : index
    %0 = vector.load %arg1[%c0, %c0_0] : memref<16x32xf32, #tpu.memory_space<vmem>>, vector<16x32xf32>
    %cst = arith.constant 0.000000e+00 : f32
    %1 = vector.broadcast %cst : f32 to vector<16x1024xf32>
    %c0_1 = arith.constant 0 : index
    %c0_2 = arith.constant 0 : index
    %2 = vector.load %arg2[%c0_1, %c0_2] : memref<32x1024xf32, #tpu.memory_space<vmem>>, vector<32x256xf32>
    %cst_3 = arith.constant dense<0.000000e+00> : vector<16x256xf32>
    %3 = tpu.matmul %0, %2, %cst_3 {dimension_numbers = #tpu.dot_dimension_numbers<[1], [0], [0], [1], [0, 0, 1, 1], [], []>} : vector<16x32xf32>, vector<32x256xf32>, vector<16x256xf32> -> vector<16x256xf32>
    %c0_4 = arith.constant 0 : index
    %c0_5 = arith.constant 0 : index
    %4 = vector.load %arg3[%c0_4, %c0_5] : memref<1x1024xf32, #tpu.memory_space<vmem>>, vector<1x256xf32>
    %5 = vector.broadcast %4 : vector<1x256xf32> to vector<16x256xf32>
    %6 = arith.addf %3, %5 : vector<16x256xf32>
    %cst_6 = arith.constant 0.000000e+00 : f32
    %7 = vector.broadcast %cst_6 : f32 to vector<16x256xf32>
    %8 = arith.maximumf %6, %7 : vector<16x256xf32>
    %9 = arith.truncf %8 : vector<16x256xf32> to vector<16x256xbf16>
    %c0_7 = arith.constant 0 : index
    %c0_8 = arith.constant 0 : index
    %10 = vector.load %arg4[%c0_7, %c0_8] : memref<1024x1024xbf16, #tpu.memory_space<vmem>>, vector<256x1024xbf16>
    %cst_9 = arith.constant dense<0.000000e+00> : vector<16x1024xf32>
    %11 = tpu.matmul %9, %10, %cst_9 {dimension_numbers = #tpu.dot_dimension_numbers<[1], [0], [0], [1], [0, 0, 1, 1], [], []>} : vector<16x256xbf16>, vector<256x1024xbf16>, vector<16x1024xf32> -> vector<16x1024xf32>
    %12 = arith.addf %1, %11 : vector<16x1024xf32>
    %c0_10 = arith.constant 0 : index
    %c256 = arith.constant 256 : index
    %13 = vector.load %arg2[%c0_10, %c256] : memref<32x1024xf32, #tpu.memory_space<vmem>>, vector<32x256xf32>
    %cst_11 = arith.constant dense<0.000000e+00> : vector<16x256xf32>
    %14 = tpu.matmul %0, %13, %cst_11 {dimension_numbers = #tpu.dot_dimension_numbers<[1], [0], [0], [1], [0, 0, 1, 1], [], []>} : vector<16x32xf32>, vector<32x256xf32>, vector<16x256xf32> -> vector<16x256xf32>
    %c0_12 = arith.constant 0 : index
    %c256_13 = arith.constant 256 : index
    %15 = vector.load %arg3[%c0_12, %c256_13] : memref<1x1024xf32, #tpu.memory_space<vmem>>, vector<1x256xf32>
    %16 = vector.broadcast %15 : vector<1x256xf32> to vector<16x256xf32>
    %17 = arith.addf %14, %16 : vector<16x256xf32>
    %cst_14 = arith.constant 0.000000e+00 : f32
    %18 = vector.broadcast %cst_14 : f32 to vector<16x256xf32>
    %19 = arith.maximumf %17, %18 : vector<16x256xf32>
    %20 = arith.truncf %19 : vector<16x256xf32> to vector<16x256xbf16>
    %c256_15 = arith.constant 256 : index
    %c0_16 = arith.constant 0 : index
    %21 = vector.load %arg4[%c256_15, %c0_16] : memref<1024x1024xbf16, #tpu.memory_space<vmem>>, vector<256x1024xbf16>
    %cst_17 = arith.constant dense<0.000000e+00> : vector<16x1024xf32>
    %22 = tpu.matmul %20, %21, %cst_17 {dimension_numbers = #tpu.dot_dimension_numbers<[1], [0], [0], [1], [0, 0, 1, 1], [], []>} : vector<16x256xbf16>, vector<256x1024xbf16>, vector<16x1024xf32> -> vector<16x1024xf32>
    %23 = arith.addf %12, %22 : vector<16x1024xf32>
    %c0_18 = arith.constant 0 : index
    %c512 = arith.constant 512 : index
    %24 = vector.load %arg2[%c0_18, %c512] : memref<32x1024xf32, #tpu.memory_space<vmem>>, vector<32x256xf32>
    %cst_19 = arith.constant dense<0.000000e+00> : vector<16x256xf32>
    %25 = tpu.matmul %0, %24, %cst_19 {dimension_numbers = #tpu.dot_dimension_numbers<[1], [0], [0], [1], [0, 0, 1, 1], [], []>} : vector<16x32xf32>, vector<32x256xf32>, vector<16x256xf32> -> vector<16x256xf32>
    %c0_20 = arith.constant 0 : index
    %c512_21 = arith.constant 512 : index
    %26 = vector.load %arg3[%c0_20, %c512_21] : memref<1x1024xf32, #tpu.memory_space<vmem>>, vector<1x256xf32>
    %27 = vector.broadcast %26 : vector<1x256xf32> to vector<16x256xf32>
    %28 = arith.addf %25, %27 : vector<16x256xf32>
    %cst_22 = arith.constant 0.000000e+00 : f32
    %29 = vector.broadcast %cst_22 : f32 to vector<16x256xf32>
    %30 = arith.maximumf %28, %29 : vector<16x256xf32>
    %31 = arith.truncf %30 : vector<16x256xf32> to vector<16x256xbf16>
    %c512_23 = arith.constant 512 : index
    %c0_24 = arith.constant 0 : index
    %32 = vector.load %arg4[%c512_23, %c0_24] : memref<1024x1024xbf16, #tpu.memory_space<vmem>>, vector<256x1024xbf16>
    %cst_25 = arith.constant dense<0.000000e+00> : vector<16x1024xf32>
    %33 = tpu.matmul %31, %32, %cst_25 {dimension_numbers = #tpu.dot_dimension_numbers<[1], [0], [0], [1], [0, 0, 1, 1], [], []>} : vector<16x256xbf16>, vector<256x1024xbf16>, vector<16x1024xf32> -> vector<16x1024xf32>
    %34 = arith.addf %23, %33 : vector<16x1024xf32>
    %c0_26 = arith.constant 0 : index
    %c768 = arith.constant 768 : index
    %35 = vector.load %arg2[%c0_26, %c768] : memref<32x1024xf32, #tpu.memory_space<vmem>>, vector<32x256xf32>
    %cst_27 = arith.constant dense<0.000000e+00> : vector<16x256xf32>
    %36 = tpu.matmul %0, %35, %cst_27 {dimension_numbers = #tpu.dot_dimension_numbers<[1], [0], [0], [1], [0, 0, 1, 1], [], []>} : vector<16x32xf32>, vector<32x256xf32>, vector<16x256xf32> -> vector<16x256xf32>
    %c0_28 = arith.constant 0 : index
    %c768_29 = arith.constant 768 : index
    %37 = vector.load %arg3[%c0_28, %c768_29] : memref<1x1024xf32, #tpu.memory_space<vmem>>, vector<1x256xf32>
    %38 = vector.broadcast %37 : vector<1x256xf32> to vector<16x256xf32>
    %39 = arith.addf %36, %38 : vector<16x256xf32>
    %cst_30 = arith.constant 0.000000e+00 : f32
    %40 = vector.broadcast %cst_30 : f32 to vector<16x256xf32>
    %41 = arith.maximumf %39, %40 : vector<16x256xf32>
    %42 = arith.truncf %41 : vector<16x256xf32> to vector<16x256xbf16>
    %c768_31 = arith.constant 768 : index
    %c0_32 = arith.constant 0 : index
    %43 = vector.load %arg4[%c768_31, %c0_32] : memref<1024x1024xbf16, #tpu.memory_space<vmem>>, vector<256x1024xbf16>
    %cst_33 = arith.constant dense<0.000000e+00> : vector<16x1024xf32>
    %44 = tpu.matmul %42, %43, %cst_33 {dimension_numbers = #tpu.dot_dimension_numbers<[1], [0], [0], [1], [0, 0, 1, 1], [], []>} : vector<16x256xbf16>, vector<256x1024xbf16>, vector<16x1024xf32> -> vector<16x1024xf32>
    %45 = arith.addf %34, %44 : vector<16x1024xf32>
    %c0_34 = arith.constant 0 : index
    %c0_35 = arith.constant 0 : index
    %46 = vector.load %arg5[%c0_34, %c0_35] : memref<1x1024xf32, #tpu.memory_space<vmem>>, vector<1x1024xf32>
    %47 = vector.broadcast %46 : vector<1x1024xf32> to vector<16x1024xf32>
    %48 = arith.addf %45, %47 : vector<16x1024xf32>
    %cst_36 = arith.constant 0.000000e+00 : f32
    %49 = vector.broadcast %cst_36 : f32 to vector<16x1024xf32>
    %50 = arith.maximumf %48, %49 : vector<16x1024xf32>
    %c0_37 = arith.constant 0 : index
    %c0_38 = arith.constant 0 : index
    %51 = vector.load %arg6[%c0_37, %c0_38] : memref<1x1024xf32, #tpu.memory_space<vmem>>, vector<1x1024xf32>
    %52 = vector.broadcast %51 : vector<1x1024xf32> to vector<16x1024xf32>
    %53 = arith.mulf %50, %52 : vector<16x1024xf32>
    %54 = vector.extract_strided_slice %53 {offsets = [0, 0], sizes = [16, 128], strides = [1, 1]} : vector<16x1024xf32> to vector<16x128xf32>
    %55 = vector.extract_strided_slice %53 {offsets = [0, 128], sizes = [16, 128], strides = [1, 1]} : vector<16x1024xf32> to vector<16x128xf32>
    %56 = arith.addf %54, %55 : vector<16x128xf32>
    %57 = vector.extract_strided_slice %53 {offsets = [0, 256], sizes = [16, 128], strides = [1, 1]} : vector<16x1024xf32> to vector<16x128xf32>
    %58 = arith.addf %56, %57 : vector<16x128xf32>
    %59 = vector.extract_strided_slice %53 {offsets = [0, 384], sizes = [16, 128], strides = [1, 1]} : vector<16x1024xf32> to vector<16x128xf32>
    %60 = arith.addf %58, %59 : vector<16x128xf32>
    %61 = vector.extract_strided_slice %53 {offsets = [0, 512], sizes = [16, 128], strides = [1, 1]} : vector<16x1024xf32> to vector<16x128xf32>
    %62 = arith.addf %60, %61 : vector<16x128xf32>
    %63 = vector.extract_strided_slice %53 {offsets = [0, 640], sizes = [16, 128], strides = [1, 1]} : vector<16x1024xf32> to vector<16x128xf32>
    %64 = arith.addf %62, %63 : vector<16x128xf32>
    %65 = vector.extract_strided_slice %53 {offsets = [0, 768], sizes = [16, 128], strides = [1, 1]} : vector<16x1024xf32> to vector<16x128xf32>
    %66 = arith.addf %64, %65 : vector<16x128xf32>
    %67 = vector.extract_strided_slice %53 {offsets = [0, 896], sizes = [16, 128], strides = [1, 1]} : vector<16x1024xf32> to vector<16x128xf32>
    %68 = arith.addf %66, %67 : vector<16x128xf32>
    %c0_39 = arith.constant 0 : index
    %c0_40 = arith.constant 0 : index
    %69 = vector.load %arg7[%c0_39, %c0_40] : memref<1x32xf32, #tpu.memory_space<vmem>>, vector<1x32xf32>
    %70 = vector.broadcast %69 : vector<1x32xf32> to vector<16x32xf32>
    %71 = arith.mulf %0, %70 : vector<16x32xf32>
    %cst_41 = arith.constant dense<0.000000e+00> : vector<16xf32>
    %72 = vector.multi_reduction <add>, %71, %cst_41 [1] : vector<16x32xf32> to vector<16xf32>
    %73 = vector.shape_cast %72 : vector<16xf32> to vector<16x1xf32>
    %74 = tpu.iota {dimensions = array<i32: 1>} : vector<16x128xi32>
    %c0_i32 = arith.constant 0 : i32
    %75 = vector.broadcast %c0_i32 : i32 to vector<16x128xi32>
    %76 = arith.cmpi eq, %74, %75 : vector<16x128xi32>
    %cst_42 = arith.constant 0.000000e+00 : f32
    %77 = vector.shape_cast %73 : vector<16x1xf32> to vector<16x1xf32>
    %78 = vector.broadcast %77 : vector<16x1xf32> to vector<16x128xf32>
    %79 = vector.broadcast %cst_42 : f32 to vector<16x128xf32>
    %80 = arith.select %76, %78, %79 : vector<16x128xi1>, vector<16x128xf32>
    %81 = arith.addf %68, %80 : vector<16x128xf32>
    %c0_43 = arith.constant 0 : index
    %c0_44 = arith.constant 0 : index
    %82 = vector.load %arg8[%c0_43, %c0_44] : memref<16x128xf32, #tpu.memory_space<vmem>>, vector<16x128xf32>
    tpu.vector_store %arg8[%c0_43, %c0_44], %81 {strides = array<i32>} : memref<16x128xf32, #tpu.memory_space<vmem>>, vector<16x128xf32>,
    return
  }
  func.func @transform_0(%arg0: i32) -> (i32, i32) {
    %c0_i32 = arith.constant 0 : i32
    %c0_i32_0 = arith.constant 0 : i32
    return %arg0, %c0_i32 : i32, i32
  }
  func.func @transform_1(%arg0: i32) -> (i32, i32) {
    %c0_i32 = arith.constant 0 : i32
    %c0_i32_0 = arith.constant 0 : i32
    %c0_i32_1 = arith.constant 0 : i32
    return %c0_i32, %c0_i32_0 : i32, i32
  }
  func.func @transform_2(%arg0: i32) -> (i32, i32) {
    %c0_i32 = arith.constant 0 : i32
    %c0_i32_0 = arith.constant 0 : i32
    %c0_i32_1 = arith.constant 0 : i32
    return %c0_i32, %c0_i32_0 : i32, i32
  }
  func.func @transform_3(%arg0: i32) -> (i32, i32) {
    %c0_i32 = arith.constant 0 : i32
    %c0_i32_0 = arith.constant 0 : i32
    %c0_i32_1 = arith.constant 0 : i32
    return %c0_i32, %c0_i32_0 : i32, i32
  }
  func.func @transform_4(%arg0: i32) -> (i32, i32) {
    %c0_i32 = arith.constant 0 : i32
    %c0_i32_0 = arith.constant 0 : i32
    %c0_i32_1 = arith.constant 0 : i32
    return %c0_i32, %c0_i32_0 : i32, i32
  }
  func.func @transform_5(%arg0: i32) -> (i32, i32) {
    %c0_i32 = arith.constant 0 : i32
    %c0_i32_0 = arith.constant 0 : i32
    %c0_i32_1 = arith.constant 0 : i32
    return %c0_i32, %c0_i32_0 : i32, i32
  }
  func.func @transform_6(%arg0: i32) -> (i32, i32) {
    %c0_i32 = arith.constant 0 : i32
    %c0_i32_0 = arith.constant 0 : i32
    %c0_i32_1 = arith.constant 0 : i32
    return %c0_i32, %c0_i32_0 : i32, i32
  }
  func.func @transform_7(%arg0: i32) -> (i32, i32) {
    %c0_i32 = arith.constant 0 : i32
    %c0_i32_0 = arith.constant 0 : i32
    return %arg0, %c0_i32 : i32, i32
  }
}

module attributes {stable_mosaic.version = 11 : i64} {
  func.func @_dense_kernel(%arg0: i32, %arg1: memref<16x32xf32, #tpu.memory_space<vmem>>, %arg2: memref<32x1024xf32, #tpu.memory_space<vmem>>, %arg3: memref<1x1024xf32, #tpu.memory_space<vmem>>, %arg4: memref<1024x1024xbf16, #tpu.memory_space<vmem>>, %arg5: memref<1x1024xf32, #tpu.memory_space<vmem>>, %arg6: memref<1x1024xf32, #tpu.memory_space<vmem>>, %arg7: memref<1x32xf32, #tpu.memory_space<vmem>>, %arg8: memref<16x128xf32, #tpu.memory_space<vmem>>) attributes {dimension_semantics = [#tpu.dimension_semantics<parallel>], iteration_bounds = array<i64: 1>, scalar_prefetch = 0 : i64, scratch_operands = 0 : i64, tpu.core_type = #tpu.core_type<tc>, window_params = [{transform_indices = @transform_0, window_bounds = array<i64: 16, 32>}, {pipeline_mode = #tpu.pipeline_mode<synchronous>, transform_indices = @transform_1, window_bounds = array<i64: 32, 1024>}, {pipeline_mode = #tpu.pipeline_mode<synchronous>, transform_indices = @transform_2, window_bounds = array<i64: 1, 1024>}, {pipeline_mode = #tpu.pipeline_mode<synchronous>, transform_indices = @transform_3, window_bounds = array<i64: 1024, 1024>}, {pipeline_mode = #tpu.pipeline_mode<synchronous>, transform_indices = @transform_4, window_bounds = array<i64: 1, 1024>}, {pipeline_mode = #tpu.pipeline_mode<synchronous>, transform_indices = @transform_5, window_bounds = array<i64: 1, 1024>}, {pipeline_mode = #tpu.pipeline_mode<synchronous>, transform_indices = @transform_6, window_bounds = array<i64: 1, 32>}, {transform_indices = @transform_7, window_bounds = array<i64: 16, 128>}]} {
    %c0 = arith.constant 0 : index
    %c0_0 = arith.constant 0 : index
    %0 = vector.load %arg1[%c0, %c0_0] : memref<16x32xf32, #tpu.memory_space<vmem>>, vector<16x32xf32>
    %cst = arith.constant 0.000000e+00 : f32
    %1 = vector.broadcast %cst : f32 to vector<16x1024xf32>
    %c0_1 = arith.constant 0 : index
    %c0_2 = arith.constant 0 : index
    %2 = vector.load %arg2[%c0_1, %c0_2] : memref<32x1024xf32, #tpu.memory_space<vmem>>, vector<32x256xf32>
    %cst_3 = arith.constant dense<0.000000e+00> : vector<16x256xf32>
    %3 = tpu.matmul %0, %2, %cst_3 {dimension_numbers = #tpu.dot_dimension_numbers<[1], [0], [0], [1], [0, 0, 1, 1], [], []>} : vector<16x32xf32>, vector<32x256xf32>, vector<16x256xf32> -> vector<16x256xf32>
    %c0_4 = arith.constant 0 : index
    %c0_5 = arith.constant 0 : index
    %4 = vector.load %arg3[%c0_4, %c0_5] : memref<1x1024xf32, #tpu.memory_space<vmem>>, vector<1x256xf32>
    %5 = vector.broadcast %4 : vector<1x256xf32> to vector<16x256xf32>
    %6 = arith.addf %3, %5 : vector<16x256xf32>
    %cst_6 = arith.constant 0.000000e+00 : f32
    %7 = vector.broadcast %cst_6 : f32 to vector<16x256xf32>
    %8 = arith.maximumf %6, %7 : vector<16x256xf32>
    %9 = arith.truncf %8 : vector<16x256xf32> to vector<16x256xbf16>
    %c0_7 = arith.constant 0 : index
    %c0_8 = arith.constant 0 : index
    %10 = vector.load %arg4[%c0_7, %c0_8] : memref<1024x1024xbf16, #tpu.memory_space<vmem>>, vector<256x1024xbf16>
    %cst_9 = arith.constant dense<0.000000e+00> : vector<16x1024xf32>
    %11 = tpu.matmul %9, %10, %cst_9 {dimension_numbers = #tpu.dot_dimension_numbers<[1], [0], [0], [1], [0, 0, 1, 1], [], []>} : vector<16x256xbf16>, vector<256x1024xbf16>, vector<16x1024xf32> -> vector<16x1024xf32>
    %12 = arith.addf %1, %11 : vector<16x1024xf32>
    %c0_10 = arith.constant 0 : index
    %c256 = arith.constant 256 : index
    %13 = vector.load %arg2[%c0_10, %c256] : memref<32x1024xf32, #tpu.memory_space<vmem>>, vector<32x256xf32>
    %cst_11 = arith.constant dense<0.000000e+00> : vector<16x256xf32>
    %14 = tpu.matmul %0, %13, %cst_11 {dimension_numbers = #tpu.dot_dimension_numbers<[1], [0], [0], [1], [0, 0, 1, 1], [], []>} : vector<16x32xf32>, vector<32x256xf32>, vector<16x256xf32> -> vector<16x256xf32>
    %c0_12 = arith.constant 0 : index
    %c256_13 = arith.constant 256 : index
    %15 = vector.load %arg3[%c0_12, %c256_13] : memref<1x1024xf32, #tpu.memory_space<vmem>>, vector<1x256xf32>
    %16 = vector.broadcast %15 : vector<1x256xf32> to vector<16x256xf32>
    %17 = arith.addf %14, %16 : vector<16x256xf32>
    %cst_14 = arith.constant 0.000000e+00 : f32
    %18 = vector.broadcast %cst_14 : f32 to vector<16x256xf32>
    %19 = arith.maximumf %17, %18 : vector<16x256xf32>
    %20 = arith.truncf %19 : vector<16x256xf32> to vector<16x256xbf16>
    %c256_15 = arith.constant 256 : index
    %c0_16 = arith.constant 0 : index
    %21 = vector.load %arg4[%c256_15, %c0_16] : memref<1024x1024xbf16, #tpu.memory_space<vmem>>, vector<256x1024xbf16>
    %cst_17 = arith.constant dense<0.000000e+00> : vector<16x1024xf32>
    %22 = tpu.matmul %20, %21, %cst_17 {dimension_numbers = #tpu.dot_dimension_numbers<[1], [0], [0], [1], [0, 0, 1, 1], [], []>} : vector<16x256xbf16>, vector<256x1024xbf16>, vector<16x1024xf32> -> vector<16x1024xf32>
    %23 = arith.addf %12, %22 : vector<16x1024xf32>
    %c0_18 = arith.constant 0 : index
    %c512 = arith.constant 512 : index
    %24 = vector.load %arg2[%c0_18, %c512] : memref<32x1024xf32, #tpu.memory_space<vmem>>, vector<32x256xf32>
    %cst_19 = arith.constant dense<0.000000e+00> : vector<16x256xf32>
    %25 = tpu.matmul %0, %24, %cst_19 {dimension_numbers = #tpu.dot_dimension_numbers<[1], [0], [0], [1], [0, 0, 1, 1], [], []>} : vector<16x32xf32>, vector<32x256xf32>, vector<16x256xf32> -> vector<16x256xf32>
    %c0_20 = arith.constant 0 : index
    %c512_21 = arith.constant 512 : index
    %26 = vector.load %arg3[%c0_20, %c512_21] : memref<1x1024xf32, #tpu.memory_space<vmem>>, vector<1x256xf32>
    %27 = vector.broadcast %26 : vector<1x256xf32> to vector<16x256xf32>
    %28 = arith.addf %25, %27 : vector<16x256xf32>
    %cst_22 = arith.constant 0.000000e+00 : f32
    %29 = vector.broadcast %cst_22 : f32 to vector<16x256xf32>
    %30 = arith.maximumf %28, %29 : vector<16x256xf32>
    %31 = arith.truncf %30 : vector<16x256xf32> to vector<16x256xbf16>
    %c512_23 = arith.constant 512 : index
    %c0_24 = arith.constant 0 : index
    %32 = vector.load %arg4[%c512_23, %c0_24] : memref<1024x1024xbf16, #tpu.memory_space<vmem>>, vector<256x1024xbf16>
    %cst_25 = arith.constant dense<0.000000e+00> : vector<16x1024xf32>
    %33 = tpu.matmul %31, %32, %cst_25 {dimension_numbers = #tpu.dot_dimension_numbers<[1], [0], [0], [1], [0, 0, 1, 1], [], []>} : vector<16x256xbf16>, vector<256x1024xbf16>, vector<16x1024xf32> -> vector<16x1024xf32>
    %34 = arith.addf %23, %33 : vector<16x1024xf32>
    %c0_26 = arith.constant 0 : index
    %c768 = arith.constant 768 : index
    %35 = vector.load %arg2[%c0_26, %c768] : memref<32x1024xf32, #tpu.memory_space<vmem>>, vector<32x256xf32>
    %cst_27 = arith.constant dense<0.000000e+00> : vector<16x256xf32>
    %36 = tpu.matmul %0, %35, %cst_27 {dimension_numbers = #tpu.dot_dimension_numbers<[1], [0], [0], [1], [0, 0, 1, 1], [], []>} : vector<16x32xf32>, vector<32x256xf32>, vector<16x256xf32> -> vector<16x256xf32>
    %c0_28 = arith.constant 0 : index
    %c768_29 = arith.constant 768 : index
    %37 = vector.load %arg3[%c0_28, %c768_29] : memref<1x1024xf32, #tpu.memory_space<vmem>>, vector<1x256xf32>
    %38 = vector.broadcast %37 : vector<1x256xf32> to vector<16x256xf32>
    %39 = arith.addf %36, %38 : vector<16x256xf32>
    %cst_30 = arith.constant 0.000000e+00 : f32
    %40 = vector.broadcast %cst_30 : f32 to vector<16x256xf32>
    %41 = arith.maximumf %39, %40 : vector<16x256xf32>
    %42 = arith.truncf %41 : vector<16x256xf32> to vector<16x256xbf16>
    %c768_31 = arith.constant 768 : index
    %c0_32 = arith.constant 0 : index
    %43 = vector.load %arg4[%c768_31, %c0_32] : memref<1024x1024xbf16, #tpu.memory_space<vmem>>, vector<256x1024xbf16>
    %cst_33 = arith.constant dense<0.000000e+00> : vector<16x1024xf32>
    %44 = tpu.matmul %42, %43, %cst_33 {dimension_numbers = #tpu.dot_dimension_numbers<[1], [0], [0], [1], [0, 0, 1, 1], [], []>} : vector<16x256xbf16>, vector<256x1024xbf16>, vector<16x1024xf32> -> vector<16x1024xf32>
    %45 = arith.addf %34, %44 : vector<16x1024xf32>
    %c0_34 = arith.constant 0 : index
    %c0_35 = arith.constant 0 : index
    %46 = vector.load %arg5[%c0_34, %c0_35] : memref<1x1024xf32, #tpu.memory_space<vmem>>, vector<1x1024xf32>
    %47 = vector.broadcast %46 : vector<1x1024xf32> to vector<16x1024xf32>
    %48 = arith.addf %45, %47 : vector<16x1024xf32>
    %cst_36 = arith.constant 0.000000e+00 : f32
    %49 = vector.broadcast %cst_36 : f32 to vector<16x1024xf32>
    %50 = arith.maximumf %48, %49 : vector<16x1024xf32>
    %c0_37 = arith.constant 0 : index
    %c0_38 = arith.constant 0 : index
    %51 = vector.load %arg6[%c0_37, %c0_38] : memref<1x1024xf32, #tpu.memory_space<vmem>>, vector<1x1024xf32>
    %52 = vector.broadcast %51 : vector<1x1024xf32> to vector<16x1024xf32>
    %53 = arith.mulf %50, %52 : vector<16x1024xf32>
    %54 = vector.extract_strided_slice %53 {offsets = [0, 0], sizes = [16, 128], strides = [1, 1]} : vector<16x1024xf32> to vector<16x128xf32>
    %55 = vector.extract_strided_slice %53 {offsets = [0, 128], sizes = [16, 128], strides = [1, 1]} : vector<16x1024xf32> to vector<16x128xf32>
    %56 = arith.addf %54, %55 : vector<16x128xf32>
    %57 = vector.extract_strided_slice %53 {offsets = [0, 256], sizes = [16, 128], strides = [1, 1]} : vector<16x1024xf32> to vector<16x128xf32>
    %58 = arith.addf %56, %57 : vector<16x128xf32>
    %59 = vector.extract_strided_slice %53 {offsets = [0, 384], sizes = [16, 128], strides = [1, 1]} : vector<16x1024xf32> to vector<16x128xf32>
    %60 = arith.addf %58, %59 : vector<16x128xf32>
    %61 = vector.extract_strided_slice %53 {offsets = [0, 512], sizes = [16, 128], strides = [1, 1]} : vector<16x1024xf32> to vector<16x128xf32>
    %62 = arith.addf %60, %61 : vector<16x128xf32>
    %63 = vector.extract_strided_slice %53 {offsets = [0, 640], sizes = [16, 128], strides = [1, 1]} : vector<16x1024xf32> to vector<16x128xf32>
    %64 = arith.addf %62, %63 : vector<16x128xf32>
    %65 = vector.extract_strided_slice %53 {offsets = [0, 768], sizes = [16, 128], strides = [1, 1]} : vector<16x1024xf32> to vector<16x128xf32>
    %66 = arith.addf %64, %65 : vector<16x128xf32>
    %67 = vector.extract_strided_slice %53 {offsets = [0, 896], sizes = [16, 128], strides = [1, 1]} : vector<16x1024xf32> to vector<16x128xf32>
    %68 = arith.addf %66, %67 : vector<16x128xf32>
    %c0_39 = arith.constant 0 : index
    %c0_40 = arith.constant 0 : index
    %69 = vector.load %arg7[%c0_39, %c0_40] : memref<1x32xf32, #tpu.memory_space<vmem>>, vector<1x32xf32>
    %70 = vector.broadcast %69 : vector<1x32xf32> to vector<16x32xf32>
    %71 = arith.mulf %0, %70 : vector<16x32xf32>
    %cst_41 = arith.constant dense<0.000000e+00> : vector<16xf32>
    %72 = vector.multi_reduction <add>, %71, %cst_41 [1] : vector<16x32xf32> to vector<16xf32>
    %73 = vector.shape_cast %72 : vector<16xf32> to vector<16x1xf32>
    %74 = tpu.iota {dimensions = array<i32: 1>} : vector<16x128xi32>
    %c0_i32 = arith.constant 0 : i32
    %75 = vector.broadcast %c0_i32 : i32 to vector<16x128xi32>
    %76 = arith.cmpi eq, %74, %75 : vector<16x128xi32>
    %cst_42 = arith.constant 0.000000e+00 : f32
    %77 = vector.shape_cast %73 : vector<16x1xf32> to vector<16x1xf32>
    %78 = vector.broadcast %77 : vector<16x1xf32> to vector<16x128xf32>
    %79 = vector.broadcast %cst_42 : f32 to vector<16x128xf32>
    %80 = arith.select %76, %78, %79 : vector<16x128xi1>, vector<16x128xf32>
    %81 = arith.addf %68, %80 : vector<16x128xf32>
    %c0_43 = arith.constant 0 : index
    %c0_44 = arith.constant 0 : index
    %82 = vector.load %arg8[%c0_43, %c0_44] : memref<16x128xf32, #tpu.memory_space<vmem>>, vector<16x128xf32>
    tpu.vector_store %arg8[%c0_43, %c0_44], %81 {strides = array<i32>} : memref<16x128xf32, #tpu.memory_space<vmem>>, vector<16x128xf32>,
    return
  }
  func.func @transform_0(%arg0: i32) -> (i32, i32) {
    %c0_i32 = arith.constant 0 : i32
    %c0_i32_0 = arith.constant 0 : i32
    return %arg0, %c0_i32 : i32, i32
  }
  func.func @transform_1(%arg0: i32) -> (i32, i32) {
    %c0_i32 = arith.constant 0 : i32
    %c0_i32_0 = arith.constant 0 : i32
    %c0_i32_1 = arith.constant 0 : i32
    return %c0_i32, %c0_i32_0 : i32, i32
  }
  func.func @transform_2(%arg0: i32) -> (i32, i32) {
    %c0_i32 = arith.constant 0 : i32
    %c0_i32_0 = arith.constant 0 : i32
    %c0_i32_1 = arith.constant 0 : i32
    return %c0_i32, %c0_i32_0 : i32, i32
  }
  func.func @transform_3(%arg0: i32) -> (i32, i32) {
    %c0_i32 = arith.constant 0 : i32
    %c0_i32_0 = arith.constant 0 : i32
    %c0_i32_1 = arith.constant 0 : i32
    return %c0_i32, %c0_i32_0 : i32, i32
  }
  func.func @transform_4(%arg0: i32) -> (i32, i32) {
    %c0_i32 = arith.constant 0 : i32
    %c0_i32_0 = arith.constant 0 : i32
    %c0_i32_1 = arith.constant 0 : i32
    return %c0_i32, %c0_i32_0 : i32, i32
  }
  func.func @transform_5(%arg0: i32) -> (i32, i32) {
    %c0_i32 = arith.constant 0 : i32
    %c0_i32_0 = arith.constant 0 : i32
    %c0_i32_1 = arith.constant 0 : i32
    return %c0_i32, %c0_i32_0 : i32, i32
  }
  func.func @transform_6(%arg0: i32) -> (i32, i32) {
    %c0_i32 = arith.constant 0 : i32
    %c0_i32_0 = arith.constant 0 : i32
    %c0_i32_1 = arith.constant 0 : i32
    return %c0_i32, %c0_i32_0 : i32, i32
  }
  func.func @transform_7(%arg0: i32) -> (i32, i32) {
    %c0_i32 = arith.constant 0 : i32
    %c0_i32_0 = arith.constant 0 : i32
    return %arg0, %c0_i32 : i32, i32
  }
}

</mosaic_0001>

<llo_original>
// kernel: tpu_custom_call.1
$region0: #{tpu_custom_call.1}
  #allocation0 [shape = 'u32[]', space=smem, size = 0x4, offset = 0x4, fixed_abs, tag = 'smem constant byte address 0x4 - core index']
  #allocation1 [shape = 'u32[144,128]{1,0:T(1,128)}', space=vmem, size = 0x12000, scoped, tag = 'internal scratch']
  %s0 = inlined_call_operand.hbm [shape: f32[16,32], index: 0, kind: input, shape index: {}]
  %s1 = inlined_call_operand.hbm [shape: f32[32,1024], index: 1, kind: input, shape index: {}]
  %s2 = inlined_call_operand.hbm [shape: f32[1,1024], index: 2, kind: input, shape index: {}]
  %s3 = inlined_call_operand.hbm [shape: bf16[1024,1024], index: 3, kind: input, shape index: {}]
  %s4 = inlined_call_operand.hbm [shape: f32[1,1024], index: 4, kind: input, shape index: {}]
  %s5 = inlined_call_operand.hbm [shape: f32[1,1024], index: 5, kind: input, shape index: {}]
  %s6 = inlined_call_operand.hbm [shape: f32[1,32], index: 6, kind: input, shape index: {}]
  %s7 = inlined_call_operand.hbm [shape: f32[16,128], index: 7, kind: output, shape index: {}]
  %s8 = sld [smem:[#allocation0]]
  $region66: #{tpu_custom_call.1} parent=0
    _
  %s10 = ssub.s32 1, %s8
  %s11 = scalar_select 0, %s10, %s8
  $region1: #{tpu_custom_call.1} parent=0
    #allocation2 [shape = 'u8[8192]{0}', space=vmem, size = 0x2000, scoped, tag = 'input window, operand 0, single buffered']
    #allocation3 [shape = 's32[1]{0}', space=sflag, size = 0x4, scoped, tag = 'scoped memory for tpu_custom_call.1']
    #allocation4 [shape = 's32[1]{0}', space=sflag, size = 0x4, scoped, tag = 'scoped memory for tpu_custom_call.1']
    #allocation5 [shape = 'u8[131072]{0}', space=vmem, size = 0x20000, scoped, tag = 'input window, operand 1, single buffered']
    #allocation6 [shape = 's32[1]{0}', space=sflag, size = 0x4, scoped, tag = 'scoped memory for tpu_custom_call.1']
    #allocation7 [shape = 'u8[4096]{0}', space=vmem, size = 0x1000, scoped, tag = 'input window, operand 2, single buffered']
    #allocation8 [shape = 'u8[2097152]{0}', space=vmem, size = 0x200000, scoped, tag = 'input window, operand 3, single buffered']
    #allocation9 [shape = 's32[1]{0}', space=sflag, size = 0x4, scoped, tag = 'scoped memory for tpu_custom_call.1']
    #allocation10 [shape = 'u8[4096]{0}', space=vmem, size = 0x1000, scoped, tag = 'input window, operand 4, single buffered']
    #allocation11 [shape = 'u8[4096]{0}', space=vmem, size = 0x1000, scoped, tag = 'input window, operand 5, single buffered']
    #allocation12 [shape = 's32[1]{0}', space=sflag, size = 0x4, scoped, tag = 'scoped memory for tpu_custom_call.1']
    #allocation13 [shape = 'u8[512]{0}', space=vmem, size = 0x400, scoped, tag = 'input window, operand 6, single buffered']
    #allocation14 [shape = 'u8[8192]{0}', space=vmem, size = 0x2000, scoped, tag = 'output window, operand 0, single buffered']
    %12 = vsyncpa [#allocation3], 0
    %13 = vsyncpa [#allocation6], 0
    %14 = vsyncpa [#allocation9], 0
    %15 = vsyncpa [#allocation12], 0
    %16 = vsyncpa [#allocation4], 0
    // Predicated region
    $region2: #{tpu_custom_call.1} parent=1 // pred_check
      _
    $region3: #{tpu_custom_call.1} parent=1 // pred_check_branch
      %18 = sbr.rel (0) target = $region5
    $region4: #{tpu_custom_call.1} parent=1 // pred_region
      %s20 = ssub.s32 256, 256
      %21 = vsyncadd [#allocation3], %s20
      %s22 = sshll.u32 [#allocation2], 4
      %s23 = int_to_ptr.vmem [resolvable:$true] %s22
      %28 = dma.hbm_to_vmem [thread:$0]  %s0, 256, %s23, [#allocation3], 128, 128, 8
    $region5: #{tpu_custom_call.1} parent=1 // pred_fallthru
      _
    // Predicated region
    $region6: #{tpu_custom_call.1} parent=1 // pred_check
      _
    $region7: #{tpu_custom_call.1} parent=1 // pred_check_branch
      %30 = sbr.rel (0) target = $region9
    $region8: #{tpu_custom_call.1} parent=1 // pred_region
      %s32 = ssub.s32 4096, 4096
      %33 = vsyncadd [#allocation6], %s32
      %s34 = sshll.u32 [#allocation5], 4
      %s35 = int_to_ptr.vmem [resolvable:$true] %s34
      %40 = dma.hbm_to_vmem [thread:$0]  %s1, 4096, %s35, [#allocation6], 1024, 1024, 64
    $region9: #{tpu_custom_call.1} parent=1 // pred_fallthru
      _
    // Predicated region
    $region10: #{tpu_custom_call.1} parent=1 // pred_check
      _
    $region11: #{tpu_custom_call.1} parent=1 // pred_check_branch
      %42 = sbr.rel (0) target = $region13
    $region12: #{tpu_custom_call.1} parent=1 // pred_region
      %s44 = ssub.s32 128, 128
      %45 = vsyncadd [#allocation6], %s44
      %s47 = sshll.u32 [#allocation7], 4
      %s48 = int_to_ptr.vmem [resolvable:$true] %s47
      %50 = dma.hbm_to_vmem [thread:$0]  %s2, 128, %s48, [#allocation6]
    $region13: #{tpu_custom_call.1} parent=1 // pred_fallthru
      _
    // Predicated region
    $region14: #{tpu_custom_call.1} parent=1 // pred_check
      _
    $region15: #{tpu_custom_call.1} parent=1 // pred_check_branch
      %52 = sbr.rel (0) target = $region17
    $region16: #{tpu_custom_call.1} parent=1 // pred_region
      %s54 = ssub.s32 65536, 65536
      %55 = vsyncadd [#allocation9], %s54
      %s56 = sshll.u32 [#allocation8], 4
      %s57 = int_to_ptr.vmem [resolvable:$true] %s56
      %62 = dma.hbm_to_vmem [thread:$0]  %s3, 65536, %s57, [#allocation9], 512, 512, 32
    $region17: #{tpu_custom_call.1} parent=1 // pred_fallthru
      _
    // Predicated region
    $region18: #{tpu_custom_call.1} parent=1 // pred_check
      _
    $region19: #{tpu_custom_call.1} parent=1 // pred_check_branch
      %64 = sbr.rel (0) target = $region21
    $region20: #{tpu_custom_call.1} parent=1 // pred_region
      %s66 = ssub.s32 128, 128
      %67 = vsyncadd [#allocation9], %s66
      %s69 = sshll.u32 [#allocation10], 4
      %s70 = int_to_ptr.vmem [resolvable:$true] %s69
      %72 = dma.hbm_to_vmem [thread:$0]  %s4, 128, %s70, [#allocation9]
    $region21: #{tpu_custom_call.1} parent=1 // pred_fallthru
      _
    // Predicated region
    $region22: #{tpu_custom_call.1} parent=1 // pred_check
      _
    $region23: #{tpu_custom_call.1} parent=1 // pred_check_branch
      %74 = sbr.rel (0) target = $region25
    $region24: #{tpu_custom_call.1} parent=1 // pred_region
      %s76 = ssub.s32 128, 128
      %77 = vsyncadd [#allocation12], %s76
      %s79 = sshll.u32 [#allocation11], 4
      %s80 = int_to_ptr.vmem [resolvable:$true] %s79
      %82 = dma.hbm_to_vmem [thread:$0]  %s5, 128, %s80, [#allocation12]
    $region25: #{tpu_custom_call.1} parent=1 // pred_fallthru
      _
    // Predicated region
    $region26: #{tpu_custom_call.1} parent=1 // pred_check
      _
    $region27: #{tpu_custom_call.1} parent=1 // pred_check_branch
      %84 = sbr.rel (0) target = $region29
    $region28: #{tpu_custom_call.1} parent=1 // pred_region
      %s86 = ssub.s32 16, 16
      %87 = vsyncadd [#allocation12], %s86
      %s89 = sshll.u32 [#allocation13], 4
      %s90 = int_to_ptr.vmem [resolvable:$true] %s89
      %92 = dma.hbm_to_vmem [thread:$0]  %s6, 16, %s90, [#allocation12]
    $region29: #{tpu_custom_call.1} parent=1 // pred_fallthru
      _
    // Predicated region
    $region30: #{tpu_custom_call.1} parent=1 // pred_check
      _
    $region31: #{tpu_custom_call.1} parent=1 // pred_check_branch
      %94 = sbr.rel (0) target = $region33
    $region32: #{tpu_custom_call.1} parent=1 // pred_region
      %95 = dma.done [#allocation3], 256
    $region33: #{tpu_custom_call.1} parent=1 // pred_fallthru
      _
    // Predicated region
    $region34: #{tpu_custom_call.1} parent=1 // pred_check
      _
    $region35: #{tpu_custom_call.1} parent=1 // pred_check_branch
      %97 = sbr.rel (0) target = $region37
    $region36: #{tpu_custom_call.1} parent=1 // pred_region
      %98 = dma.done [#allocation6], 4096
    $region37: #{tpu_custom_call.1} parent=1 // pred_fallthru
      _
    // Predicated region
    $region38: #{tpu_custom_call.1} parent=1 // pred_check
      _
    $region39: #{tpu_custom_call.1} parent=1 // pred_check_branch
      %100 = sbr.rel (0) target = $region41
    $region40: #{tpu_custom_call.1} parent=1 // pred_region
      %101 = dma.done [#allocation6], 128
    $region41: #{tpu_custom_call.1} parent=1 // pred_fallthru
      _
    // Predicated region
    $region42: #{tpu_custom_call.1} parent=1 // pred_check
      _
    $region43: #{tpu_custom_call.1} parent=1 // pred_check_branch
      %103 = sbr.rel (0) target = $region45
    $region44: #{tpu_custom_call.1} parent=1 // pred_region
      %104 = dma.done [#allocation9], 65536
    $region45: #{tpu_custom_call.1} parent=1 // pred_fallthru
      _
    // Predicated region
    $region46: #{tpu_custom_call.1} parent=1 // pred_check
      _
    $region47: #{tpu_custom_call.1} parent=1 // pred_check_branch
      %106 = sbr.rel (0) target = $region49
    $region48: #{tpu_custom_call.1} parent=1 // pred_region
      %107 = dma.done [#allocation9], 128
    $region49: #{tpu_custom_call.1} parent=1 // pred_fallthru
      _
    // Predicated region
    $region50: #{tpu_custom_call.1} parent=1 // pred_check
      _
    $region51: #{tpu_custom_call.1} parent=1 // pred_check_branch
      %109 = sbr.rel (0) target = $region53
    $region52: #{tpu_custom_call.1} parent=1 // pred_region
      %110 = dma.done [#allocation12], 128
    $region53: #{tpu_custom_call.1} parent=1 // pred_fallthru
      _
    // Predicated region
    $region54: #{tpu_custom_call.1} parent=1 // pred_check
      _
    $region55: #{tpu_custom_call.1} parent=1 // pred_check_branch
      %112 = sbr.rel (0) target = $region57
    $region56: #{tpu_custom_call.1} parent=1 // pred_region
      %113 = dma.done [#allocation12], 16
    $region57: #{tpu_custom_call.1} parent=1 // pred_fallthru
      _
    %v114 = vld [vmem:[#allocation2] sm:$0xff]
    %v115 = vld [vmem:[#allocation2 + $0x8] sm:$0xff]
    %v116 = vld [vmem:[#allocation5] sm:$0xff]
    %v117 = vld [vmem:[#allocation5 + $0x8] sm:$0xff]
    %v118 = vld [vmem:[#allocation5 + $0x40] sm:$0xff]
    %v119 = vld [vmem:[#allocation5 + $0x48] sm:$0xff]
    %v120 = vld [vmem:[#allocation5 + $0x80] sm:$0xff]
    %v121 = vld [vmem:[#allocation5 + $0x88] sm:$0xff]
    %v122 = vld [vmem:[#allocation5 + $0xc0] sm:$0xff]
    %v123 = vld [vmem:[#allocation5 + $0xc8] sm:$0xff]
    %v124 = vld [vmem:[#allocation7] sm:$0x3]
    %v126 = vlaneseq
    %v127 = vshrl.u32 %v126, 7
    %v128 = vsub.s32 0, %v127
    %v129 = vrot.slane %v124, %v128
    %v130 = vlaneseq
    %v131 = vshrl.u32 %v130, 7
    %v132 = vsub.s32 1, %v131
    %v133 = vrot.slane %v124, %v132
    %vm136 = vcmask 261120
    %v138 = vsel %vm136, %v114, 0
    %v141 = vsel %vm136, %v115, 0
    %143 = vmatprep.subr.mxu0 %v117
    %144 = vmatpush1.msra.mxu0 %v116
    %145 = vmatprep.subr.mxu0 %v119
    %146 = vmatpush1.msra.mxu0 %v118
    %147 = vmatprep.subr.mxu0 %v121
    %148 = vmatpush1.msra.mxu0 %v120
    %149 = vmatprep.subr.mxu0 %v123
    %150 = vmatpush1.msra.mxu0 %v122
    %151 = vmatprep.subr.mxu0 0.0
    %152 = vmatpush1.msra.mxu0 0.0
    %153 = vmatprep.subr.mxu0 0.0
    %154 = vmatpush1.msra.mxu0 0.0
    %155 = vmatprep.subr.mxu0 0.0
    %156 = vmatpush1.msra.mxu0 0.0
    %157 = vmatprep.subr.mxu0 0.0
    %158 = vmatpush1.msra.mxu0 0.0
    %159 = vmatprep.subr.mxu0 0.0
    %160 = vmatpush1.msra.mxu0 0.0
    %161 = vmatprep.subr.mxu0 0.0
    %162 = vmatpush1.msra.mxu0 0.0
    %163 = vmatprep.subr.mxu0 0.0
    %164 = vmatpush1.msra.mxu0 0.0
    %165 = vmatprep.subr.mxu0 0.0
    %166 = vmatpush1.msra.mxu0 0.0
    %167 = vmatprep.subr.mxu0 0.0
    %168 = vmatpush1.msra.mxu0 0.0
    %169 = vmatprep.subr.mxu0 0.0
    %170 = vmatpush1.msra.mxu0 0.0
    %171 = vmatprep.subr.mxu0 0.0
    %172 = vmatpush1.msra.mxu0 0.0
    %173 = vmatprep.subr.mxu0 0.0
    %174 = vmatpush1.msra.mxu0 0.0
    %175 = vmatprep.subr.mxu0 0.0
    %176 = vmatpush1.msra.mxu0 0.0
    %177 = vmatprep.subr.mxu0 0.0
    %178 = vmatpush1.msra.mxu0 0.0
    %179 = vmatprep.subr.mxu0 0.0
    %180 = vmatpush1.msra.mxu0 0.0
    %181 = vmatprep.subr.mxu0 0.0
    %182 = vmatpush1.msra.mxu0 0.0
    %183 = vmatprep.subr.mxu0 0.0
    %184 = vmatpush1.msra.mxu0 0.0
    %185 = vmatprep.subr.mxu0 0.0
    %186 = vmatpush1.msra.mxu0 0.0
    %187 = vmatprep.subr.mxu0 0.0
    %188 = vmatpush1.msra.mxu0 0.0
    %189 = vmatprep.subr.mxu0 0.0
    %190 = vmatpush1.msra.mxu0 0.0
    %191 = vmatprep.subr.mxu0 0.0
    %192 = vmatpush1.msra.mxu0 0.0
    %193 = vmatprep.subr.mxu0 0.0
    %194 = vmatpush1.msra.mxu0 0.0
    %195 = vmatprep.subr.mxu0 0.0
    %196 = vmatpush1.msra.mxu0 0.0
    %197 = vmatprep.subr.mxu0 0.0
    %198 = vmatpush1.msra.mxu0 0.0
    %199 = vmatprep.subr.mxu0 0.0
    %200 = vmatpush1.msra.mxu0 0.0
    %201 = vmatprep.subr.mxu0 0.0
    %202 = vmatpush1.msra.mxu0 0.0
    %203 = vmatprep.subr.mxu0 0.0
    %204 = vmatpush1.msra.mxu0 0.0
    %205 = vmatprep.subr.mxu0 0.0
    %206 = vmatpush1.msra.mxu0 0.0
    %207 = vmatprep.mubr.f32.mxu0 0.0
    %208 = vmatmul.mubr.f32.gmra.mrb[0].mxu0 %v138
    %v209 = vpop.f32.mrb[0].mxu0
    %v210 = vadd.f32 %v129, %v209
    %v211 = vpop.f32.mrb[0].mxu0
    %v212 = vadd.f32 %v133, %v211
    %213 = vmatprep.mubr.f32.mxu0 0.0
    %214 = vmatmul.mubr.f32.gmra.mrb[0].mxu0 %v141
    %v215 = vpop.f32.mrb[0].mxu0
    %v216 = vadd.f32 %v129, %v215
    %v217 = vpop.f32.mrb[0].mxu0
    %v218 = vadd.f32 %v133, %v217
    %219 = vdwg.mxu0
    %v220 = vmax.f32 %v210, 0.0
    %v221 = vmax.f32 %v212, 0.0
    %v222 = vmax.f32 %v216, 0.0
    %v223 = vmax.f32 %v218, 0.0
    %v224 = vpack.c.bf16 %v222, %v220
    %v225 = vpack.c.bf16 %v223, %v221
    %v226 = vld [vmem:[#allocation8] sm:$0xff]
    %v227 = vld [vmem:[#allocation8 + $0x8] sm:$0xff]
    %v228 = vld [vmem:[#allocation8 + $0x10] sm:$0xff]
    %v229 = vld [vmem:[#allocation8 + $0x18] sm:$0xff]
    %v230 = vld [vmem:[#allocation8 + $0x20] sm:$0xff]
    %v231 = vld [vmem:[#allocation8 + $0x28] sm:$0xff]
    %v232 = vld [vmem:[#allocation8 + $0x30] sm:$0xff]
    %v233 = vld [vmem:[#allocation8 + $0x38] sm:$0xff]
    %v234 = vld [vmem:[#allocation8 + $0x40] sm:$0xff]
    %v235 = vld [vmem:[#allocation8 + $0x48] sm:$0xff]
    %v236 = vld [vmem:[#allocation8 + $0x50] sm:$0xff]
    %v237 = vld [vmem:[#allocation8 + $0x58] sm:$0xff]
    %v238 = vld [vmem:[#allocation8 + $0x60] sm:$0xff]
    %v239 = vld [vmem:[#allocation8 + $0x68] sm:$0xff]
    %v240 = vld [vmem:[#allocation8 + $0x70] sm:$0xff]
    %v241 = vld [vmem:[#allocation8 + $0x78] sm:$0xff]
    %v242 = vld [vmem:[#allocation8 + $0x80] sm:$0xff]
    %v243 = vld [vmem:[#allocation8 + $0x88] sm:$0xff]
    %v244 = vld [vmem:[#allocation8 + $0x90] sm:$0xff]
    %v245 = vld [vmem:[#allocation8 + $0x98] sm:$0xff]
    %v246 = vld [vmem:[#allocation8 + $0xa0] sm:$0xff]
    %v247 = vld [vmem:[#allocation8 + $0xa8] sm:$0xff]
    %v248 = vld [vmem:[#allocation8 + $0xb0] sm:$0xff]
    %v249 = vld [vmem:[#allocation8 + $0xb8] sm:$0xff]
    %v250 = vld [vmem:[#allocation8 + $0xc0] sm:$0xff]
    %v251 = vld [vmem:[#allocation8 + $0xc8] sm:$0xff]
    %v252 = vld [vmem:[#allocation8 + $0xd0] sm:$0xff]
    %v253 = vld [vmem:[#allocation8 + $0xd8] sm:$0xff]
    %v254 = vld [vmem:[#allocation8 + $0xe0] sm:$0xff]
    %v255 = vld [vmem:[#allocation8 + $0xe8] sm:$0xff]
    %v256 = vld [vmem:[#allocation8 + $0xf0] sm:$0xff]
    %v257 = vld [vmem:[#allocation8 + $0xf8] sm:$0xff]
    %v258 = vld [vmem:[#allocation8 + $0x100] sm:$0xff]
    %v259 = vld [vmem:[#allocation8 + $0x108] sm:$0xff]
    %v260 = vld [vmem:[#allocation8 + $0x110] sm:$0xff]
    %v261 = vld [vmem:[#allocation8 + $0x118] sm:$0xff]
    %v262 = vld [vmem:[#allocation8 + $0x120] sm:$0xff]
    %v263 = vld [vmem:[#allocation8 + $0x128] sm:$0xff]
    %v264 = vld [vmem:[#allocation8 + $0x130] sm:$0xff]
    %v265 = vld [vmem:[#allocation8 + $0x138] sm:$0xff]
    %v266 = vld [vmem:[#allocation8 + $0x140] sm:$0xff]
    %v267 = vld [vmem:[#allocation8 + $0x148] sm:$0xff]
    %v268 = vld [vmem:[#allocation8 + $0x150] sm:$0xff]
    %v269 = vld [vmem:[#allocation8 + $0x158] sm:$0xff]
    %v270 = vld [vmem:[#allocation8 + $0x160] sm:$0xff]
    %v271 = vld [vmem:[#allocation8 + $0x168] sm:$0xff]
    %v272 = vld [vmem:[#allocation8 + $0x170] sm:$0xff]
    %v273 = vld [vmem:[#allocation8 + $0x178] sm:$0xff]
    %v274 = vld [vmem:[#allocation8 + $0x180] sm:$0xff]
    %v275 = vld [vmem:[#allocation8 + $0x188] sm:$0xff]
    %v276 = vld [vmem:[#allocation8 + $0x190] sm:$0xff]
    %v277 = vld [vmem:[#allocation8 + $0x198] sm:$0xff]
    %v278 = vld [vmem:[#allocation8 + $0x1a0] sm:$0xff]
    %v279 = vld [vmem:[#allocation8 + $0x1a8] sm:$0xff]
    %v280 = vld [vmem:[#allocation8 + $0x1b0] sm:$0xff]
    %v281 = vld [vmem:[#allocation8 + $0x1b8] sm:$0xff]
    %v282 = vld [vmem:[#allocation8 + $0x1c0] sm:$0xff]
    %v283 = vld [vmem:[#allocation8 + $0x1c8] sm:$0xff]
    %v284 = vld [vmem:[#allocation8 + $0x1d0] sm:$0xff]
    %v285 = vld [vmem:[#allocation8 + $0x1d8] sm:$0xff]
    %v286 = vld [vmem:[#allocation8 + $0x1e0] sm:$0xff]
    %v287 = vld [vmem:[#allocation8 + $0x1e8] sm:$0xff]
    %v288 = vld [vmem:[#allocation8 + $0x1f0] sm:$0xff]
    %v289 = vld [vmem:[#allocation8 + $0x1f8] sm:$0xff]
    %v290 = vld [vmem:[#allocation8 + $0x200] sm:$0xff]
    %v291 = vld [vmem:[#allocation8 + $0x208] sm:$0xff]
    %v292 = vld [vmem:[#allocation8 + $0x210] sm:$0xff]
    %v293 = vld [vmem:[#allocation8 + $0x218] sm:$0xff]
    %v294 = vld [vmem:[#allocation8 + $0x220] sm:$0xff]
    %v295 = vld [vmem:[#allocation8 + $0x228] sm:$0xff]
    %v296 = vld [vmem:[#allocation8 + $0x230] sm:$0xff]
    %v297 = vld [vmem:[#allocation8 + $0x238] sm:$0xff]
    %v298 = vld [vmem:[#allocation8 + $0x240] sm:$0xff]
    %v299 = vld [vmem:[#allocation8 + $0x248] sm:$0xff]
    %v300 = vld [vmem:[#allocation8 + $0x250] sm:$0xff]
    %v301 = vld [vmem:[#allocation8 + $0x258] sm:$0xff]
    %v302 = vld [vmem:[#allocation8 + $0x260] sm:$0xff]
    %v303 = vld [vmem:[#allocation8 + $0x268] sm:$0xff]
    %v304 = vld [vmem:[#allocation8 + $0x270] sm:$0xff]
    %v305 = vld [vmem:[#allocation8 + $0x278] sm:$0xff]
    %v306 = vld [vmem:[#allocation8 + $0x280] sm:$0xff]
    %v307 = vld [vmem:[#allocation8 + $0x288] sm:$0xff]
    %v308 = vld [vmem:[#allocation8 + $0x290] sm:$0xff]
    %v309 = vld [vmem:[#allocation8 + $0x298] sm:$0xff]
    %v310 = vld [vmem:[#allocation8 + $0x2a0] sm:$0xff]
    %v311 = vld [vmem:[#allocation8 + $0x2a8] sm:$0xff]
    %v312 = vld [vmem:[#allocation8 + $0x2b0] sm:$0xff]
    %v313 = vld [vmem:[#allocation8 + $0x2b8] sm:$0xff]
    %v314 = vld [vmem:[#allocation8 + $0x2c0] sm:$0xff]
    %v315 = vld [vmem:[#allocation8 + $0x2c8] sm:$0xff]
    %v316 = vld [vmem:[#allocation8 + $0x2d0] sm:$0xff]
    %v317 = vld [vmem:[#allocation8 + $0x2d8] sm:$0xff]
    %v318 = vld [vmem:[#allocation8 + $0x2e0] sm:$0xff]
    %v319 = vld [vmem:[#allocation8 + $0x2e8] sm:$0xff]
    %v320 = vld [vmem:[#allocation8 + $0x2f0] sm:$0xff]
    %v321 = vld [vmem:[#allocation8 + $0x2f8] sm:$0xff]
    %v322 = vld [vmem:[#allocation8 + $0x300] sm:$0xff]
    %v323 = vld [vmem:[#allocation8 + $0x308] sm:$0xff]
    %v324 = vld [vmem:[#allocation8 + $0x310] sm:$0xff]
    %v325 = vld [vmem:[#allocation8 + $0x318] sm:$0xff]
    %v326 = vld [vmem:[#allocation8 + $0x320] sm:$0xff]
    %v327 = vld [vmem:[#allocation8 + $0x328] sm:$0xff]
    %v328 = vld [vmem:[#allocation8 + $0x330] sm:$0xff]
    %v329 = vld [vmem:[#allocation8 + $0x338] sm:$0xff]
    %v330 = vld [vmem:[#allocation8 + $0x340] sm:$0xff]
    %v331 = vld [vmem:[#allocation8 + $0x348] sm:$0xff]
    %v332 = vld [vmem:[#allocation8 + $0x350] sm:$0xff]
    %v333 = vld [vmem:[#allocation8 + $0x358] sm:$0xff]
    %v334 = vld [vmem:[#allocation8 + $0x360] sm:$0xff]
    %v335 = vld [vmem:[#allocation8 + $0x368] sm:$0xff]
    %v336 = vld [vmem:[#allocation8 + $0x370] sm:$0xff]
    %v337 = vld [vmem:[#allocation8 + $0x378] sm:$0xff]
    %v338 = vld [vmem:[#allocation8 + $0x380] sm:$0xff]
    %v339 = vld [vmem:[#allocation8 + $0x388] sm:$0xff]
    %v340 = vld [vmem:[#allocation8 + $0x390] sm:$0xff]
    %v341 = vld [vmem:[#allocation8 + $0x398] sm:$0xff]
    %v342 = vld [vmem:[#allocation8 + $0x3a0] sm:$0xff]
    %v343 = vld [vmem:[#allocation8 + $0x3a8] sm:$0xff]
    %v344 = vld [vmem:[#allocation8 + $0x3b0] sm:$0xff]
    %v345 = vld [vmem:[#allocation8 + $0x3b8] sm:$0xff]
    %v346 = vld [vmem:[#allocation8 + $0x3c0] sm:$0xff]
    %v347 = vld [vmem:[#allocation8 + $0x3c8] sm:$0xff]
    %v348 = vld [vmem:[#allocation8 + $0x3d0] sm:$0xff]
    %v349 = vld [vmem:[#allocation8 + $0x3d8] sm:$0xff]
    %v350 = vld [vmem:[#allocation8 + $0x3e0] sm:$0xff]
    %v351 = vld [vmem:[#allocation8 + $0x3e8] sm:$0xff]
    %v352 = vld [vmem:[#allocation8 + $0x3f0] sm:$0xff]
    %v353 = vld [vmem:[#allocation8 + $0x3f8] sm:$0xff]
    %v354 = vld [vmem:[#allocation5 + $0x10] sm:$0xff]
    %v355 = vld [vmem:[#allocation5 + $0x18] sm:$0xff]
    %v356 = vld [vmem:[#allocation5 + $0x50] sm:$0xff]
    %v357 = vld [vmem:[#allocation5 + $0x58] sm:$0xff]
    %v358 = vld [vmem:[#allocation5 + $0x90] sm:$0xff]
    %v359 = vld [vmem:[#allocation5 + $0x98] sm:$0xff]
    %v360 = vld [vmem:[#allocation5 + $0xd0] sm:$0xff]
    %v361 = vld [vmem:[#allocation5 + $0xd8] sm:$0xff]
    %v362 = vld [vmem:[#allocation7 + $0x2] sm:$0x3]
    %v364 = vlaneseq
    %v365 = vshrl.u32 %v364, 7
    %v366 = vsub.s32 0, %v365
    %v367 = vrot.slane %v362, %v366
    %v368 = vlaneseq
    %v369 = vshrl.u32 %v368, 7
    %v370 = vsub.s32 1, %v369
    %v371 = vrot.slane %v362, %v370
    %374 = vmatprep.subr.mxu0 %v355
    %375 = vmatpush1.msra.mxu0 %v354
    %376 = vmatprep.subr.mxu0 %v357
    %377 = vmatpush1.msra.mxu0 %v356
    %378 = vmatprep.subr.mxu0 %v359
    %379 = vmatpush1.msra.mxu0 %v358
    %380 = vmatprep.subr.mxu0 %v361
    %381 = vmatpush1.msra.mxu0 %v360
    %382 = vmatprep.subr.mxu0 0.0
    %383 = vmatpush1.msra.mxu0 0.0
    %384 = vmatprep.subr.mxu0 0.0
    %385 = vmatpush1.msra.mxu0 0.0
    %386 = vmatprep.subr.mxu0 0.0
    %387 = vmatpush1.msra.mxu0 0.0
    %388 = vmatprep.subr.mxu0 0.0
    %389 = vmatpush1.msra.mxu0 0.0
    %390 = vmatprep.subr.mxu0 0.0
    %391 = vmatpush1.msra.mxu0 0.0
    %392 = vmatprep.subr.mxu0 0.0
    %393 = vmatpush1.msra.mxu0 0.0
    %394 = vmatprep.subr.mxu0 0.0
    %395 = vmatpush1.msra.mxu0 0.0
    %396 = vmatprep.subr.mxu0 0.0
    %397 = vmatpush1.msra.mxu0 0.0
    %398 = vmatprep.subr.mxu0 0.0
    %399 = vmatpush1.msra.mxu0 0.0
    %400 = vmatprep.subr.mxu0 0.0
    %401 = vmatpush1.msra.mxu0 0.0
    %402 = vmatprep.subr.mxu0 0.0
    %403 = vmatpush1.msra.mxu0 0.0
    %404 = vmatprep.subr.mxu0 0.0
    %405 = vmatpush1.msra.mxu0 0.0
    %406 = vmatprep.subr.mxu0 0.0
    %407 = vmatpush1.msra.mxu0 0.0
    %408 = vmatprep.subr.mxu0 0.0
    %409 = vmatpush1.msra.mxu0 0.0
    %410 = vmatprep.subr.mxu0 0.0
    %411 = vmatpush1.msra.mxu0 0.0
    %412 = vmatprep.subr.mxu0 0.0
    %413 = vmatpush1.msra.mxu0 0.0
    %414 = vmatprep.subr.mxu0 0.0
    %415 = vmatpush1.msra.mxu0 0.0
    %416 = vmatprep.subr.mxu0 0.0
    %417 = vmatpush1.msra.mxu0 0.0
    %418 = vmatprep.subr.mxu0 0.0
    %419 = vmatpush1.msra.mxu0 0.0
    %420 = vmatprep.subr.mxu0 0.0
    %421 = vmatpush1.msra.mxu0 0.0
    %422 = vmatprep.subr.mxu0 0.0
    %423 = vmatpush1.msra.mxu0 0.0
    %424 = vmatprep.subr.mxu0 0.0
    %425 = vmatpush1.msra.mxu0 0.0
    %426 = vmatprep.subr.mxu0 0.0
    %427 = vmatpush1.msra.mxu0 0.0
    %428 = vmatprep.subr.mxu0 0.0
    %429 = vmatpush1.msra.mxu0 0.0
    %430 = vmatprep.subr.mxu0 0.0
    %431 = vmatpush1.msra.mxu0 0.0
    %432 = vmatprep.subr.mxu0 0.0
    %433 = vmatpush1.msra.mxu0 0.0
    %434 = vmatprep.subr.mxu0 0.0
    %435 = vmatpush1.msra.mxu0 0.0
    %436 = vmatprep.subr.mxu0 0.0
    %437 = vmatpush1.msra.mxu0 0.0
    %438 = vmatprep.mubr.f32.mxu0 0.0
    %439 = vmatmul.mubr.f32.gmra.mrb[0].mxu0 %v138
    %v440 = vpop.f32.mrb[0].mxu0
    %v441 = vadd.f32 %v367, %v440
    %v442 = vpop.f32.mrb[0].mxu0
    %v443 = vadd.f32 %v371, %v442
    %444 = vmatprep.mubr.f32.mxu0 0.0
    %445 = vmatmul.mubr.f32.gmra.mrb[0].mxu0 %v141
    %v446 = vpop.f32.mrb[0].mxu0
    %v447 = vadd.f32 %v367, %v446
    %v448 = vpop.f32.mrb[0].mxu0
    %v449 = vadd.f32 %v371, %v448
    %450 = vdwg.mxu0
    %v451 = vmax.f32 %v441, 0.0
    %v452 = vmax.f32 %v443, 0.0
    %v453 = vmax.f32 %v447, 0.0
    %v454 = vmax.f32 %v449, 0.0
    %v455 = vpack.c.bf16 %v453, %v451
    %v456 = vpack.c.bf16 %v454, %v452
    %v457 = vld [vmem:[#allocation8 + $0x400] sm:$0xff]
    %v458 = vld [vmem:[#allocation8 + $0x408] sm:$0xff]
    %v459 = vld [vmem:[#allocation8 + $0x410] sm:$0xff]
    %v460 = vld [vmem:[#allocation8 + $0x418] sm:$0xff]
    %v461 = vld [vmem:[#allocation8 + $0x420] sm:$0xff]
    %v462 = vld [vmem:[#allocation8 + $0x428] sm:$0xff]
    %v463 = vld [vmem:[#allocation8 + $0x430] sm:$0xff]
    %v464 = vld [vmem:[#allocation8 + $0x438] sm:$0xff]
    %v465 = vld [vmem:[#allocation8 + $0x440] sm:$0xff]
    %v466 = vld [vmem:[#allocation8 + $0x448] sm:$0xff]
    %v467 = vld [vmem:[#allocation8 + $0x450] sm:$0xff]
    %v468 = vld [vmem:[#allocation8 + $0x458] sm:$0xff]
    %v469 = vld [vmem:[#allocation8 + $0x460] sm:$0xff]
    %v470 = vld [vmem:[#allocation8 + $0x468] sm:$0xff]
    %v471 = vld [vmem:[#allocation8 + $0x470] sm:$0xff]
    %v472 = vld [vmem:[#allocation8 + $0x478] sm:$0xff]
    %v473 = vld [vmem:[#allocation8 + $0x480] sm:$0xff]
    %v474 = vld [vmem:[#allocation8 + $0x488] sm:$0xff]
    %v475 = vld [vmem:[#allocation8 + $0x490] sm:$0xff]
    %v476 = vld [vmem:[#allocation8 + $0x498] sm:$0xff]
    %v477 = vld [vmem:[#allocation8 + $0x4a0] sm:$0xff]
    %v478 = vld [vmem:[#allocation8 + $0x4a8] sm:$0xff]
    %v479 = vld [vmem:[#allocation8 + $0x4b0] sm:$0xff]
    %v480 = vld [vmem:[#allocation8 + $0x4b8] sm:$0xff]
    %v481 = vld [vmem:[#allocation8 + $0x4c0] sm:$0xff]
    %v482 = vld [vmem:[#allocation8 + $0x4c8] sm:$0xff]
    %v483 = vld [vmem:[#allocation8 + $0x4d0] sm:$0xff]
    %v484 = vld [vmem:[#allocation8 + $0x4d8] sm:$0xff]
    %v485 = vld [vmem:[#allocation8 + $0x4e0] sm:$0xff]
    %v486 = vld [vmem:[#allocation8 + $0x4e8] sm:$0xff]
    %v487 = vld [vmem:[#allocation8 + $0x4f0] sm:$0xff]
    %v488 = vld [vmem:[#allocation8 + $0x4f8] sm:$0xff]
    %v489 = vld [vmem:[#allocation8 + $0x500] sm:$0xff]
    %v490 = vld [vmem:[#allocation8 + $0x508] sm:$0xff]
    %v491 = vld [vmem:[#allocation8 + $0x510] sm:$0xff]
    %v492 = vld [vmem:[#allocation8 + $0x518] sm:$0xff]
    %v493 = vld [vmem:[#allocation8 + $0x520] sm:$0xff]
    %v494 = vld [vmem:[#allocation8 + $0x528] sm:$0xff]
    %v495 = vld [vmem:[#allocation8 + $0x530] sm:$0xff]
    %v496 = vld [vmem:[#allocation8 + $0x538] sm:$0xff]
    %v497 = vld [vmem:[#allocation8 + $0x540] sm:$0xff]
    %v498 = vld [vmem:[#allocation8 + $0x548] sm:$0xff]
    %v499 = vld [vmem:[#allocation8 + $0x550] sm:$0xff]
    %v500 = vld [vmem:[#allocation8 + $0x558] sm:$0xff]
    %v501 = vld [vmem:[#allocation8 + $0x560] sm:$0xff]
    %v502 = vld [vmem:[#allocation8 + $0x568] sm:$0xff]
    %v503 = vld [vmem:[#allocation8 + $0x570] sm:$0xff]
    %v504 = vld [vmem:[#allocation8 + $0x578] sm:$0xff]
    %v505 = vld [vmem:[#allocation8 + $0x580] sm:$0xff]
    %v506 = vld [vmem:[#allocation8 + $0x588] sm:$0xff]
    %v507 = vld [vmem:[#allocation8 + $0x590] sm:$0xff]
    %v508 = vld [vmem:[#allocation8 + $0x598] sm:$0xff]
    %v509 = vld [vmem:[#allocation8 + $0x5a0] sm:$0xff]
    %v510 = vld [vmem:[#allocation8 + $0x5a8] sm:$0xff]
    %v511 = vld [vmem:[#allocation8 + $0x5b0] sm:$0xff]
    %v512 = vld [vmem:[#allocation8 + $0x5b8] sm:$0xff]
    %v513 = vld [vmem:[#allocation8 + $0x5c0] sm:$0xff]
    %v514 = vld [vmem:[#allocation8 + $0x5c8] sm:$0xff]
    %v515 = vld [vmem:[#allocation8 + $0x5d0] sm:$0xff]
    %v516 = vld [vmem:[#allocation8 + $0x5d8] sm:$0xff]
    %v517 = vld [vmem:[#allocation8 + $0x5e0] sm:$0xff]
    %v518 = vld [vmem:[#allocation8 + $0x5e8] sm:$0xff]
    %v519 = vld [vmem:[#allocation8 + $0x5f0] sm:$0xff]
    %v520 = vld [vmem:[#allocation8 + $0x5f8] sm:$0xff]
    %v521 = vld [vmem:[#allocation8 + $0x600] sm:$0xff]
    %v522 = vld [vmem:[#allocation8 + $0x608] sm:$0xff]
    %v523 = vld [vmem:[#allocation8 + $0x610] sm:$0xff]
    %v524 = vld [vmem:[#allocation8 + $0x618] sm:$0xff]
    %v525 = vld [vmem:[#allocation8 + $0x620] sm:$0xff]
    %v526 = vld [vmem:[#allocation8 + $0x628] sm:$0xff]
    %v527 = vld [vmem:[#allocation8 + $0x630] sm:$0xff]
    %v528 = vld [vmem:[#allocation8 + $0x638] sm:$0xff]
    %v529 = vld [vmem:[#allocation8 + $0x640] sm:$0xff]
    %v530 = vld [vmem:[#allocation8 + $0x648] sm:$0xff]
    %v531 = vld [vmem:[#allocation8 + $0x650] sm:$0xff]
    %v532 = vld [vmem:[#allocation8 + $0x658] sm:$0xff]
    %v533 = vld [vmem:[#allocation8 + $0x660] sm:$0xff]
    %v534 = vld [vmem:[#allocation8 + $0x668] sm:$0xff]
    %v535 = vld [vmem:[#allocation8 + $0x670] sm:$0xff]
    %v536 = vld [vmem:[#allocation8 + $0x678] sm:$0xff]
    %v537 = vld [vmem:[#allocation8 + $0x680] sm:$0xff]
    %v538 = vld [vmem:[#allocation8 + $0x688] sm:$0xff]
    %v539 = vld [vmem:[#allocation8 + $0x690] sm:$0xff]
    %v540 = vld [vmem:[#allocation8 + $0x698] sm:$0xff]
    %v541 = vld [vmem:[#allocation8 + $0x6a0] sm:$0xff]
    %v542 = vld [vmem:[#allocation8 + $0x6a8] sm:$0xff]
    %v543 = vld [vmem:[#allocation8 + $0x6b0] sm:$0xff]
    %v544 = vld [vmem:[#allocation8 + $0x6b8] sm:$0xff]
    %v545 = vld [vmem:[#allocation8 + $0x6c0] sm:$0xff]
    %v546 = vld [vmem:[#allocation8 + $0x6c8] sm:$0xff]
    %v547 = vld [vmem:[#allocation8 + $0x6d0] sm:$0xff]
    %v548 = vld [vmem:[#allocation8 + $0x6d8] sm:$0xff]
    %v549 = vld [vmem:[#allocation8 + $0x6e0] sm:$0xff]
    %v550 = vld [vmem:[#allocation8 + $0x6e8] sm:$0xff]
    %v551 = vld [vmem:[#allocation8 + $0x6f0] sm:$0xff]
    %v552 = vld [vmem:[#allocation8 + $0x6f8] sm:$0xff]
    %v553 = vld [vmem:[#allocation8 + $0x700] sm:$0xff]
    %v554 = vld [vmem:[#allocation8 + $0x708] sm:$0xff]
    %v555 = vld [vmem:[#allocation8 + $0x710] sm:$0xff]
    %v556 = vld [vmem:[#allocation8 + $0x718] sm:$0xff]
    %v557 = vld [vmem:[#allocation8 + $0x720] sm:$0xff]
    %v558 = vld [vmem:[#allocation8 + $0x728] sm:$0xff]
    %v559 = vld [vmem:[#allocation8 + $0x730] sm:$0xff]
    %v560 = vld [vmem:[#allocation8 + $0x738] sm:$0xff]
    %v561 = vld [vmem:[#allocation8 + $0x740] sm:$0xff]
    %v562 = vld [vmem:[#allocation8 + $0x748] sm:$0xff]
    %v563 = vld [vmem:[#allocation8 + $0x750] sm:$0xff]
    %v564 = vld [vmem:[#allocation8 + $0x758] sm:$0xff]
    %v565 = vld [vmem:[#allocation8 + $0x760] sm:$0xff]
    %v566 = vld [vmem:[#allocation8 + $0x768] sm:$0xff]
    %v567 = vld [vmem:[#allocation8 + $0x770] sm:$0xff]
    %v568 = vld [vmem:[#allocation8 + $0x778] sm:$0xff]
    %v569 = vld [vmem:[#allocation8 + $0x780] sm:$0xff]
    %v570 = vld [vmem:[#allocation8 + $0x788] sm:$0xff]
    %v571 = vld [vmem:[#allocation8 + $0x790] sm:$0xff]
    %v572 = vld [vmem:[#allocation8 + $0x798] sm:$0xff]
    %v573 = vld [vmem:[#allocation8 + $0x7a0] sm:$0xff]
    %v574 = vld [vmem:[#allocation8 + $0x7a8] sm:$0xff]
    %v575 = vld [vmem:[#allocation8 + $0x7b0] sm:$0xff]
    %v576 = vld [vmem:[#allocation8 + $0x7b8] sm:$0xff]
    %v577 = vld [vmem:[#allocation8 + $0x7c0] sm:$0xff]
    %v578 = vld [vmem:[#allocation8 + $0x7c8] sm:$0xff]
    %v579 = vld [vmem:[#allocation8 + $0x7d0] sm:$0xff]
    %v580 = vld [vmem:[#allocation8 + $0x7d8] sm:$0xff]
    %v581 = vld [vmem:[#allocation8 + $0x7e0] sm:$0xff]
    %v582 = vld [vmem:[#allocation8 + $0x7e8] sm:$0xff]
    %v583 = vld [vmem:[#allocation8 + $0x7f0] sm:$0xff]
    %v584 = vld [vmem:[#allocation8 + $0x7f8] sm:$0xff]
    %v713 = vunpack.c.l.b16 %v457
    %v714 = vunpack.c.h.b16 %v457
    %v715 = vunpack.c.l.b16 %v458
    %v716 = vunpack.c.h.b16 %v458
    %v717 = vunpack.c.l.b16 %v459
    %v718 = vunpack.c.h.b16 %v459
    %v719 = vunpack.c.l.b16 %v460
    %v720 = vunpack.c.h.b16 %v460
    %v721 = vunpack.c.l.b16 %v461
    %v722 = vunpack.c.h.b16 %v461
    %v723 = vunpack.c.l.b16 %v462
    %v724 = vunpack.c.h.b16 %v462
    %v725 = vunpack.c.l.b16 %v463
    %v726 = vunpack.c.h.b16 %v463
    %v727 = vunpack.c.l.b16 %v464
    %v728 = vunpack.c.h.b16 %v464
    %v729 = vunpack.c.l.b16 %v465
    %v730 = vunpack.c.h.b16 %v465
    %v731 = vunpack.c.l.b16 %v466
    %v732 = vunpack.c.h.b16 %v466
    %v733 = vunpack.c.l.b16 %v467
    %v734 = vunpack.c.h.b16 %v467
    %v735 = vunpack.c.l.b16 %v468
    %v736 = vunpack.c.h.b16 %v468
    %v737 = vunpack.c.l.b16 %v469
    %v738 = vunpack.c.h.b16 %v469
    %v739 = vunpack.c.l.b16 %v470
    %v740 = vunpack.c.h.b16 %v470
    %v741 = vunpack.c.l.b16 %v471
    %v742 = vunpack.c.h.b16 %v471
    %v743 = vunpack.c.l.b16 %v472
    %v744 = vunpack.c.h.b16 %v472
    %v745 = vunpack.c.l.b16 %v473
    %v746 = vunpack.c.h.b16 %v473
    %v747 = vunpack.c.l.b16 %v474
    %v748 = vunpack.c.h.b16 %v474
    %v749 = vunpack.c.l.b16 %v475
    %v750 = vunpack.c.h.b16 %v475
    %v751 = vunpack.c.l.b16 %v476
    %v752 = vunpack.c.h.b16 %v476
    %v753 = vunpack.c.l.b16 %v477
    %v754 = vunpack.c.h.b16 %v477
    %v755 = vunpack.c.l.b16 %v478
    %v756 = vunpack.c.h.b16 %v478
    %v757 = vunpack.c.l.b16 %v479
    %v758 = vunpack.c.h.b16 %v479
    %v759 = vunpack.c.l.b16 %v480
    %v760 = vunpack.c.h.b16 %v480
    %v761 = vunpack.c.l.b16 %v481
    %v762 = vunpack.c.h.b16 %v481
    %v763 = vunpack.c.l.b16 %v482
    %v764 = vunpack.c.h.b16 %v482
    %v765 = vunpack.c.l.b16 %v483
    %v766 = vunpack.c.h.b16 %v483
    %v767 = vunpack.c.l.b16 %v484
    %v768 = vunpack.c.h.b16 %v484
    %v769 = vunpack.c.l.b16 %v485
    %v770 = vunpack.c.h.b16 %v485
    %v771 = vunpack.c.l.b16 %v486
    %v772 = vunpack.c.h.b16 %v486
    %v773 = vunpack.c.l.b16 %v487
    %v774 = vunpack.c.h.b16 %v487
    %v775 = vunpack.c.l.b16 %v488
    %v776 = vunpack.c.h.b16 %v488
    %v777 = vunpack.c.l.b16 %v489
    %v778 = vunpack.c.h.b16 %v489
    %v779 = vunpack.c.l.b16 %v490
    %v780 = vunpack.c.h.b16 %v490
    %v781 = vunpack.c.l.b16 %v491
    %v782 = vunpack.c.h.b16 %v491
    %v783 = vunpack.c.l.b16 %v492
    %v784 = vunpack.c.h.b16 %v492
    %v785 = vunpack.c.l.b16 %v493
    %v786 = vunpack.c.h.b16 %v493
    %v787 = vunpack.c.l.b16 %v494
    %v788 = vunpack.c.h.b16 %v494
    %v789 = vunpack.c.l.b16 %v495
    %v790 = vunpack.c.h.b16 %v495
    %v791 = vunpack.c.l.b16 %v496
    %v792 = vunpack.c.h.b16 %v496
    %v793 = vunpack.c.l.b16 %v497
    %v794 = vunpack.c.h.b16 %v497
    %v795 = vunpack.c.l.b16 %v498
    %v796 = vunpack.c.h.b16 %v498
    %v797 = vunpack.c.l.b16 %v499
    %v798 = vunpack.c.h.b16 %v499
    %v799 = vunpack.c.l.b16 %v500
    %v800 = vunpack.c.h.b16 %v500
    %v801 = vunpack.c.l.b16 %v501
    %v802 = vunpack.c.h.b16 %v501
    %v803 = vunpack.c.l.b16 %v502
    %v804 = vunpack.c.h.b16 %v502
    %v805 = vunpack.c.l.b16 %v503
    %v806 = vunpack.c.h.b16 %v503
    %v807 = vunpack.c.l.b16 %v504
    %v808 = vunpack.c.h.b16 %v504
    %v809 = vunpack.c.l.b16 %v505
    %v810 = vunpack.c.h.b16 %v505
    %v811 = vunpack.c.l.b16 %v506
    %v812 = vunpack.c.h.b16 %v506
    %v813 = vunpack.c.l.b16 %v507
    %v814 = vunpack.c.h.b16 %v507
    %v815 = vunpack.c.l.b16 %v508
    %v816 = vunpack.c.h.b16 %v508
    %v817 = vunpack.c.l.b16 %v509
    %v818 = vunpack.c.h.b16 %v509
    %v819 = vunpack.c.l.b16 %v510
    %v820 = vunpack.c.h.b16 %v510
    %v821 = vunpack.c.l.b16 %v511
    %v822 = vunpack.c.h.b16 %v511
    %v823 = vunpack.c.l.b16 %v512
    %v824 = vunpack.c.h.b16 %v512
    %v825 = vunpack.c.l.b16 %v513
    %v826 = vunpack.c.h.b16 %v513
    %v827 = vunpack.c.l.b16 %v514
    %v828 = vunpack.c.h.b16 %v514
    %v829 = vunpack.c.l.b16 %v515
    %v830 = vunpack.c.h.b16 %v515
    %v831 = vunpack.c.l.b16 %v516
    %v832 = vunpack.c.h.b16 %v516
    %v833 = vunpack.c.l.b16 %v517
    %v834 = vunpack.c.h.b16 %v517
    %v835 = vunpack.c.l.b16 %v518
    %v836 = vunpack.c.h.b16 %v518
    %v837 = vunpack.c.l.b16 %v519
    %v838 = vunpack.c.h.b16 %v519
    %v839 = vunpack.c.l.b16 %v520
    %v840 = vunpack.c.h.b16 %v520
    %v841 = vunpack.c.l.b16 %v521
    %v842 = vunpack.c.h.b16 %v521
    %v843 = vunpack.c.l.b16 %v522
    %v844 = vunpack.c.h.b16 %v522
    %v845 = vunpack.c.l.b16 %v523
    %v846 = vunpack.c.h.b16 %v523
    %v847 = vunpack.c.l.b16 %v524
    %v848 = vunpack.c.h.b16 %v524
    %v849 = vunpack.c.l.b16 %v525
    %v850 = vunpack.c.h.b16 %v525
    %v851 = vunpack.c.l.b16 %v526
    %v852 = vunpack.c.h.b16 %v526
    %v853 = vunpack.c.l.b16 %v527
    %v854 = vunpack.c.h.b16 %v527
    %v855 = vunpack.c.l.b16 %v528
    %v856 = vunpack.c.h.b16 %v528
    %v857 = vunpack.c.l.b16 %v529
    %v858 = vunpack.c.h.b16 %v529
    %v859 = vunpack.c.l.b16 %v530
    %v860 = vunpack.c.h.b16 %v530
    %v861 = vunpack.c.l.b16 %v531
    %v862 = vunpack.c.h.b16 %v531
    %v863 = vunpack.c.l.b16 %v532
    %v864 = vunpack.c.h.b16 %v532
    %v865 = vunpack.c.l.b16 %v533
    %v866 = vunpack.c.h.b16 %v533
    %v867 = vunpack.c.l.b16 %v534
    %v868 = vunpack.c.h.b16 %v534
    %v869 = vunpack.c.l.b16 %v535
    %v870 = vunpack.c.h.b16 %v535
    %v871 = vunpack.c.l.b16 %v536
    %v872 = vunpack.c.h.b16 %v536
    %v873 = vunpack.c.l.b16 %v537
    %v874 = vunpack.c.h.b16 %v537
    %v875 = vunpack.c.l.b16 %v538
    %v876 = vunpack.c.h.b16 %v538
    %v877 = vunpack.c.l.b16 %v539
    %v878 = vunpack.c.h.b16 %v539
    %v879 = vunpack.c.l.b16 %v540
    %v880 = vunpack.c.h.b16 %v540
    %v881 = vunpack.c.l.b16 %v541
    %v882 = vunpack.c.h.b16 %v541
    %v883 = vunpack.c.l.b16 %v542
    %v884 = vunpack.c.h.b16 %v542
    %v885 = vunpack.c.l.b16 %v543
    %v886 = vunpack.c.h.b16 %v543
    %v887 = vunpack.c.l.b16 %v544
    %v888 = vunpack.c.h.b16 %v544
    %v889 = vunpack.c.l.b16 %v545
    %v890 = vunpack.c.h.b16 %v545
    %v891 = vunpack.c.l.b16 %v546
    %v892 = vunpack.c.h.b16 %v546
    %v893 = vunpack.c.l.b16 %v547
    %v894 = vunpack.c.h.b16 %v547
    %v895 = vunpack.c.l.b16 %v548
    %v896 = vunpack.c.h.b16 %v548
    %v897 = vunpack.c.l.b16 %v549
    %v898 = vunpack.c.h.b16 %v549
    %v899 = vunpack.c.l.b16 %v550
    %v900 = vunpack.c.h.b16 %v550
    %v901 = vunpack.c.l.b16 %v551
    %v902 = vunpack.c.h.b16 %v551
    %v903 = vunpack.c.l.b16 %v552
    %v904 = vunpack.c.h.b16 %v552
    %v905 = vunpack.c.l.b16 %v553
    %v906 = vunpack.c.h.b16 %v553
    %v907 = vunpack.c.l.b16 %v554
    %v908 = vunpack.c.h.b16 %v554
    %v909 = vunpack.c.l.b16 %v555
    %v910 = vunpack.c.h.b16 %v555
    %v911 = vunpack.c.l.b16 %v556
    %v912 = vunpack.c.h.b16 %v556
    %v913 = vunpack.c.l.b16 %v557
    %v914 = vunpack.c.h.b16 %v557
    %v915 = vunpack.c.l.b16 %v558
    %v916 = vunpack.c.h.b16 %v558
    %v917 = vunpack.c.l.b16 %v559
    %v918 = vunpack.c.h.b16 %v559
    %v919 = vunpack.c.l.b16 %v560
    %v920 = vunpack.c.h.b16 %v560
    %v921 = vunpack.c.l.b16 %v561
    %v922 = vunpack.c.h.b16 %v561
    %v923 = vunpack.c.l.b16 %v562
    %v924 = vunpack.c.h.b16 %v562
    %v925 = vunpack.c.l.b16 %v563
    %v926 = vunpack.c.h.b16 %v563
    %v927 = vunpack.c.l.b16 %v564
    %v928 = vunpack.c.h.b16 %v564
    %v929 = vunpack.c.l.b16 %v565
    %v930 = vunpack.c.h.b16 %v565
    %v931 = vunpack.c.l.b16 %v566
    %v932 = vunpack.c.h.b16 %v566
    %v933 = vunpack.c.l.b16 %v567
    %v934 = vunpack.c.h.b16 %v567
    %v935 = vunpack.c.l.b16 %v568
    %v936 = vunpack.c.h.b16 %v568
    %v937 = vunpack.c.l.b16 %v569
    %v938 = vunpack.c.h.b16 %v569
    %v939 = vunpack.c.l.b16 %v570
    %v940 = vunpack.c.h.b16 %v570
    %v941 = vunpack.c.l.b16 %v571
    %v942 = vunpack.c.h.b16 %v571
    %v943 = vunpack.c.l.b16 %v572
    %v944 = vunpack.c.h.b16 %v572
    %v945 = vunpack.c.l.b16 %v573
    %v946 = vunpack.c.h.b16 %v573
    %v947 = vunpack.c.l.b16 %v574
    %v948 = vunpack.c.h.b16 %v574
    %v949 = vunpack.c.l.b16 %v575
    %v950 = vunpack.c.h.b16 %v575
    %v951 = vunpack.c.l.b16 %v576
    %v952 = vunpack.c.h.b16 %v576
    %v953 = vunpack.c.l.b16 %v577
    %v954 = vunpack.c.h.b16 %v577
    %v955 = vunpack.c.l.b16 %v578
    %v956 = vunpack.c.h.b16 %v578
    %v957 = vunpack.c.l.b16 %v579
    %v958 = vunpack.c.h.b16 %v579
    %v959 = vunpack.c.l.b16 %v580
    %v960 = vunpack.c.h.b16 %v580
    %v961 = vunpack.c.l.b16 %v581
    %v962 = vunpack.c.h.b16 %v581
    %v963 = vunpack.c.l.b16 %v582
    %v964 = vunpack.c.h.b16 %v582
    %v965 = vunpack.c.l.b16 %v583
    %v966 = vunpack.c.h.b16 %v583
    %v967 = vunpack.c.l.b16 %v584
    %v968 = vunpack.c.h.b16 %v584
    %v969 = vpack.c.b16 %v721, %v713
    %v970 = vpack.c.b16 %v722, %v714
    %v971 = vpack.c.b16 %v723, %v715
    %v972 = vpack.c.b16 %v724, %v716
    %v973 = vpack.c.b16 %v725, %v717
    %v974 = vpack.c.b16 %v726, %v718
    %v975 = vpack.c.b16 %v727, %v719
    %v976 = vpack.c.b16 %v728, %v720
    %v977 = vpack.c.b16 %v737, %v729
    %v978 = vpack.c.b16 %v738, %v730
    %v979 = vpack.c.b16 %v739, %v731
    %v980 = vpack.c.b16 %v740, %v732
    %v981 = vpack.c.b16 %v741, %v733
    %v982 = vpack.c.b16 %v742, %v734
    %v983 = vpack.c.b16 %v743, %v735
    %v984 = vpack.c.b16 %v744, %v736
    %v985 = vpack.c.b16 %v753, %v745
    %v986 = vpack.c.b16 %v754, %v746
    %v987 = vpack.c.b16 %v755, %v747
    %v988 = vpack.c.b16 %v756, %v748
    %v989 = vpack.c.b16 %v757, %v749
    %v990 = vpack.c.b16 %v758, %v750
    %v991 = vpack.c.b16 %v759, %v751
    %v992 = vpack.c.b16 %v760, %v752
    %v993 = vpack.c.b16 %v769, %v761
    %v994 = vpack.c.b16 %v770, %v762
    %v995 = vpack.c.b16 %v771, %v763
    %v996 = vpack.c.b16 %v772, %v764
    %v997 = vpack.c.b16 %v773, %v765
    %v998 = vpack.c.b16 %v774, %v766
    %v999 = vpack.c.b16 %v775, %v767
    %v1000 = vpack.c.b16 %v776, %v768
    %v1001 = vpack.c.b16 %v785, %v777
    %v1002 = vpack.c.b16 %v786, %v778
    %v1003 = vpack.c.b16 %v787, %v779
    %v1004 = vpack.c.b16 %v788, %v780
    %v1005 = vpack.c.b16 %v789, %v781
    %v1006 = vpack.c.b16 %v790, %v782
    %v1007 = vpack.c.b16 %v791, %v783
    %v1008 = vpack.c.b16 %v792, %v784
    %v1009 = vpack.c.b16 %v801, %v793
    %v1010 = vpack.c.b16 %v802, %v794
    %v1011 = vpack.c.b16 %v803, %v795
    %v1012 = vpack.c.b16 %v804, %v796
    %v1013 = vpack.c.b16 %v805, %v797
    %v1014 = vpack.c.b16 %v806, %v798
    %v1015 = vpack.c.b16 %v807, %v799
    %v1016 = vpack.c.b16 %v808, %v800
    %v1017 = vpack.c.b16 %v817, %v809
    %v1018 = vpack.c.b16 %v818, %v810
    %v1019 = vpack.c.b16 %v819, %v811
    %v1020 = vpack.c.b16 %v820, %v812
    %v1021 = vpack.c.b16 %v821, %v813
    %v1022 = vpack.c.b16 %v822, %v814
    %v1023 = vpack.c.b16 %v823, %v815
    %v1024 = vpack.c.b16 %v824, %v816
    %v1025 = vpack.c.b16 %v833, %v825
    %v1026 = vpack.c.b16 %v834, %v826
    %v1027 = vpack.c.b16 %v835, %v827
    %v1028 = vpack.c.b16 %v836, %v828
    %v1029 = vpack.c.b16 %v837, %v829
    %v1030 = vpack.c.b16 %v838, %v830
    %v1031 = vpack.c.b16 %v839, %v831
    %v1032 = vpack.c.b16 %v840, %v832
    %v1033 = vpack.c.b16 %v849, %v841
    %v1034 = vpack.c.b16 %v850, %v842
    %v1035 = vpack.c.b16 %v851, %v843
    %v1036 = vpack.c.b16 %v852, %v844
    %v1037 = vpack.c.b16 %v853, %v845
    %v1038 = vpack.c.b16 %v854, %v846
    %v1039 = vpack.c.b16 %v855, %v847
    %v1040 = vpack.c.b16 %v856, %v848
    %v1041 = vpack.c.b16 %v865, %v857
    %v1042 = vpack.c.b16 %v866, %v858
    %v1043 = vpack.c.b16 %v867, %v859
    %v1044 = vpack.c.b16 %v868, %v860
    %v1045 = vpack.c.b16 %v869, %v861
    %v1046 = vpack.c.b16 %v870, %v862
    %v1047 = vpack.c.b16 %v871, %v863
    %v1048 = vpack.c.b16 %v872, %v864
    %v1049 = vpack.c.b16 %v881, %v873
    %v1050 = vpack.c.b16 %v882, %v874
    %v1051 = vpack.c.b16 %v883, %v875
    %v1052 = vpack.c.b16 %v884, %v876
    %v1053 = vpack.c.b16 %v885, %v877
    %v1054 = vpack.c.b16 %v886, %v878
    %v1055 = vpack.c.b16 %v887, %v879
    %v1056 = vpack.c.b16 %v888, %v880
    %v1057 = vpack.c.b16 %v897, %v889
    %v1058 = vpack.c.b16 %v898, %v890
    %v1059 = vpack.c.b16 %v899, %v891
    %v1060 = vpack.c.b16 %v900, %v892
    %v1061 = vpack.c.b16 %v901, %v893
    %v1062 = vpack.c.b16 %v902, %v894
    %v1063 = vpack.c.b16 %v903, %v895
    %v1064 = vpack.c.b16 %v904, %v896
    %v1065 = vpack.c.b16 %v913, %v905
    %v1066 = vpack.c.b16 %v914, %v906
    %v1067 = vpack.c.b16 %v915, %v907
    %v1068 = vpack.c.b16 %v916, %v908
    %v1069 = vpack.c.b16 %v917, %v909
    %v1070 = vpack.c.b16 %v918, %v910
    %v1071 = vpack.c.b16 %v919, %v911
    %v1072 = vpack.c.b16 %v920, %v912
    %v1073 = vpack.c.b16 %v929, %v921
    %v1074 = vpack.c.b16 %v930, %v922
    %v1075 = vpack.c.b16 %v931, %v923
    %v1076 = vpack.c.b16 %v932, %v924
    %v1077 = vpack.c.b16 %v933, %v925
    %v1078 = vpack.c.b16 %v934, %v926
    %v1079 = vpack.c.b16 %v935, %v927
    %v1080 = vpack.c.b16 %v936, %v928
    %v1081 = vpack.c.b16 %v945, %v937
    %v1082 = vpack.c.b16 %v946, %v938
    %v1083 = vpack.c.b16 %v947, %v939
    %v1084 = vpack.c.b16 %v948, %v940
    %v1085 = vpack.c.b16 %v949, %v941
    %v1086 = vpack.c.b16 %v950, %v942
    %v1087 = vpack.c.b16 %v951, %v943
    %v1088 = vpack.c.b16 %v952, %v944
    %v1089 = vpack.c.b16 %v961, %v953
    %v1090 = vpack.c.b16 %v962, %v954
    %v1091 = vpack.c.b16 %v963, %v955
    %v1092 = vpack.c.b16 %v964, %v956
    %v1093 = vpack.c.b16 %v965, %v957
    %v1094 = vpack.c.b16 %v966, %v958
    %v1095 = vpack.c.b16 %v967, %v959
    %v1096 = vpack.c.b16 %v968, %v960
    %1225 = vmatprep.subr.bf16.mxu0 %v970
    %1226 = vmatpush1.bf16.msra.mxu0 %v969
    %1227 = vmatprep.subr.bf16.mxu0 %v978
    %1228 = vmatpush1.bf16.msra.mxu0 %v977
    %1229 = vmatprep.subr.bf16.mxu0 %v986
    %1230 = vmatpush1.bf16.msra.mxu0 %v985
    %1231 = vmatprep.subr.bf16.mxu0 %v994
    %1232 = vmatpush1.bf16.msra.mxu0 %v993
    %1233 = vmatprep.subr.bf16.mxu0 %v1002
    %1234 = vmatpush1.bf16.msra.mxu0 %v1001
    %1235 = vmatprep.subr.bf16.mxu0 %v1010
    %1236 = vmatpush1.bf16.msra.mxu0 %v1009
    %1237 = vmatprep.subr.bf16.mxu0 %v1018
    %1238 = vmatpush1.bf16.msra.mxu0 %v1017
    %1239 = vmatprep.subr.bf16.mxu0 %v1026
    %1240 = vmatpush1.bf16.msra.mxu0 %v1025
    %1241 = vmatprep.subr.bf16.mxu0 %v1034
    %1242 = vmatpush1.bf16.msra.mxu0 %v1033
    %1243 = vmatprep.subr.bf16.mxu0 %v1042
    %1244 = vmatpush1.bf16.msra.mxu0 %v1041
    %1245 = vmatprep.subr.bf16.mxu0 %v1050
    %1246 = vmatpush1.bf16.msra.mxu0 %v1049
    %1247 = vmatprep.subr.bf16.mxu0 %v1058
    %1248 = vmatpush1.bf16.msra.mxu0 %v1057
    %1249 = vmatprep.subr.bf16.mxu0 %v1066
    %1250 = vmatpush1.bf16.msra.mxu0 %v1065
    %1251 = vmatprep.subr.bf16.mxu0 %v1074
    %1252 = vmatpush1.bf16.msra.mxu0 %v1073
    %1253 = vmatprep.subr.bf16.mxu0 %v1082
    %1254 = vmatpush1.bf16.msra.mxu0 %v1081
    %1255 = vmatprep.subr.bf16.mxu0 %v1090
    %1256 = vmatpush1.bf16.msra.mxu0 %v1089
    %1257 = vmatprep.mubr.bf16.mxu0 %v456
    %1258 = vmatmul.mubr.bf16.gmra.mrb[0].mxu0 %v455
    %v1259 = vpop.f32.mrb[0].mxu0
    %v1260 = vadd.f32 0.0, %v1259
    %v1261 = vpop.f32.mrb[0].mxu0
    %v1262 = vadd.f32 0.0, %v1261
    %v1263 = vpop.f32.mrb[0].mxu0
    %v1264 = vadd.f32 0.0, %v1263
    %v1265 = vpop.f32.mrb[0].mxu0
    %v1266 = vadd.f32 0.0, %v1265
    %1267 = vdwg.mxu0
    %1268 = vmatprep.subr.bf16.mxu0 %v972
    %1269 = vmatpush1.bf16.msra.mxu0 %v971
    %1270 = vmatprep.subr.bf16.mxu0 %v980
    %1271 = vmatpush1.bf16.msra.mxu0 %v979
    %1272 = vmatprep.subr.bf16.mxu0 %v988
    %1273 = vmatpush1.bf16.msra.mxu0 %v987
    %1274 = vmatprep.subr.bf16.mxu0 %v996
    %1275 = vmatpush1.bf16.msra.mxu0 %v995
    %1276 = vmatprep.subr.bf16.mxu0 %v1004
    %1277 = vmatpush1.bf16.msra.mxu0 %v1003
    %1278 = vmatprep.subr.bf16.mxu0 %v1012
    %1279 = vmatpush1.bf16.msra.mxu0 %v1011
    %1280 = vmatprep.subr.bf16.mxu0 %v1020
    %1281 = vmatpush1.bf16.msra.mxu0 %v1019
    %1282 = vmatprep.subr.bf16.mxu0 %v1028
    %1283 = vmatpush1.bf16.msra.mxu0 %v1027
    %1284 = vmatprep.subr.bf16.mxu0 %v1036
    %1285 = vmatpush1.bf16.msra.mxu0 %v1035
    %1286 = vmatprep.subr.bf16.mxu0 %v1044
    %1287 = vmatpush1.bf16.msra.mxu0 %v1043
    %1288 = vmatprep.subr.bf16.mxu0 %v1052
    %1289 = vmatpush1.bf16.msra.mxu0 %v1051
    %1290 = vmatprep.subr.bf16.mxu0 %v1060
    %1291 = vmatpush1.bf16.msra.mxu0 %v1059
    %1292 = vmatprep.subr.bf16.mxu0 %v1068
    %1293 = vmatpush1.bf16.msra.mxu0 %v1067
    %1294 = vmatprep.subr.bf16.mxu0 %v1076
    %1295 = vmatpush1.bf16.msra.mxu0 %v1075
    %1296 = vmatprep.subr.bf16.mxu0 %v1084
    %1297 = vmatpush1.bf16.msra.mxu0 %v1083
    %1298 = vmatprep.subr.bf16.mxu0 %v1092
    %1299 = vmatpush1.bf16.msra.mxu0 %v1091
    %1300 = vmatprep.mubr.bf16.mxu0 %v456
    %1301 = vmatmul.mubr.bf16.gmra.mrb[0].mxu0 %v455
    %v1302 = vpop.f32.mrb[0].mxu0
    %v1303 = vadd.f32 0.0, %v1302
    %v1304 = vpop.f32.mrb[0].mxu0
    %v1305 = vadd.f32 0.0, %v1304
    %v1306 = vpop.f32.mrb[0].mxu0
    %v1307 = vadd.f32 0.0, %v1306
    %v1308 = vpop.f32.mrb[0].mxu0
    %v1309 = vadd.f32 0.0, %v1308
    %1310 = vdwg.mxu0
    %1311 = vmatprep.subr.bf16.mxu0 %v974
    %1312 = vmatpush1.bf16.msra.mxu0 %v973
    %1313 = vmatprep.subr.bf16.mxu0 %v982
    %1314 = vmatpush1.bf16.msra.mxu0 %v981
    %1315 = vmatprep.subr.bf16.mxu0 %v990
    %1316 = vmatpush1.bf16.msra.mxu0 %v989
    %1317 = vmatprep.subr.bf16.mxu0 %v998
    %1318 = vmatpush1.bf16.msra.mxu0 %v997
    %1319 = vmatprep.subr.bf16.mxu0 %v1006
    %1320 = vmatpush1.bf16.msra.mxu0 %v1005
    %1321 = vmatprep.subr.bf16.mxu0 %v1014
    %1322 = vmatpush1.bf16.msra.mxu0 %v1013
    %1323 = vmatprep.subr.bf16.mxu0 %v1022
    %1324 = vmatpush1.bf16.msra.mxu0 %v1021
    %1325 = vmatprep.subr.bf16.mxu0 %v1030
    %1326 = vmatpush1.bf16.msra.mxu0 %v1029
    %1327 = vmatprep.subr.bf16.mxu0 %v1038
    %1328 = vmatpush1.bf16.msra.mxu0 %v1037
    %1329 = vmatprep.subr.bf16.mxu0 %v1046
    %1330 = vmatpush1.bf16.msra.mxu0 %v1045
    %1331 = vmatprep.subr.bf16.mxu0 %v1054
    %1332 = vmatpush1.bf16.msra.mxu0 %v1053
    %1333 = vmatprep.subr.bf16.mxu0 %v1062
    %1334 = vmatpush1.bf16.msra.mxu0 %v1061
    %1335 = vmatprep.subr.bf16.mxu0 %v1070
    %1336 = vmatpush1.bf16.msra.mxu0 %v1069
    %1337 = vmatprep.subr.bf16.mxu0 %v1078
    %1338 = vmatpush1.bf16.msra.mxu0 %v1077
    %1339 = vmatprep.subr.bf16.mxu0 %v1086
    %1340 = vmatpush1.bf16.msra.mxu0 %v1085
    %1341 = vmatprep.subr.bf16.mxu0 %v1094
    %1342 = vmatpush1.bf16.msra.mxu0 %v1093
    %1343 = vmatprep.mubr.bf16.mxu0 %v456
    %1344 = vmatmul.mubr.bf16.gmra.mrb[0].mxu0 %v455
    %v1345 = vpop.f32.mrb[0].mxu0
    %v1346 = vadd.f32 0.0, %v1345
    %v1347 = vpop.f32.mrb[0].mxu0
    %v1348 = vadd.f32 0.0, %v1347
    %v1349 = vpop.f32.mrb[0].mxu0
    %v1350 = vadd.f32 0.0, %v1349
    %v1351 = vpop.f32.mrb[0].mxu0
    %v1352 = vadd.f32 0.0, %v1351
    %1353 = vdwg.mxu0
    %1354 = vmatprep.subr.bf16.mxu0 %v976
    %1355 = vmatpush1.bf16.msra.mxu0 %v975
    %1356 = vmatprep.subr.bf16.mxu0 %v984
    %1357 = vmatpush1.bf16.msra.mxu0 %v983
    %1358 = vmatprep.subr.bf16.mxu0 %v992
    %1359 = vmatpush1.bf16.msra.mxu0 %v991
    %1360 = vmatprep.subr.bf16.mxu0 %v1000
    %1361 = vmatpush1.bf16.msra.mxu0 %v999
    %1362 = vmatprep.subr.bf16.mxu0 %v1008
    %1363 = vmatpush1.bf16.msra.mxu0 %v1007
    %1364 = vmatprep.subr.bf16.mxu0 %v1016
    %1365 = vmatpush1.bf16.msra.mxu0 %v1015
    %1366 = vmatprep.subr.bf16.mxu0 %v1024
    %1367 = vmatpush1.bf16.msra.mxu0 %v1023
    %1368 = vmatprep.subr.bf16.mxu0 %v1032
    %1369 = vmatpush1.bf16.msra.mxu0 %v1031
    %1370 = vmatprep.subr.bf16.mxu0 %v1040
    %1371 = vmatpush1.bf16.msra.mxu0 %v1039
    %1372 = vmatprep.subr.bf16.mxu0 %v1048
    %1373 = vmatpush1.bf16.msra.mxu0 %v1047
    %1374 = vmatprep.subr.bf16.mxu0 %v1056
    %1375 = vmatpush1.bf16.msra.mxu0 %v1055
    %1376 = vmatprep.subr.bf16.mxu0 %v1064
    %1377 = vmatpush1.bf16.msra.mxu0 %v1063
    %1378 = vmatprep.subr.bf16.mxu0 %v1072
    %1379 = vmatpush1.bf16.msra.mxu0 %v1071
    %1380 = vmatprep.subr.bf16.mxu0 %v1080
    %1381 = vmatpush1.bf16.msra.mxu0 %v1079
    %1382 = vmatprep.subr.bf16.mxu0 %v1088
    %1383 = vmatpush1.bf16.msra.mxu0 %v1087
    %1384 = vmatprep.subr.bf16.mxu0 %v1096
    %1385 = vmatpush1.bf16.msra.mxu0 %v1095
    %1386 = vmatprep.mubr.bf16.mxu0 %v456
    %1387 = vmatmul.mubr.bf16.gmra.mrb[0].mxu0 %v455
    %v1388 = vpop.f32.mrb[0].mxu0
    %v1389 = vadd.f32 0.0, %v1388
    %v1390 = vpop.f32.mrb[0].mxu0
    %v1391 = vadd.f32 0.0, %v1390
    %v1392 = vpop.f32.mrb[0].mxu0
    %v1393 = vadd.f32 0.0, %v1392
    %v1394 = vpop.f32.mrb[0].mxu0
    %v1395 = vadd.f32 0.0, %v1394
    %1396 = vdwg.mxu0
    %v1525 = vunpack.c.l.b16 %v226
    %v1526 = vunpack.c.h.b16 %v226
    %v1527 = vunpack.c.l.b16 %v227
    %v1528 = vunpack.c.h.b16 %v227
    %v1529 = vunpack.c.l.b16 %v228
    %v1530 = vunpack.c.h.b16 %v228
    %v1531 = vunpack.c.l.b16 %v229
    %v1532 = vunpack.c.h.b16 %v229
    %v1533 = vunpack.c.l.b16 %v230
    %v1534 = vunpack.c.h.b16 %v230
    %v1535 = vunpack.c.l.b16 %v231
    %v1536 = vunpack.c.h.b16 %v231
    %v1537 = vunpack.c.l.b16 %v232
    %v1538 = vunpack.c.h.b16 %v232
    %v1539 = vunpack.c.l.b16 %v233
    %v1540 = vunpack.c.h.b16 %v233
    %v1541 = vunpack.c.l.b16 %v234
    %v1542 = vunpack.c.h.b16 %v234
    %v1543 = vunpack.c.l.b16 %v235
    %v1544 = vunpack.c.h.b16 %v235
    %v1545 = vunpack.c.l.b16 %v236
    %v1546 = vunpack.c.h.b16 %v236
    %v1547 = vunpack.c.l.b16 %v237
    %v1548 = vunpack.c.h.b16 %v237
    %v1549 = vunpack.c.l.b16 %v238
    %v1550 = vunpack.c.h.b16 %v238
    %v1551 = vunpack.c.l.b16 %v239
    %v1552 = vunpack.c.h.b16 %v239
    %v1553 = vunpack.c.l.b16 %v240
    %v1554 = vunpack.c.h.b16 %v240
    %v1555 = vunpack.c.l.b16 %v241
    %v1556 = vunpack.c.h.b16 %v241
    %v1557 = vunpack.c.l.b16 %v242
    %v1558 = vunpack.c.h.b16 %v242
    %v1559 = vunpack.c.l.b16 %v243
    %v1560 = vunpack.c.h.b16 %v243
    %v1561 = vunpack.c.l.b16 %v244
    %v1562 = vunpack.c.h.b16 %v244
    %v1563 = vunpack.c.l.b16 %v245
    %v1564 = vunpack.c.h.b16 %v245
    %v1565 = vunpack.c.l.b16 %v246
    %v1566 = vunpack.c.h.b16 %v246
    %v1567 = vunpack.c.l.b16 %v247
    %v1568 = vunpack.c.h.b16 %v247
    %v1569 = vunpack.c.l.b16 %v248
    %v1570 = vunpack.c.h.b16 %v248
    %v1571 = vunpack.c.l.b16 %v249
    %v1572 = vunpack.c.h.b16 %v249
    %v1573 = vunpack.c.l.b16 %v250
    %v1574 = vunpack.c.h.b16 %v250
    %v1575 = vunpack.c.l.b16 %v251
    %v1576 = vunpack.c.h.b16 %v251
    %v1577 = vunpack.c.l.b16 %v252
    %v1578 = vunpack.c.h.b16 %v252
    %v1579 = vunpack.c.l.b16 %v253
    %v1580 = vunpack.c.h.b16 %v253
    %v1581 = vunpack.c.l.b16 %v254
    %v1582 = vunpack.c.h.b16 %v254
    %v1583 = vunpack.c.l.b16 %v255
    %v1584 = vunpack.c.h.b16 %v255
    %v1585 = vunpack.c.l.b16 %v256
    %v1586 = vunpack.c.h.b16 %v256
    %v1587 = vunpack.c.l.b16 %v257
    %v1588 = vunpack.c.h.b16 %v257
    %v1589 = vunpack.c.l.b16 %v258
    %v1590 = vunpack.c.h.b16 %v258
    %v1591 = vunpack.c.l.b16 %v259
    %v1592 = vunpack.c.h.b16 %v259
    %v1593 = vunpack.c.l.b16 %v260
    %v1594 = vunpack.c.h.b16 %v260
    %v1595 = vunpack.c.l.b16 %v261
    %v1596 = vunpack.c.h.b16 %v261
    %v1597 = vunpack.c.l.b16 %v262
    %v1598 = vunpack.c.h.b16 %v262
    %v1599 = vunpack.c.l.b16 %v263
    %v1600 = vunpack.c.h.b16 %v263
    %v1601 = vunpack.c.l.b16 %v264
    %v1602 = vunpack.c.h.b16 %v264
    %v1603 = vunpack.c.l.b16 %v265
    %v1604 = vunpack.c.h.b16 %v265
    %v1605 = vunpack.c.l.b16 %v266
    %v1606 = vunpack.c.h.b16 %v266
    %v1607 = vunpack.c.l.b16 %v267
    %v1608 = vunpack.c.h.b16 %v267
    %v1609 = vunpack.c.l.b16 %v268
    %v1610 = vunpack.c.h.b16 %v268
    %v1611 = vunpack.c.l.b16 %v269
    %v1612 = vunpack.c.h.b16 %v269
    %v1613 = vunpack.c.l.b16 %v270
    %v1614 = vunpack.c.h.b16 %v270
    %v1615 = vunpack.c.l.b16 %v271
    %v1616 = vunpack.c.h.b16 %v271
    %v1617 = vunpack.c.l.b16 %v272
    %v1618 = vunpack.c.h.b16 %v272
    %v1619 = vunpack.c.l.b16 %v273
    %v1620 = vunpack.c.h.b16 %v273
    %v1621 = vunpack.c.l.b16 %v274
    %v1622 = vunpack.c.h.b16 %v274
    %v1623 = vunpack.c.l.b16 %v275
    %v1624 = vunpack.c.h.b16 %v275
    %v1625 = vunpack.c.l.b16 %v276
    %v1626 = vunpack.c.h.b16 %v276
    %v1627 = vunpack.c.l.b16 %v277
    %v1628 = vunpack.c.h.b16 %v277
    %v1629 = vunpack.c.l.b16 %v278
    %v1630 = vunpack.c.h.b16 %v278
    %v1631 = vunpack.c.l.b16 %v279
    %v1632 = vunpack.c.h.b16 %v279
    %v1633 = vunpack.c.l.b16 %v280
    %v1634 = vunpack.c.h.b16 %v280
    %v1635 = vunpack.c.l.b16 %v281
    %v1636 = vunpack.c.h.b16 %v281
    %v1637 = vunpack.c.l.b16 %v282
    %v1638 = vunpack.c.h.b16 %v282
    %v1639 = vunpack.c.l.b16 %v283
    %v1640 = vunpack.c.h.b16 %v283
    %v1641 = vunpack.c.l.b16 %v284
    %v1642 = vunpack.c.h.b16 %v284
    %v1643 = vunpack.c.l.b16 %v285
    %v1644 = vunpack.c.h.b16 %v285
    %v1645 = vunpack.c.l.b16 %v286
    %v1646 = vunpack.c.h.b16 %v286
    %v1647 = vunpack.c.l.b16 %v287
    %v1648 = vunpack.c.h.b16 %v287
    %v1649 = vunpack.c.l.b16 %v288
    %v1650 = vunpack.c.h.b16 %v288
    %v1651 = vunpack.c.l.b16 %v289
    %v1652 = vunpack.c.h.b16 %v289
    %v1653 = vunpack.c.l.b16 %v290
    %v1654 = vunpack.c.h.b16 %v290
    %v1655 = vunpack.c.l.b16 %v291
    %v1656 = vunpack.c.h.b16 %v291
    %v1657 = vunpack.c.l.b16 %v292
    %v1658 = vunpack.c.h.b16 %v292
    %v1659 = vunpack.c.l.b16 %v293
    %v1660 = vunpack.c.h.b16 %v293
    %v1661 = vunpack.c.l.b16 %v294
    %v1662 = vunpack.c.h.b16 %v294
    %v1663 = vunpack.c.l.b16 %v295
    %v1664 = vunpack.c.h.b16 %v295
    %v1665 = vunpack.c.l.b16 %v296
    %v1666 = vunpack.c.h.b16 %v296
    %v1667 = vunpack.c.l.b16 %v297
    %v1668 = vunpack.c.h.b16 %v297
    %v1669 = vunpack.c.l.b16 %v298
    %v1670 = vunpack.c.h.b16 %v298
    %v1671 = vunpack.c.l.b16 %v299
    %v1672 = vunpack.c.h.b16 %v299
    %v1673 = vunpack.c.l.b16 %v300
    %v1674 = vunpack.c.h.b16 %v300
    %v1675 = vunpack.c.l.b16 %v301
    %v1676 = vunpack.c.h.b16 %v301
    %v1677 = vunpack.c.l.b16 %v302
    %v1678 = vunpack.c.h.b16 %v302
    %v1679 = vunpack.c.l.b16 %v303
    %v1680 = vunpack.c.h.b16 %v303
    %v1681 = vunpack.c.l.b16 %v304
    %v1682 = vunpack.c.h.b16 %v304
    %v1683 = vunpack.c.l.b16 %v305
    %v1684 = vunpack.c.h.b16 %v305
    %v1685 = vunpack.c.l.b16 %v306
    %v1686 = vunpack.c.h.b16 %v306
    %v1687 = vunpack.c.l.b16 %v307
    %v1688 = vunpack.c.h.b16 %v307
    %v1689 = vunpack.c.l.b16 %v308
    %v1690 = vunpack.c.h.b16 %v308
    %v1691 = vunpack.c.l.b16 %v309
    %v1692 = vunpack.c.h.b16 %v309
    %v1693 = vunpack.c.l.b16 %v310
    %v1694 = vunpack.c.h.b16 %v310
    %v1695 = vunpack.c.l.b16 %v311
    %v1696 = vunpack.c.h.b16 %v311
    %v1697 = vunpack.c.l.b16 %v312
    %v1698 = vunpack.c.h.b16 %v312
    %v1699 = vunpack.c.l.b16 %v313
    %v1700 = vunpack.c.h.b16 %v313
    %v1701 = vunpack.c.l.b16 %v314
    %v1702 = vunpack.c.h.b16 %v314
    %v1703 = vunpack.c.l.b16 %v315
    %v1704 = vunpack.c.h.b16 %v315
    %v1705 = vunpack.c.l.b16 %v316
    %v1706 = vunpack.c.h.b16 %v316
    %v1707 = vunpack.c.l.b16 %v317
    %v1708 = vunpack.c.h.b16 %v317
    %v1709 = vunpack.c.l.b16 %v318
    %v1710 = vunpack.c.h.b16 %v318
    %v1711 = vunpack.c.l.b16 %v319
    %v1712 = vunpack.c.h.b16 %v319
    %v1713 = vunpack.c.l.b16 %v320
    %v1714 = vunpack.c.h.b16 %v320
    %v1715 = vunpack.c.l.b16 %v321
    %v1716 = vunpack.c.h.b16 %v321
    %v1717 = vunpack.c.l.b16 %v322
    %v1718 = vunpack.c.h.b16 %v322
    %v1719 = vunpack.c.l.b16 %v323
    %v1720 = vunpack.c.h.b16 %v323
    %v1721 = vunpack.c.l.b16 %v324
    %v1722 = vunpack.c.h.b16 %v324
    %v1723 = vunpack.c.l.b16 %v325
    %v1724 = vunpack.c.h.b16 %v325
    %v1725 = vunpack.c.l.b16 %v326
    %v1726 = vunpack.c.h.b16 %v326
    %v1727 = vunpack.c.l.b16 %v327
    %v1728 = vunpack.c.h.b16 %v327
    %v1729 = vunpack.c.l.b16 %v328
    %v1730 = vunpack.c.h.b16 %v328
    %v1731 = vunpack.c.l.b16 %v329
    %v1732 = vunpack.c.h.b16 %v329
    %v1733 = vunpack.c.l.b16 %v330
    %v1734 = vunpack.c.h.b16 %v330
    %v1735 = vunpack.c.l.b16 %v331
    %v1736 = vunpack.c.h.b16 %v331
    %v1737 = vunpack.c.l.b16 %v332
    %v1738 = vunpack.c.h.b16 %v332
    %v1739 = vunpack.c.l.b16 %v333
    %v1740 = vunpack.c.h.b16 %v333
    %v1741 = vunpack.c.l.b16 %v334
    %v1742 = vunpack.c.h.b16 %v334
    %v1743 = vunpack.c.l.b16 %v335
    %v1744 = vunpack.c.h.b16 %v335
    %v1745 = vunpack.c.l.b16 %v336
    %v1746 = vunpack.c.h.b16 %v336
    %v1747 = vunpack.c.l.b16 %v337
    %v1748 = vunpack.c.h.b16 %v337
    %v1749 = vunpack.c.l.b16 %v338
    %v1750 = vunpack.c.h.b16 %v338
    %v1751 = vunpack.c.l.b16 %v339
    %v1752 = vunpack.c.h.b16 %v339
    %v1753 = vunpack.c.l.b16 %v340
    %v1754 = vunpack.c.h.b16 %v340
    %v1755 = vunpack.c.l.b16 %v341
    %v1756 = vunpack.c.h.b16 %v341
    %v1757 = vunpack.c.l.b16 %v342
    %v1758 = vunpack.c.h.b16 %v342
    %v1759 = vunpack.c.l.b16 %v343
    %v1760 = vunpack.c.h.b16 %v343
    %v1761 = vunpack.c.l.b16 %v344
    %v1762 = vunpack.c.h.b16 %v344
    %v1763 = vunpack.c.l.b16 %v345
    %v1764 = vunpack.c.h.b16 %v345
    %v1765 = vunpack.c.l.b16 %v346
    %v1766 = vunpack.c.h.b16 %v346
    %v1767 = vunpack.c.l.b16 %v347
    %v1768 = vunpack.c.h.b16 %v347
    %v1769 = vunpack.c.l.b16 %v348
    %v1770 = vunpack.c.h.b16 %v348
    %v1771 = vunpack.c.l.b16 %v349
    %v1772 = vunpack.c.h.b16 %v349
    %v1773 = vunpack.c.l.b16 %v350
    %v1774 = vunpack.c.h.b16 %v350
    %v1775 = vunpack.c.l.b16 %v351
    %v1776 = vunpack.c.h.b16 %v351
    %v1777 = vunpack.c.l.b16 %v352
    %v1778 = vunpack.c.h.b16 %v352
    %v1779 = vunpack.c.l.b16 %v353
    %v1780 = vunpack.c.h.b16 %v353
    %v1781 = vpack.c.b16 %v1533, %v1525
    %v1782 = vpack.c.b16 %v1534, %v1526
    %v1783 = vpack.c.b16 %v1535, %v1527
    %v1784 = vpack.c.b16 %v1536, %v1528
    %v1785 = vpack.c.b16 %v1537, %v1529
    %v1786 = vpack.c.b16 %v1538, %v1530
    %v1787 = vpack.c.b16 %v1539, %v1531
    %v1788 = vpack.c.b16 %v1540, %v1532
    %v1789 = vpack.c.b16 %v1549, %v1541
    %v1790 = vpack.c.b16 %v1550, %v1542
    %v1791 = vpack.c.b16 %v1551, %v1543
    %v1792 = vpack.c.b16 %v1552, %v1544
    %v1793 = vpack.c.b16 %v1553, %v1545
    %v1794 = vpack.c.b16 %v1554, %v1546
    %v1795 = vpack.c.b16 %v1555, %v1547
    %v1796 = vpack.c.b16 %v1556, %v1548
    %v1797 = vpack.c.b16 %v1565, %v1557
    %v1798 = vpack.c.b16 %v1566, %v1558
    %v1799 = vpack.c.b16 %v1567, %v1559
    %v1800 = vpack.c.b16 %v1568, %v1560
    %v1801 = vpack.c.b16 %v1569, %v1561
    %v1802 = vpack.c.b16 %v1570, %v1562
    %v1803 = vpack.c.b16 %v1571, %v1563
    %v1804 = vpack.c.b16 %v1572, %v1564
    %v1805 = vpack.c.b16 %v1581, %v1573
    %v1806 = vpack.c.b16 %v1582, %v1574
    %v1807 = vpack.c.b16 %v1583, %v1575
    %v1808 = vpack.c.b16 %v1584, %v1576
    %v1809 = vpack.c.b16 %v1585, %v1577
    %v1810 = vpack.c.b16 %v1586, %v1578
    %v1811 = vpack.c.b16 %v1587, %v1579
    %v1812 = vpack.c.b16 %v1588, %v1580
    %v1813 = vpack.c.b16 %v1597, %v1589
    %v1814 = vpack.c.b16 %v1598, %v1590
    %v1815 = vpack.c.b16 %v1599, %v1591
    %v1816 = vpack.c.b16 %v1600, %v1592
    %v1817 = vpack.c.b16 %v1601, %v1593
    %v1818 = vpack.c.b16 %v1602, %v1594
    %v1819 = vpack.c.b16 %v1603, %v1595
    %v1820 = vpack.c.b16 %v1604, %v1596
    %v1821 = vpack.c.b16 %v1613, %v1605
    %v1822 = vpack.c.b16 %v1614, %v1606
    %v1823 = vpack.c.b16 %v1615, %v1607
    %v1824 = vpack.c.b16 %v1616, %v1608
    %v1825 = vpack.c.b16 %v1617, %v1609
    %v1826 = vpack.c.b16 %v1618, %v1610
    %v1827 = vpack.c.b16 %v1619, %v1611
    %v1828 = vpack.c.b16 %v1620, %v1612
    %v1829 = vpack.c.b16 %v1629, %v1621
    %v1830 = vpack.c.b16 %v1630, %v1622
    %v1831 = vpack.c.b16 %v1631, %v1623
    %v1832 = vpack.c.b16 %v1632, %v1624
    %v1833 = vpack.c.b16 %v1633, %v1625
    %v1834 = vpack.c.b16 %v1634, %v1626
    %v1835 = vpack.c.b16 %v1635, %v1627
    %v1836 = vpack.c.b16 %v1636, %v1628
    %v1837 = vpack.c.b16 %v1645, %v1637
    %v1838 = vpack.c.b16 %v1646, %v1638
    %v1839 = vpack.c.b16 %v1647, %v1639
    %v1840 = vpack.c.b16 %v1648, %v1640
    %v1841 = vpack.c.b16 %v1649, %v1641
    %v1842 = vpack.c.b16 %v1650, %v1642
    %v1843 = vpack.c.b16 %v1651, %v1643
    %v1844 = vpack.c.b16 %v1652, %v1644
    %v1845 = vpack.c.b16 %v1661, %v1653
    %v1846 = vpack.c.b16 %v1662, %v1654
    %v1847 = vpack.c.b16 %v1663, %v1655
    %v1848 = vpack.c.b16 %v1664, %v1656
    %v1849 = vpack.c.b16 %v1665, %v1657
    %v1850 = vpack.c.b16 %v1666, %v1658
    %v1851 = vpack.c.b16 %v1667, %v1659
    %v1852 = vpack.c.b16 %v1668, %v1660
    %v1853 = vpack.c.b16 %v1677, %v1669
    %v1854 = vpack.c.b16 %v1678, %v1670
    %v1855 = vpack.c.b16 %v1679, %v1671
    %v1856 = vpack.c.b16 %v1680, %v1672
    %v1857 = vpack.c.b16 %v1681, %v1673
    %v1858 = vpack.c.b16 %v1682, %v1674
    %v1859 = vpack.c.b16 %v1683, %v1675
    %v1860 = vpack.c.b16 %v1684, %v1676
    %v1861 = vpack.c.b16 %v1693, %v1685
    %v1862 = vpack.c.b16 %v1694, %v1686
    %v1863 = vpack.c.b16 %v1695, %v1687
    %v1864 = vpack.c.b16 %v1696, %v1688
    %v1865 = vpack.c.b16 %v1697, %v1689
    %v1866 = vpack.c.b16 %v1698, %v1690
    %v1867 = vpack.c.b16 %v1699, %v1691
    %v1868 = vpack.c.b16 %v1700, %v1692
    %v1869 = vpack.c.b16 %v1709, %v1701
    %v1870 = vpack.c.b16 %v1710, %v1702
    %v1871 = vpack.c.b16 %v1711, %v1703
    %v1872 = vpack.c.b16 %v1712, %v1704
    %v1873 = vpack.c.b16 %v1713, %v1705
    %v1874 = vpack.c.b16 %v1714, %v1706
    %v1875 = vpack.c.b16 %v1715, %v1707
    %v1876 = vpack.c.b16 %v1716, %v1708
    %v1877 = vpack.c.b16 %v1725, %v1717
    %v1878 = vpack.c.b16 %v1726, %v1718
    %v1879 = vpack.c.b16 %v1727, %v1719
    %v1880 = vpack.c.b16 %v1728, %v1720
    %v1881 = vpack.c.b16 %v1729, %v1721
    %v1882 = vpack.c.b16 %v1730, %v1722
    %v1883 = vpack.c.b16 %v1731, %v1723
    %v1884 = vpack.c.b16 %v1732, %v1724
    %v1885 = vpack.c.b16 %v1741, %v1733
    %v1886 = vpack.c.b16 %v1742, %v1734
    %v1887 = vpack.c.b16 %v1743, %v1735
    %v1888 = vpack.c.b16 %v1744, %v1736
    %v1889 = vpack.c.b16 %v1745, %v1737
    %v1890 = vpack.c.b16 %v1746, %v1738
    %v1891 = vpack.c.b16 %v1747, %v1739
    %v1892 = vpack.c.b16 %v1748, %v1740
    %v1893 = vpack.c.b16 %v1757, %v1749
    %v1894 = vpack.c.b16 %v1758, %v1750
    %v1895 = vpack.c.b16 %v1759, %v1751
    %v1896 = vpack.c.b16 %v1760, %v1752
    %v1897 = vpack.c.b16 %v1761, %v1753
    %v1898 = vpack.c.b16 %v1762, %v1754
    %v1899 = vpack.c.b16 %v1763, %v1755
    %v1900 = vpack.c.b16 %v1764, %v1756
    %v1901 = vpack.c.b16 %v1773, %v1765
    %v1902 = vpack.c.b16 %v1774, %v1766
    %v1903 = vpack.c.b16 %v1775, %v1767
    %v1904 = vpack.c.b16 %v1776, %v1768
    %v1905 = vpack.c.b16 %v1777, %v1769
    %v1906 = vpack.c.b16 %v1778, %v1770
    %v1907 = vpack.c.b16 %v1779, %v1771
    %v1908 = vpack.c.b16 %v1780, %v1772
    %2037 = vmatprep.subr.bf16.mxu0 %v1782
    %2038 = vmatpush1.bf16.msra.mxu0 %v1781
    %2039 = vmatprep.subr.bf16.mxu0 %v1790
    %2040 = vmatpush1.bf16.msra.mxu0 %v1789
    %2041 = vmatprep.subr.bf16.mxu0 %v1798
    %2042 = vmatpush1.bf16.msra.mxu0 %v1797
    %2043 = vmatprep.subr.bf16.mxu0 %v1806
    %2044 = vmatpush1.bf16.msra.mxu0 %v1805
    %2045 = vmatprep.subr.bf16.mxu0 %v1814
    %2046 = vmatpush1.bf16.msra.mxu0 %v1813
    %2047 = vmatprep.subr.bf16.mxu0 %v1822
    %2048 = vmatpush1.bf16.msra.mxu0 %v1821
    %2049 = vmatprep.subr.bf16.mxu0 %v1830
    %2050 = vmatpush1.bf16.msra.mxu0 %v1829
    %2051 = vmatprep.subr.bf16.mxu0 %v1838
    %2052 = vmatpush1.bf16.msra.mxu0 %v1837
    %2053 = vmatprep.subr.bf16.mxu0 %v1846
    %2054 = vmatpush1.bf16.msra.mxu0 %v1845
    %2055 = vmatprep.subr.bf16.mxu0 %v1854
    %2056 = vmatpush1.bf16.msra.mxu0 %v1853
    %2057 = vmatprep.subr.bf16.mxu0 %v1862
    %2058 = vmatpush1.bf16.msra.mxu0 %v1861
    %2059 = vmatprep.subr.bf16.mxu0 %v1870
    %2060 = vmatpush1.bf16.msra.mxu0 %v1869
    %2061 = vmatprep.subr.bf16.mxu0 %v1878
    %2062 = vmatpush1.bf16.msra.mxu0 %v1877
    %2063 = vmatprep.subr.bf16.mxu0 %v1886
    %2064 = vmatpush1.bf16.msra.mxu0 %v1885
    %2065 = vmatprep.subr.bf16.mxu0 %v1894
    %2066 = vmatpush1.bf16.msra.mxu0 %v1893
    %2067 = vmatprep.subr.bf16.mxu0 %v1902
    %2068 = vmatpush1.bf16.msra.mxu0 %v1901
    %2069 = vmatprep.mubr.bf16.mxu0 %v225
    %2070 = vmatmul.mubr.bf16.gmra.mrb[0].mxu0 %v224
    %v2071 = vpop.f32.mrb[0].mxu0
    %v2072 = vadd.f32 %v1260, %v2071
    %v2073 = vpop.f32.mrb[0].mxu0
    %v2074 = vadd.f32 %v1262, %v2073
    %v2075 = vpop.f32.mrb[0].mxu0
    %v2076 = vadd.f32 %v1264, %v2075
    %v2077 = vpop.f32.mrb[0].mxu0
    %v2078 = vadd.f32 %v1266, %v2077
    %2079 = vdwg.mxu0
    %2080 = vmatprep.subr.bf16.mxu0 %v1784
    %2081 = vmatpush1.bf16.msra.mxu0 %v1783
    %2082 = vmatprep.subr.bf16.mxu0 %v1792
    %2083 = vmatpush1.bf16.msra.mxu0 %v1791
    %2084 = vmatprep.subr.bf16.mxu0 %v1800
    %2085 = vmatpush1.bf16.msra.mxu0 %v1799
    %2086 = vmatprep.subr.bf16.mxu0 %v1808
    %2087 = vmatpush1.bf16.msra.mxu0 %v1807
    %2088 = vmatprep.subr.bf16.mxu0 %v1816
    %2089 = vmatpush1.bf16.msra.mxu0 %v1815
    %2090 = vmatprep.subr.bf16.mxu0 %v1824
    %2091 = vmatpush1.bf16.msra.mxu0 %v1823
    %2092 = vmatprep.subr.bf16.mxu0 %v1832
    %2093 = vmatpush1.bf16.msra.mxu0 %v1831
    %2094 = vmatprep.subr.bf16.mxu0 %v1840
    %2095 = vmatpush1.bf16.msra.mxu0 %v1839
    %2096 = vmatprep.subr.bf16.mxu0 %v1848
    %2097 = vmatpush1.bf16.msra.mxu0 %v1847
    %2098 = vmatprep.subr.bf16.mxu0 %v1856
    %2099 = vmatpush1.bf16.msra.mxu0 %v1855
    %2100 = vmatprep.subr.bf16.mxu0 %v1864
    %2101 = vmatpush1.bf16.msra.mxu0 %v1863
    %2102 = vmatprep.subr.bf16.mxu0 %v1872
    %2103 = vmatpush1.bf16.msra.mxu0 %v1871
    %2104 = vmatprep.subr.bf16.mxu0 %v1880
    %2105 = vmatpush1.bf16.msra.mxu0 %v1879
    %2106 = vmatprep.subr.bf16.mxu0 %v1888
    %2107 = vmatpush1.bf16.msra.mxu0 %v1887
    %2108 = vmatprep.subr.bf16.mxu0 %v1896
    %2109 = vmatpush1.bf16.msra.mxu0 %v1895
    %2110 = vmatprep.subr.bf16.mxu0 %v1904
    %2111 = vmatpush1.bf16.msra.mxu0 %v1903
    %2112 = vmatprep.mubr.bf16.mxu0 %v225
    %2113 = vmatmul.mubr.bf16.gmra.mrb[0].mxu0 %v224
    %v2114 = vpop.f32.mrb[0].mxu0
    %v2115 = vadd.f32 %v1303, %v2114
    %v2116 = vpop.f32.mrb[0].mxu0
    %v2117 = vadd.f32 %v1305, %v2116
    %v2118 = vpop.f32.mrb[0].mxu0
    %v2119 = vadd.f32 %v1307, %v2118
    %v2120 = vpop.f32.mrb[0].mxu0
    %v2121 = vadd.f32 %v1309, %v2120
    %2122 = vdwg.mxu0
    %2123 = vmatprep.subr.bf16.mxu0 %v1786
    %2124 = vmatpush1.bf16.msra.mxu0 %v1785
    %2125 = vmatprep.subr.bf16.mxu0 %v1794
    %2126 = vmatpush1.bf16.msra.mxu0 %v1793
    %2127 = vmatprep.subr.bf16.mxu0 %v1802
    %2128 = vmatpush1.bf16.msra.mxu0 %v1801
    %2129 = vmatprep.subr.bf16.mxu0 %v1810
    %2130 = vmatpush1.bf16.msra.mxu0 %v1809
    %2131 = vmatprep.subr.bf16.mxu0 %v1818
    %2132 = vmatpush1.bf16.msra.mxu0 %v1817
    %2133 = vmatprep.subr.bf16.mxu0 %v1826
    %2134 = vmatpush1.bf16.msra.mxu0 %v1825
    %2135 = vmatprep.subr.bf16.mxu0 %v1834
    %2136 = vmatpush1.bf16.msra.mxu0 %v1833
    %2137 = vmatprep.subr.bf16.mxu0 %v1842
    %2138 = vmatpush1.bf16.msra.mxu0 %v1841
    %2139 = vmatprep.subr.bf16.mxu0 %v1850
    %2140 = vmatpush1.bf16.msra.mxu0 %v1849
    %2141 = vmatprep.subr.bf16.mxu0 %v1858
    %2142 = vmatpush1.bf16.msra.mxu0 %v1857
    %2143 = vmatprep.subr.bf16.mxu0 %v1866
    %2144 = vmatpush1.bf16.msra.mxu0 %v1865
    %2145 = vmatprep.subr.bf16.mxu0 %v1874
    %2146 = vmatpush1.bf16.msra.mxu0 %v1873
    %2147 = vmatprep.subr.bf16.mxu0 %v1882
    %2148 = vmatpush1.bf16.msra.mxu0 %v1881
    %2149 = vmatprep.subr.bf16.mxu0 %v1890
    %2150 = vmatpush1.bf16.msra.mxu0 %v1889
    %2151 = vmatprep.subr.bf16.mxu0 %v1898
    %2152 = vmatpush1.bf16.msra.mxu0 %v1897
    %2153 = vmatprep.subr.bf16.mxu0 %v1906
    %2154 = vmatpush1.bf16.msra.mxu0 %v1905
    %2155 = vmatprep.mubr.bf16.mxu0 %v225
    %2156 = vmatmul.mubr.bf16.gmra.mrb[0].mxu0 %v224
    %v2157 = vpop.f32.mrb[0].mxu0
    %v2158 = vadd.f32 %v1346, %v2157
    %v2159 = vpop.f32.mrb[0].mxu0
    %v2160 = vadd.f32 %v1348, %v2159
    %v2161 = vpop.f32.mrb[0].mxu0
    %v2162 = vadd.f32 %v1350, %v2161
    %v2163 = vpop.f32.mrb[0].mxu0
    %v2164 = vadd.f32 %v1352, %v2163
    %2165 = vdwg.mxu0
    %2166 = vmatprep.subr.bf16.mxu0 %v1788
    %2167 = vmatpush1.bf16.msra.mxu0 %v1787
    %2168 = vmatprep.subr.bf16.mxu0 %v1796
    %2169 = vmatpush1.bf16.msra.mxu0 %v1795
    %2170 = vmatprep.subr.bf16.mxu0 %v1804
    %2171 = vmatpush1.bf16.msra.mxu0 %v1803
    %2172 = vmatprep.subr.bf16.mxu0 %v1812
    %2173 = vmatpush1.bf16.msra.mxu0 %v1811
    %2174 = vmatprep.subr.bf16.mxu0 %v1820
    %2175 = vmatpush1.bf16.msra.mxu0 %v1819
    %2176 = vmatprep.subr.bf16.mxu0 %v1828
    %2177 = vmatpush1.bf16.msra.mxu0 %v1827
    %2178 = vmatprep.subr.bf16.mxu0 %v1836
    %2179 = vmatpush1.bf16.msra.mxu0 %v1835
    %2180 = vmatprep.subr.bf16.mxu0 %v1844
    %2181 = vmatpush1.bf16.msra.mxu0 %v1843
    %2182 = vmatprep.subr.bf16.mxu0 %v1852
    %2183 = vmatpush1.bf16.msra.mxu0 %v1851
    %2184 = vmatprep.subr.bf16.mxu0 %v1860
    %2185 = vmatpush1.bf16.msra.mxu0 %v1859
    %2186 = vmatprep.subr.bf16.mxu0 %v1868
    %2187 = vmatpush1.bf16.msra.mxu0 %v1867
    %2188 = vmatprep.subr.bf16.mxu0 %v1876
    %2189 = vmatpush1.bf16.msra.mxu0 %v1875
    %2190 = vmatprep.subr.bf16.mxu0 %v1884
    %2191 = vmatpush1.bf16.msra.mxu0 %v1883
    %2192 = vmatprep.subr.bf16.mxu0 %v1892
    %2193 = vmatpush1.bf16.msra.mxu0 %v1891
    %2194 = vmatprep.subr.bf16.mxu0 %v1900
    %2195 = vmatpush1.bf16.msra.mxu0 %v1899
    %2196 = vmatprep.subr.bf16.mxu0 %v1908
    %2197 = vmatpush1.bf16.msra.mxu0 %v1907
    %2198 = vmatprep.mubr.bf16.mxu0 %v225
    %2199 = vmatmul.mubr.bf16.gmra.mrb[0].mxu0 %v224
    %v2200 = vpop.f32.mrb[0].mxu0
    %v2201 = vadd.f32 %v1389, %v2200
    %v2202 = vpop.f32.mrb[0].mxu0
    %v2203 = vadd.f32 %v1391, %v2202
    %v2204 = vpop.f32.mrb[0].mxu0
    %v2205 = vadd.f32 %v1393, %v2204
    %v2206 = vpop.f32.mrb[0].mxu0
    %v2207 = vadd.f32 %v1395, %v2206
    %2208 = vdwg.mxu0
    %v2209 = vld [vmem:[#allocation5 + $0x20] sm:$0xff]
    %v2210 = vld [vmem:[#allocation5 + $0x28] sm:$0xff]
    %v2211 = vld [vmem:[#allocation5 + $0x60] sm:$0xff]
    %v2212 = vld [vmem:[#allocation5 + $0x68] sm:$0xff]
    %v2213 = vld [vmem:[#allocation5 + $0xa0] sm:$0xff]
    %v2214 = vld [vmem:[#allocation5 + $0xa8] sm:$0xff]
    %v2215 = vld [vmem:[#allocation5 + $0xe0] sm:$0xff]
    %v2216 = vld [vmem:[#allocation5 + $0xe8] sm:$0xff]
    %v2217 = vld [vmem:[#allocation7 + $0x4] sm:$0x3]
    %v2219 = vlaneseq
    %v2220 = vshrl.u32 %v2219, 7
    %v2221 = vsub.s32 0, %v2220
    %v2222 = vrot.slane %v2217, %v2221
    %v2223 = vlaneseq
    %v2224 = vshrl.u32 %v2223, 7
    %v2225 = vsub.s32 1, %v2224
    %v2226 = vrot.slane %v2217, %v2225
    %2229 = vmatprep.subr.mxu0 %v2210
    %2230 = vmatpush1.msra.mxu0 %v2209
    %2231 = vmatprep.subr.mxu0 %v2212
    %2232 = vmatpush1.msra.mxu0 %v2211
    %2233 = vmatprep.subr.mxu0 %v2214
    %2234 = vmatpush1.msra.mxu0 %v2213
    %2235 = vmatprep.subr.mxu0 %v2216
    %2236 = vmatpush1.msra.mxu0 %v2215
    %2237 = vmatprep.subr.mxu0 0.0
    %2238 = vmatpush1.msra.mxu0 0.0
    %2239 = vmatprep.subr.mxu0 0.0
    %2240 = vmatpush1.msra.mxu0 0.0
    %2241 = vmatprep.subr.mxu0 0.0
    %2242 = vmatpush1.msra.mxu0 0.0
    %2243 = vmatprep.subr.mxu0 0.0
    %2244 = vmatpush1.msra.mxu0 0.0
    %2245 = vmatprep.subr.mxu0 0.0
    %2246 = vmatpush1.msra.mxu0 0.0
    %2247 = vmatprep.subr.mxu0 0.0
    %2248 = vmatpush1.msra.mxu0 0.0
    %2249 = vmatprep.subr.mxu0 0.0
    %2250 = vmatpush1.msra.mxu0 0.0
    %2251 = vmatprep.subr.mxu0 0.0
    %2252 = vmatpush1.msra.mxu0 0.0
    %2253 = vmatprep.subr.mxu0 0.0
    %2254 = vmatpush1.msra.mxu0 0.0
    %2255 = vmatprep.subr.mxu0 0.0
    %2256 = vmatpush1.msra.mxu0 0.0
    %2257 = vmatprep.subr.mxu0 0.0
    %2258 = vmatpush1.msra.mxu0 0.0
    %2259 = vmatprep.subr.mxu0 0.0
    %2260 = vmatpush1.msra.mxu0 0.0
    %2261 = vmatprep.subr.mxu0 0.0
    %2262 = vmatpush1.msra.mxu0 0.0
    %2263 = vmatprep.subr.mxu0 0.0
    %2264 = vmatpush1.msra.mxu0 0.0
    %2265 = vmatprep.subr.mxu0 0.0
    %2266 = vmatpush1.msra.mxu0 0.0
    %2267 = vmatprep.subr.mxu0 0.0
    %2268 = vmatpush1.msra.mxu0 0.0
    %2269 = vmatprep.subr.mxu0 0.0
    %2270 = vmatpush1.msra.mxu0 0.0
    %2271 = vmatprep.subr.mxu0 0.0
    %2272 = vmatpush1.msra.mxu0 0.0
    %2273 = vmatprep.subr.mxu0 0.0
    %2274 = vmatpush1.msra.mxu0 0.0
    %2275 = vmatprep.subr.mxu0 0.0
    %2276 = vmatpush1.msra.mxu0 0.0
    %2277 = vmatprep.subr.mxu0 0.0
    %2278 = vmatpush1.msra.mxu0 0.0
    %2279 = vmatprep.subr.mxu0 0.0
    %2280 = vmatpush1.msra.mxu0 0.0
    %2281 = vmatprep.subr.mxu0 0.0
    %2282 = vmatpush1.msra.mxu0 0.0
    %2283 = vmatprep.subr.mxu0 0.0
    %2284 = vmatpush1.msra.mxu0 0.0
    %2285 = vmatprep.subr.mxu0 0.0
    %2286 = vmatpush1.msra.mxu0 0.0
    %2287 = vmatprep.subr.mxu0 0.0
    %2288 = vmatpush1.msra.mxu0 0.0
    %2289 = vmatprep.subr.mxu0 0.0
    %2290 = vmatpush1.msra.mxu0 0.0
    %2291 = vmatprep.subr.mxu0 0.0
    %2292 = vmatpush1.msra.mxu0 0.0
    %2293 = vmatprep.mubr.f32.mxu0 0.0
    %2294 = vmatmul.mubr.f32.gmra.mrb[0].mxu0 %v138
    %v2295 = vpop.f32.mrb[0].mxu0
    %v2296 = vadd.f32 %v2222, %v2295
    %v2297 = vpop.f32.mrb[0].mxu0
    %v2298 = vadd.f32 %v2226, %v2297
    %2299 = vmatprep.mubr.f32.mxu0 0.0
    %2300 = vmatmul.mubr.f32.gmra.mrb[0].mxu0 %v141
    %v2301 = vpop.f32.mrb[0].mxu0
    %v2302 = vadd.f32 %v2222, %v2301
    %v2303 = vpop.f32.mrb[0].mxu0
    %v2304 = vadd.f32 %v2226, %v2303
    %2305 = vdwg.mxu0
    %v2306 = vmax.f32 %v2296, 0.0
    %v2307 = vmax.f32 %v2298, 0.0
    %v2308 = vmax.f32 %v2302, 0.0
    %v2309 = vmax.f32 %v2304, 0.0
    %v2310 = vpack.c.bf16 %v2308, %v2306
    %v2311 = vpack.c.bf16 %v2309, %v2307
    %v2312 = vld [vmem:[#allocation8 + $0x800] sm:$0xff]
    %v2313 = vld [vmem:[#allocation8 + $0x808] sm:$0xff]
    %v2314 = vld [vmem:[#allocation8 + $0x810] sm:$0xff]
    %v2315 = vld [vmem:[#allocation8 + $0x818] sm:$0xff]
    %v2316 = vld [vmem:[#allocation8 + $0x820] sm:$0xff]
    %v2317 = vld [vmem:[#allocation8 + $0x828] sm:$0xff]
    %v2318 = vld [vmem:[#allocation8 + $0x830] sm:$0xff]
    %v2319 = vld [vmem:[#allocation8 + $0x838] sm:$0xff]
    %v2320 = vld [vmem:[#allocation8 + $0x840] sm:$0xff]
    %v2321 = vld [vmem:[#allocation8 + $0x848] sm:$0xff]
    %v2322 = vld [vmem:[#allocation8 + $0x850] sm:$0xff]
    %v2323 = vld [vmem:[#allocation8 + $0x858] sm:$0xff]
    %v2324 = vld [vmem:[#allocation8 + $0x860] sm:$0xff]
    %v2325 = vld [vmem:[#allocation8 + $0x868] sm:$0xff]
    %v2326 = vld [vmem:[#allocation8 + $0x870] sm:$0xff]
    %v2327 = vld [vmem:[#allocation8 + $0x878] sm:$0xff]
    %v2328 = vld [vmem:[#allocation8 + $0x880] sm:$0xff]
    %v2329 = vld [vmem:[#allocation8 + $0x888] sm:$0xff]
    %v2330 = vld [vmem:[#allocation8 + $0x890] sm:$0xff]
    %v2331 = vld [vmem:[#allocation8 + $0x898] sm:$0xff]
    %v2332 = vld [vmem:[#allocation8 + $0x8a0] sm:$0xff]
    %v2333 = vld [vmem:[#allocation8 + $0x8a8] sm:$0xff]
    %v2334 = vld [vmem:[#allocation8 + $0x8b0] sm:$0xff]
    %v2335 = vld [vmem:[#allocation8 + $0x8b8] sm:$0xff]
    %v2336 = vld [vmem:[#allocation8 + $0x8c0] sm:$0xff]
    %v2337 = vld [vmem:[#allocation8 + $0x8c8] sm:$0xff]
    %v2338 = vld [vmem:[#allocation8 + $0x8d0] sm:$0xff]
    %v2339 = vld [vmem:[#allocation8 + $0x8d8] sm:$0xff]
    %v2340 = vld [vmem:[#allocation8 + $0x8e0] sm:$0xff]
    %v2341 = vld [vmem:[#allocation8 + $0x8e8] sm:$0xff]
    %v2342 = vld [vmem:[#allocation8 + $0x8f0] sm:$0xff]
    %v2343 = vld [vmem:[#allocation8 + $0x8f8] sm:$0xff]
    %v2344 = vld [vmem:[#allocation8 + $0x900] sm:$0xff]
    %v2345 = vld [vmem:[#allocation8 + $0x908] sm:$0xff]
    %v2346 = vld [vmem:[#allocation8 + $0x910] sm:$0xff]
    %v2347 = vld [vmem:[#allocation8 + $0x918] sm:$0xff]
    %v2348 = vld [vmem:[#allocation8 + $0x920] sm:$0xff]
    %v2349 = vld [vmem:[#allocation8 + $0x928] sm:$0xff]
    %v2350 = vld [vmem:[#allocation8 + $0x930] sm:$0xff]
    %v2351 = vld [vmem:[#allocation8 + $0x938] sm:$0xff]
    %v2352 = vld [vmem:[#allocation8 + $0x940] sm:$0xff]
    %v2353 = vld [vmem:[#allocation8 + $0x948] sm:$0xff]
    %v2354 = vld [vmem:[#allocation8 + $0x950] sm:$0xff]
    %v2355 = vld [vmem:[#allocation8 + $0x958] sm:$0xff]
    %v2356 = vld [vmem:[#allocation8 + $0x960] sm:$0xff]
    %v2357 = vld [vmem:[#allocation8 + $0x968] sm:$0xff]
    %v2358 = vld [vmem:[#allocation8 + $0x970] sm:$0xff]
    %v2359 = vld [vmem:[#allocation8 + $0x978] sm:$0xff]
    %v2360 = vld [vmem:[#allocation8 + $0x980] sm:$0xff]
    %v2361 = vld [vmem:[#allocation8 + $0x988] sm:$0xff]
    %v2362 = vld [vmem:[#allocation8 + $0x990] sm:$0xff]
    %v2363 = vld [vmem:[#allocation8 + $0x998] sm:$0xff]
    %v2364 = vld [vmem:[#allocation8 + $0x9a0] sm:$0xff]
    %v2365 = vld [vmem:[#allocation8 + $0x9a8] sm:$0xff]
    %v2366 = vld [vmem:[#allocation8 + $0x9b0] sm:$0xff]
    %v2367 = vld [vmem:[#allocation8 + $0x9b8] sm:$0xff]
    %v2368 = vld [vmem:[#allocation8 + $0x9c0] sm:$0xff]
    %v2369 = vld [vmem:[#allocation8 + $0x9c8] sm:$0xff]
    %v2370 = vld [vmem:[#allocation8 + $0x9d0] sm:$0xff]
    %v2371 = vld [vmem:[#allocation8 + $0x9d8] sm:$0xff]
    %v2372 = vld [vmem:[#allocation8 + $0x9e0] sm:$0xff]
    %v2373 = vld [vmem:[#allocation8 + $0x9e8] sm:$0xff]
    %v2374 = vld [vmem:[#allocation8 + $0x9f0] sm:$0xff]
    %v2375 = vld [vmem:[#allocation8 + $0x9f8] sm:$0xff]
    %v2376 = vld [vmem:[#allocation8 + $0xa00] sm:$0xff]
    %v2377 = vld [vmem:[#allocation8 + $0xa08] sm:$0xff]
    %v2378 = vld [vmem:[#allocation8 + $0xa10] sm:$0xff]
    %v2379 = vld [vmem:[#allocation8 + $0xa18] sm:$0xff]
    %v2380 = vld [vmem:[#allocation8 + $0xa20] sm:$0xff]
    %v2381 = vld [vmem:[#allocation8 + $0xa28] sm:$0xff]
    %v2382 = vld [vmem:[#allocation8 + $0xa30] sm:$0xff]
    %v2383 = vld [vmem:[#allocation8 + $0xa38] sm:$0xff]
    %v2384 = vld [vmem:[#allocation8 + $0xa40] sm:$0xff]
    %v2385 = vld [vmem:[#allocation8 + $0xa48] sm:$0xff]
    %v2386 = vld [vmem:[#allocation8 + $0xa50] sm:$0xff]
    %v2387 = vld [vmem:[#allocation8 + $0xa58] sm:$0xff]
    %v2388 = vld [vmem:[#allocation8 + $0xa60] sm:$0xff]
    %v2389 = vld [vmem:[#allocation8 + $0xa68] sm:$0xff]
    %v2390 = vld [vmem:[#allocation8 + $0xa70] sm:$0xff]
    %v2391 = vld [vmem:[#allocation8 + $0xa78] sm:$0xff]
    %v2392 = vld [vmem:[#allocation8 + $0xa80] sm:$0xff]
    %v2393 = vld [vmem:[#allocation8 + $0xa88] sm:$0xff]
    %v2394 = vld [vmem:[#allocation8 + $0xa90] sm:$0xff]
    %v2395 = vld [vmem:[#allocation8 + $0xa98] sm:$0xff]
    %v2396 = vld [vmem:[#allocation8 + $0xaa0] sm:$0xff]
    %v2397 = vld [vmem:[#allocation8 + $0xaa8] sm:$0xff]
    %v2398 = vld [vmem:[#allocation8 + $0xab0] sm:$0xff]
    %v2399 = vld [vmem:[#allocation8 + $0xab8] sm:$0xff]
    %v2400 = vld [vmem:[#allocation8 + $0xac0] sm:$0xff]
    %v2401 = vld [vmem:[#allocation8 + $0xac8] sm:$0xff]
    %v2402 = vld [vmem:[#allocation8 + $0xad0] sm:$0xff]
    %v2403 = vld [vmem:[#allocation8 + $0xad8] sm:$0xff]
    %v2404 = vld [vmem:[#allocation8 + $0xae0] sm:$0xff]
    %v2405 = vld [vmem:[#allocation8 + $0xae8] sm:$0xff]
    %v2406 = vld [vmem:[#allocation8 + $0xaf0] sm:$0xff]
    %v2407 = vld [vmem:[#allocation8 + $0xaf8] sm:$0xff]
    %v2408 = vld [vmem:[#allocation8 + $0xb00] sm:$0xff]
    %v2409 = vld [vmem:[#allocation8 + $0xb08] sm:$0xff]
    %v2410 = vld [vmem:[#allocation8 + $0xb10] sm:$0xff]
    %v2411 = vld [vmem:[#allocation8 + $0xb18] sm:$0xff]
    %v2412 = vld [vmem:[#allocation8 + $0xb20] sm:$0xff]
    %v2413 = vld [vmem:[#allocation8 + $0xb28] sm:$0xff]
    %v2414 = vld [vmem:[#allocation8 + $0xb30] sm:$0xff]
    %v2415 = vld [vmem:[#allocation8 + $0xb38] sm:$0xff]
    %v2416 = vld [vmem:[#allocation8 + $0xb40] sm:$0xff]
    %v2417 = vld [vmem:[#allocation8 + $0xb48] sm:$0xff]
    %v2418 = vld [vmem:[#allocation8 + $0xb50] sm:$0xff]
    %v2419 = vld [vmem:[#allocation8 + $0xb58] sm:$0xff]
    %v2420 = vld [vmem:[#allocation8 + $0xb60] sm:$0xff]
    %v2421 = vld [vmem:[#allocation8 + $0xb68] sm:$0xff]
    %v2422 = vld [vmem:[#allocation8 + $0xb70] sm:$0xff]
    %v2423 = vld [vmem:[#allocation8 + $0xb78] sm:$0xff]
    %v2424 = vld [vmem:[#allocation8 + $0xb80] sm:$0xff]
    %v2425 = vld [vmem:[#allocation8 + $0xb88] sm:$0xff]
    %v2426 = vld [vmem:[#allocation8 + $0xb90] sm:$0xff]
    %v2427 = vld [vmem:[#allocation8 + $0xb98] sm:$0xff]
    %v2428 = vld [vmem:[#allocation8 + $0xba0] sm:$0xff]
    %v2429 = vld [vmem:[#allocation8 + $0xba8] sm:$0xff]
    %v2430 = vld [vmem:[#allocation8 + $0xbb0] sm:$0xff]
    %v2431 = vld [vmem:[#allocation8 + $0xbb8] sm:$0xff]
    %v2432 = vld [vmem:[#allocation8 + $0xbc0] sm:$0xff]
    %v2433 = vld [vmem:[#allocation8 + $0xbc8] sm:$0xff]
    %v2434 = vld [vmem:[#allocation8 + $0xbd0] sm:$0xff]
    %v2435 = vld [vmem:[#allocation8 + $0xbd8] sm:$0xff]
    %v2436 = vld [vmem:[#allocation8 + $0xbe0] sm:$0xff]
    %v2437 = vld [vmem:[#allocation8 + $0xbe8] sm:$0xff]
    %v2438 = vld [vmem:[#allocation8 + $0xbf0] sm:$0xff]
    %v2439 = vld [vmem:[#allocation8 + $0xbf8] sm:$0xff]
    %v2568 = vunpack.c.l.b16 %v2312
    %v2569 = vunpack.c.h.b16 %v2312
    %v2570 = vunpack.c.l.b16 %v2313
    %v2571 = vunpack.c.h.b16 %v2313
    %v2572 = vunpack.c.l.b16 %v2314
    %v2573 = vunpack.c.h.b16 %v2314
    %v2574 = vunpack.c.l.b16 %v2315
    %v2575 = vunpack.c.h.b16 %v2315
    %v2576 = vunpack.c.l.b16 %v2316
    %v2577 = vunpack.c.h.b16 %v2316
    %v2578 = vunpack.c.l.b16 %v2317
    %v2579 = vunpack.c.h.b16 %v2317
    %v2580 = vunpack.c.l.b16 %v2318
    %v2581 = vunpack.c.h.b16 %v2318
    %v2582 = vunpack.c.l.b16 %v2319
    %v2583 = vunpack.c.h.b16 %v2319
    %v2584 = vunpack.c.l.b16 %v2320
    %v2585 = vunpack.c.h.b16 %v2320
    %v2586 = vunpack.c.l.b16 %v2321
    %v2587 = vunpack.c.h.b16 %v2321
    %v2588 = vunpack.c.l.b16 %v2322
    %v2589 = vunpack.c.h.b16 %v2322
    %v2590 = vunpack.c.l.b16 %v2323
    %v2591 = vunpack.c.h.b16 %v2323
    %v2592 = vunpack.c.l.b16 %v2324
    %v2593 = vunpack.c.h.b16 %v2324
    %v2594 = vunpack.c.l.b16 %v2325
    %v2595 = vunpack.c.h.b16 %v2325
    %v2596 = vunpack.c.l.b16 %v2326
    %v2597 = vunpack.c.h.b16 %v2326
    %v2598 = vunpack.c.l.b16 %v2327
    %v2599 = vunpack.c.h.b16 %v2327
    %v2600 = vunpack.c.l.b16 %v2328
    %v2601 = vunpack.c.h.b16 %v2328
    %v2602 = vunpack.c.l.b16 %v2329
    %v2603 = vunpack.c.h.b16 %v2329
    %v2604 = vunpack.c.l.b16 %v2330
    %v2605 = vunpack.c.h.b16 %v2330
    %v2606 = vunpack.c.l.b16 %v2331
    %v2607 = vunpack.c.h.b16 %v2331
    %v2608 = vunpack.c.l.b16 %v2332
    %v2609 = vunpack.c.h.b16 %v2332
    %v2610 = vunpack.c.l.b16 %v2333
    %v2611 = vunpack.c.h.b16 %v2333
    %v2612 = vunpack.c.l.b16 %v2334
    %v2613 = vunpack.c.h.b16 %v2334
    %v2614 = vunpack.c.l.b16 %v2335
    %v2615 = vunpack.c.h.b16 %v2335
    %v2616 = vunpack.c.l.b16 %v2336
    %v2617 = vunpack.c.h.b16 %v2336
    %v2618 = vunpack.c.l.b16 %v2337
    %v2619 = vunpack.c.h.b16 %v2337
    %v2620 = vunpack.c.l.b16 %v2338
    %v2621 = vunpack.c.h.b16 %v2338
    %v2622 = vunpack.c.l.b16 %v2339
    %v2623 = vunpack.c.h.b16 %v2339
    %v2624 = vunpack.c.l.b16 %v2340
    %v2625 = vunpack.c.h.b16 %v2340
    %v2626 = vunpack.c.l.b16 %v2341
    %v2627 = vunpack.c.h.b16 %v2341
    %v2628 = vunpack.c.l.b16 %v2342
    %v2629 = vunpack.c.h.b16 %v2342
    %v2630 = vunpack.c.l.b16 %v2343
    %v2631 = vunpack.c.h.b16 %v2343
    %v2632 = vunpack.c.l.b16 %v2344
    %v2633 = vunpack.c.h.b16 %v2344
    %v2634 = vunpack.c.l.b16 %v2345
    %v2635 = vunpack.c.h.b16 %v2345
    %v2636 = vunpack.c.l.b16 %v2346
    %v2637 = vunpack.c.h.b16 %v2346
    %v2638 = vunpack.c.l.b16 %v2347
    %v2639 = vunpack.c.h.b16 %v2347
    %v2640 = vunpack.c.l.b16 %v2348
    %v2641 = vunpack.c.h.b16 %v2348
    %v2642 = vunpack.c.l.b16 %v2349
    %v2643 = vunpack.c.h.b16 %v2349
    %v2644 = vunpack.c.l.b16 %v2350
    %v2645 = vunpack.c.h.b16 %v2350
    %v2646 = vunpack.c.l.b16 %v2351
    %v2647 = vunpack.c.h.b16 %v2351
    %v2648 = vunpack.c.l.b16 %v2352
    %v2649 = vunpack.c.h.b16 %v2352
    %v2650 = vunpack.c.l.b16 %v2353
    %v2651 = vunpack.c.h.b16 %v2353
    %v2652 = vunpack.c.l.b16 %v2354
    %v2653 = vunpack.c.h.b16 %v2354
    %v2654 = vunpack.c.l.b16 %v2355
    %v2655 = vunpack.c.h.b16 %v2355
    %v2656 = vunpack.c.l.b16 %v2356
    %v2657 = vunpack.c.h.b16 %v2356
    %v2658 = vunpack.c.l.b16 %v2357
    %v2659 = vunpack.c.h.b16 %v2357
    %v2660 = vunpack.c.l.b16 %v2358
    %v2661 = vunpack.c.h.b16 %v2358
    %v2662 = vunpack.c.l.b16 %v2359
    %v2663 = vunpack.c.h.b16 %v2359
    %v2664 = vunpack.c.l.b16 %v2360
    %v2665 = vunpack.c.h.b16 %v2360
    %v2666 = vunpack.c.l.b16 %v2361
    %v2667 = vunpack.c.h.b16 %v2361
    %v2668 = vunpack.c.l.b16 %v2362
    %v2669 = vunpack.c.h.b16 %v2362
    %v2670 = vunpack.c.l.b16 %v2363
    %v2671 = vunpack.c.h.b16 %v2363
    %v2672 = vunpack.c.l.b16 %v2364
    %v2673 = vunpack.c.h.b16 %v2364
    %v2674 = vunpack.c.l.b16 %v2365
    %v2675 = vunpack.c.h.b16 %v2365
    %v2676 = vunpack.c.l.b16 %v2366
    %v2677 = vunpack.c.h.b16 %v2366
    %v2678 = vunpack.c.l.b16 %v2367
    %v2679 = vunpack.c.h.b16 %v2367
    %v2680 = vunpack.c.l.b16 %v2368
    %v2681 = vunpack.c.h.b16 %v2368
    %v2682 = vunpack.c.l.b16 %v2369
    %v2683 = vunpack.c.h.b16 %v2369
    %v2684 = vunpack.c.l.b16 %v2370
    %v2685 = vunpack.c.h.b16 %v2370
    %v2686 = vunpack.c.l.b16 %v2371
    %v2687 = vunpack.c.h.b16 %v2371
    %v2688 = vunpack.c.l.b16 %v2372
    %v2689 = vunpack.c.h.b16 %v2372
    %v2690 = vunpack.c.l.b16 %v2373
    %v2691 = vunpack.c.h.b16 %v2373
    %v2692 = vunpack.c.l.b16 %v2374
    %v2693 = vunpack.c.h.b16 %v2374
    %v2694 = vunpack.c.l.b16 %v2375
    %v2695 = vunpack.c.h.b16 %v2375
    %v2696 = vunpack.c.l.b16 %v2376
    %v2697 = vunpack.c.h.b16 %v2376
    %v2698 = vunpack.c.l.b16 %v2377
    %v2699 = vunpack.c.h.b16 %v2377
    %v2700 = vunpack.c.l.b16 %v2378
    %v2701 = vunpack.c.h.b16 %v2378
    %v2702 = vunpack.c.l.b16 %v2379
    %v2703 = vunpack.c.h.b16 %v2379
    %v2704 = vunpack.c.l.b16 %v2380
    %v2705 = vunpack.c.h.b16 %v2380
    %v2706 = vunpack.c.l.b16 %v2381
    %v2707 = vunpack.c.h.b16 %v2381
    %v2708 = vunpack.c.l.b16 %v2382
    %v2709 = vunpack.c.h.b16 %v2382
    %v2710 = vunpack.c.l.b16 %v2383
    %v2711 = vunpack.c.h.b16 %v2383
    %v2712 = vunpack.c.l.b16 %v2384
    %v2713 = vunpack.c.h.b16 %v2384
    %v2714 = vunpack.c.l.b16 %v2385
    %v2715 = vunpack.c.h.b16 %v2385
    %v2716 = vunpack.c.l.b16 %v2386
    %v2717 = vunpack.c.h.b16 %v2386
    %v2718 = vunpack.c.l.b16 %v2387
    %v2719 = vunpack.c.h.b16 %v2387
    %v2720 = vunpack.c.l.b16 %v2388
    %v2721 = vunpack.c.h.b16 %v2388
    %v2722 = vunpack.c.l.b16 %v2389
    %v2723 = vunpack.c.h.b16 %v2389
    %v2724 = vunpack.c.l.b16 %v2390
    %v2725 = vunpack.c.h.b16 %v2390
    %v2726 = vunpack.c.l.b16 %v2391
    %v2727 = vunpack.c.h.b16 %v2391
    %v2728 = vunpack.c.l.b16 %v2392
    %v2729 = vunpack.c.h.b16 %v2392
    %v2730 = vunpack.c.l.b16 %v2393
    %v2731 = vunpack.c.h.b16 %v2393
    %v2732 = vunpack.c.l.b16 %v2394
    %v2733 = vunpack.c.h.b16 %v2394
    %v2734 = vunpack.c.l.b16 %v2395
    %v2735 = vunpack.c.h.b16 %v2395
    %v2736 = vunpack.c.l.b16 %v2396
    %v2737 = vunpack.c.h.b16 %v2396
    %v2738 = vunpack.c.l.b16 %v2397
    %v2739 = vunpack.c.h.b16 %v2397
    %v2740 = vunpack.c.l.b16 %v2398
    %v2741 = vunpack.c.h.b16 %v2398
    %v2742 = vunpack.c.l.b16 %v2399
    %v2743 = vunpack.c.h.b16 %v2399
    %v2744 = vunpack.c.l.b16 %v2400
    %v2745 = vunpack.c.h.b16 %v2400
    %v2746 = vunpack.c.l.b16 %v2401
    %v2747 = vunpack.c.h.b16 %v2401
    %v2748 = vunpack.c.l.b16 %v2402
    %v2749 = vunpack.c.h.b16 %v2402
    %v2750 = vunpack.c.l.b16 %v2403
    %v2751 = vunpack.c.h.b16 %v2403
    %v2752 = vunpack.c.l.b16 %v2404
    %v2753 = vunpack.c.h.b16 %v2404
    %v2754 = vunpack.c.l.b16 %v2405
    %v2755 = vunpack.c.h.b16 %v2405
    %v2756 = vunpack.c.l.b16 %v2406
    %v2757 = vunpack.c.h.b16 %v2406
    %v2758 = vunpack.c.l.b16 %v2407
    %v2759 = vunpack.c.h.b16 %v2407
    %v2760 = vunpack.c.l.b16 %v2408
    %v2761 = vunpack.c.h.b16 %v2408
    %v2762 = vunpack.c.l.b16 %v2409
    %v2763 = vunpack.c.h.b16 %v2409
    %v2764 = vunpack.c.l.b16 %v2410
    %v2765 = vunpack.c.h.b16 %v2410
    %v2766 = vunpack.c.l.b16 %v2411
    %v2767 = vunpack.c.h.b16 %v2411
    %v2768 = vunpack.c.l.b16 %v2412
    %v2769 = vunpack.c.h.b16 %v2412
    %v2770 = vunpack.c.l.b16 %v2413
    %v2771 = vunpack.c.h.b16 %v2413
    %v2772 = vunpack.c.l.b16 %v2414
    %v2773 = vunpack.c.h.b16 %v2414
    %v2774 = vunpack.c.l.b16 %v2415
    %v2775 = vunpack.c.h.b16 %v2415
    %v2776 = vunpack.c.l.b16 %v2416
    %v2777 = vunpack.c.h.b16 %v2416
    %v2778 = vunpack.c.l.b16 %v2417
    %v2779 = vunpack.c.h.b16 %v2417
    %v2780 = vunpack.c.l.b16 %v2418
    %v2781 = vunpack.c.h.b16 %v2418
    %v2782 = vunpack.c.l.b16 %v2419
    %v2783 = vunpack.c.h.b16 %v2419
    %v2784 = vunpack.c.l.b16 %v2420
    %v2785 = vunpack.c.h.b16 %v2420
    %v2786 = vunpack.c.l.b16 %v2421
    %v2787 = vunpack.c.h.b16 %v2421
    %v2788 = vunpack.c.l.b16 %v2422
    %v2789 = vunpack.c.h.b16 %v2422
    %v2790 = vunpack.c.l.b16 %v2423
    %v2791 = vunpack.c.h.b16 %v2423
    %v2792 = vunpack.c.l.b16 %v2424
    %v2793 = vunpack.c.h.b16 %v2424
    %v2794 = vunpack.c.l.b16 %v2425
    %v2795 = vunpack.c.h.b16 %v2425
    %v2796 = vunpack.c.l.b16 %v2426
    %v2797 = vunpack.c.h.b16 %v2426
    %v2798 = vunpack.c.l.b16 %v2427
    %v2799 = vunpack.c.h.b16 %v2427
    %v2800 = vunpack.c.l.b16 %v2428
    %v2801 = vunpack.c.h.b16 %v2428
    %v2802 = vunpack.c.l.b16 %v2429
    %v2803 = vunpack.c.h.b16 %v2429
    %v2804 = vunpack.c.l.b16 %v2430
    %v2805 = vunpack.c.h.b16 %v2430
    %v2806 = vunpack.c.l.b16 %v2431
    %v2807 = vunpack.c.h.b16 %v2431
    %v2808 = vunpack.c.l.b16 %v2432
    %v2809 = vunpack.c.h.b16 %v2432
    %v2810 = vunpack.c.l.b16 %v2433
    %v2811 = vunpack.c.h.b16 %v2433
    %v2812 = vunpack.c.l.b16 %v2434
    %v2813 = vunpack.c.h.b16 %v2434
    %v2814 = vunpack.c.l.b16 %v2435
    %v2815 = vunpack.c.h.b16 %v2435
    %v2816 = vunpack.c.l.b16 %v2436
    %v2817 = vunpack.c.h.b16 %v2436
    %v2818 = vunpack.c.l.b16 %v2437
    %v2819 = vunpack.c.h.b16 %v2437
    %v2820 = vunpack.c.l.b16 %v2438
    %v2821 = vunpack.c.h.b16 %v2438
    %v2822 = vunpack.c.l.b16 %v2439
    %v2823 = vunpack.c.h.b16 %v2439
    %v2824 = vpack.c.b16 %v2576, %v2568
    %v2825 = vpack.c.b16 %v2577, %v2569
    %v2826 = vpack.c.b16 %v2578, %v2570
    %v2827 = vpack.c.b16 %v2579, %v2571
    %v2828 = vpack.c.b16 %v2580, %v2572
    %v2829 = vpack.c.b16 %v2581, %v2573
    %v2830 = vpack.c.b16 %v2582, %v2574
    %v2831 = vpack.c.b16 %v2583, %v2575
    %v2832 = vpack.c.b16 %v2592, %v2584
    %v2833 = vpack.c.b16 %v2593, %v2585
    %v2834 = vpack.c.b16 %v2594, %v2586
    %v2835 = vpack.c.b16 %v2595, %v2587
    %v2836 = vpack.c.b16 %v2596, %v2588
    %v2837 = vpack.c.b16 %v2597, %v2589
    %v2838 = vpack.c.b16 %v2598, %v2590
    %v2839 = vpack.c.b16 %v2599, %v2591
    %v2840 = vpack.c.b16 %v2608, %v2600
    %v2841 = vpack.c.b16 %v2609, %v2601
    %v2842 = vpack.c.b16 %v2610, %v2602
    %v2843 = vpack.c.b16 %v2611, %v2603
    %v2844 = vpack.c.b16 %v2612, %v2604
    %v2845 = vpack.c.b16 %v2613, %v2605
    %v2846 = vpack.c.b16 %v2614, %v2606
    %v2847 = vpack.c.b16 %v2615, %v2607
    %v2848 = vpack.c.b16 %v2624, %v2616
    %v2849 = vpack.c.b16 %v2625, %v2617
    %v2850 = vpack.c.b16 %v2626, %v2618
    %v2851 = vpack.c.b16 %v2627, %v2619
    %v2852 = vpack.c.b16 %v2628, %v2620
    %v2853 = vpack.c.b16 %v2629, %v2621
    %v2854 = vpack.c.b16 %v2630, %v2622
    %v2855 = vpack.c.b16 %v2631, %v2623
    %v2856 = vpack.c.b16 %v2640, %v2632
    %v2857 = vpack.c.b16 %v2641, %v2633
    %v2858 = vpack.c.b16 %v2642, %v2634
    %v2859 = vpack.c.b16 %v2643, %v2635
    %v2860 = vpack.c.b16 %v2644, %v2636
    %v2861 = vpack.c.b16 %v2645, %v2637
    %v2862 = vpack.c.b16 %v2646, %v2638
    %v2863 = vpack.c.b16 %v2647, %v2639
    %v2864 = vpack.c.b16 %v2656, %v2648
    %v2865 = vpack.c.b16 %v2657, %v2649
    %v2866 = vpack.c.b16 %v2658, %v2650
    %v2867 = vpack.c.b16 %v2659, %v2651
    %v2868 = vpack.c.b16 %v2660, %v2652
    %v2869 = vpack.c.b16 %v2661, %v2653
    %v2870 = vpack.c.b16 %v2662, %v2654
    %v2871 = vpack.c.b16 %v2663, %v2655
    %v2872 = vpack.c.b16 %v2672, %v2664
    %v2873 = vpack.c.b16 %v2673, %v2665
    %v2874 = vpack.c.b16 %v2674, %v2666
    %v2875 = vpack.c.b16 %v2675, %v2667
    %v2876 = vpack.c.b16 %v2676, %v2668
    %v2877 = vpack.c.b16 %v2677, %v2669
    %v2878 = vpack.c.b16 %v2678, %v2670
    %v2879 = vpack.c.b16 %v2679, %v2671
    %v2880 = vpack.c.b16 %v2688, %v2680
    %v2881 = vpack.c.b16 %v2689, %v2681
    %v2882 = vpack.c.b16 %v2690, %v2682
    %v2883 = vpack.c.b16 %v2691, %v2683
    %v2884 = vpack.c.b16 %v2692, %v2684
    %v2885 = vpack.c.b16 %v2693, %v2685
    %v2886 = vpack.c.b16 %v2694, %v2686
    %v2887 = vpack.c.b16 %v2695, %v2687
    %v2888 = vpack.c.b16 %v2704, %v2696
    %v2889 = vpack.c.b16 %v2705, %v2697
    %v2890 = vpack.c.b16 %v2706, %v2698
    %v2891 = vpack.c.b16 %v2707, %v2699
    %v2892 = vpack.c.b16 %v2708, %v2700
    %v2893 = vpack.c.b16 %v2709, %v2701
    %v2894 = vpack.c.b16 %v2710, %v2702
    %v2895 = vpack.c.b16 %v2711, %v2703
    %v2896 = vpack.c.b16 %v2720, %v2712
    %v2897 = vpack.c.b16 %v2721, %v2713
    %v2898 = vpack.c.b16 %v2722, %v2714
    %v2899 = vpack.c.b16 %v2723, %v2715
    %v2900 = vpack.c.b16 %v2724, %v2716
    %v2901 = vpack.c.b16 %v2725, %v2717
    %v2902 = vpack.c.b16 %v2726, %v2718
    %v2903 = vpack.c.b16 %v2727, %v2719
    %v2904 = vpack.c.b16 %v2736, %v2728
    %v2905 = vpack.c.b16 %v2737, %v2729
    %v2906 = vpack.c.b16 %v2738, %v2730
    %v2907 = vpack.c.b16 %v2739, %v2731
    %v2908 = vpack.c.b16 %v2740, %v2732
    %v2909 = vpack.c.b16 %v2741, %v2733
    %v2910 = vpack.c.b16 %v2742, %v2734
    %v2911 = vpack.c.b16 %v2743, %v2735
    %v2912 = vpack.c.b16 %v2752, %v2744
    %v2913 = vpack.c.b16 %v2753, %v2745
    %v2914 = vpack.c.b16 %v2754, %v2746
    %v2915 = vpack.c.b16 %v2755, %v2747
    %v2916 = vpack.c.b16 %v2756, %v2748
    %v2917 = vpack.c.b16 %v2757, %v2749
    %v2918 = vpack.c.b16 %v2758, %v2750
    %v2919 = vpack.c.b16 %v2759, %v2751
    %v2920 = vpack.c.b16 %v2768, %v2760
    %v2921 = vpack.c.b16 %v2769, %v2761
    %v2922 = vpack.c.b16 %v2770, %v2762
    %v2923 = vpack.c.b16 %v2771, %v2763
    %v2924 = vpack.c.b16 %v2772, %v2764
    %v2925 = vpack.c.b16 %v2773, %v2765
    %v2926 = vpack.c.b16 %v2774, %v2766
    %v2927 = vpack.c.b16 %v2775, %v2767
    %v2928 = vpack.c.b16 %v2784, %v2776
    %v2929 = vpack.c.b16 %v2785, %v2777
    %v2930 = vpack.c.b16 %v2786, %v2778
    %v2931 = vpack.c.b16 %v2787, %v2779
    %v2932 = vpack.c.b16 %v2788, %v2780
    %v2933 = vpack.c.b16 %v2789, %v2781
    %v2934 = vpack.c.b16 %v2790, %v2782
    %v2935 = vpack.c.b16 %v2791, %v2783
    %v2936 = vpack.c.b16 %v2800, %v2792
    %v2937 = vpack.c.b16 %v2801, %v2793
    %v2938 = vpack.c.b16 %v2802, %v2794
    %v2939 = vpack.c.b16 %v2803, %v2795
    %v2940 = vpack.c.b16 %v2804, %v2796
    %v2941 = vpack.c.b16 %v2805, %v2797
    %v2942 = vpack.c.b16 %v2806, %v2798
    %v2943 = vpack.c.b16 %v2807, %v2799
    %v2944 = vpack.c.b16 %v2816, %v2808
    %v2945 = vpack.c.b16 %v2817, %v2809
    %v2946 = vpack.c.b16 %v2818, %v2810
    %v2947 = vpack.c.b16 %v2819, %v2811
    %v2948 = vpack.c.b16 %v2820, %v2812
    %v2949 = vpack.c.b16 %v2821, %v2813
    %v2950 = vpack.c.b16 %v2822, %v2814
    %v2951 = vpack.c.b16 %v2823, %v2815
    %3080 = vmatprep.subr.bf16.mxu0 %v2825
    %3081 = vmatpush1.bf16.msra.mxu0 %v2824
    %3082 = vmatprep.subr.bf16.mxu0 %v2833
    %3083 = vmatpush1.bf16.msra.mxu0 %v2832
    %3084 = vmatprep.subr.bf16.mxu0 %v2841
    %3085 = vmatpush1.bf16.msra.mxu0 %v2840
    %3086 = vmatprep.subr.bf16.mxu0 %v2849
    %3087 = vmatpush1.bf16.msra.mxu0 %v2848
    %3088 = vmatprep.subr.bf16.mxu0 %v2857
    %3089 = vmatpush1.bf16.msra.mxu0 %v2856
    %3090 = vmatprep.subr.bf16.mxu0 %v2865
    %3091 = vmatpush1.bf16.msra.mxu0 %v2864
    %3092 = vmatprep.subr.bf16.mxu0 %v2873
    %3093 = vmatpush1.bf16.msra.mxu0 %v2872
    %3094 = vmatprep.subr.bf16.mxu0 %v2881
    %3095 = vmatpush1.bf16.msra.mxu0 %v2880
    %3096 = vmatprep.subr.bf16.mxu0 %v2889
    %3097 = vmatpush1.bf16.msra.mxu0 %v2888
    %3098 = vmatprep.subr.bf16.mxu0 %v2897
    %3099 = vmatpush1.bf16.msra.mxu0 %v2896
    %3100 = vmatprep.subr.bf16.mxu0 %v2905
    %3101 = vmatpush1.bf16.msra.mxu0 %v2904
    %3102 = vmatprep.subr.bf16.mxu0 %v2913
    %3103 = vmatpush1.bf16.msra.mxu0 %v2912
    %3104 = vmatprep.subr.bf16.mxu0 %v2921
    %3105 = vmatpush1.bf16.msra.mxu0 %v2920
    %3106 = vmatprep.subr.bf16.mxu0 %v2929
    %3107 = vmatpush1.bf16.msra.mxu0 %v2928
    %3108 = vmatprep.subr.bf16.mxu0 %v2937
    %3109 = vmatpush1.bf16.msra.mxu0 %v2936
    %3110 = vmatprep.subr.bf16.mxu0 %v2945
    %3111 = vmatpush1.bf16.msra.mxu0 %v2944
    %3112 = vmatprep.mubr.bf16.mxu0 %v2311
    %3113 = vmatmul.mubr.bf16.gmra.mrb[0].mxu0 %v2310
    %v3114 = vpop.f32.mrb[0].mxu0
    %v3115 = vadd.f32 0.0, %v3114
    %v3116 = vpop.f32.mrb[0].mxu0
    %v3117 = vadd.f32 0.0, %v3116
    %v3118 = vpop.f32.mrb[0].mxu0
    %v3119 = vadd.f32 0.0, %v3118
    %v3120 = vpop.f32.mrb[0].mxu0
    %v3121 = vadd.f32 0.0, %v3120
    %3122 = vdwg.mxu0
    %3123 = vmatprep.subr.bf16.mxu0 %v2827
    %3124 = vmatpush1.bf16.msra.mxu0 %v2826
    %3125 = vmatprep.subr.bf16.mxu0 %v2835
    %3126 = vmatpush1.bf16.msra.mxu0 %v2834
    %3127 = vmatprep.subr.bf16.mxu0 %v2843
    %3128 = vmatpush1.bf16.msra.mxu0 %v2842
    %3129 = vmatprep.subr.bf16.mxu0 %v2851
    %3130 = vmatpush1.bf16.msra.mxu0 %v2850
    %3131 = vmatprep.subr.bf16.mxu0 %v2859
    %3132 = vmatpush1.bf16.msra.mxu0 %v2858
    %3133 = vmatprep.subr.bf16.mxu0 %v2867
    %3134 = vmatpush1.bf16.msra.mxu0 %v2866
    %3135 = vmatprep.subr.bf16.mxu0 %v2875
    %3136 = vmatpush1.bf16.msra.mxu0 %v2874
    %3137 = vmatprep.subr.bf16.mxu0 %v2883
    %3138 = vmatpush1.bf16.msra.mxu0 %v2882
    %3139 = vmatprep.subr.bf16.mxu0 %v2891
    %3140 = vmatpush1.bf16.msra.mxu0 %v2890
    %3141 = vmatprep.subr.bf16.mxu0 %v2899
    %3142 = vmatpush1.bf16.msra.mxu0 %v2898
    %3143 = vmatprep.subr.bf16.mxu0 %v2907
    %3144 = vmatpush1.bf16.msra.mxu0 %v2906
    %3145 = vmatprep.subr.bf16.mxu0 %v2915
    %3146 = vmatpush1.bf16.msra.mxu0 %v2914
    %3147 = vmatprep.subr.bf16.mxu0 %v2923
    %3148 = vmatpush1.bf16.msra.mxu0 %v2922
    %3149 = vmatprep.subr.bf16.mxu0 %v2931
    %3150 = vmatpush1.bf16.msra.mxu0 %v2930
    %3151 = vmatprep.subr.bf16.mxu0 %v2939
    %3152 = vmatpush1.bf16.msra.mxu0 %v2938
    %3153 = vmatprep.subr.bf16.mxu0 %v2947
    %3154 = vmatpush1.bf16.msra.mxu0 %v2946
    %3155 = vmatprep.mubr.bf16.mxu0 %v2311
    %3156 = vmatmul.mubr.bf16.gmra.mrb[0].mxu0 %v2310
    %v3157 = vpop.f32.mrb[0].mxu0
    %v3158 = vadd.f32 0.0, %v3157
    %v3159 = vpop.f32.mrb[0].mxu0
    %v3160 = vadd.f32 0.0, %v3159
    %v3161 = vpop.f32.mrb[0].mxu0
    %v3162 = vadd.f32 0.0, %v3161
    %v3163 = vpop.f32.mrb[0].mxu0
    %v3164 = vadd.f32 0.0, %v3163
    %3165 = vdwg.mxu0
    %3166 = vmatprep.subr.bf16.mxu0 %v2829
    %3167 = vmatpush1.bf16.msra.mxu0 %v2828
    %3168 = vmatprep.subr.bf16.mxu0 %v2837
    %3169 = vmatpush1.bf16.msra.mxu0 %v2836
    %3170 = vmatprep.subr.bf16.mxu0 %v2845
    %3171 = vmatpush1.bf16.msra.mxu0 %v2844
    %3172 = vmatprep.subr.bf16.mxu0 %v2853
    %3173 = vmatpush1.bf16.msra.mxu0 %v2852
    %3174 = vmatprep.subr.bf16.mxu0 %v2861
    %3175 = vmatpush1.bf16.msra.mxu0 %v2860
    %3176 = vmatprep.subr.bf16.mxu0 %v2869
    %3177 = vmatpush1.bf16.msra.mxu0 %v2868
    %3178 = vmatprep.subr.bf16.mxu0 %v2877
    %3179 = vmatpush1.bf16.msra.mxu0 %v2876
    %3180 = vmatprep.subr.bf16.mxu0 %v2885
    %3181 = vmatpush1.bf16.msra.mxu0 %v2884
    %3182 = vmatprep.subr.bf16.mxu0 %v2893
    %3183 = vmatpush1.bf16.msra.mxu0 %v2892
    %3184 = vmatprep.subr.bf16.mxu0 %v2901
    %3185 = vmatpush1.bf16.msra.mxu0 %v2900
    %3186 = vmatprep.subr.bf16.mxu0 %v2909
    %3187 = vmatpush1.bf16.msra.mxu0 %v2908
    %3188 = vmatprep.subr.bf16.mxu0 %v2917
    %3189 = vmatpush1.bf16.msra.mxu0 %v2916
    %3190 = vmatprep.subr.bf16.mxu0 %v2925
    %3191 = vmatpush1.bf16.msra.mxu0 %v2924
    %3192 = vmatprep.subr.bf16.mxu0 %v2933
    %3193 = vmatpush1.bf16.msra.mxu0 %v2932
    %3194 = vmatprep.subr.bf16.mxu0 %v2941
    %3195 = vmatpush1.bf16.msra.mxu0 %v2940
    %3196 = vmatprep.subr.bf16.mxu0 %v2949
    %3197 = vmatpush1.bf16.msra.mxu0 %v2948
    %3198 = vmatprep.mubr.bf16.mxu0 %v2311
    %3199 = vmatmul.mubr.bf16.gmra.mrb[0].mxu0 %v2310
    %v3200 = vpop.f32.mrb[0].mxu0
    %v3201 = vadd.f32 0.0, %v3200
    %v3202 = vpop.f32.mrb[0].mxu0
    %v3203 = vadd.f32 0.0, %v3202
    %v3204 = vpop.f32.mrb[0].mxu0
    %v3205 = vadd.f32 0.0, %v3204
    %v3206 = vpop.f32.mrb[0].mxu0
    %v3207 = vadd.f32 0.0, %v3206
    %3208 = vdwg.mxu0
    %3209 = vmatprep.subr.bf16.mxu0 %v2831
    %3210 = vmatpush1.bf16.msra.mxu0 %v2830
    %3211 = vmatprep.subr.bf16.mxu0 %v2839
    %3212 = vmatpush1.bf16.msra.mxu0 %v2838
    %3213 = vmatprep.subr.bf16.mxu0 %v2847
    %3214 = vmatpush1.bf16.msra.mxu0 %v2846
    %3215 = vmatprep.subr.bf16.mxu0 %v2855
    %3216 = vmatpush1.bf16.msra.mxu0 %v2854
    %3217 = vmatprep.subr.bf16.mxu0 %v2863
    %3218 = vmatpush1.bf16.msra.mxu0 %v2862
    %3219 = vmatprep.subr.bf16.mxu0 %v2871
    %3220 = vmatpush1.bf16.msra.mxu0 %v2870
    %3221 = vmatprep.subr.bf16.mxu0 %v2879
    %3222 = vmatpush1.bf16.msra.mxu0 %v2878
    %3223 = vmatprep.subr.bf16.mxu0 %v2887
    %3224 = vmatpush1.bf16.msra.mxu0 %v2886
    %3225 = vmatprep.subr.bf16.mxu0 %v2895
    %3226 = vmatpush1.bf16.msra.mxu0 %v2894
    %3227 = vmatprep.subr.bf16.mxu0 %v2903
    %3228 = vmatpush1.bf16.msra.mxu0 %v2902
    %3229 = vmatprep.subr.bf16.mxu0 %v2911
    %3230 = vmatpush1.bf16.msra.mxu0 %v2910
    %3231 = vmatprep.subr.bf16.mxu0 %v2919
    %3232 = vmatpush1.bf16.msra.mxu0 %v2918
    %3233 = vmatprep.subr.bf16.mxu0 %v2927
    %3234 = vmatpush1.bf16.msra.mxu0 %v2926
    %3235 = vmatprep.subr.bf16.mxu0 %v2935
    %3236 = vmatpush1.bf16.msra.mxu0 %v2934
    %3237 = vmatprep.subr.bf16.mxu0 %v2943
    %3238 = vmatpush1.bf16.msra.mxu0 %v2942
    %3239 = vmatprep.subr.bf16.mxu0 %v2951
    %3240 = vmatpush1.bf16.msra.mxu0 %v2950
    %3241 = vmatprep.mubr.bf16.mxu0 %v2311
    %3242 = vmatmul.mubr.bf16.gmra.mrb[0].mxu0 %v2310
    %v3243 = vpop.f32.mrb[0].mxu0
    %v3244 = vadd.f32 0.0, %v3243
    %v3245 = vpop.f32.mrb[0].mxu0
    %v3246 = vadd.f32 0.0, %v3245
    %v3247 = vpop.f32.mrb[0].mxu0
    %v3248 = vadd.f32 0.0, %v3247
    %v3249 = vpop.f32.mrb[0].mxu0
    %v3250 = vadd.f32 0.0, %v3249
    %3251 = vdwg.mxu0
    %v3252 = vadd.f32 %v2072, %v3115
    %v3253 = vadd.f32 %v2074, %v3117
    %v3254 = vadd.f32 %v2115, %v3158
    %v3255 = vadd.f32 %v2117, %v3160
    %v3256 = vadd.f32 %v2158, %v3201
    %v3257 = vadd.f32 %v2160, %v3203
    %v3258 = vadd.f32 %v2201, %v3244
    %v3259 = vadd.f32 %v2203, %v3246
    %v3260 = vadd.f32 %v2076, %v3119
    %v3261 = vadd.f32 %v2078, %v3121
    %v3262 = vadd.f32 %v2119, %v3162
    %v3263 = vadd.f32 %v2121, %v3164
    %v3264 = vadd.f32 %v2162, %v3205
    %v3265 = vadd.f32 %v2164, %v3207
    %v3266 = vadd.f32 %v2205, %v3248
    %v3267 = vadd.f32 %v2207, %v3250
    %v3268 = vld [vmem:[#allocation5 + $0x30] sm:$0xff]
    %v3269 = vld [vmem:[#allocation5 + $0x38] sm:$0xff]
    %v3270 = vld [vmem:[#allocation5 + $0x70] sm:$0xff]
    %v3271 = vld [vmem:[#allocation5 + $0x78] sm:$0xff]
    %v3272 = vld [vmem:[#allocation5 + $0xb0] sm:$0xff]
    %v3273 = vld [vmem:[#allocation5 + $0xb8] sm:$0xff]
    %v3274 = vld [vmem:[#allocation5 + $0xf0] sm:$0xff]
    %v3275 = vld [vmem:[#allocation5 + $0xf8] sm:$0xff]
    %v3276 = vld [vmem:[#allocation7 + $0x6] sm:$0x3]
    %v3278 = vlaneseq
    %v3279 = vshrl.u32 %v3278, 7
    %v3280 = vsub.s32 0, %v3279
    %v3281 = vrot.slane %v3276, %v3280
    %v3282 = vlaneseq
    %v3283 = vshrl.u32 %v3282, 7
    %v3284 = vsub.s32 1, %v3283
    %v3285 = vrot.slane %v3276, %v3284
    %3288 = vmatprep.subr.mxu0 %v3269
    %3289 = vmatpush1.msra.mxu0 %v3268
    %3290 = vmatprep.subr.mxu0 %v3271
    %3291 = vmatpush1.msra.mxu0 %v3270
    %3292 = vmatprep.subr.mxu0 %v3273
    %3293 = vmatpush1.msra.mxu0 %v3272
    %3294 = vmatprep.subr.mxu0 %v3275
    %3295 = vmatpush1.msra.mxu0 %v3274
    %3296 = vmatprep.subr.mxu0 0.0
    %3297 = vmatpush1.msra.mxu0 0.0
    %3298 = vmatprep.subr.mxu0 0.0
    %3299 = vmatpush1.msra.mxu0 0.0
    %3300 = vmatprep.subr.mxu0 0.0
    %3301 = vmatpush1.msra.mxu0 0.0
    %3302 = vmatprep.subr.mxu0 0.0
    %3303 = vmatpush1.msra.mxu0 0.0
    %3304 = vmatprep.subr.mxu0 0.0
    %3305 = vmatpush1.msra.mxu0 0.0
    %3306 = vmatprep.subr.mxu0 0.0
    %3307 = vmatpush1.msra.mxu0 0.0
    %3308 = vmatprep.subr.mxu0 0.0
    %3309 = vmatpush1.msra.mxu0 0.0
    %3310 = vmatprep.subr.mxu0 0.0
    %3311 = vmatpush1.msra.mxu0 0.0
    %3312 = vmatprep.subr.mxu0 0.0
    %3313 = vmatpush1.msra.mxu0 0.0
    %3314 = vmatprep.subr.mxu0 0.0
    %3315 = vmatpush1.msra.mxu0 0.0
    %3316 = vmatprep.subr.mxu0 0.0
    %3317 = vmatpush1.msra.mxu0 0.0
    %3318 = vmatprep.subr.mxu0 0.0
    %3319 = vmatpush1.msra.mxu0 0.0
    %3320 = vmatprep.subr.mxu0 0.0
    %3321 = vmatpush1.msra.mxu0 0.0
    %3322 = vmatprep.subr.mxu0 0.0
    %3323 = vmatpush1.msra.mxu0 0.0
    %3324 = vmatprep.subr.mxu0 0.0
    %3325 = vmatpush1.msra.mxu0 0.0
    %3326 = vmatprep.subr.mxu0 0.0
    %3327 = vmatpush1.msra.mxu0 0.0
    %3328 = vmatprep.subr.mxu0 0.0
    %3329 = vmatpush1.msra.mxu0 0.0
    %3330 = vmatprep.subr.mxu0 0.0
    %3331 = vmatpush1.msra.mxu0 0.0
    %3332 = vmatprep.subr.mxu0 0.0
    %3333 = vmatpush1.msra.mxu0 0.0
    %3334 = vmatprep.subr.mxu0 0.0
    %3335 = vmatpush1.msra.mxu0 0.0
    %3336 = vmatprep.subr.mxu0 0.0
    %3337 = vmatpush1.msra.mxu0 0.0
    %3338 = vmatprep.subr.mxu0 0.0
    %3339 = vmatpush1.msra.mxu0 0.0
    %3340 = vmatprep.subr.mxu0 0.0
    %3341 = vmatpush1.msra.mxu0 0.0
    %3342 = vmatprep.subr.mxu0 0.0
    %3343 = vmatpush1.msra.mxu0 0.0
    %3344 = vmatprep.subr.mxu0 0.0
    %3345 = vmatpush1.msra.mxu0 0.0
    %3346 = vmatprep.subr.mxu0 0.0
    %3347 = vmatpush1.msra.mxu0 0.0
    %3348 = vmatprep.subr.mxu0 0.0
    %3349 = vmatpush1.msra.mxu0 0.0
    %3350 = vmatprep.subr.mxu0 0.0
    %3351 = vmatpush1.msra.mxu0 0.0
    %3352 = vmatprep.mubr.f32.mxu0 0.0
    %3353 = vmatmul.mubr.f32.gmra.mrb[0].mxu0 %v138
    %v3354 = vpop.f32.mrb[0].mxu0
    %v3355 = vadd.f32 %v3281, %v3354
    %v3356 = vpop.f32.mrb[0].mxu0
    %v3357 = vadd.f32 %v3285, %v3356
    %3358 = vmatprep.mubr.f32.mxu0 0.0
    %3359 = vmatmul.mubr.f32.gmra.mrb[0].mxu0 %v141
    %v3360 = vpop.f32.mrb[0].mxu0
    %v3361 = vadd.f32 %v3281, %v3360
    %v3362 = vpop.f32.mrb[0].mxu0
    %v3363 = vadd.f32 %v3285, %v3362
    %3364 = vdwg.mxu0
    %v3365 = vmax.f32 %v3355, 0.0
    %v3366 = vmax.f32 %v3357, 0.0
    %v3367 = vmax.f32 %v3361, 0.0
    %v3368 = vmax.f32 %v3363, 0.0
    %v3369 = vpack.c.bf16 %v3367, %v3365
    %v3370 = vpack.c.bf16 %v3368, %v3366
    %v3371 = vld [vmem:[#allocation8 + $0xc00] sm:$0xff]
    %v3372 = vld [vmem:[#allocation8 + $0xc08] sm:$0xff]
    %v3373 = vld [vmem:[#allocation8 + $0xc10] sm:$0xff]
    %v3374 = vld [vmem:[#allocation8 + $0xc18] sm:$0xff]
    %v3375 = vld [vmem:[#allocation8 + $0xc20] sm:$0xff]
    %v3376 = vld [vmem:[#allocation8 + $0xc28] sm:$0xff]
    %v3377 = vld [vmem:[#allocation8 + $0xc30] sm:$0xff]
    %v3378 = vld [vmem:[#allocation8 + $0xc38] sm:$0xff]
    %v3379 = vld [vmem:[#allocation8 + $0xc40] sm:$0xff]
    %v3380 = vld [vmem:[#allocation8 + $0xc48] sm:$0xff]
    %v3381 = vld [vmem:[#allocation8 + $0xc50] sm:$0xff]
    %v3382 = vld [vmem:[#allocation8 + $0xc58] sm:$0xff]
    %v3383 = vld [vmem:[#allocation8 + $0xc60] sm:$0xff]
    %v3384 = vld [vmem:[#allocation8 + $0xc68] sm:$0xff]
    %v3385 = vld [vmem:[#allocation8 + $0xc70] sm:$0xff]
    %v3386 = vld [vmem:[#allocation8 + $0xc78] sm:$0xff]
    %v3387 = vld [vmem:[#allocation8 + $0xc80] sm:$0xff]
    %v3388 = vld [vmem:[#allocation8 + $0xc88] sm:$0xff]
    %v3389 = vld [vmem:[#allocation8 + $0xc90] sm:$0xff]
    %v3390 = vld [vmem:[#allocation8 + $0xc98] sm:$0xff]
    %v3391 = vld [vmem:[#allocation8 + $0xca0] sm:$0xff]
    %v3392 = vld [vmem:[#allocation8 + $0xca8] sm:$0xff]
    %v3393 = vld [vmem:[#allocation8 + $0xcb0] sm:$0xff]
    %v3394 = vld [vmem:[#allocation8 + $0xcb8] sm:$0xff]
    %v3395 = vld [vmem:[#allocation8 + $0xcc0] sm:$0xff]
    %v3396 = vld [vmem:[#allocation8 + $0xcc8] sm:$0xff]
    %v3397 = vld [vmem:[#allocation8 + $0xcd0] sm:$0xff]
    %v3398 = vld [vmem:[#allocation8 + $0xcd8] sm:$0xff]
    %v3399 = vld [vmem:[#allocation8 + $0xce0] sm:$0xff]
    %v3400 = vld [vmem:[#allocation8 + $0xce8] sm:$0xff]
    %v3401 = vld [vmem:[#allocation8 + $0xcf0] sm:$0xff]
    %v3402 = vld [vmem:[#allocation8 + $0xcf8] sm:$0xff]
    %v3403 = vld [vmem:[#allocation8 + $0xd00] sm:$0xff]
    %v3404 = vld [vmem:[#allocation8 + $0xd08] sm:$0xff]
    %v3405 = vld [vmem:[#allocation8 + $0xd10] sm:$0xff]
    %v3406 = vld [vmem:[#allocation8 + $0xd18] sm:$0xff]
    %v3407 = vld [vmem:[#allocation8 + $0xd20] sm:$0xff]
    %v3408 = vld [vmem:[#allocation8 + $0xd28] sm:$0xff]
    %v3409 = vld [vmem:[#allocation8 + $0xd30] sm:$0xff]
    %v3410 = vld [vmem:[#allocation8 + $0xd38] sm:$0xff]
    %v3411 = vld [vmem:[#allocation8 + $0xd40] sm:$0xff]
    %v3412 = vld [vmem:[#allocation8 + $0xd48] sm:$0xff]
    %v3413 = vld [vmem:[#allocation8 + $0xd50] sm:$0xff]
    %v3414 = vld [vmem:[#allocation8 + $0xd58] sm:$0xff]
    %v3415 = vld [vmem:[#allocation8 + $0xd60] sm:$0xff]
    %v3416 = vld [vmem:[#allocation8 + $0xd68] sm:$0xff]
    %v3417 = vld [vmem:[#allocation8 + $0xd70] sm:$0xff]
    %v3418 = vld [vmem:[#allocation8 + $0xd78] sm:$0xff]
    %v3419 = vld [vmem:[#allocation8 + $0xd80] sm:$0xff]
    %v3420 = vld [vmem:[#allocation8 + $0xd88] sm:$0xff]
    %v3421 = vld [vmem:[#allocation8 + $0xd90] sm:$0xff]
    %v3422 = vld [vmem:[#allocation8 + $0xd98] sm:$0xff]
    %v3423 = vld [vmem:[#allocation8 + $0xda0] sm:$0xff]
    %v3424 = vld [vmem:[#allocation8 + $0xda8] sm:$0xff]
    %v3425 = vld [vmem:[#allocation8 + $0xdb0] sm:$0xff]
    %v3426 = vld [vmem:[#allocation8 + $0xdb8] sm:$0xff]
    %v3427 = vld [vmem:[#allocation8 + $0xdc0] sm:$0xff]
    %v3428 = vld [vmem:[#allocation8 + $0xdc8] sm:$0xff]
    %v3429 = vld [vmem:[#allocation8 + $0xdd0] sm:$0xff]
    %v3430 = vld [vmem:[#allocation8 + $0xdd8] sm:$0xff]
    %v3431 = vld [vmem:[#allocation8 + $0xde0] sm:$0xff]
    %v3432 = vld [vmem:[#allocation8 + $0xde8] sm:$0xff]
    %v3433 = vld [vmem:[#allocation8 + $0xdf0] sm:$0xff]
    %v3434 = vld [vmem:[#allocation8 + $0xdf8] sm:$0xff]
    %v3435 = vld [vmem:[#allocation8 + $0xe00] sm:$0xff]
    %v3436 = vld [vmem:[#allocation8 + $0xe08] sm:$0xff]
    %v3437 = vld [vmem:[#allocation8 + $0xe10] sm:$0xff]
    %v3438 = vld [vmem:[#allocation8 + $0xe18] sm:$0xff]
    %v3439 = vld [vmem:[#allocation8 + $0xe20] sm:$0xff]
    %v3440 = vld [vmem:[#allocation8 + $0xe28] sm:$0xff]
    %v3441 = vld [vmem:[#allocation8 + $0xe30] sm:$0xff]
    %v3442 = vld [vmem:[#allocation8 + $0xe38] sm:$0xff]
    %v3443 = vld [vmem:[#allocation8 + $0xe40] sm:$0xff]
    %v3444 = vld [vmem:[#allocation8 + $0xe48] sm:$0xff]
    %v3445 = vld [vmem:[#allocation8 + $0xe50] sm:$0xff]
    %v3446 = vld [vmem:[#allocation8 + $0xe58] sm:$0xff]
    %v3447 = vld [vmem:[#allocation8 + $0xe60] sm:$0xff]
    %v3448 = vld [vmem:[#allocation8 + $0xe68] sm:$0xff]
    %v3449 = vld [vmem:[#allocation8 + $0xe70] sm:$0xff]
    %v3450 = vld [vmem:[#allocation8 + $0xe78] sm:$0xff]
    %v3451 = vld [vmem:[#allocation8 + $0xe80] sm:$0xff]
    %v3452 = vld [vmem:[#allocation8 + $0xe88] sm:$0xff]
    %v3453 = vld [vmem:[#allocation8 + $0xe90] sm:$0xff]
    %v3454 = vld [vmem:[#allocation8 + $0xe98] sm:$0xff]
    %v3455 = vld [vmem:[#allocation8 + $0xea0] sm:$0xff]
    %v3456 = vld [vmem:[#allocation8 + $0xea8] sm:$0xff]
    %v3457 = vld [vmem:[#allocation8 + $0xeb0] sm:$0xff]
    %v3458 = vld [vmem:[#allocation8 + $0xeb8] sm:$0xff]
    %v3459 = vld [vmem:[#allocation8 + $0xec0] sm:$0xff]
    %v3460 = vld [vmem:[#allocation8 + $0xec8] sm:$0xff]
    %v3461 = vld [vmem:[#allocation8 + $0xed0] sm:$0xff]
    %v3462 = vld [vmem:[#allocation8 + $0xed8] sm:$0xff]
    %v3463 = vld [vmem:[#allocation8 + $0xee0] sm:$0xff]
    %v3464 = vld [vmem:[#allocation8 + $0xee8] sm:$0xff]
    %v3465 = vld [vmem:[#allocation8 + $0xef0] sm:$0xff]
    %v3466 = vld [vmem:[#allocation8 + $0xef8] sm:$0xff]
    %v3467 = vld [vmem:[#allocation8 + $0xf00] sm:$0xff]
    %v3468 = vld [vmem:[#allocation8 + $0xf08] sm:$0xff]
    %v3469 = vld [vmem:[#allocation8 + $0xf10] sm:$0xff]
    %v3470 = vld [vmem:[#allocation8 + $0xf18] sm:$0xff]
    %v3471 = vld [vmem:[#allocation8 + $0xf20] sm:$0xff]
    %v3472 = vld [vmem:[#allocation8 + $0xf28] sm:$0xff]
    %v3473 = vld [vmem:[#allocation8 + $0xf30] sm:$0xff]
    %v3474 = vld [vmem:[#allocation8 + $0xf38] sm:$0xff]
    %v3475 = vld [vmem:[#allocation8 + $0xf40] sm:$0xff]
    %v3476 = vld [vmem:[#allocation8 + $0xf48] sm:$0xff]
    %v3477 = vld [vmem:[#allocation8 + $0xf50] sm:$0xff]
    %v3478 = vld [vmem:[#allocation8 + $0xf58] sm:$0xff]
    %v3479 = vld [vmem:[#allocation8 + $0xf60] sm:$0xff]
    %v3480 = vld [vmem:[#allocation8 + $0xf68] sm:$0xff]
    %v3481 = vld [vmem:[#allocation8 + $0xf70] sm:$0xff]
    %v3482 = vld [vmem:[#allocation8 + $0xf78] sm:$0xff]
    %v3483 = vld [vmem:[#allocation8 + $0xf80] sm:$0xff]
    %v3484 = vld [vmem:[#allocation8 + $0xf88] sm:$0xff]
    %v3485 = vld [vmem:[#allocation8 + $0xf90] sm:$0xff]
    %v3486 = vld [vmem:[#allocation8 + $0xf98] sm:$0xff]
    %v3487 = vld [vmem:[#allocation8 + $0xfa0] sm:$0xff]
    %v3488 = vld [vmem:[#allocation8 + $0xfa8] sm:$0xff]
    %v3489 = vld [vmem:[#allocation8 + $0xfb0] sm:$0xff]
    %v3490 = vld [vmem:[#allocation8 + $0xfb8] sm:$0xff]
    %v3491 = vld [vmem:[#allocation8 + $0xfc0] sm:$0xff]
    %v3492 = vld [vmem:[#allocation8 + $0xfc8] sm:$0xff]
    %v3493 = vld [vmem:[#allocation8 + $0xfd0] sm:$0xff]
    %v3494 = vld [vmem:[#allocation8 + $0xfd8] sm:$0xff]
    %v3495 = vld [vmem:[#allocation8 + $0xfe0] sm:$0xff]
    %v3496 = vld [vmem:[#allocation8 + $0xfe8] sm:$0xff]
    %v3497 = vld [vmem:[#allocation8 + $0xff0] sm:$0xff]
    %v3498 = vld [vmem:[#allocation8 + $0xff8] sm:$0xff]
    %v3627 = vunpack.c.l.b16 %v3371
    %v3628 = vunpack.c.h.b16 %v3371
    %v3629 = vunpack.c.l.b16 %v3372
    %v3630 = vunpack.c.h.b16 %v3372
    %v3631 = vunpack.c.l.b16 %v3373
    %v3632 = vunpack.c.h.b16 %v3373
    %v3633 = vunpack.c.l.b16 %v3374
    %v3634 = vunpack.c.h.b16 %v3374
    %v3635 = vunpack.c.l.b16 %v3375
    %v3636 = vunpack.c.h.b16 %v3375
    %v3637 = vunpack.c.l.b16 %v3376
    %v3638 = vunpack.c.h.b16 %v3376
    %v3639 = vunpack.c.l.b16 %v3377
    %v3640 = vunpack.c.h.b16 %v3377
    %v3641 = vunpack.c.l.b16 %v3378
    %v3642 = vunpack.c.h.b16 %v3378
    %v3643 = vunpack.c.l.b16 %v3379
    %v3644 = vunpack.c.h.b16 %v3379
    %v3645 = vunpack.c.l.b16 %v3380
    %v3646 = vunpack.c.h.b16 %v3380
    %v3647 = vunpack.c.l.b16 %v3381
    %v3648 = vunpack.c.h.b16 %v3381
    %v3649 = vunpack.c.l.b16 %v3382
    %v3650 = vunpack.c.h.b16 %v3382
    %v3651 = vunpack.c.l.b16 %v3383
    %v3652 = vunpack.c.h.b16 %v3383
    %v3653 = vunpack.c.l.b16 %v3384
    %v3654 = vunpack.c.h.b16 %v3384
    %v3655 = vunpack.c.l.b16 %v3385
    %v3656 = vunpack.c.h.b16 %v3385
    %v3657 = vunpack.c.l.b16 %v3386
    %v3658 = vunpack.c.h.b16 %v3386
    %v3659 = vunpack.c.l.b16 %v3387
    %v3660 = vunpack.c.h.b16 %v3387
    %v3661 = vunpack.c.l.b16 %v3388
    %v3662 = vunpack.c.h.b16 %v3388
    %v3663 = vunpack.c.l.b16 %v3389
    %v3664 = vunpack.c.h.b16 %v3389
    %v3665 = vunpack.c.l.b16 %v3390
    %v3666 = vunpack.c.h.b16 %v3390
    %v3667 = vunpack.c.l.b16 %v3391
    %v3668 = vunpack.c.h.b16 %v3391
    %v3669 = vunpack.c.l.b16 %v3392
    %v3670 = vunpack.c.h.b16 %v3392
    %v3671 = vunpack.c.l.b16 %v3393
    %v3672 = vunpack.c.h.b16 %v3393
    %v3673 = vunpack.c.l.b16 %v3394
    %v3674 = vunpack.c.h.b16 %v3394
    %v3675 = vunpack.c.l.b16 %v3395
    %v3676 = vunpack.c.h.b16 %v3395
    %v3677 = vunpack.c.l.b16 %v3396
    %v3678 = vunpack.c.h.b16 %v3396
    %v3679 = vunpack.c.l.b16 %v3397
    %v3680 = vunpack.c.h.b16 %v3397
    %v3681 = vunpack.c.l.b16 %v3398
    %v3682 = vunpack.c.h.b16 %v3398
    %v3683 = vunpack.c.l.b16 %v3399
    %v3684 = vunpack.c.h.b16 %v3399
    %v3685 = vunpack.c.l.b16 %v3400
    %v3686 = vunpack.c.h.b16 %v3400
    %v3687 = vunpack.c.l.b16 %v3401
    %v3688 = vunpack.c.h.b16 %v3401
    %v3689 = vunpack.c.l.b16 %v3402
    %v3690 = vunpack.c.h.b16 %v3402
    %v3691 = vunpack.c.l.b16 %v3403
    %v3692 = vunpack.c.h.b16 %v3403
    %v3693 = vunpack.c.l.b16 %v3404
    %v3694 = vunpack.c.h.b16 %v3404
    %v3695 = vunpack.c.l.b16 %v3405
    %v3696 = vunpack.c.h.b16 %v3405
    %v3697 = vunpack.c.l.b16 %v3406
    %v3698 = vunpack.c.h.b16 %v3406
    %v3699 = vunpack.c.l.b16 %v3407
    %v3700 = vunpack.c.h.b16 %v3407
    %v3701 = vunpack.c.l.b16 %v3408
    %v3702 = vunpack.c.h.b16 %v3408
    %v3703 = vunpack.c.l.b16 %v3409
    %v3704 = vunpack.c.h.b16 %v3409
    %v3705 = vunpack.c.l.b16 %v3410
    %v3706 = vunpack.c.h.b16 %v3410
    %v3707 = vunpack.c.l.b16 %v3411
    %v3708 = vunpack.c.h.b16 %v3411
    %v3709 = vunpack.c.l.b16 %v3412
    %v3710 = vunpack.c.h.b16 %v3412
    %v3711 = vunpack.c.l.b16 %v3413
    %v3712 = vunpack.c.h.b16 %v3413
    %v3713 = vunpack.c.l.b16 %v3414
    %v3714 = vunpack.c.h.b16 %v3414
    %v3715 = vunpack.c.l.b16 %v3415
    %v3716 = vunpack.c.h.b16 %v3415
    %v3717 = vunpack.c.l.b16 %v3416
    %v3718 = vunpack.c.h.b16 %v3416
    %v3719 = vunpack.c.l.b16 %v3417
    %v3720 = vunpack.c.h.b16 %v3417
    %v3721 = vunpack.c.l.b16 %v3418
    %v3722 = vunpack.c.h.b16 %v3418
    %v3723 = vunpack.c.l.b16 %v3419
    %v3724 = vunpack.c.h.b16 %v3419
    %v3725 = vunpack.c.l.b16 %v3420
    %v3726 = vunpack.c.h.b16 %v3420
    %v3727 = vunpack.c.l.b16 %v3421
    %v3728 = vunpack.c.h.b16 %v3421
    %v3729 = vunpack.c.l.b16 %v3422
    %v3730 = vunpack.c.h.b16 %v3422
    %v3731 = vunpack.c.l.b16 %v3423
    %v3732 = vunpack.c.h.b16 %v3423
    %v3733 = vunpack.c.l.b16 %v3424
    %v3734 = vunpack.c.h.b16 %v3424
    %v3735 = vunpack.c.l.b16 %v3425
    %v3736 = vunpack.c.h.b16 %v3425
    %v3737 = vunpack.c.l.b16 %v3426
    %v3738 = vunpack.c.h.b16 %v3426
    %v3739 = vunpack.c.l.b16 %v3427
    %v3740 = vunpack.c.h.b16 %v3427
    %v3741 = vunpack.c.l.b16 %v3428
    %v3742 = vunpack.c.h.b16 %v3428
    %v3743 = vunpack.c.l.b16 %v3429
    %v3744 = vunpack.c.h.b16 %v3429
    %v3745 = vunpack.c.l.b16 %v3430
    %v3746 = vunpack.c.h.b16 %v3430
    %v3747 = vunpack.c.l.b16 %v3431
    %v3748 = vunpack.c.h.b16 %v3431
    %v3749 = vunpack.c.l.b16 %v3432
    %v3750 = vunpack.c.h.b16 %v3432
    %v3751 = vunpack.c.l.b16 %v3433
    %v3752 = vunpack.c.h.b16 %v3433
    %v3753 = vunpack.c.l.b16 %v3434
    %v3754 = vunpack.c.h.b16 %v3434
    %v3755 = vunpack.c.l.b16 %v3435
    %v3756 = vunpack.c.h.b16 %v3435
    %v3757 = vunpack.c.l.b16 %v3436
    %v3758 = vunpack.c.h.b16 %v3436
    %v3759 = vunpack.c.l.b16 %v3437
    %v3760 = vunpack.c.h.b16 %v3437
    %v3761 = vunpack.c.l.b16 %v3438
    %v3762 = vunpack.c.h.b16 %v3438
    %v3763 = vunpack.c.l.b16 %v3439
    %v3764 = vunpack.c.h.b16 %v3439
    %v3765 = vunpack.c.l.b16 %v3440
    %v3766 = vunpack.c.h.b16 %v3440
    %v3767 = vunpack.c.l.b16 %v3441
    %v3768 = vunpack.c.h.b16 %v3441
    %v3769 = vunpack.c.l.b16 %v3442
    %v3770 = vunpack.c.h.b16 %v3442
    %v3771 = vunpack.c.l.b16 %v3443
    %v3772 = vunpack.c.h.b16 %v3443
    %v3773 = vunpack.c.l.b16 %v3444
    %v3774 = vunpack.c.h.b16 %v3444
    %v3775 = vunpack.c.l.b16 %v3445
    %v3776 = vunpack.c.h.b16 %v3445
    %v3777 = vunpack.c.l.b16 %v3446
    %v3778 = vunpack.c.h.b16 %v3446
    %v3779 = vunpack.c.l.b16 %v3447
    %v3780 = vunpack.c.h.b16 %v3447
    %v3781 = vunpack.c.l.b16 %v3448
    %v3782 = vunpack.c.h.b16 %v3448
    %v3783 = vunpack.c.l.b16 %v3449
    %v3784 = vunpack.c.h.b16 %v3449
    %v3785 = vunpack.c.l.b16 %v3450
    %v3786 = vunpack.c.h.b16 %v3450
    %v3787 = vunpack.c.l.b16 %v3451
    %v3788 = vunpack.c.h.b16 %v3451
    %v3789 = vunpack.c.l.b16 %v3452
    %v3790 = vunpack.c.h.b16 %v3452
    %v3791 = vunpack.c.l.b16 %v3453
    %v3792 = vunpack.c.h.b16 %v3453
    %v3793 = vunpack.c.l.b16 %v3454
    %v3794 = vunpack.c.h.b16 %v3454
    %v3795 = vunpack.c.l.b16 %v3455
    %v3796 = vunpack.c.h.b16 %v3455
    %v3797 = vunpack.c.l.b16 %v3456
    %v3798 = vunpack.c.h.b16 %v3456
    %v3799 = vunpack.c.l.b16 %v3457
    %v3800 = vunpack.c.h.b16 %v3457
    %v3801 = vunpack.c.l.b16 %v3458
    %v3802 = vunpack.c.h.b16 %v3458
    %v3803 = vunpack.c.l.b16 %v3459
    %v3804 = vunpack.c.h.b16 %v3459
    %v3805 = vunpack.c.l.b16 %v3460
    %v3806 = vunpack.c.h.b16 %v3460
    %v3807 = vunpack.c.l.b16 %v3461
    %v3808 = vunpack.c.h.b16 %v3461
    %v3809 = vunpack.c.l.b16 %v3462
    %v3810 = vunpack.c.h.b16 %v3462
    %v3811 = vunpack.c.l.b16 %v3463
    %v3812 = vunpack.c.h.b16 %v3463
    %v3813 = vunpack.c.l.b16 %v3464
    %v3814 = vunpack.c.h.b16 %v3464
    %v3815 = vunpack.c.l.b16 %v3465
    %v3816 = vunpack.c.h.b16 %v3465
    %v3817 = vunpack.c.l.b16 %v3466
    %v3818 = vunpack.c.h.b16 %v3466
    %v3819 = vunpack.c.l.b16 %v3467
    %v3820 = vunpack.c.h.b16 %v3467
    %v3821 = vunpack.c.l.b16 %v3468
    %v3822 = vunpack.c.h.b16 %v3468
    %v3823 = vunpack.c.l.b16 %v3469
    %v3824 = vunpack.c.h.b16 %v3469
    %v3825 = vunpack.c.l.b16 %v3470
    %v3826 = vunpack.c.h.b16 %v3470
    %v3827 = vunpack.c.l.b16 %v3471
    %v3828 = vunpack.c.h.b16 %v3471
    %v3829 = vunpack.c.l.b16 %v3472
    %v3830 = vunpack.c.h.b16 %v3472
    %v3831 = vunpack.c.l.b16 %v3473
    %v3832 = vunpack.c.h.b16 %v3473
    %v3833 = vunpack.c.l.b16 %v3474
    %v3834 = vunpack.c.h.b16 %v3474
    %v3835 = vunpack.c.l.b16 %v3475
    %v3836 = vunpack.c.h.b16 %v3475
    %v3837 = vunpack.c.l.b16 %v3476
    %v3838 = vunpack.c.h.b16 %v3476
    %v3839 = vunpack.c.l.b16 %v3477
    %v3840 = vunpack.c.h.b16 %v3477
    %v3841 = vunpack.c.l.b16 %v3478
    %v3842 = vunpack.c.h.b16 %v3478
    %v3843 = vunpack.c.l.b16 %v3479
    %v3844 = vunpack.c.h.b16 %v3479
    %v3845 = vunpack.c.l.b16 %v3480
    %v3846 = vunpack.c.h.b16 %v3480
    %v3847 = vunpack.c.l.b16 %v3481
    %v3848 = vunpack.c.h.b16 %v3481
    %v3849 = vunpack.c.l.b16 %v3482
    %v3850 = vunpack.c.h.b16 %v3482
    %v3851 = vunpack.c.l.b16 %v3483
    %v3852 = vunpack.c.h.b16 %v3483
    %v3853 = vunpack.c.l.b16 %v3484
    %v3854 = vunpack.c.h.b16 %v3484
    %v3855 = vunpack.c.l.b16 %v3485
    %v3856 = vunpack.c.h.b16 %v3485
    %v3857 = vunpack.c.l.b16 %v3486
    %v3858 = vunpack.c.h.b16 %v3486
    %v3859 = vunpack.c.l.b16 %v3487
    %v3860 = vunpack.c.h.b16 %v3487
    %v3861 = vunpack.c.l.b16 %v3488
    %v3862 = vunpack.c.h.b16 %v3488
    %v3863 = vunpack.c.l.b16 %v3489
    %v3864 = vunpack.c.h.b16 %v3489
    %v3865 = vunpack.c.l.b16 %v3490
    %v3866 = vunpack.c.h.b16 %v3490
    %v3867 = vunpack.c.l.b16 %v3491
    %v3868 = vunpack.c.h.b16 %v3491
    %v3869 = vunpack.c.l.b16 %v3492
    %v3870 = vunpack.c.h.b16 %v3492
    %v3871 = vunpack.c.l.b16 %v3493
    %v3872 = vunpack.c.h.b16 %v3493
    %v3873 = vunpack.c.l.b16 %v3494
    %v3874 = vunpack.c.h.b16 %v3494
    %v3875 = vunpack.c.l.b16 %v3495
    %v3876 = vunpack.c.h.b16 %v3495
    %v3877 = vunpack.c.l.b16 %v3496
    %v3878 = vunpack.c.h.b16 %v3496
    %v3879 = vunpack.c.l.b16 %v3497
    %v3880 = vunpack.c.h.b16 %v3497
    %v3881 = vunpack.c.l.b16 %v3498
    %v3882 = vunpack.c.h.b16 %v3498
    %v3883 = vpack.c.b16 %v3635, %v3627
    %v3884 = vpack.c.b16 %v3636, %v3628
    %v3885 = vpack.c.b16 %v3637, %v3629
    %v3886 = vpack.c.b16 %v3638, %v3630
    %v3887 = vpack.c.b16 %v3639, %v3631
    %v3888 = vpack.c.b16 %v3640, %v3632
    %v3889 = vpack.c.b16 %v3641, %v3633
    %v3890 = vpack.c.b16 %v3642, %v3634
    %v3891 = vpack.c.b16 %v3651, %v3643
    %v3892 = vpack.c.b16 %v3652, %v3644
    %v3893 = vpack.c.b16 %v3653, %v3645
    %v3894 = vpack.c.b16 %v3654, %v3646
    %v3895 = vpack.c.b16 %v3655, %v3647
    %v3896 = vpack.c.b16 %v3656, %v3648
    %v3897 = vpack.c.b16 %v3657, %v3649
    %v3898 = vpack.c.b16 %v3658, %v3650
    %v3899 = vpack.c.b16 %v3667, %v3659
    %v3900 = vpack.c.b16 %v3668, %v3660
    %v3901 = vpack.c.b16 %v3669, %v3661
    %v3902 = vpack.c.b16 %v3670, %v3662
    %v3903 = vpack.c.b16 %v3671, %v3663
    %v3904 = vpack.c.b16 %v3672, %v3664
    %v3905 = vpack.c.b16 %v3673, %v3665
    %v3906 = vpack.c.b16 %v3674, %v3666
    %v3907 = vpack.c.b16 %v3683, %v3675
    %v3908 = vpack.c.b16 %v3684, %v3676
    %v3909 = vpack.c.b16 %v3685, %v3677
    %v3910 = vpack.c.b16 %v3686, %v3678
    %v3911 = vpack.c.b16 %v3687, %v3679
    %v3912 = vpack.c.b16 %v3688, %v3680
    %v3913 = vpack.c.b16 %v3689, %v3681
    %v3914 = vpack.c.b16 %v3690, %v3682
    %v3915 = vpack.c.b16 %v3699, %v3691
    %v3916 = vpack.c.b16 %v3700, %v3692
    %v3917 = vpack.c.b16 %v3701, %v3693
    %v3918 = vpack.c.b16 %v3702, %v3694
    %v3919 = vpack.c.b16 %v3703, %v3695
    %v3920 = vpack.c.b16 %v3704, %v3696
    %v3921 = vpack.c.b16 %v3705, %v3697
    %v3922 = vpack.c.b16 %v3706, %v3698
    %v3923 = vpack.c.b16 %v3715, %v3707
    %v3924 = vpack.c.b16 %v3716, %v3708
    %v3925 = vpack.c.b16 %v3717, %v3709
    %v3926 = vpack.c.b16 %v3718, %v3710
    %v3927 = vpack.c.b16 %v3719, %v3711
    %v3928 = vpack.c.b16 %v3720, %v3712
    %v3929 = vpack.c.b16 %v3721, %v3713
    %v3930 = vpack.c.b16 %v3722, %v3714
    %v3931 = vpack.c.b16 %v3731, %v3723
    %v3932 = vpack.c.b16 %v3732, %v3724
    %v3933 = vpack.c.b16 %v3733, %v3725
    %v3934 = vpack.c.b16 %v3734, %v3726
    %v3935 = vpack.c.b16 %v3735, %v3727
    %v3936 = vpack.c.b16 %v3736, %v3728
    %v3937 = vpack.c.b16 %v3737, %v3729
    %v3938 = vpack.c.b16 %v3738, %v3730
    %v3939 = vpack.c.b16 %v3747, %v3739
    %v3940 = vpack.c.b16 %v3748, %v3740
    %v3941 = vpack.c.b16 %v3749, %v3741
    %v3942 = vpack.c.b16 %v3750, %v3742
    %v3943 = vpack.c.b16 %v3751, %v3743
    %v3944 = vpack.c.b16 %v3752, %v3744
    %v3945 = vpack.c.b16 %v3753, %v3745
    %v3946 = vpack.c.b16 %v3754, %v3746
    %v3947 = vpack.c.b16 %v3763, %v3755
    %v3948 = vpack.c.b16 %v3764, %v3756
    %v3949 = vpack.c.b16 %v3765, %v3757
    %v3950 = vpack.c.b16 %v3766, %v3758
    %v3951 = vpack.c.b16 %v3767, %v3759
    %v3952 = vpack.c.b16 %v3768, %v3760
    %v3953 = vpack.c.b16 %v3769, %v3761
    %v3954 = vpack.c.b16 %v3770, %v3762
    %v3955 = vpack.c.b16 %v3779, %v3771
    %v3956 = vpack.c.b16 %v3780, %v3772
    %v3957 = vpack.c.b16 %v3781, %v3773
    %v3958 = vpack.c.b16 %v3782, %v3774
    %v3959 = vpack.c.b16 %v3783, %v3775
    %v3960 = vpack.c.b16 %v3784, %v3776
    %v3961 = vpack.c.b16 %v3785, %v3777
    %v3962 = vpack.c.b16 %v3786, %v3778
    %v3963 = vpack.c.b16 %v3795, %v3787
    %v3964 = vpack.c.b16 %v3796, %v3788
    %v3965 = vpack.c.b16 %v3797, %v3789
    %v3966 = vpack.c.b16 %v3798, %v3790
    %v3967 = vpack.c.b16 %v3799, %v3791
    %v3968 = vpack.c.b16 %v3800, %v3792
    %v3969 = vpack.c.b16 %v3801, %v3793
    %v3970 = vpack.c.b16 %v3802, %v3794
    %v3971 = vpack.c.b16 %v3811, %v3803
    %v3972 = vpack.c.b16 %v3812, %v3804
    %v3973 = vpack.c.b16 %v3813, %v3805
    %v3974 = vpack.c.b16 %v3814, %v3806
    %v3975 = vpack.c.b16 %v3815, %v3807
    %v3976 = vpack.c.b16 %v3816, %v3808
    %v3977 = vpack.c.b16 %v3817, %v3809
    %v3978 = vpack.c.b16 %v3818, %v3810
    %v3979 = vpack.c.b16 %v3827, %v3819
    %v3980 = vpack.c.b16 %v3828, %v3820
    %v3981 = vpack.c.b16 %v3829, %v3821
    %v3982 = vpack.c.b16 %v3830, %v3822
    %v3983 = vpack.c.b16 %v3831, %v3823
    %v3984 = vpack.c.b16 %v3832, %v3824
    %v3985 = vpack.c.b16 %v3833, %v3825
    %v3986 = vpack.c.b16 %v3834, %v3826
    %v3987 = vpack.c.b16 %v3843, %v3835
    %v3988 = vpack.c.b16 %v3844, %v3836
    %v3989 = vpack.c.b16 %v3845, %v3837
    %v3990 = vpack.c.b16 %v3846, %v3838
    %v3991 = vpack.c.b16 %v3847, %v3839
    %v3992 = vpack.c.b16 %v3848, %v3840
    %v3993 = vpack.c.b16 %v3849, %v3841
    %v3994 = vpack.c.b16 %v3850, %v3842
    %v3995 = vpack.c.b16 %v3859, %v3851
    %v3996 = vpack.c.b16 %v3860, %v3852
    %v3997 = vpack.c.b16 %v3861, %v3853
    %v3998 = vpack.c.b16 %v3862, %v3854
    %v3999 = vpack.c.b16 %v3863, %v3855
    %v4000 = vpack.c.b16 %v3864, %v3856
    %v4001 = vpack.c.b16 %v3865, %v3857
    %v4002 = vpack.c.b16 %v3866, %v3858
    %v4003 = vpack.c.b16 %v3875, %v3867
    %v4004 = vpack.c.b16 %v3876, %v3868
    %v4005 = vpack.c.b16 %v3877, %v3869
    %v4006 = vpack.c.b16 %v3878, %v3870
    %v4007 = vpack.c.b16 %v3879, %v3871
    %v4008 = vpack.c.b16 %v3880, %v3872
    %v4009 = vpack.c.b16 %v3881, %v3873
    %v4010 = vpack.c.b16 %v3882, %v3874
    %4139 = vmatprep.subr.bf16.mxu0 %v3884
    %4140 = vmatpush1.bf16.msra.mxu0 %v3883
    %4141 = vmatprep.subr.bf16.mxu0 %v3892
    %4142 = vmatpush1.bf16.msra.mxu0 %v3891
    %4143 = vmatprep.subr.bf16.mxu0 %v3900
    %4144 = vmatpush1.bf16.msra.mxu0 %v3899
    %4145 = vmatprep.subr.bf16.mxu0 %v3908
    %4146 = vmatpush1.bf16.msra.mxu0 %v3907
    %4147 = vmatprep.subr.bf16.mxu0 %v3916
    %4148 = vmatpush1.bf16.msra.mxu0 %v3915
    %4149 = vmatprep.subr.bf16.mxu0 %v3924
    %4150 = vmatpush1.bf16.msra.mxu0 %v3923
    %4151 = vmatprep.subr.bf16.mxu0 %v3932
    %4152 = vmatpush1.bf16.msra.mxu0 %v3931
    %4153 = vmatprep.subr.bf16.mxu0 %v3940
    %4154 = vmatpush1.bf16.msra.mxu0 %v3939
    %4155 = vmatprep.subr.bf16.mxu0 %v3948
    %4156 = vmatpush1.bf16.msra.mxu0 %v3947
    %4157 = vmatprep.subr.bf16.mxu0 %v3956
    %4158 = vmatpush1.bf16.msra.mxu0 %v3955
    %4159 = vmatprep.subr.bf16.mxu0 %v3964
    %4160 = vmatpush1.bf16.msra.mxu0 %v3963
    %4161 = vmatprep.subr.bf16.mxu0 %v3972
    %4162 = vmatpush1.bf16.msra.mxu0 %v3971
    %4163 = vmatprep.subr.bf16.mxu0 %v3980
    %4164 = vmatpush1.bf16.msra.mxu0 %v3979
    %4165 = vmatprep.subr.bf16.mxu0 %v3988
    %4166 = vmatpush1.bf16.msra.mxu0 %v3987
    %4167 = vmatprep.subr.bf16.mxu0 %v3996
    %4168 = vmatpush1.bf16.msra.mxu0 %v3995
    %4169 = vmatprep.subr.bf16.mxu0 %v4004
    %4170 = vmatpush1.bf16.msra.mxu0 %v4003
    %4171 = vmatprep.mubr.bf16.mxu0 %v3370
    %4172 = vmatmul.mubr.bf16.gmra.mrb[0].mxu0 %v3369
    %v4173 = vpop.f32.mrb[0].mxu0
    %v4174 = vadd.f32 0.0, %v4173
    %v4175 = vpop.f32.mrb[0].mxu0
    %v4176 = vadd.f32 0.0, %v4175
    %v4177 = vpop.f32.mrb[0].mxu0
    %v4178 = vadd.f32 0.0, %v4177
    %v4179 = vpop.f32.mrb[0].mxu0
    %v4180 = vadd.f32 0.0, %v4179
    %4181 = vdwg.mxu0
    %4182 = vmatprep.subr.bf16.mxu0 %v3886
    %4183 = vmatpush1.bf16.msra.mxu0 %v3885
    %4184 = vmatprep.subr.bf16.mxu0 %v3894
    %4185 = vmatpush1.bf16.msra.mxu0 %v3893
    %4186 = vmatprep.subr.bf16.mxu0 %v3902
    %4187 = vmatpush1.bf16.msra.mxu0 %v3901
    %4188 = vmatprep.subr.bf16.mxu0 %v3910
    %4189 = vmatpush1.bf16.msra.mxu0 %v3909
    %4190 = vmatprep.subr.bf16.mxu0 %v3918
    %4191 = vmatpush1.bf16.msra.mxu0 %v3917
    %4192 = vmatprep.subr.bf16.mxu0 %v3926
    %4193 = vmatpush1.bf16.msra.mxu0 %v3925
    %4194 = vmatprep.subr.bf16.mxu0 %v3934
    %4195 = vmatpush1.bf16.msra.mxu0 %v3933
    %4196 = vmatprep.subr.bf16.mxu0 %v3942
    %4197 = vmatpush1.bf16.msra.mxu0 %v3941
    %4198 = vmatprep.subr.bf16.mxu0 %v3950
    %4199 = vmatpush1.bf16.msra.mxu0 %v3949
    %4200 = vmatprep.subr.bf16.mxu0 %v3958
    %4201 = vmatpush1.bf16.msra.mxu0 %v3957
    %4202 = vmatprep.subr.bf16.mxu0 %v3966
    %4203 = vmatpush1.bf16.msra.mxu0 %v3965
    %4204 = vmatprep.subr.bf16.mxu0 %v3974
    %4205 = vmatpush1.bf16.msra.mxu0 %v3973
    %4206 = vmatprep.subr.bf16.mxu0 %v3982
    %4207 = vmatpush1.bf16.msra.mxu0 %v3981
    %4208 = vmatprep.subr.bf16.mxu0 %v3990
    %4209 = vmatpush1.bf16.msra.mxu0 %v3989
    %4210 = vmatprep.subr.bf16.mxu0 %v3998
    %4211 = vmatpush1.bf16.msra.mxu0 %v3997
    %4212 = vmatprep.subr.bf16.mxu0 %v4006
    %4213 = vmatpush1.bf16.msra.mxu0 %v4005
    %4214 = vmatprep.mubr.bf16.mxu0 %v3370
    %4215 = vmatmul.mubr.bf16.gmra.mrb[0].mxu0 %v3369
    %v4216 = vpop.f32.mrb[0].mxu0
    %v4217 = vadd.f32 0.0, %v4216
    %v4218 = vpop.f32.mrb[0].mxu0
    %v4219 = vadd.f32 0.0, %v4218
    %v4220 = vpop.f32.mrb[0].mxu0
    %v4221 = vadd.f32 0.0, %v4220
    %v4222 = vpop.f32.mrb[0].mxu0
    %v4223 = vadd.f32 0.0, %v4222
    %4224 = vdwg.mxu0
    %4225 = vmatprep.subr.bf16.mxu0 %v3888
    %4226 = vmatpush1.bf16.msra.mxu0 %v3887
    %4227 = vmatprep.subr.bf16.mxu0 %v3896
    %4228 = vmatpush1.bf16.msra.mxu0 %v3895
    %4229 = vmatprep.subr.bf16.mxu0 %v3904
    %4230 = vmatpush1.bf16.msra.mxu0 %v3903
    %4231 = vmatprep.subr.bf16.mxu0 %v3912
    %4232 = vmatpush1.bf16.msra.mxu0 %v3911
    %4233 = vmatprep.subr.bf16.mxu0 %v3920
    %4234 = vmatpush1.bf16.msra.mxu0 %v3919
    %4235 = vmatprep.subr.bf16.mxu0 %v3928
    %4236 = vmatpush1.bf16.msra.mxu0 %v3927
    %4237 = vmatprep.subr.bf16.mxu0 %v3936
    %4238 = vmatpush1.bf16.msra.mxu0 %v3935
    %4239 = vmatprep.subr.bf16.mxu0 %v3944
    %4240 = vmatpush1.bf16.msra.mxu0 %v3943
    %4241 = vmatprep.subr.bf16.mxu0 %v3952
    %4242 = vmatpush1.bf16.msra.mxu0 %v3951
    %4243 = vmatprep.subr.bf16.mxu0 %v3960
    %4244 = vmatpush1.bf16.msra.mxu0 %v3959
    %4245 = vmatprep.subr.bf16.mxu0 %v3968
    %4246 = vmatpush1.bf16.msra.mxu0 %v3967
    %4247 = vmatprep.subr.bf16.mxu0 %v3976
    %4248 = vmatpush1.bf16.msra.mxu0 %v3975
    %4249 = vmatprep.subr.bf16.mxu0 %v3984
    %4250 = vmatpush1.bf16.msra.mxu0 %v3983
    %4251 = vmatprep.subr.bf16.mxu0 %v3992
    %4252 = vmatpush1.bf16.msra.mxu0 %v3991
    %4253 = vmatprep.subr.bf16.mxu0 %v4000
    %4254 = vmatpush1.bf16.msra.mxu0 %v3999
    %4255 = vmatprep.subr.bf16.mxu0 %v4008
    %4256 = vmatpush1.bf16.msra.mxu0 %v4007
    %4257 = vmatprep.mubr.bf16.mxu0 %v3370
    %4258 = vmatmul.mubr.bf16.gmra.mrb[0].mxu0 %v3369
    %v4259 = vpop.f32.mrb[0].mxu0
    %v4260 = vadd.f32 0.0, %v4259
    %v4261 = vpop.f32.mrb[0].mxu0
    %v4262 = vadd.f32 0.0, %v4261
    %v4263 = vpop.f32.mrb[0].mxu0
    %v4264 = vadd.f32 0.0, %v4263
    %v4265 = vpop.f32.mrb[0].mxu0
    %v4266 = vadd.f32 0.0, %v4265
    %4267 = vdwg.mxu0
    %4268 = vmatprep.subr.bf16.mxu0 %v3890
    %4269 = vmatpush1.bf16.msra.mxu0 %v3889
    %4270 = vmatprep.subr.bf16.mxu0 %v3898
    %4271 = vmatpush1.bf16.msra.mxu0 %v3897
    %4272 = vmatprep.subr.bf16.mxu0 %v3906
    %4273 = vmatpush1.bf16.msra.mxu0 %v3905
    %4274 = vmatprep.subr.bf16.mxu0 %v3914
    %4275 = vmatpush1.bf16.msra.mxu0 %v3913
    %4276 = vmatprep.subr.bf16.mxu0 %v3922
    %4277 = vmatpush1.bf16.msra.mxu0 %v3921
    %4278 = vmatprep.subr.bf16.mxu0 %v3930
    %4279 = vmatpush1.bf16.msra.mxu0 %v3929
    %4280 = vmatprep.subr.bf16.mxu0 %v3938
    %4281 = vmatpush1.bf16.msra.mxu0 %v3937
    %4282 = vmatprep.subr.bf16.mxu0 %v3946
    %4283 = vmatpush1.bf16.msra.mxu0 %v3945
    %4284 = vmatprep.subr.bf16.mxu0 %v3954
    %4285 = vmatpush1.bf16.msra.mxu0 %v3953
    %4286 = vmatprep.subr.bf16.mxu0 %v3962
    %4287 = vmatpush1.bf16.msra.mxu0 %v3961
    %4288 = vmatprep.subr.bf16.mxu0 %v3970
    %4289 = vmatpush1.bf16.msra.mxu0 %v3969
    %4290 = vmatprep.subr.bf16.mxu0 %v3978
    %4291 = vmatpush1.bf16.msra.mxu0 %v3977
    %4292 = vmatprep.subr.bf16.mxu0 %v3986
    %4293 = vmatpush1.bf16.msra.mxu0 %v3985
    %4294 = vmatprep.subr.bf16.mxu0 %v3994
    %4295 = vmatpush1.bf16.msra.mxu0 %v3993
    %4296 = vmatprep.subr.bf16.mxu0 %v4002
    %4297 = vmatpush1.bf16.msra.mxu0 %v4001
    %4298 = vmatprep.subr.bf16.mxu0 %v4010
    %4299 = vmatpush1.bf16.msra.mxu0 %v4009
    %4300 = vmatprep.mubr.bf16.mxu0 %v3370
    %4301 = vmatmul.mubr.bf16.gmra.mrb[0].mxu0 %v3369
    %v4302 = vpop.f32.mrb[0].mxu0
    %v4303 = vadd.f32 0.0, %v4302
    %v4304 = vpop.f32.mrb[0].mxu0
    %v4305 = vadd.f32 0.0, %v4304
    %v4306 = vpop.f32.mrb[0].mxu0
    %v4307 = vadd.f32 0.0, %v4306
    %v4308 = vpop.f32.mrb[0].mxu0
    %v4309 = vadd.f32 0.0, %v4308
    %4310 = vdwg.mxu0
    %v4311 = vadd.f32 %v3252, %v4174
    %v4312 = vadd.f32 %v3253, %v4176
    %v4313 = vadd.f32 %v3254, %v4217
    %v4314 = vadd.f32 %v3255, %v4219
    %v4315 = vadd.f32 %v3256, %v4260
    %v4316 = vadd.f32 %v3257, %v4262
    %v4317 = vadd.f32 %v3258, %v4303
    %v4318 = vadd.f32 %v3259, %v4305
    %v4319 = vadd.f32 %v3260, %v4178
    %v4320 = vadd.f32 %v3261, %v4180
    %v4321 = vadd.f32 %v3262, %v4221
    %v4322 = vadd.f32 %v3263, %v4223
    %v4323 = vadd.f32 %v3264, %v4264
    %v4324 = vadd.f32 %v3265, %v4266
    %v4325 = vadd.f32 %v3266, %v4307
    %v4326 = vadd.f32 %v3267, %v4309
    %v4327 = vld [vmem:[#allocation10] sm:$0xff]
    %v4329 = vlaneseq
    %v4330 = vshrl.u32 %v4329, 7
    %v4331 = vsub.s32 0, %v4330
    %v4332 = vrot.slane %v4327, %v4331
    %v4333 = vlaneseq
    %v4334 = vshrl.u32 %v4333, 7
    %v4335 = vsub.s32 1, %v4334
    %v4336 = vrot.slane %v4327, %v4335
    %v4337 = vlaneseq
    %v4338 = vshrl.u32 %v4337, 7
    %v4339 = vsub.s32 2, %v4338
    %v4340 = vrot.slane %v4327, %v4339
    %v4341 = vlaneseq
    %v4342 = vshrl.u32 %v4341, 7
    %v4343 = vsub.s32 3, %v4342
    %v4344 = vrot.slane %v4327, %v4343
    %v4345 = vlaneseq
    %v4346 = vshrl.u32 %v4345, 7
    %v4347 = vsub.s32 4, %v4346
    %v4348 = vrot.slane %v4327, %v4347
    %v4349 = vlaneseq
    %v4350 = vshrl.u32 %v4349, 7
    %v4351 = vsub.s32 5, %v4350
    %v4352 = vrot.slane %v4327, %v4351
    %v4353 = vlaneseq
    %v4354 = vshrl.u32 %v4353, 7
    %v4355 = vsub.s32 6, %v4354
    %v4356 = vrot.slane %v4327, %v4355
    %v4357 = vlaneseq
    %v4358 = vshrl.u32 %v4357, 7
    %v4359 = vsub.s32 7, %v4358
    %v4360 = vrot.slane %v4327, %v4359
    %v4369 = vadd.f32 %v4311, %v4332
    %v4370 = vadd.f32 %v4312, %v4336
    %v4371 = vadd.f32 %v4313, %v4340
    %v4372 = vadd.f32 %v4314, %v4344
    %v4373 = vadd.f32 %v4315, %v4348
    %v4374 = vadd.f32 %v4316, %v4352
    %v4375 = vadd.f32 %v4317, %v4356
    %v4376 = vadd.f32 %v4318, %v4360
    %v4377 = vadd.f32 %v4319, %v4332
    %v4378 = vadd.f32 %v4320, %v4336
    %v4379 = vadd.f32 %v4321, %v4340
    %v4380 = vadd.f32 %v4322, %v4344
    %v4381 = vadd.f32 %v4323, %v4348
    %v4382 = vadd.f32 %v4324, %v4352
    %v4383 = vadd.f32 %v4325, %v4356
    %v4384 = vadd.f32 %v4326, %v4360
    %v4385 = vmax.f32 %v4369, 0.0
    %v4386 = vmax.f32 %v4370, 0.0
    %v4387 = vmax.f32 %v4371, 0.0
    %v4388 = vmax.f32 %v4372, 0.0
    %v4389 = vmax.f32 %v4373, 0.0
    %v4390 = vmax.f32 %v4374, 0.0
    %v4391 = vmax.f32 %v4375, 0.0
    %v4392 = vmax.f32 %v4376, 0.0
    %v4393 = vmax.f32 %v4377, 0.0
    %v4394 = vmax.f32 %v4378, 0.0
    %v4395 = vmax.f32 %v4379, 0.0
    %v4396 = vmax.f32 %v4380, 0.0
    %v4397 = vmax.f32 %v4381, 0.0
    %v4398 = vmax.f32 %v4382, 0.0
    %v4399 = vmax.f32 %v4383, 0.0
    %v4400 = vmax.f32 %v4384, 0.0
    %v4401 = vld [vmem:[#allocation11] sm:$0xff]
    %v4403 = vlaneseq
    %v4404 = vshrl.u32 %v4403, 7
    %v4405 = vsub.s32 0, %v4404
    %v4406 = vrot.slane %v4401, %v4405
    %v4407 = vlaneseq
    %v4408 = vshrl.u32 %v4407, 7
    %v4409 = vsub.s32 1, %v4408
    %v4410 = vrot.slane %v4401, %v4409
    %v4411 = vlaneseq
    %v4412 = vshrl.u32 %v4411, 7
    %v4413 = vsub.s32 2, %v4412
    %v4414 = vrot.slane %v4401, %v4413
    %v4415 = vlaneseq
    %v4416 = vshrl.u32 %v4415, 7
    %v4417 = vsub.s32 3, %v4416
    %v4418 = vrot.slane %v4401, %v4417
    %v4419 = vlaneseq
    %v4420 = vshrl.u32 %v4419, 7
    %v4421 = vsub.s32 4, %v4420
    %v4422 = vrot.slane %v4401, %v4421
    %v4423 = vlaneseq
    %v4424 = vshrl.u32 %v4423, 7
    %v4425 = vsub.s32 5, %v4424
    %v4426 = vrot.slane %v4401, %v4425
    %v4427 = vlaneseq
    %v4428 = vshrl.u32 %v4427, 7
    %v4429 = vsub.s32 6, %v4428
    %v4430 = vrot.slane %v4401, %v4429
    %v4431 = vlaneseq
    %v4432 = vshrl.u32 %v4431, 7
    %v4433 = vsub.s32 7, %v4432
    %v4434 = vrot.slane %v4401, %v4433
    %v4443 = vmul.f32 %v4385, %v4406
    %v4444 = vmul.f32 %v4386, %v4410
    %v4445 = vmul.f32 %v4387, %v4414
    %v4446 = vmul.f32 %v4388, %v4418
    %v4447 = vmul.f32 %v4389, %v4422
    %v4448 = vmul.f32 %v4390, %v4426
    %v4449 = vmul.f32 %v4391, %v4430
    %v4450 = vmul.f32 %v4392, %v4434
    %v4451 = vmul.f32 %v4393, %v4406
    %v4452 = vmul.f32 %v4394, %v4410
    %v4453 = vmul.f32 %v4395, %v4414
    %v4454 = vmul.f32 %v4396, %v4418
    %v4455 = vmul.f32 %v4397, %v4422
    %v4456 = vmul.f32 %v4398, %v4426
    %v4457 = vmul.f32 %v4399, %v4430
    %v4458 = vmul.f32 %v4400, %v4434
    %v4459 = vadd.f32 %v4443, %v4444
    %v4460 = vadd.f32 %v4451, %v4452
    %v4461 = vadd.f32 %v4459, %v4445
    %v4462 = vadd.f32 %v4460, %v4453
    %v4463 = vadd.f32 %v4461, %v4446
    %v4464 = vadd.f32 %v4462, %v4454
    %v4465 = vadd.f32 %v4463, %v4447
    %v4466 = vadd.f32 %v4464, %v4455
    %v4467 = vadd.f32 %v4465, %v4448
    %v4468 = vadd.f32 %v4466, %v4456
    %v4469 = vadd.f32 %v4467, %v4449
    %v4470 = vadd.f32 %v4468, %v4457
    %v4471 = vadd.f32 %v4469, %v4450
    %v4472 = vadd.f32 %v4470, %v4458
    %v4473 = vld [vmem:[#allocation13] sm:$0x1]
    %v4475 = vlaneseq
    %v4476 = vshrl.u32 %v4475, 7
    %v4477 = vsub.s32 0, %v4476
    %v4478 = vrot.slane %v4473, %v4477
    %v4480 = vmul.f32 %v114, %v4478
    %v4481 = vmul.f32 %v115, %v4478
    %v4482 = vsel %vm136, %v4480, 0.0
    %4483 = vadd.xlane.f32.xlu0 %v4482
    %v4484 = vpop.xlane.xlu0 %4483
    %v4485 = vsel %vm136, %v4481, 0.0
    %4486 = vadd.xlane.f32.xlu0 %v4485
    %v4487 = vpop.xlane.xlu0 %4486
    %v4488 = vlaneseq
    %v4489 = vand.u32 %v4488, 127
    %vm4490 = vcmp.eq.s32.totalorder %v4489, 0
    %v4491 = vsel %vm4490, %v4484, 0.0
    %v4492 = vsel %vm4490, %v4487, 0.0
    %v4493 = vadd.f32 %v4471, %v4491
    %v4494 = vadd.f32 %v4472, %v4492
    %4495 = vst [vmem:[#allocation14] sm:$0xff] %v4493
    %4496 = vst [vmem:[#allocation14 + $0x8] sm:$0xff] %v4494
    // Predicated region
    $region58: #{tpu_custom_call.1} parent=1 // pred_check
      _
    $region59: #{tpu_custom_call.1} parent=1 // pred_check_branch
      %4498 = sbr.rel (0) target = $region61
    $region60: #{tpu_custom_call.1} parent=1 // pred_region
      %s4500 = ssub.s32 256, 256
      %4501 = vsyncadd [#allocation4], %s4500
      %s4502 = sshll.u32 [#allocation14], 4
      %s4503 = int_to_ptr.vmem [resolvable:$true] %s4502
      %4508 = dma.vmem_to_hbm [thread:$0]  %s4503, 256, %s7, [#allocation4], 128, 128, 8
    $region61: #{tpu_custom_call.1} parent=1 // pred_fallthru
      _
    // Predicated region
    $region62: #{tpu_custom_call.1} parent=1 // pred_check
      _
    $region63: #{tpu_custom_call.1} parent=1 // pred_check_branch
      %4510 = sbr.rel (0) target = $region65
    $region64: #{tpu_custom_call.1} parent=1 // pred_region
      %4511 = dma.done [#allocation4], 256
    $region65: #{tpu_custom_call.1} parent=1 // pred_fallthru
      _
    %4512 = vsyncpa [#allocation3], 1
    %4513 = vsyncpa [#allocation6], 1
    %4514 = vsyncpa [#allocation9], 1
    %4515 = vsyncpa [#allocation12], 1
    %4516 = vsyncpa [#allocation4], 1

// kernel: tpu_custom_call.1
$region0: #{tpu_custom_call.1}
  #allocation0 [shape = 'u32[]', space=smem, size = 0x4, offset = 0x4, fixed_abs, tag = 'smem constant byte address 0x4 - core index']
  #allocation1 [shape = 'u32[144,128]{1,0:T(1,128)}', space=vmem, size = 0x12000, scoped, tag = 'internal scratch']
  %s0 = inlined_call_operand.hbm [shape: f32[16,32], index: 0, kind: input, shape index: {}]
  %s1 = inlined_call_operand.hbm [shape: f32[32,1024], index: 1, kind: input, shape index: {}]
  %s2 = inlined_call_operand.hbm [shape: f32[1,1024], index: 2, kind: input, shape index: {}]
  %s3 = inlined_call_operand.hbm [shape: bf16[1024,1024], index: 3, kind: input, shape index: {}]
  %s4 = inlined_call_operand.hbm [shape: f32[1,1024], index: 4, kind: input, shape index: {}]
  %s5 = inlined_call_operand.hbm [shape: f32[1,1024], index: 5, kind: input, shape index: {}]
  %s6 = inlined_call_operand.hbm [shape: f32[1,32], index: 6, kind: input, shape index: {}]
  %s7 = inlined_call_operand.hbm [shape: f32[16,128], index: 7, kind: output, shape index: {}]
  %s8 = sld [smem:[#allocation0]]
  $region66: #{tpu_custom_call.1} parent=0
    _
  %s10 = ssub.s32 1, %s8
  %s11 = scalar_select 0, %s10, %s8
  $region1: #{tpu_custom_call.1} parent=0
    #allocation2 [shape = 'u8[8192]{0}', space=vmem, size = 0x2000, scoped, tag = 'input window, operand 0, single buffered']
    #allocation3 [shape = 's32[1]{0}', space=sflag, size = 0x4, scoped, tag = 'scoped memory for tpu_custom_call.1']
    #allocation4 [shape = 's32[1]{0}', space=sflag, size = 0x4, scoped, tag = 'scoped memory for tpu_custom_call.1']
    #allocation5 [shape = 'u8[131072]{0}', space=vmem, size = 0x20000, scoped, tag = 'input window, operand 1, single buffered']
    #allocation6 [shape = 's32[1]{0}', space=sflag, size = 0x4, scoped, tag = 'scoped memory for tpu_custom_call.1']
    #allocation7 [shape = 'u8[4096]{0}', space=vmem, size = 0x1000, scoped, tag = 'input window, operand 2, single buffered']
    #allocation8 [shape = 'u8[2097152]{0}', space=vmem, size = 0x200000, scoped, tag = 'input window, operand 3, single buffered']
    #allocation9 [shape = 's32[1]{0}', space=sflag, size = 0x4, scoped, tag = 'scoped memory for tpu_custom_call.1']
    #allocation10 [shape = 'u8[4096]{0}', space=vmem, size = 0x1000, scoped, tag = 'input window, operand 4, single buffered']
    #allocation11 [shape = 'u8[4096]{0}', space=vmem, size = 0x1000, scoped, tag = 'input window, operand 5, single buffered']
    #allocation12 [shape = 's32[1]{0}', space=sflag, size = 0x4, scoped, tag = 'scoped memory for tpu_custom_call.1']
    #allocation13 [shape = 'u8[512]{0}', space=vmem, size = 0x400, scoped, tag = 'input window, operand 6, single buffered']
    #allocation14 [shape = 'u8[8192]{0}', space=vmem, size = 0x2000, scoped, tag = 'output window, operand 0, single buffered']
    %12 = vsyncpa [#allocation3], 0
    %13 = vsyncpa [#allocation6], 0
    %14 = vsyncpa [#allocation9], 0
    %15 = vsyncpa [#allocation12], 0
    %16 = vsyncpa [#allocation4], 0
    // Predicated region
    $region2: #{tpu_custom_call.1} parent=1 // pred_check
      _
    $region3: #{tpu_custom_call.1} parent=1 // pred_check_branch
      %18 = sbr.rel (0) target = $region5
    $region4: #{tpu_custom_call.1} parent=1 // pred_region
      %s20 = ssub.s32 256, 256
      %21 = vsyncadd [#allocation3], %s20
      %s22 = sshll.u32 [#allocation2], 4
      %s23 = int_to_ptr.vmem [resolvable:$true] %s22
      %28 = dma.hbm_to_vmem [thread:$0]  %s0, 256, %s23, [#allocation3], 128, 128, 8
    $region5: #{tpu_custom_call.1} parent=1 // pred_fallthru
      _
    // Predicated region
    $region6: #{tpu_custom_call.1} parent=1 // pred_check
      _
    $region7: #{tpu_custom_call.1} parent=1 // pred_check_branch
      %30 = sbr.rel (0) target = $region9
    $region8: #{tpu_custom_call.1} parent=1 // pred_region
      %s32 = ssub.s32 4096, 4096
      %33 = vsyncadd [#allocation6], %s32
      %s34 = sshll.u32 [#allocation5], 4
      %s35 = int_to_ptr.vmem [resolvable:$true] %s34
      %40 = dma.hbm_to_vmem [thread:$0]  %s1, 4096, %s35, [#allocation6], 1024, 1024, 64
    $region9: #{tpu_custom_call.1} parent=1 // pred_fallthru
      _
    // Predicated region
    $region10: #{tpu_custom_call.1} parent=1 // pred_check
      _
    $region11: #{tpu_custom_call.1} parent=1 // pred_check_branch
      %42 = sbr.rel (0) target = $region13
    $region12: #{tpu_custom_call.1} parent=1 // pred_region
      %s44 = ssub.s32 128, 128
      %45 = vsyncadd [#allocation6], %s44
      %s47 = sshll.u32 [#allocation7], 4
      %s48 = int_to_ptr.vmem [resolvable:$true] %s47
      %50 = dma.hbm_to_vmem [thread:$0]  %s2, 128, %s48, [#allocation6]
    $region13: #{tpu_custom_call.1} parent=1 // pred_fallthru
      _
    // Predicated region
    $region14: #{tpu_custom_call.1} parent=1 // pred_check
      _
    $region15: #{tpu_custom_call.1} parent=1 // pred_check_branch
      %52 = sbr.rel (0) target = $region17
    $region16: #{tpu_custom_call.1} parent=1 // pred_region
      %s54 = ssub.s32 65536, 65536
      %55 = vsyncadd [#allocation9], %s54
      %s56 = sshll.u32 [#allocation8], 4
      %s57 = int_to_ptr.vmem [resolvable:$true] %s56
      %62 = dma.hbm_to_vmem [thread:$0]  %s3, 65536, %s57, [#allocation9], 512, 512, 32
    $region17: #{tpu_custom_call.1} parent=1 // pred_fallthru
      _
    // Predicated region
    $region18: #{tpu_custom_call.1} parent=1 // pred_check
      _
    $region19: #{tpu_custom_call.1} parent=1 // pred_check_branch
      %64 = sbr.rel (0) target = $region21
    $region20: #{tpu_custom_call.1} parent=1 // pred_region
      %s66 = ssub.s32 128, 128
      %67 = vsyncadd [#allocation9], %s66
      %s69 = sshll.u32 [#allocation10], 4
      %s70 = int_to_ptr.vmem [resolvable:$true] %s69
      %72 = dma.hbm_to_vmem [thread:$0]  %s4, 128, %s70, [#allocation9]
    $region21: #{tpu_custom_call.1} parent=1 // pred_fallthru
      _
    // Predicated region
    $region22: #{tpu_custom_call.1} parent=1 // pred_check
      _
    $region23: #{tpu_custom_call.1} parent=1 // pred_check_branch
      %74 = sbr.rel (0) target = $region25
    $region24: #{tpu_custom_call.1} parent=1 // pred_region
      %s76 = ssub.s32 128, 128
      %77 = vsyncadd [#allocation12], %s76
      %s79 = sshll.u32 [#allocation11], 4
      %s80 = int_to_ptr.vmem [resolvable:$true] %s79
      %82 = dma.hbm_to_vmem [thread:$0]  %s5, 128, %s80, [#allocation12]
    $region25: #{tpu_custom_call.1} parent=1 // pred_fallthru
      _
    // Predicated region
    $region26: #{tpu_custom_call.1} parent=1 // pred_check
      _
    $region27: #{tpu_custom_call.1} parent=1 // pred_check_branch
      %84 = sbr.rel (0) target = $region29
    $region28: #{tpu_custom_call.1} parent=1 // pred_region
      %s86 = ssub.s32 16, 16
      %87 = vsyncadd [#allocation12], %s86
      %s89 = sshll.u32 [#allocation13], 4
      %s90 = int_to_ptr.vmem [resolvable:$true] %s89
      %92 = dma.hbm_to_vmem [thread:$0]  %s6, 16, %s90, [#allocation12]
    $region29: #{tpu_custom_call.1} parent=1 // pred_fallthru
      _
    // Predicated region
    $region30: #{tpu_custom_call.1} parent=1 // pred_check
      _
    $region31: #{tpu_custom_call.1} parent=1 // pred_check_branch
      %94 = sbr.rel (0) target = $region33
    $region32: #{tpu_custom_call.1} parent=1 // pred_region
      %95 = dma.done [#allocation3], 256
    $region33: #{tpu_custom_call.1} parent=1 // pred_fallthru
      _
    // Predicated region
    $region34: #{tpu_custom_call.1} parent=1 // pred_check
      _
    $region35: #{tpu_custom_call.1} parent=1 // pred_check_branch
      %97 = sbr.rel (0) target = $region37
    $region36: #{tpu_custom_call.1} parent=1 // pred_region
      %98 = dma.done [#allocation6], 4096
    $region37: #{tpu_custom_call.1} parent=1 // pred_fallthru
      _
    // Predicated region
    $region38: #{tpu_custom_call.1} parent=1 // pred_check
      _
    $region39: #{tpu_custom_call.1} parent=1 // pred_check_branch
      %100 = sbr.rel (0) target = $region41
    $region40: #{tpu_custom_call.1} parent=1 // pred_region
      %101 = dma.done [#allocation6], 128
    $region41: #{tpu_custom_call.1} parent=1 // pred_fallthru
      _
    // Predicated region
    $region42: #{tpu_custom_call.1} parent=1 // pred_check
      _
    $region43: #{tpu_custom_call.1} parent=1 // pred_check_branch
      %103 = sbr.rel (0) target = $region45
    $region44: #{tpu_custom_call.1} parent=1 // pred_region
      %104 = dma.done [#allocation9], 65536
    $region45: #{tpu_custom_call.1} parent=1 // pred_fallthru
      _
    // Predicated region
    $region46: #{tpu_custom_call.1} parent=1 // pred_check
      _
    $region47: #{tpu_custom_call.1} parent=1 // pred_check_branch
      %106 = sbr.rel (0) target = $region49
    $region48: #{tpu_custom_call.1} parent=1 // pred_region
      %107 = dma.done [#allocation9], 128
    $region49: #{tpu_custom_call.1} parent=1 // pred_fallthru
      _
    // Predicated region
    $region50: #{tpu_custom_call.1} parent=1 // pred_check
      _
    $region51: #{tpu_custom_call.1} parent=1 // pred_check_branch
      %109 = sbr.rel (0) target = $region53
    $region52: #{tpu_custom_call.1} parent=1 // pred_region
      %110 = dma.done [#allocation12], 128
    $region53: #{tpu_custom_call.1} parent=1 // pred_fallthru
      _
    // Predicated region
    $region54: #{tpu_custom_call.1} parent=1 // pred_check
      _
    $region55: #{tpu_custom_call.1} parent=1 // pred_check_branch
      %112 = sbr.rel (0) target = $region57
    $region56: #{tpu_custom_call.1} parent=1 // pred_region
      %113 = dma.done [#allocation12], 16
    $region57: #{tpu_custom_call.1} parent=1 // pred_fallthru
      _
    %v114 = vld [vmem:[#allocation2] sm:$0xff]
    %v115 = vld [vmem:[#allocation2 + $0x8] sm:$0xff]
    %v116 = vld [vmem:[#allocation5] sm:$0xff]
    %v117 = vld [vmem:[#allocation5 + $0x8] sm:$0xff]
    %v118 = vld [vmem:[#allocation5 + $0x40] sm:$0xff]
    %v119 = vld [vmem:[#allocation5 + $0x48] sm:$0xff]
    %v120 = vld [vmem:[#allocation5 + $0x80] sm:$0xff]
    %v121 = vld [vmem:[#allocation5 + $0x88] sm:$0xff]
    %v122 = vld [vmem:[#allocation5 + $0xc0] sm:$0xff]
    %v123 = vld [vmem:[#allocation5 + $0xc8] sm:$0xff]
    %v124 = vld [vmem:[#allocation7] sm:$0x3]
    %v126 = vlaneseq
    %v127 = vshrl.u32 %v126, 7
    %v128 = vsub.s32 0, %v127
    %v129 = vrot.slane %v124, %v128
    %v130 = vlaneseq
    %v131 = vshrl.u32 %v130, 7
    %v132 = vsub.s32 1, %v131
    %v133 = vrot.slane %v124, %v132
    %vm136 = vcmask 261120
    %v138 = vsel %vm136, %v114, 0
    %v141 = vsel %vm136, %v115, 0
    %143 = vmatprep.subr.mxu0 %v117
    %144 = vmatpush1.msra.mxu0 %v116
    %145 = vmatprep.subr.mxu0 %v119
    %146 = vmatpush1.msra.mxu0 %v118
    %147 = vmatprep.subr.mxu0 %v121
    %148 = vmatpush1.msra.mxu0 %v120
    %149 = vmatprep.subr.mxu0 %v123
    %150 = vmatpush1.msra.mxu0 %v122
    %151 = vmatprep.subr.mxu0 0.0
    %152 = vmatpush1.msra.mxu0 0.0
    %153 = vmatprep.subr.mxu0 0.0
    %154 = vmatpush1.msra.mxu0 0.0
    %155 = vmatprep.subr.mxu0 0.0
    %156 = vmatpush1.msra.mxu0 0.0
    %157 = vmatprep.subr.mxu0 0.0
    %158 = vmatpush1.msra.mxu0 0.0
    %159 = vmatprep.subr.mxu0 0.0
    %160 = vmatpush1.msra.mxu0 0.0
    %161 = vmatprep.subr.mxu0 0.0
    %162 = vmatpush1.msra.mxu0 0.0
    %163 = vmatprep.subr.mxu0 0.0
    %164 = vmatpush1.msra.mxu0 0.0
    %165 = vmatprep.subr.mxu0 0.0
    %166 = vmatpush1.msra.mxu0 0.0
    %167 = vmatprep.subr.mxu0 0.0
    %168 = vmatpush1.msra.mxu0 0.0
    %169 = vmatprep.subr.mxu0 0.0
    %170 = vmatpush1.msra.mxu0 0.0
    %171 = vmatprep.subr.mxu0 0.0
    %172 = vmatpush1.msra.mxu0 0.0
    %173 = vmatprep.subr.mxu0 0.0
    %174 = vmatpush1.msra.mxu0 0.0
    %175 = vmatprep.subr.mxu0 0.0
    %176 = vmatpush1.msra.mxu0 0.0
    %177 = vmatprep.subr.mxu0 0.0
    %178 = vmatpush1.msra.mxu0 0.0
    %179 = vmatprep.subr.mxu0 0.0
    %180 = vmatpush1.msra.mxu0 0.0
    %181 = vmatprep.subr.mxu0 0.0
    %182 = vmatpush1.msra.mxu0 0.0
    %183 = vmatprep.subr.mxu0 0.0
    %184 = vmatpush1.msra.mxu0 0.0
    %185 = vmatprep.subr.mxu0 0.0
    %186 = vmatpush1.msra.mxu0 0.0
    %187 = vmatprep.subr.mxu0 0.0
    %188 = vmatpush1.msra.mxu0 0.0
    %189 = vmatprep.subr.mxu0 0.0
    %190 = vmatpush1.msra.mxu0 0.0
    %191 = vmatprep.subr.mxu0 0.0
    %192 = vmatpush1.msra.mxu0 0.0
    %193 = vmatprep.subr.mxu0 0.0
    %194 = vmatpush1.msra.mxu0 0.0
    %195 = vmatprep.subr.mxu0 0.0
    %196 = vmatpush1.msra.mxu0 0.0
    %197 = vmatprep.subr.mxu0 0.0
    %198 = vmatpush1.msra.mxu0 0.0
    %199 = vmatprep.subr.mxu0 0.0
    %200 = vmatpush1.msra.mxu0 0.0
    %201 = vmatprep.subr.mxu0 0.0
    %202 = vmatpush1.msra.mxu0 0.0
    %203 = vmatprep.subr.mxu0 0.0
    %204 = vmatpush1.msra.mxu0 0.0
    %205 = vmatprep.subr.mxu0 0.0
    %206 = vmatpush1.msra.mxu0 0.0
    %207 = vmatprep.mubr.f32.mxu0 0.0
    %208 = vmatmul.mubr.f32.gmra.mrb[0].mxu0 %v138
    %v209 = vpop.f32.mrb[0].mxu0
    %v210 = vadd.f32 %v129, %v209
    %v211 = vpop.f32.mrb[0].mxu0
    %v212 = vadd.f32 %v133, %v211
    %213 = vmatprep.mubr.f32.mxu0 0.0
    %214 = vmatmul.mubr.f32.gmra.mrb[0].mxu0 %v141
    %v215 = vpop.f32.mrb[0].mxu0
    %v216 = vadd.f32 %v129, %v215
    %v217 = vpop.f32.mrb[0].mxu0
    %v218 = vadd.f32 %v133, %v217
    %219 = vdwg.mxu0
    %v220 = vmax.f32 %v210, 0.0
    %v221 = vmax.f32 %v212, 0.0
    %v222 = vmax.f32 %v216, 0.0
    %v223 = vmax.f32 %v218, 0.0
    %v224 = vpack.c.bf16 %v222, %v220
    %v225 = vpack.c.bf16 %v223, %v221
    %v226 = vld [vmem:[#allocation8] sm:$0xff]
    %v227 = vld [vmem:[#allocation8 + $0x8] sm:$0xff]
    %v228 = vld [vmem:[#allocation8 + $0x10] sm:$0xff]
    %v229 = vld [vmem:[#allocation8 + $0x18] sm:$0xff]
    %v230 = vld [vmem:[#allocation8 + $0x20] sm:$0xff]
    %v231 = vld [vmem:[#allocation8 + $0x28] sm:$0xff]
    %v232 = vld [vmem:[#allocation8 + $0x30] sm:$0xff]
    %v233 = vld [vmem:[#allocation8 + $0x38] sm:$0xff]
    %v234 = vld [vmem:[#allocation8 + $0x40] sm:$0xff]
    %v235 = vld [vmem:[#allocation8 + $0x48] sm:$0xff]
    %v236 = vld [vmem:[#allocation8 + $0x50] sm:$0xff]
    %v237 = vld [vmem:[#allocation8 + $0x58] sm:$0xff]
    %v238 = vld [vmem:[#allocation8 + $0x60] sm:$0xff]
    %v239 = vld [vmem:[#allocation8 + $0x68] sm:$0xff]
    %v240 = vld [vmem:[#allocation8 + $0x70] sm:$0xff]
    %v241 = vld [vmem:[#allocation8 + $0x78] sm:$0xff]
    %v242 = vld [vmem:[#allocation8 + $0x80] sm:$0xff]
    %v243 = vld [vmem:[#allocation8 + $0x88] sm:$0xff]
    %v244 = vld [vmem:[#allocation8 + $0x90] sm:$0xff]
    %v245 = vld [vmem:[#allocation8 + $0x98] sm:$0xff]
    %v246 = vld [vmem:[#allocation8 + $0xa0] sm:$0xff]
    %v247 = vld [vmem:[#allocation8 + $0xa8] sm:$0xff]
    %v248 = vld [vmem:[#allocation8 + $0xb0] sm:$0xff]
    %v249 = vld [vmem:[#allocation8 + $0xb8] sm:$0xff]
    %v250 = vld [vmem:[#allocation8 + $0xc0] sm:$0xff]
    %v251 = vld [vmem:[#allocation8 + $0xc8] sm:$0xff]
    %v252 = vld [vmem:[#allocation8 + $0xd0] sm:$0xff]
    %v253 = vld [vmem:[#allocation8 + $0xd8] sm:$0xff]
    %v254 = vld [vmem:[#allocation8 + $0xe0] sm:$0xff]
    %v255 = vld [vmem:[#allocation8 + $0xe8] sm:$0xff]
    %v256 = vld [vmem:[#allocation8 + $0xf0] sm:$0xff]
    %v257 = vld [vmem:[#allocation8 + $0xf8] sm:$0xff]
    %v258 = vld [vmem:[#allocation8 + $0x100] sm:$0xff]
    %v259 = vld [vmem:[#allocation8 + $0x108] sm:$0xff]
    %v260 = vld [vmem:[#allocation8 + $0x110] sm:$0xff]
    %v261 = vld [vmem:[#allocation8 + $0x118] sm:$0xff]
    %v262 = vld [vmem:[#allocation8 + $0x120] sm:$0xff]
    %v263 = vld [vmem:[#allocation8 + $0x128] sm:$0xff]
    %v264 = vld [vmem:[#allocation8 + $0x130] sm:$0xff]
    %v265 = vld [vmem:[#allocation8 + $0x138] sm:$0xff]
    %v266 = vld [vmem:[#allocation8 + $0x140] sm:$0xff]
    %v267 = vld [vmem:[#allocation8 + $0x148] sm:$0xff]
    %v268 = vld [vmem:[#allocation8 + $0x150] sm:$0xff]
    %v269 = vld [vmem:[#allocation8 + $0x158] sm:$0xff]
    %v270 = vld [vmem:[#allocation8 + $0x160] sm:$0xff]
    %v271 = vld [vmem:[#allocation8 + $0x168] sm:$0xff]
    %v272 = vld [vmem:[#allocation8 + $0x170] sm:$0xff]
    %v273 = vld [vmem:[#allocation8 + $0x178] sm:$0xff]
    %v274 = vld [vmem:[#allocation8 + $0x180] sm:$0xff]
    %v275 = vld [vmem:[#allocation8 + $0x188] sm:$0xff]
    %v276 = vld [vmem:[#allocation8 + $0x190] sm:$0xff]
    %v277 = vld [vmem:[#allocation8 + $0x198] sm:$0xff]
    %v278 = vld [vmem:[#allocation8 + $0x1a0] sm:$0xff]
    %v279 = vld [vmem:[#allocation8 + $0x1a8] sm:$0xff]
    %v280 = vld [vmem:[#allocation8 + $0x1b0] sm:$0xff]
    %v281 = vld [vmem:[#allocation8 + $0x1b8] sm:$0xff]
    %v282 = vld [vmem:[#allocation8 + $0x1c0] sm:$0xff]
    %v283 = vld [vmem:[#allocation8 + $0x1c8] sm:$0xff]
    %v284 = vld [vmem:[#allocation8 + $0x1d0] sm:$0xff]
    %v285 = vld [vmem:[#allocation8 + $0x1d8] sm:$0xff]
    %v286 = vld [vmem:[#allocation8 + $0x1e0] sm:$0xff]
    %v287 = vld [vmem:[#allocation8 + $0x1e8] sm:$0xff]
    %v288 = vld [vmem:[#allocation8 + $0x1f0] sm:$0xff]
    %v289 = vld [vmem:[#allocation8 + $0x1f8] sm:$0xff]
    %v290 = vld [vmem:[#allocation8 + $0x200] sm:$0xff]
    %v291 = vld [vmem:[#allocation8 + $0x208] sm:$0xff]
    %v292 = vld [vmem:[#allocation8 + $0x210] sm:$0xff]
    %v293 = vld [vmem:[#allocation8 + $0x218] sm:$0xff]
    %v294 = vld [vmem:[#allocation8 + $0x220] sm:$0xff]
    %v295 = vld [vmem:[#allocation8 + $0x228] sm:$0xff]
    %v296 = vld [vmem:[#allocation8 + $0x230] sm:$0xff]
    %v297 = vld [vmem:[#allocation8 + $0x238] sm:$0xff]
    %v298 = vld [vmem:[#allocation8 + $0x240] sm:$0xff]
    %v299 = vld [vmem:[#allocation8 + $0x248] sm:$0xff]
    %v300 = vld [vmem:[#allocation8 + $0x250] sm:$0xff]
    %v301 = vld [vmem:[#allocation8 + $0x258] sm:$0xff]
    %v302 = vld [vmem:[#allocation8 + $0x260] sm:$0xff]
    %v303 = vld [vmem:[#allocation8 + $0x268] sm:$0xff]
    %v304 = vld [vmem:[#allocation8 + $0x270] sm:$0xff]
    %v305 = vld [vmem:[#allocation8 + $0x278] sm:$0xff]
    %v306 = vld [vmem:[#allocation8 + $0x280] sm:$0xff]
    %v307 = vld [vmem:[#allocation8 + $0x288] sm:$0xff]
    %v308 = vld [vmem:[#allocation8 + $0x290] sm:$0xff]
    %v309 = vld [vmem:[#allocation8 + $0x298] sm:$0xff]
    %v310 = vld [vmem:[#allocation8 + $0x2a0] sm:$0xff]
    %v311 = vld [vmem:[#allocation8 + $0x2a8] sm:$0xff]
    %v312 = vld [vmem:[#allocation8 + $0x2b0] sm:$0xff]
    %v313 = vld [vmem:[#allocation8 + $0x2b8] sm:$0xff]
    %v314 = vld [vmem:[#allocation8 + $0x2c0] sm:$0xff]
    %v315 = vld [vmem:[#allocation8 + $0x2c8] sm:$0xff]
    %v316 = vld [vmem:[#allocation8 + $0x2d0] sm:$0xff]
    %v317 = vld [vmem:[#allocation8 + $0x2d8] sm:$0xff]
    %v318 = vld [vmem:[#allocation8 + $0x2e0] sm:$0xff]
    %v319 = vld [vmem:[#allocation8 + $0x2e8] sm:$0xff]
    %v320 = vld [vmem:[#allocation8 + $0x2f0] sm:$0xff]
    %v321 = vld [vmem:[#allocation8 + $0x2f8] sm:$0xff]
    %v322 = vld [vmem:[#allocation8 + $0x300] sm:$0xff]
    %v323 = vld [vmem:[#allocation8 + $0x308] sm:$0xff]
    %v324 = vld [vmem:[#allocation8 + $0x310] sm:$0xff]
    %v325 = vld [vmem:[#allocation8 + $0x318] sm:$0xff]
    %v326 = vld [vmem:[#allocation8 + $0x320] sm:$0xff]
    %v327 = vld [vmem:[#allocation8 + $0x328] sm:$0xff]
    %v328 = vld [vmem:[#allocation8 + $0x330] sm:$0xff]
    %v329 = vld [vmem:[#allocation8 + $0x338] sm:$0xff]
    %v330 = vld [vmem:[#allocation8 + $0x340] sm:$0xff]
    %v331 = vld [vmem:[#allocation8 + $0x348] sm:$0xff]
    %v332 = vld [vmem:[#allocation8 + $0x350] sm:$0xff]
    %v333 = vld [vmem:[#allocation8 + $0x358] sm:$0xff]
    %v334 = vld [vmem:[#allocation8 + $0x360] sm:$0xff]
    %v335 = vld [vmem:[#allocation8 + $0x368] sm:$0xff]
    %v336 = vld [vmem:[#allocation8 + $0x370] sm:$0xff]
    %v337 = vld [vmem:[#allocation8 + $0x378] sm:$0xff]
    %v338 = vld [vmem:[#allocation8 + $0x380] sm:$0xff]
    %v339 = vld [vmem:[#allocation8 + $0x388] sm:$0xff]
    %v340 = vld [vmem:[#allocation8 + $0x390] sm:$0xff]
    %v341 = vld [vmem:[#allocation8 + $0x398] sm:$0xff]
    %v342 = vld [vmem:[#allocation8 + $0x3a0] sm:$0xff]
    %v343 = vld [vmem:[#allocation8 + $0x3a8] sm:$0xff]
    %v344 = vld [vmem:[#allocation8 + $0x3b0] sm:$0xff]
    %v345 = vld [vmem:[#allocation8 + $0x3b8] sm:$0xff]
    %v346 = vld [vmem:[#allocation8 + $0x3c0] sm:$0xff]
    %v347 = vld [vmem:[#allocation8 + $0x3c8] sm:$0xff]
    %v348 = vld [vmem:[#allocation8 + $0x3d0] sm:$0xff]
    %v349 = vld [vmem:[#allocation8 + $0x3d8] sm:$0xff]
    %v350 = vld [vmem:[#allocation8 + $0x3e0] sm:$0xff]
    %v351 = vld [vmem:[#allocation8 + $0x3e8] sm:$0xff]
    %v352 = vld [vmem:[#allocation8 + $0x3f0] sm:$0xff]
    %v353 = vld [vmem:[#allocation8 + $0x3f8] sm:$0xff]
    %v354 = vld [vmem:[#allocation5 + $0x10] sm:$0xff]
    %v355 = vld [vmem:[#allocation5 + $0x18] sm:$0xff]
    %v356 = vld [vmem:[#allocation5 + $0x50] sm:$0xff]
    %v357 = vld [vmem:[#allocation5 + $0x58] sm:$0xff]
    %v358 = vld [vmem:[#allocation5 + $0x90] sm:$0xff]
    %v359 = vld [vmem:[#allocation5 + $0x98] sm:$0xff]
    %v360 = vld [vmem:[#allocation5 + $0xd0] sm:$0xff]
    %v361 = vld [vmem:[#allocation5 + $0xd8] sm:$0xff]
    %v362 = vld [vmem:[#allocation7 + $0x2] sm:$0x3]
    %v364 = vlaneseq
    %v365 = vshrl.u32 %v364, 7
    %v366 = vsub.s32 0, %v365
    %v367 = vrot.slane %v362, %v366
    %v368 = vlaneseq
    %v369 = vshrl.u32 %v368, 7
    %v370 = vsub.s32 1, %v369
    %v371 = vrot.slane %v362, %v370
    %374 = vmatprep.subr.mxu0 %v355
    %375 = vmatpush1.msra.mxu0 %v354
    %376 = vmatprep.subr.mxu0 %v357
    %377 = vmatpush1.msra.mxu0 %v356
    %378 = vmatprep.subr.mxu0 %v359
    %379 = vmatpush1.msra.mxu0 %v358
    %380 = vmatprep.subr.mxu0 %v361
    %381 = vmatpush1.msra.mxu0 %v360
    %382 = vmatprep.subr.mxu0 0.0
    %383 = vmatpush1.msra.mxu0 0.0
    %384 = vmatprep.subr.mxu0 0.0
    %385 = vmatpush1.msra.mxu0 0.0
    %386 = vmatprep.subr.mxu0 0.0
    %387 = vmatpush1.msra.mxu0 0.0
    %388 = vmatprep.subr.mxu0 0.0
    %389 = vmatpush1.msra.mxu0 0.0
    %390 = vmatprep.subr.mxu0 0.0
    %391 = vmatpush1.msra.mxu0 0.0
    %392 = vmatprep.subr.mxu0 0.0
    %393 = vmatpush1.msra.mxu0 0.0
    %394 = vmatprep.subr.mxu0 0.0
    %395 = vmatpush1.msra.mxu0 0.0
    %396 = vmatprep.subr.mxu0 0.0
    %397 = vmatpush1.msra.mxu0 0.0
    %398 = vmatprep.subr.mxu0 0.0
    %399 = vmatpush1.msra.mxu0 0.0
    %400 = vmatprep.subr.mxu0 0.0
    %401 = vmatpush1.msra.mxu0 0.0
    %402 = vmatprep.subr.mxu0 0.0
    %403 = vmatpush1.msra.mxu0 0.0
    %404 = vmatprep.subr.mxu0 0.0
    %405 = vmatpush1.msra.mxu0 0.0
    %406 = vmatprep.subr.mxu0 0.0
    %407 = vmatpush1.msra.mxu0 0.0
    %408 = vmatprep.subr.mxu0 0.0
    %409 = vmatpush1.msra.mxu0 0.0
    %410 = vmatprep.subr.mxu0 0.0
    %411 = vmatpush1.msra.mxu0 0.0
    %412 = vmatprep.subr.mxu0 0.0
    %413 = vmatpush1.msra.mxu0 0.0
    %414 = vmatprep.subr.mxu0 0.0
    %415 = vmatpush1.msra.mxu0 0.0
    %416 = vmatprep.subr.mxu0 0.0
    %417 = vmatpush1.msra.mxu0 0.0
    %418 = vmatprep.subr.mxu0 0.0
    %419 = vmatpush1.msra.mxu0 0.0
    %420 = vmatprep.subr.mxu0 0.0
    %421 = vmatpush1.msra.mxu0 0.0
    %422 = vmatprep.subr.mxu0 0.0
    %423 = vmatpush1.msra.mxu0 0.0
    %424 = vmatprep.subr.mxu0 0.0
    %425 = vmatpush1.msra.mxu0 0.0
    %426 = vmatprep.subr.mxu0 0.0
    %427 = vmatpush1.msra.mxu0 0.0
    %428 = vmatprep.subr.mxu0 0.0
    %429 = vmatpush1.msra.mxu0 0.0
    %430 = vmatprep.subr.mxu0 0.0
    %431 = vmatpush1.msra.mxu0 0.0
    %432 = vmatprep.subr.mxu0 0.0
    %433 = vmatpush1.msra.mxu0 0.0
    %434 = vmatprep.subr.mxu0 0.0
    %435 = vmatpush1.msra.mxu0 0.0
    %436 = vmatprep.subr.mxu0 0.0
    %437 = vmatpush1.msra.mxu0 0.0
    %438 = vmatprep.mubr.f32.mxu0 0.0
    %439 = vmatmul.mubr.f32.gmra.mrb[0].mxu0 %v138
    %v440 = vpop.f32.mrb[0].mxu0
    %v441 = vadd.f32 %v367, %v440
    %v442 = vpop.f32.mrb[0].mxu0
    %v443 = vadd.f32 %v371, %v442
    %444 = vmatprep.mubr.f32.mxu0 0.0
    %445 = vmatmul.mubr.f32.gmra.mrb[0].mxu0 %v141
    %v446 = vpop.f32.mrb[0].mxu0
    %v447 = vadd.f32 %v367, %v446
    %v448 = vpop.f32.mrb[0].mxu0
    %v449 = vadd.f32 %v371, %v448
    %450 = vdwg.mxu0
    %v451 = vmax.f32 %v441, 0.0
    %v452 = vmax.f32 %v443, 0.0
    %v453 = vmax.f32 %v447, 0.0
    %v454 = vmax.f32 %v449, 0.0
    %v455 = vpack.c.bf16 %v453, %v451
    %v456 = vpack.c.bf16 %v454, %v452
    %v457 = vld [vmem:[#allocation8 + $0x400] sm:$0xff]
    %v458 = vld [vmem:[#allocation8 + $0x408] sm:$0xff]
    %v459 = vld [vmem:[#allocation8 + $0x410] sm:$0xff]
    %v460 = vld [vmem:[#allocation8 + $0x418] sm:$0xff]
    %v461 = vld [vmem:[#allocation8 + $0x420] sm:$0xff]
    %v462 = vld [vmem:[#allocation8 + $0x428] sm:$0xff]
    %v463 = vld [vmem:[#allocation8 + $0x430] sm:$0xff]
    %v464 = vld [vmem:[#allocation8 + $0x438] sm:$0xff]
    %v465 = vld [vmem:[#allocation8 + $0x440] sm:$0xff]
    %v466 = vld [vmem:[#allocation8 + $0x448] sm:$0xff]
    %v467 = vld [vmem:[#allocation8 + $0x450] sm:$0xff]
    %v468 = vld [vmem:[#allocation8 + $0x458] sm:$0xff]
    %v469 = vld [vmem:[#allocation8 + $0x460] sm:$0xff]
    %v470 = vld [vmem:[#allocation8 + $0x468] sm:$0xff]
    %v471 = vld [vmem:[#allocation8 + $0x470] sm:$0xff]
    %v472 = vld [vmem:[#allocation8 + $0x478] sm:$0xff]
    %v473 = vld [vmem:[#allocation8 + $0x480] sm:$0xff]
    %v474 = vld [vmem:[#allocation8 + $0x488] sm:$0xff]
    %v475 = vld [vmem:[#allocation8 + $0x490] sm:$0xff]
    %v476 = vld [vmem:[#allocation8 + $0x498] sm:$0xff]
    %v477 = vld [vmem:[#allocation8 + $0x4a0] sm:$0xff]
    %v478 = vld [vmem:[#allocation8 + $0x4a8] sm:$0xff]
    %v479 = vld [vmem:[#allocation8 + $0x4b0] sm:$0xff]
    %v480 = vld [vmem:[#allocation8 + $0x4b8] sm:$0xff]
    %v481 = vld [vmem:[#allocation8 + $0x4c0] sm:$0xff]
    %v482 = vld [vmem:[#allocation8 + $0x4c8] sm:$0xff]
    %v483 = vld [vmem:[#allocation8 + $0x4d0] sm:$0xff]
    %v484 = vld [vmem:[#allocation8 + $0x4d8] sm:$0xff]
    %v485 = vld [vmem:[#allocation8 + $0x4e0] sm:$0xff]
    %v486 = vld [vmem:[#allocation8 + $0x4e8] sm:$0xff]
    %v487 = vld [vmem:[#allocation8 + $0x4f0] sm:$0xff]
    %v488 = vld [vmem:[#allocation8 + $0x4f8] sm:$0xff]
    %v489 = vld [vmem:[#allocation8 + $0x500] sm:$0xff]
    %v490 = vld [vmem:[#allocation8 + $0x508] sm:$0xff]
    %v491 = vld [vmem:[#allocation8 + $0x510] sm:$0xff]
    %v492 = vld [vmem:[#allocation8 + $0x518] sm:$0xff]
    %v493 = vld [vmem:[#allocation8 + $0x520] sm:$0xff]
    %v494 = vld [vmem:[#allocation8 + $0x528] sm:$0xff]
    %v495 = vld [vmem:[#allocation8 + $0x530] sm:$0xff]
    %v496 = vld [vmem:[#allocation8 + $0x538] sm:$0xff]
    %v497 = vld [vmem:[#allocation8 + $0x540] sm:$0xff]
    %v498 = vld [vmem:[#allocation8 + $0x548] sm:$0xff]
    %v499 = vld [vmem:[#allocation8 + $0x550] sm:$0xff]
    %v500 = vld [vmem:[#allocation8 + $0x558] sm:$0xff]
    %v501 = vld [vmem:[#allocation8 + $0x560] sm:$0xff]
    %v502 = vld [vmem:[#allocation8 + $0x568] sm:$0xff]
    %v503 = vld [vmem:[#allocation8 + $0x570] sm:$0xff]
    %v504 = vld [vmem:[#allocation8 + $0x578] sm:$0xff]
    %v505 = vld [vmem:[#allocation8 + $0x580] sm:$0xff]
    %v506 = vld [vmem:[#allocation8 + $0x588] sm:$0xff]
    %v507 = vld [vmem:[#allocation8 + $0x590] sm:$0xff]
    %v508 = vld [vmem:[#allocation8 + $0x598] sm:$0xff]
    %v509 = vld [vmem:[#allocation8 + $0x5a0] sm:$0xff]
    %v510 = vld [vmem:[#allocation8 + $0x5a8] sm:$0xff]
    %v511 = vld [vmem:[#allocation8 + $0x5b0] sm:$0xff]
    %v512 = vld [vmem:[#allocation8 + $0x5b8] sm:$0xff]
    %v513 = vld [vmem:[#allocation8 + $0x5c0] sm:$0xff]
    %v514 = vld [vmem:[#allocation8 + $0x5c8] sm:$0xff]
    %v515 = vld [vmem:[#allocation8 + $0x5d0] sm:$0xff]
    %v516 = vld [vmem:[#allocation8 + $0x5d8] sm:$0xff]
    %v517 = vld [vmem:[#allocation8 + $0x5e0] sm:$0xff]
    %v518 = vld [vmem:[#allocation8 + $0x5e8] sm:$0xff]
    %v519 = vld [vmem:[#allocation8 + $0x5f0] sm:$0xff]
    %v520 = vld [vmem:[#allocation8 + $0x5f8] sm:$0xff]
    %v521 = vld [vmem:[#allocation8 + $0x600] sm:$0xff]
    %v522 = vld [vmem:[#allocation8 + $0x608] sm:$0xff]
    %v523 = vld [vmem:[#allocation8 + $0x610] sm:$0xff]
    %v524 = vld [vmem:[#allocation8 + $0x618] sm:$0xff]
    %v525 = vld [vmem:[#allocation8 + $0x620] sm:$0xff]
    %v526 = vld [vmem:[#allocation8 + $0x628] sm:$0xff]
    %v527 = vld [vmem:[#allocation8 + $0x630] sm:$0xff]
    %v528 = vld [vmem:[#allocation8 + $0x638] sm:$0xff]
    %v529 = vld [vmem:[#allocation8 + $0x640] sm:$0xff]
    %v530 = vld [vmem:[#allocation8 + $0x648] sm:$0xff]
    %v531 = vld [vmem:[#allocation8 + $0x650] sm:$0xff]
    %v532 = vld [vmem:[#allocation8 + $0x658] sm:$0xff]
    %v533 = vld [vmem:[#allocation8 + $0x660] sm:$0xff]
    %v534 = vld [vmem:[#allocation8 + $0x668] sm:$0xff]
    %v535 = vld [vmem:[#allocation8 + $0x670] sm:$0xff]
    %v536 = vld [vmem:[#allocation8 + $0x678] sm:$0xff]
    %v537 = vld [vmem:[#allocation8 + $0x680] sm:$0xff]
    %v538 = vld [vmem:[#allocation8 + $0x688] sm:$0xff]
    %v539 = vld [vmem:[#allocation8 + $0x690] sm:$0xff]
    %v540 = vld [vmem:[#allocation8 + $0x698] sm:$0xff]
    %v541 = vld [vmem:[#allocation8 + $0x6a0] sm:$0xff]
    %v542 = vld [vmem:[#allocation8 + $0x6a8] sm:$0xff]
    %v543 = vld [vmem:[#allocation8 + $0x6b0] sm:$0xff]
    %v544 = vld [vmem:[#allocation8 + $0x6b8] sm:$0xff]
    %v545 = vld [vmem:[#allocation8 + $0x6c0] sm:$0xff]
    %v546 = vld [vmem:[#allocation8 + $0x6c8] sm:$0xff]
    %v547 = vld [vmem:[#allocation8 + $0x6d0] sm:$0xff]
    %v548 = vld [vmem:[#allocation8 + $0x6d8] sm:$0xff]
    %v549 = vld [vmem:[#allocation8 + $0x6e0] sm:$0xff]
    %v550 = vld [vmem:[#allocation8 + $0x6e8] sm:$0xff]
    %v551 = vld [vmem:[#allocation8 + $0x6f0] sm:$0xff]
    %v552 = vld [vmem:[#allocation8 + $0x6f8] sm:$0xff]
    %v553 = vld [vmem:[#allocation8 + $0x700] sm:$0xff]
    %v554 = vld [vmem:[#allocation8 + $0x708] sm:$0xff]
    %v555 = vld [vmem:[#allocation8 + $0x710] sm:$0xff]
    %v556 = vld [vmem:[#allocation8 + $0x718] sm:$0xff]
    %v557 = vld [vmem:[#allocation8 + $0x720] sm:$0xff]
    %v558 = vld [vmem:[#allocation8 + $0x728] sm:$0xff]
    %v559 = vld [vmem:[#allocation8 + $0x730] sm:$0xff]
    %v560 = vld [vmem:[#allocation8 + $0x738] sm:$0xff]
    %v561 = vld [vmem:[#allocation8 + $0x740] sm:$0xff]
    %v562 = vld [vmem:[#allocation8 + $0x748] sm:$0xff]
    %v563 = vld [vmem:[#allocation8 + $0x750] sm:$0xff]
    %v564 = vld [vmem:[#allocation8 + $0x758] sm:$0xff]
    %v565 = vld [vmem:[#allocation8 + $0x760] sm:$0xff]
    %v566 = vld [vmem:[#allocation8 + $0x768] sm:$0xff]
    %v567 = vld [vmem:[#allocation8 + $0x770] sm:$0xff]
    %v568 = vld [vmem:[#allocation8 + $0x778] sm:$0xff]
    %v569 = vld [vmem:[#allocation8 + $0x780] sm:$0xff]
    %v570 = vld [vmem:[#allocation8 + $0x788] sm:$0xff]
    %v571 = vld [vmem:[#allocation8 + $0x790] sm:$0xff]
    %v572 = vld [vmem:[#allocation8 + $0x798] sm:$0xff]
    %v573 = vld [vmem:[#allocation8 + $0x7a0] sm:$0xff]
    %v574 = vld [vmem:[#allocation8 + $0x7a8] sm:$0xff]
    %v575 = vld [vmem:[#allocation8 + $0x7b0] sm:$0xff]
    %v576 = vld [vmem:[#allocation8 + $0x7b8] sm:$0xff]
    %v577 = vld [vmem:[#allocation8 + $0x7c0] sm:$0xff]
    %v578 = vld [vmem:[#allocation8 + $0x7c8] sm:$0xff]
    %v579 = vld [vmem:[#allocation8 + $0x7d0] sm:$0xff]
    %v580 = vld [vmem:[#allocation8 + $0x7d8] sm:$0xff]
    %v581 = vld [vmem:[#allocation8 + $0x7e0] sm:$0xff]
    %v582 = vld [vmem:[#allocation8 + $0x7e8] sm:$0xff]
    %v583 = vld [vmem:[#allocation8 + $0x7f0] sm:$0xff]
    %v584 = vld [vmem:[#allocation8 + $0x7f8] sm:$0xff]
    %v713 = vunpack.c.l.b16 %v457
    %v714 = vunpack.c.h.b16 %v457
    %v715 = vunpack.c.l.b16 %v458
    %v716 = vunpack.c.h.b16 %v458
    %v717 = vunpack.c.l.b16 %v459
    %v718 = vunpack.c.h.b16 %v459
    %v719 = vunpack.c.l.b16 %v460
    %v720 = vunpack.c.h.b16 %v460
    %v721 = vunpack.c.l.b16 %v461
    %v722 = vunpack.c.h.b16 %v461
    %v723 = vunpack.c.l.b16 %v462
    %v724 = vunpack.c.h.b16 %v462
    %v725 = vunpack.c.l.b16 %v463
    %v726 = vunpack.c.h.b16 %v463
    %v727 = vunpack.c.l.b16 %v464
    %v728 = vunpack.c.h.b16 %v464
    %v729 = vunpack.c.l.b16 %v465
    %v730 = vunpack.c.h.b16 %v465
    %v731 = vunpack.c.l.b16 %v466
    %v732 = vunpack.c.h.b16 %v466
    %v733 = vunpack.c.l.b16 %v467
    %v734 = vunpack.c.h.b16 %v467
    %v735 = vunpack.c.l.b16 %v468
    %v736 = vunpack.c.h.b16 %v468
    %v737 = vunpack.c.l.b16 %v469
    %v738 = vunpack.c.h.b16 %v469
    %v739 = vunpack.c.l.b16 %v470
    %v740 = vunpack.c.h.b16 %v470
    %v741 = vunpack.c.l.b16 %v471
    %v742 = vunpack.c.h.b16 %v471
    %v743 = vunpack.c.l.b16 %v472
    %v744 = vunpack.c.h.b16 %v472
    %v745 = vunpack.c.l.b16 %v473
    %v746 = vunpack.c.h.b16 %v473
    %v747 = vunpack.c.l.b16 %v474
    %v748 = vunpack.c.h.b16 %v474
    %v749 = vunpack.c.l.b16 %v475
    %v750 = vunpack.c.h.b16 %v475
    %v751 = vunpack.c.l.b16 %v476
    %v752 = vunpack.c.h.b16 %v476
    %v753 = vunpack.c.l.b16 %v477
    %v754 = vunpack.c.h.b16 %v477
    %v755 = vunpack.c.l.b16 %v478
    %v756 = vunpack.c.h.b16 %v478
    %v757 = vunpack.c.l.b16 %v479
    %v758 = vunpack.c.h.b16 %v479
    %v759 = vunpack.c.l.b16 %v480
    %v760 = vunpack.c.h.b16 %v480
    %v761 = vunpack.c.l.b16 %v481
    %v762 = vunpack.c.h.b16 %v481
    %v763 = vunpack.c.l.b16 %v482
    %v764 = vunpack.c.h.b16 %v482
    %v765 = vunpack.c.l.b16 %v483
    %v766 = vunpack.c.h.b16 %v483
    %v767 = vunpack.c.l.b16 %v484
    %v768 = vunpack.c.h.b16 %v484
    %v769 = vunpack.c.l.b16 %v485
    %v770 = vunpack.c.h.b16 %v485
    %v771 = vunpack.c.l.b16 %v486
    %v772 = vunpack.c.h.b16 %v486
    %v773 = vunpack.c.l.b16 %v487
    %v774 = vunpack.c.h.b16 %v487
    %v775 = vunpack.c.l.b16 %v488
    %v776 = vunpack.c.h.b16 %v488
    %v777 = vunpack.c.l.b16 %v489
    %v778 = vunpack.c.h.b16 %v489
    %v779 = vunpack.c.l.b16 %v490
    %v780 = vunpack.c.h.b16 %v490
    %v781 = vunpack.c.l.b16 %v491
    %v782 = vunpack.c.h.b16 %v491
    %v783 = vunpack.c.l.b16 %v492
    %v784 = vunpack.c.h.b16 %v492
    %v785 = vunpack.c.l.b16 %v493
    %v786 = vunpack.c.h.b16 %v493
    %v787 = vunpack.c.l.b16 %v494
    %v788 = vunpack.c.h.b16 %v494
    %v789 = vunpack.c.l.b16 %v495
    %v790 = vunpack.c.h.b16 %v495
    %v791 = vunpack.c.l.b16 %v496
    %v792 = vunpack.c.h.b16 %v496
    %v793 = vunpack.c.l.b16 %v497
    %v794 = vunpack.c.h.b16 %v497
    %v795 = vunpack.c.l.b16 %v498
    %v796 = vunpack.c.h.b16 %v498
    %v797 = vunpack.c.l.b16 %v499
    %v798 = vunpack.c.h.b16 %v499
    %v799 = vunpack.c.l.b16 %v500
    %v800 = vunpack.c.h.b16 %v500
    %v801 = vunpack.c.l.b16 %v501
    %v802 = vunpack.c.h.b16 %v501
    %v803 = vunpack.c.l.b16 %v502
    %v804 = vunpack.c.h.b16 %v502
    %v805 = vunpack.c.l.b16 %v503
    %v806 = vunpack.c.h.b16 %v503
    %v807 = vunpack.c.l.b16 %v504
    %v808 = vunpack.c.h.b16 %v504
    %v809 = vunpack.c.l.b16 %v505
    %v810 = vunpack.c.h.b16 %v505
    %v811 = vunpack.c.l.b16 %v506
    %v812 = vunpack.c.h.b16 %v506
    %v813 = vunpack.c.l.b16 %v507
    %v814 = vunpack.c.h.b16 %v507
    %v815 = vunpack.c.l.b16 %v508
    %v816 = vunpack.c.h.b16 %v508
    %v817 = vunpack.c.l.b16 %v509
    %v818 = vunpack.c.h.b16 %v509
    %v819 = vunpack.c.l.b16 %v510
    %v820 = vunpack.c.h.b16 %v510
    %v821 = vunpack.c.l.b16 %v511
    %v822 = vunpack.c.h.b16 %v511
    %v823 = vunpack.c.l.b16 %v512
    %v824 = vunpack.c.h.b16 %v512
    %v825 = vunpack.c.l.b16 %v513
    %v826 = vunpack.c.h.b16 %v513
    %v827 = vunpack.c.l.b16 %v514
    %v828 = vunpack.c.h.b16 %v514
    %v829 = vunpack.c.l.b16 %v515
    %v830 = vunpack.c.h.b16 %v515
    %v831 = vunpack.c.l.b16 %v516
    %v832 = vunpack.c.h.b16 %v516
    %v833 = vunpack.c.l.b16 %v517
    %v834 = vunpack.c.h.b16 %v517
    %v835 = vunpack.c.l.b16 %v518
    %v836 = vunpack.c.h.b16 %v518
    %v837 = vunpack.c.l.b16 %v519
    %v838 = vunpack.c.h.b16 %v519
    %v839 = vunpack.c.l.b16 %v520
    %v840 = vunpack.c.h.b16 %v520
    %v841 = vunpack.c.l.b16 %v521
    %v842 = vunpack.c.h.b16 %v521
    %v843 = vunpack.c.l.b16 %v522
    %v844 = vunpack.c.h.b16 %v522
    %v845 = vunpack.c.l.b16 %v523
    %v846 = vunpack.c.h.b16 %v523
    %v847 = vunpack.c.l.b16 %v524
    %v848 = vunpack.c.h.b16 %v524
    %v849 = vunpack.c.l.b16 %v525
    %v850 = vunpack.c.h.b16 %v525
    %v851 = vunpack.c.l.b16 %v526
    %v852 = vunpack.c.h.b16 %v526
    %v853 = vunpack.c.l.b16 %v527
    %v854 = vunpack.c.h.b16 %v527
    %v855 = vunpack.c.l.b16 %v528
    %v856 = vunpack.c.h.b16 %v528
    %v857 = vunpack.c.l.b16 %v529
    %v858 = vunpack.c.h.b16 %v529
    %v859 = vunpack.c.l.b16 %v530
    %v860 = vunpack.c.h.b16 %v530
    %v861 = vunpack.c.l.b16 %v531
    %v862 = vunpack.c.h.b16 %v531
    %v863 = vunpack.c.l.b16 %v532
    %v864 = vunpack.c.h.b16 %v532
    %v865 = vunpack.c.l.b16 %v533
    %v866 = vunpack.c.h.b16 %v533
    %v867 = vunpack.c.l.b16 %v534
    %v868 = vunpack.c.h.b16 %v534
    %v869 = vunpack.c.l.b16 %v535
    %v870 = vunpack.c.h.b16 %v535
    %v871 = vunpack.c.l.b16 %v536
    %v872 = vunpack.c.h.b16 %v536
    %v873 = vunpack.c.l.b16 %v537
    %v874 = vunpack.c.h.b16 %v537
    %v875 = vunpack.c.l.b16 %v538
    %v876 = vunpack.c.h.b16 %v538
    %v877 = vunpack.c.l.b16 %v539
    %v878 = vunpack.c.h.b16 %v539
    %v879 = vunpack.c.l.b16 %v540
    %v880 = vunpack.c.h.b16 %v540
    %v881 = vunpack.c.l.b16 %v541
    %v882 = vunpack.c.h.b16 %v541
    %v883 = vunpack.c.l.b16 %v542
    %v884 = vunpack.c.h.b16 %v542
    %v885 = vunpack.c.l.b16 %v543
    %v886 = vunpack.c.h.b16 %v543
    %v887 = vunpack.c.l.b16 %v544
    %v888 = vunpack.c.h.b16 %v544
    %v889 = vunpack.c.l.b16 %v545
    %v890 = vunpack.c.h.b16 %v545
    %v891 = vunpack.c.l.b16 %v546
    %v892 = vunpack.c.h.b16 %v546
    %v893 = vunpack.c.l.b16 %v547
    %v894 = vunpack.c.h.b16 %v547
    %v895 = vunpack.c.l.b16 %v548
    %v896 = vunpack.c.h.b16 %v548
    %v897 = vunpack.c.l.b16 %v549
    %v898 = vunpack.c.h.b16 %v549
    %v899 = vunpack.c.l.b16 %v550
    %v900 = vunpack.c.h.b16 %v550
    %v901 = vunpack.c.l.b16 %v551
    %v902 = vunpack.c.h.b16 %v551
    %v903 = vunpack.c.l.b16 %v552
    %v904 = vunpack.c.h.b16 %v552
    %v905 = vunpack.c.l.b16 %v553
    %v906 = vunpack.c.h.b16 %v553
    %v907 = vunpack.c.l.b16 %v554
    %v908 = vunpack.c.h.b16 %v554
    %v909 = vunpack.c.l.b16 %v555
    %v910 = vunpack.c.h.b16 %v555
    %v911 = vunpack.c.l.b16 %v556
    %v912 = vunpack.c.h.b16 %v556
    %v913 = vunpack.c.l.b16 %v557
    %v914 = vunpack.c.h.b16 %v557
    %v915 = vunpack.c.l.b16 %v558
    %v916 = vunpack.c.h.b16 %v558
    %v917 = vunpack.c.l.b16 %v559
    %v918 = vunpack.c.h.b16 %v559
    %v919 = vunpack.c.l.b16 %v560
    %v920 = vunpack.c.h.b16 %v560
    %v921 = vunpack.c.l.b16 %v561
    %v922 = vunpack.c.h.b16 %v561
    %v923 = vunpack.c.l.b16 %v562
    %v924 = vunpack.c.h.b16 %v562
    %v925 = vunpack.c.l.b16 %v563
    %v926 = vunpack.c.h.b16 %v563
    %v927 = vunpack.c.l.b16 %v564
    %v928 = vunpack.c.h.b16 %v564
    %v929 = vunpack.c.l.b16 %v565
    %v930 = vunpack.c.h.b16 %v565
    %v931 = vunpack.c.l.b16 %v566
    %v932 = vunpack.c.h.b16 %v566
    %v933 = vunpack.c.l.b16 %v567
    %v934 = vunpack.c.h.b16 %v567
    %v935 = vunpack.c.l.b16 %v568
    %v936 = vunpack.c.h.b16 %v568
    %v937 = vunpack.c.l.b16 %v569
    %v938 = vunpack.c.h.b16 %v569
    %v939 = vunpack.c.l.b16 %v570
    %v940 = vunpack.c.h.b16 %v570
    %v941 = vunpack.c.l.b16 %v571
    %v942 = vunpack.c.h.b16 %v571
    %v943 = vunpack.c.l.b16 %v572
    %v944 = vunpack.c.h.b16 %v572
    %v945 = vunpack.c.l.b16 %v573
    %v946 = vunpack.c.h.b16 %v573
    %v947 = vunpack.c.l.b16 %v574
    %v948 = vunpack.c.h.b16 %v574
    %v949 = vunpack.c.l.b16 %v575
    %v950 = vunpack.c.h.b16 %v575
    %v951 = vunpack.c.l.b16 %v576
    %v952 = vunpack.c.h.b16 %v576
    %v953 = vunpack.c.l.b16 %v577
    %v954 = vunpack.c.h.b16 %v577
    %v955 = vunpack.c.l.b16 %v578
    %v956 = vunpack.c.h.b16 %v578
    %v957 = vunpack.c.l.b16 %v579
    %v958 = vunpack.c.h.b16 %v579
    %v959 = vunpack.c.l.b16 %v580
    %v960 = vunpack.c.h.b16 %v580
    %v961 = vunpack.c.l.b16 %v581
    %v962 = vunpack.c.h.b16 %v581
    %v963 = vunpack.c.l.b16 %v582
    %v964 = vunpack.c.h.b16 %v582
    %v965 = vunpack.c.l.b16 %v583
    %v966 = vunpack.c.h.b16 %v583
    %v967 = vunpack.c.l.b16 %v584
    %v968 = vunpack.c.h.b16 %v584
    %v969 = vpack.c.b16 %v721, %v713
    %v970 = vpack.c.b16 %v722, %v714
    %v971 = vpack.c.b16 %v723, %v715
    %v972 = vpack.c.b16 %v724, %v716
    %v973 = vpack.c.b16 %v725, %v717
    %v974 = vpack.c.b16 %v726, %v718
    %v975 = vpack.c.b16 %v727, %v719
    %v976 = vpack.c.b16 %v728, %v720
    %v977 = vpack.c.b16 %v737, %v729
    %v978 = vpack.c.b16 %v738, %v730
    %v979 = vpack.c.b16 %v739, %v731
    %v980 = vpack.c.b16 %v740, %v732
    %v981 = vpack.c.b16 %v741, %v733
    %v982 = vpack.c.b16 %v742, %v734
    %v983 = vpack.c.b16 %v743, %v735
    %v984 = vpack.c.b16 %v744, %v736
    %v985 = vpack.c.b16 %v753, %v745
    %v986 = vpack.c.b16 %v754, %v746
    %v987 = vpack.c.b16 %v755, %v747
    %v988 = vpack.c.b16 %v756, %v748
    %v989 = vpack.c.b16 %v757, %v749
    %v990 = vpack.c.b16 %v758, %v750
    %v991 = vpack.c.b16 %v759, %v751
    %v992 = vpack.c.b16 %v760, %v752
    %v993 = vpack.c.b16 %v769, %v761
    %v994 = vpack.c.b16 %v770, %v762
    %v995 = vpack.c.b16 %v771, %v763
    %v996 = vpack.c.b16 %v772, %v764
    %v997 = vpack.c.b16 %v773, %v765
    %v998 = vpack.c.b16 %v774, %v766
    %v999 = vpack.c.b16 %v775, %v767
    %v1000 = vpack.c.b16 %v776, %v768
    %v1001 = vpack.c.b16 %v785, %v777
    %v1002 = vpack.c.b16 %v786, %v778
    %v1003 = vpack.c.b16 %v787, %v779
    %v1004 = vpack.c.b16 %v788, %v780
    %v1005 = vpack.c.b16 %v789, %v781
    %v1006 = vpack.c.b16 %v790, %v782
    %v1007 = vpack.c.b16 %v791, %v783
    %v1008 = vpack.c.b16 %v792, %v784
    %v1009 = vpack.c.b16 %v801, %v793
    %v1010 = vpack.c.b16 %v802, %v794
    %v1011 = vpack.c.b16 %v803, %v795
    %v1012 = vpack.c.b16 %v804, %v796
    %v1013 = vpack.c.b16 %v805, %v797
    %v1014 = vpack.c.b16 %v806, %v798
    %v1015 = vpack.c.b16 %v807, %v799
    %v1016 = vpack.c.b16 %v808, %v800
    %v1017 = vpack.c.b16 %v817, %v809
    %v1018 = vpack.c.b16 %v818, %v810
    %v1019 = vpack.c.b16 %v819, %v811
    %v1020 = vpack.c.b16 %v820, %v812
    %v1021 = vpack.c.b16 %v821, %v813
    %v1022 = vpack.c.b16 %v822, %v814
    %v1023 = vpack.c.b16 %v823, %v815
    %v1024 = vpack.c.b16 %v824, %v816
    %v1025 = vpack.c.b16 %v833, %v825
    %v1026 = vpack.c.b16 %v834, %v826
    %v1027 = vpack.c.b16 %v835, %v827
    %v1028 = vpack.c.b16 %v836, %v828
    %v1029 = vpack.c.b16 %v837, %v829
    %v1030 = vpack.c.b16 %v838, %v830
    %v1031 = vpack.c.b16 %v839, %v831
    %v1032 = vpack.c.b16 %v840, %v832
    %v1033 = vpack.c.b16 %v849, %v841
    %v1034 = vpack.c.b16 %v850, %v842
    %v1035 = vpack.c.b16 %v851, %v843
    %v1036 = vpack.c.b16 %v852, %v844
    %v1037 = vpack.c.b16 %v853, %v845
    %v1038 = vpack.c.b16 %v854, %v846
    %v1039 = vpack.c.b16 %v855, %v847
    %v1040 = vpack.c.b16 %v856, %v848
    %v1041 = vpack.c.b16 %v865, %v857
    %v1042 = vpack.c.b16 %v866, %v858
    %v1043 = vpack.c.b16 %v867, %v859
    %v1044 = vpack.c.b16 %v868, %v860
    %v1045 = vpack.c.b16 %v869, %v861
    %v1046 = vpack.c.b16 %v870, %v862
    %v1047 = vpack.c.b16 %v871, %v863
    %v1048 = vpack.c.b16 %v872, %v864
    %v1049 = vpack.c.b16 %v881, %v873
    %v1050 = vpack.c.b16 %v882, %v874
    %v1051 = vpack.c.b16 %v883, %v875
    %v1052 = vpack.c.b16 %v884, %v876
    %v1053 = vpack.c.b16 %v885, %v877
    %v1054 = vpack.c.b16 %v886, %v878
    %v1055 = vpack.c.b16 %v887, %v879
    %v1056 = vpack.c.b16 %v888, %v880
    %v1057 = vpack.c.b16 %v897, %v889
    %v1058 = vpack.c.b16 %v898, %v890
    %v1059 = vpack.c.b16 %v899, %v891
    %v1060 = vpack.c.b16 %v900, %v892
    %v1061 = vpack.c.b16 %v901, %v893
    %v1062 = vpack.c.b16 %v902, %v894
    %v1063 = vpack.c.b16 %v903, %v895
    %v1064 = vpack.c.b16 %v904, %v896
    %v1065 = vpack.c.b16 %v913, %v905
    %v1066 = vpack.c.b16 %v914, %v906
    %v1067 = vpack.c.b16 %v915, %v907
    %v1068 = vpack.c.b16 %v916, %v908
    %v1069 = vpack.c.b16 %v917, %v909
    %v1070 = vpack.c.b16 %v918, %v910
    %v1071 = vpack.c.b16 %v919, %v911
    %v1072 = vpack.c.b16 %v920, %v912
    %v1073 = vpack.c.b16 %v929, %v921
    %v1074 = vpack.c.b16 %v930, %v922
    %v1075 = vpack.c.b16 %v931, %v923
    %v1076 = vpack.c.b16 %v932, %v924
    %v1077 = vpack.c.b16 %v933, %v925
    %v1078 = vpack.c.b16 %v934, %v926
    %v1079 = vpack.c.b16 %v935, %v927
    %v1080 = vpack.c.b16 %v936, %v928
    %v1081 = vpack.c.b16 %v945, %v937
    %v1082 = vpack.c.b16 %v946, %v938
    %v1083 = vpack.c.b16 %v947, %v939
    %v1084 = vpack.c.b16 %v948, %v940
    %v1085 = vpack.c.b16 %v949, %v941
    %v1086 = vpack.c.b16 %v950, %v942
    %v1087 = vpack.c.b16 %v951, %v943
    %v1088 = vpack.c.b16 %v952, %v944
    %v1089 = vpack.c.b16 %v961, %v953
    %v1090 = vpack.c.b16 %v962, %v954
    %v1091 = vpack.c.b16 %v963, %v955
    %v1092 = vpack.c.b16 %v964, %v956
    %v1093 = vpack.c.b16 %v965, %v957
    %v1094 = vpack.c.b16 %v966, %v958
    %v1095 = vpack.c.b16 %v967, %v959
    %v1096 = vpack.c.b16 %v968, %v960
    %1225 = vmatprep.subr.bf16.mxu0 %v970
    %1226 = vmatpush1.bf16.msra.mxu0 %v969
    %1227 = vmatprep.subr.bf16.mxu0 %v978
    %1228 = vmatpush1.bf16.msra.mxu0 %v977
    %1229 = vmatprep.subr.bf16.mxu0 %v986
    %1230 = vmatpush1.bf16.msra.mxu0 %v985
    %1231 = vmatprep.subr.bf16.mxu0 %v994
    %1232 = vmatpush1.bf16.msra.mxu0 %v993
    %1233 = vmatprep.subr.bf16.mxu0 %v1002
    %1234 = vmatpush1.bf16.msra.mxu0 %v1001
    %1235 = vmatprep.subr.bf16.mxu0 %v1010
    %1236 = vmatpush1.bf16.msra.mxu0 %v1009
    %1237 = vmatprep.subr.bf16.mxu0 %v1018
    %1238 = vmatpush1.bf16.msra.mxu0 %v1017
    %1239 = vmatprep.subr.bf16.mxu0 %v1026
    %1240 = vmatpush1.bf16.msra.mxu0 %v1025
    %1241 = vmatprep.subr.bf16.mxu0 %v1034
    %1242 = vmatpush1.bf16.msra.mxu0 %v1033
    %1243 = vmatprep.subr.bf16.mxu0 %v1042
    %1244 = vmatpush1.bf16.msra.mxu0 %v1041
    %1245 = vmatprep.subr.bf16.mxu0 %v1050
    %1246 = vmatpush1.bf16.msra.mxu0 %v1049
    %1247 = vmatprep.subr.bf16.mxu0 %v1058
    %1248 = vmatpush1.bf16.msra.mxu0 %v1057
    %1249 = vmatprep.subr.bf16.mxu0 %v1066
    %1250 = vmatpush1.bf16.msra.mxu0 %v1065
    %1251 = vmatprep.subr.bf16.mxu0 %v1074
    %1252 = vmatpush1.bf16.msra.mxu0 %v1073
    %1253 = vmatprep.subr.bf16.mxu0 %v1082
    %1254 = vmatpush1.bf16.msra.mxu0 %v1081
    %1255 = vmatprep.subr.bf16.mxu0 %v1090
    %1256 = vmatpush1.bf16.msra.mxu0 %v1089
    %1257 = vmatprep.mubr.bf16.mxu0 %v456
    %1258 = vmatmul.mubr.bf16.gmra.mrb[0].mxu0 %v455
    %v1259 = vpop.f32.mrb[0].mxu0
    %v1260 = vadd.f32 0.0, %v1259
    %v1261 = vpop.f32.mrb[0].mxu0
    %v1262 = vadd.f32 0.0, %v1261
    %v1263 = vpop.f32.mrb[0].mxu0
    %v1264 = vadd.f32 0.0, %v1263
    %v1265 = vpop.f32.mrb[0].mxu0
    %v1266 = vadd.f32 0.0, %v1265
    %1267 = vdwg.mxu0
    %1268 = vmatprep.subr.bf16.mxu0 %v972
    %1269 = vmatpush1.bf16.msra.mxu0 %v971
    %1270 = vmatprep.subr.bf16.mxu0 %v980
    %1271 = vmatpush1.bf16.msra.mxu0 %v979
    %1272 = vmatprep.subr.bf16.mxu0 %v988
    %1273 = vmatpush1.bf16.msra.mxu0 %v987
    %1274 = vmatprep.subr.bf16.mxu0 %v996
    %1275 = vmatpush1.bf16.msra.mxu0 %v995
    %1276 = vmatprep.subr.bf16.mxu0 %v1004
    %1277 = vmatpush1.bf16.msra.mxu0 %v1003
    %1278 = vmatprep.subr.bf16.mxu0 %v1012
    %1279 = vmatpush1.bf16.msra.mxu0 %v1011
    %1280 = vmatprep.subr.bf16.mxu0 %v1020
    %1281 = vmatpush1.bf16.msra.mxu0 %v1019
    %1282 = vmatprep.subr.bf16.mxu0 %v1028
    %1283 = vmatpush1.bf16.msra.mxu0 %v1027
    %1284 = vmatprep.subr.bf16.mxu0 %v1036
    %1285 = vmatpush1.bf16.msra.mxu0 %v1035
    %1286 = vmatprep.subr.bf16.mxu0 %v1044
    %1287 = vmatpush1.bf16.msra.mxu0 %v1043
    %1288 = vmatprep.subr.bf16.mxu0 %v1052
    %1289 = vmatpush1.bf16.msra.mxu0 %v1051
    %1290 = vmatprep.subr.bf16.mxu0 %v1060
    %1291 = vmatpush1.bf16.msra.mxu0 %v1059
    %1292 = vmatprep.subr.bf16.mxu0 %v1068
    %1293 = vmatpush1.bf16.msra.mxu0 %v1067
    %1294 = vmatprep.subr.bf16.mxu0 %v1076
    %1295 = vmatpush1.bf16.msra.mxu0 %v1075
    %1296 = vmatprep.subr.bf16.mxu0 %v1084
    %1297 = vmatpush1.bf16.msra.mxu0 %v1083
    %1298 = vmatprep.subr.bf16.mxu0 %v1092
    %1299 = vmatpush1.bf16.msra.mxu0 %v1091
    %1300 = vmatprep.mubr.bf16.mxu0 %v456
    %1301 = vmatmul.mubr.bf16.gmra.mrb[0].mxu0 %v455
    %v1302 = vpop.f32.mrb[0].mxu0
    %v1303 = vadd.f32 0.0, %v1302
    %v1304 = vpop.f32.mrb[0].mxu0
    %v1305 = vadd.f32 0.0, %v1304
    %v1306 = vpop.f32.mrb[0].mxu0
    %v1307 = vadd.f32 0.0, %v1306
    %v1308 = vpop.f32.mrb[0].mxu0
    %v1309 = vadd.f32 0.0, %v1308
    %1310 = vdwg.mxu0
    %1311 = vmatprep.subr.bf16.mxu0 %v974
    %1312 = vmatpush1.bf16.msra.mxu0 %v973
    %1313 = vmatprep.subr.bf16.mxu0 %v982
    %1314 = vmatpush1.bf16.msra.mxu0 %v981
    %1315 = vmatprep.subr.bf16.mxu0 %v990
    %1316 = vmatpush1.bf16.msra.mxu0 %v989
    %1317 = vmatprep.subr.bf16.mxu0 %v998
    %1318 = vmatpush1.bf16.msra.mxu0 %v997
    %1319 = vmatprep.subr.bf16.mxu0 %v1006
    %1320 = vmatpush1.bf16.msra.mxu0 %v1005
    %1321 = vmatprep.subr.bf16.mxu0 %v1014
    %1322 = vmatpush1.bf16.msra.mxu0 %v1013
    %1323 = vmatprep.subr.bf16.mxu0 %v1022
    %1324 = vmatpush1.bf16.msra.mxu0 %v1021
    %1325 = vmatprep.subr.bf16.mxu0 %v1030
    %1326 = vmatpush1.bf16.msra.mxu0 %v1029
    %1327 = vmatprep.subr.bf16.mxu0 %v1038
    %1328 = vmatpush1.bf16.msra.mxu0 %v1037
    %1329 = vmatprep.subr.bf16.mxu0 %v1046
    %1330 = vmatpush1.bf16.msra.mxu0 %v1045
    %1331 = vmatprep.subr.bf16.mxu0 %v1054
    %1332 = vmatpush1.bf16.msra.mxu0 %v1053
    %1333 = vmatprep.subr.bf16.mxu0 %v1062
    %1334 = vmatpush1.bf16.msra.mxu0 %v1061
    %1335 = vmatprep.subr.bf16.mxu0 %v1070
    %1336 = vmatpush1.bf16.msra.mxu0 %v1069
    %1337 = vmatprep.subr.bf16.mxu0 %v1078
    %1338 = vmatpush1.bf16.msra.mxu0 %v1077
    %1339 = vmatprep.subr.bf16.mxu0 %v1086
    %1340 = vmatpush1.bf16.msra.mxu0 %v1085
    %1341 = vmatprep.subr.bf16.mxu0 %v1094
    %1342 = vmatpush1.bf16.msra.mxu0 %v1093
    %1343 = vmatprep.mubr.bf16.mxu0 %v456
    %1344 = vmatmul.mubr.bf16.gmra.mrb[0].mxu0 %v455
    %v1345 = vpop.f32.mrb[0].mxu0
    %v1346 = vadd.f32 0.0, %v1345
    %v1347 = vpop.f32.mrb[0].mxu0
    %v1348 = vadd.f32 0.0, %v1347
    %v1349 = vpop.f32.mrb[0].mxu0
    %v1350 = vadd.f32 0.0, %v1349
    %v1351 = vpop.f32.mrb[0].mxu0
    %v1352 = vadd.f32 0.0, %v1351
    %1353 = vdwg.mxu0
    %1354 = vmatprep.subr.bf16.mxu0 %v976
    %1355 = vmatpush1.bf16.msra.mxu0 %v975
    %1356 = vmatprep.subr.bf16.mxu0 %v984
    %1357 = vmatpush1.bf16.msra.mxu0 %v983
    %1358 = vmatprep.subr.bf16.mxu0 %v992
    %1359 = vmatpush1.bf16.msra.mxu0 %v991
    %1360 = vmatprep.subr.bf16.mxu0 %v1000
    %1361 = vmatpush1.bf16.msra.mxu0 %v999
    %1362 = vmatprep.subr.bf16.mxu0 %v1008
    %1363 = vmatpush1.bf16.msra.mxu0 %v1007
    %1364 = vmatprep.subr.bf16.mxu0 %v1016
    %1365 = vmatpush1.bf16.msra.mxu0 %v1015
    %1366 = vmatprep.subr.bf16.mxu0 %v1024
    %1367 = vmatpush1.bf16.msra.mxu0 %v1023
    %1368 = vmatprep.subr.bf16.mxu0 %v1032
    %1369 = vmatpush1.bf16.msra.mxu0 %v1031
    %1370 = vmatprep.subr.bf16.mxu0 %v1040
    %1371 = vmatpush1.bf16.msra.mxu0 %v1039
    %1372 = vmatprep.subr.bf16.mxu0 %v1048
    %1373 = vmatpush1.bf16.msra.mxu0 %v1047
    %1374 = vmatprep.subr.bf16.mxu0 %v1056
    %1375 = vmatpush1.bf16.msra.mxu0 %v1055
    %1376 = vmatprep.subr.bf16.mxu0 %v1064
    %1377 = vmatpush1.bf16.msra.mxu0 %v1063
    %1378 = vmatprep.subr.bf16.mxu0 %v1072
    %1379 = vmatpush1.bf16.msra.mxu0 %v1071
    %1380 = vmatprep.subr.bf16.mxu0 %v1080
    %1381 = vmatpush1.bf16.msra.mxu0 %v1079
    %1382 = vmatprep.subr.bf16.mxu0 %v1088
    %1383 = vmatpush1.bf16.msra.mxu0 %v1087
    %1384 = vmatprep.subr.bf16.mxu0 %v1096
    %1385 = vmatpush1.bf16.msra.mxu0 %v1095
    %1386 = vmatprep.mubr.bf16.mxu0 %v456
    %1387 = vmatmul.mubr.bf16.gmra.mrb[0].mxu0 %v455
    %v1388 = vpop.f32.mrb[0].mxu0
    %v1389 = vadd.f32 0.0, %v1388
    %v1390 = vpop.f32.mrb[0].mxu0
    %v1391 = vadd.f32 0.0, %v1390
    %v1392 = vpop.f32.mrb[0].mxu0
    %v1393 = vadd.f32 0.0, %v1392
    %v1394 = vpop.f32.mrb[0].mxu0
    %v1395 = vadd.f32 0.0, %v1394
    %1396 = vdwg.mxu0
    %v1525 = vunpack.c.l.b16 %v226
    %v1526 = vunpack.c.h.b16 %v226
    %v1527 = vunpack.c.l.b16 %v227
    %v1528 = vunpack.c.h.b16 %v227
    %v1529 = vunpack.c.l.b16 %v228
    %v1530 = vunpack.c.h.b16 %v228
    %v1531 = vunpack.c.l.b16 %v229
    %v1532 = vunpack.c.h.b16 %v229
    %v1533 = vunpack.c.l.b16 %v230
    %v1534 = vunpack.c.h.b16 %v230
    %v1535 = vunpack.c.l.b16 %v231
    %v1536 = vunpack.c.h.b16 %v231
    %v1537 = vunpack.c.l.b16 %v232
    %v1538 = vunpack.c.h.b16 %v232
    %v1539 = vunpack.c.l.b16 %v233
    %v1540 = vunpack.c.h.b16 %v233
    %v1541 = vunpack.c.l.b16 %v234
    %v1542 = vunpack.c.h.b16 %v234
    %v1543 = vunpack.c.l.b16 %v235
    %v1544 = vunpack.c.h.b16 %v235
    %v1545 = vunpack.c.l.b16 %v236
    %v1546 = vunpack.c.h.b16 %v236
    %v1547 = vunpack.c.l.b16 %v237
    %v1548 = vunpack.c.h.b16 %v237
    %v1549 = vunpack.c.l.b16 %v238
    %v1550 = vunpack.c.h.b16 %v238
    %v1551 = vunpack.c.l.b16 %v239
    %v1552 = vunpack.c.h.b16 %v239
    %v1553 = vunpack.c.l.b16 %v240
    %v1554 = vunpack.c.h.b16 %v240
    %v1555 = vunpack.c.l.b16 %v241
    %v1556 = vunpack.c.h.b16 %v241
    %v1557 = vunpack.c.l.b16 %v242
    %v1558 = vunpack.c.h.b16 %v242
    %v1559 = vunpack.c.l.b16 %v243
    %v1560 = vunpack.c.h.b16 %v243
    %v1561 = vunpack.c.l.b16 %v244
    %v1562 = vunpack.c.h.b16 %v244
    %v1563 = vunpack.c.l.b16 %v245
    %v1564 = vunpack.c.h.b16 %v245
    %v1565 = vunpack.c.l.b16 %v246
    %v1566 = vunpack.c.h.b16 %v246
    %v1567 = vunpack.c.l.b16 %v247
    %v1568 = vunpack.c.h.b16 %v247
    %v1569 = vunpack.c.l.b16 %v248
    %v1570 = vunpack.c.h.b16 %v248
    %v1571 = vunpack.c.l.b16 %v249
    %v1572 = vunpack.c.h.b16 %v249
    %v1573 = vunpack.c.l.b16 %v250
    %v1574 = vunpack.c.h.b16 %v250
    %v1575 = vunpack.c.l.b16 %v251
    %v1576 = vunpack.c.h.b16 %v251
    %v1577 = vunpack.c.l.b16 %v252
    %v1578 = vunpack.c.h.b16 %v252
    %v1579 = vunpack.c.l.b16 %v253
    %v1580 = vunpack.c.h.b16 %v253
    %v1581 = vunpack.c.l.b16 %v254
    %v1582 = vunpack.c.h.b16 %v254
    %v1583 = vunpack.c.l.b16 %v255
    %v1584 = vunpack.c.h.b16 %v255
    %v1585 = vunpack.c.l.b16 %v256
    %v1586 = vunpack.c.h.b16 %v256
    %v1587 = vunpack.c.l.b16 %v257
    %v1588 = vunpack.c.h.b16 %v257
    %v1589 = vunpack.c.l.b16 %v258
    %v1590 = vunpack.c.h.b16 %v258
    %v1591 = vunpack.c.l.b16 %v259
    %v1592 = vunpack.c.h.b16 %v259
    %v1593 = vunpack.c.l.b16 %v260
    %v1594 = vunpack.c.h.b16 %v260
    %v1595 = vunpack.c.l.b16 %v261
    %v1596 = vunpack.c.h.b16 %v261
    %v1597 = vunpack.c.l.b16 %v262
    %v1598 = vunpack.c.h.b16 %v262
    %v1599 = vunpack.c.l.b16 %v263
    %v1600 = vunpack.c.h.b16 %v263
    %v1601 = vunpack.c.l.b16 %v264
    %v1602 = vunpack.c.h.b16 %v264
    %v1603 = vunpack.c.l.b16 %v265
    %v1604 = vunpack.c.h.b16 %v265
    %v1605 = vunpack.c.l.b16 %v266
    %v1606 = vunpack.c.h.b16 %v266
    %v1607 = vunpack.c.l.b16 %v267
    %v1608 = vunpack.c.h.b16 %v267
    %v1609 = vunpack.c.l.b16 %v268
    %v1610 = vunpack.c.h.b16 %v268
    %v1611 = vunpack.c.l.b16 %v269
    %v1612 = vunpack.c.h.b16 %v269
    %v1613 = vunpack.c.l.b16 %v270
    %v1614 = vunpack.c.h.b16 %v270
    %v1615 = vunpack.c.l.b16 %v271
    %v1616 = vunpack.c.h.b16 %v271
    %v1617 = vunpack.c.l.b16 %v272
    %v1618 = vunpack.c.h.b16 %v272
    %v1619 = vunpack.c.l.b16 %v273
    %v1620 = vunpack.c.h.b16 %v273
    %v1621 = vunpack.c.l.b16 %v274
    %v1622 = vunpack.c.h.b16 %v274
    %v1623 = vunpack.c.l.b16 %v275
    %v1624 = vunpack.c.h.b16 %v275
    %v1625 = vunpack.c.l.b16 %v276
    %v1626 = vunpack.c.h.b16 %v276
    %v1627 = vunpack.c.l.b16 %v277
    %v1628 = vunpack.c.h.b16 %v277
    %v1629 = vunpack.c.l.b16 %v278
    %v1630 = vunpack.c.h.b16 %v278
    %v1631 = vunpack.c.l.b16 %v279
    %v1632 = vunpack.c.h.b16 %v279
    %v1633 = vunpack.c.l.b16 %v280
    %v1634 = vunpack.c.h.b16 %v280
    %v1635 = vunpack.c.l.b16 %v281
    %v1636 = vunpack.c.h.b16 %v281
    %v1637 = vunpack.c.l.b16 %v282
    %v1638 = vunpack.c.h.b16 %v282
    %v1639 = vunpack.c.l.b16 %v283
    %v1640 = vunpack.c.h.b16 %v283
    %v1641 = vunpack.c.l.b16 %v284
    %v1642 = vunpack.c.h.b16 %v284
    %v1643 = vunpack.c.l.b16 %v285
    %v1644 = vunpack.c.h.b16 %v285
    %v1645 = vunpack.c.l.b16 %v286
    %v1646 = vunpack.c.h.b16 %v286
    %v1647 = vunpack.c.l.b16 %v287
    %v1648 = vunpack.c.h.b16 %v287
    %v1649 = vunpack.c.l.b16 %v288
    %v1650 = vunpack.c.h.b16 %v288
    %v1651 = vunpack.c.l.b16 %v289
    %v1652 = vunpack.c.h.b16 %v289
    %v1653 = vunpack.c.l.b16 %v290
    %v1654 = vunpack.c.h.b16 %v290
    %v1655 = vunpack.c.l.b16 %v291
    %v1656 = vunpack.c.h.b16 %v291
    %v1657 = vunpack.c.l.b16 %v292
    %v1658 = vunpack.c.h.b16 %v292
    %v1659 = vunpack.c.l.b16 %v293
    %v1660 = vunpack.c.h.b16 %v293
    %v1661 = vunpack.c.l.b16 %v294
    %v1662 = vunpack.c.h.b16 %v294
    %v1663 = vunpack.c.l.b16 %v295
    %v1664 = vunpack.c.h.b16 %v295
    %v1665 = vunpack.c.l.b16 %v296
    %v1666 = vunpack.c.h.b16 %v296
    %v1667 = vunpack.c.l.b16 %v297
    %v1668 = vunpack.c.h.b16 %v297
    %v1669 = vunpack.c.l.b16 %v298
    %v1670 = vunpack.c.h.b16 %v298
    %v1671 = vunpack.c.l.b16 %v299
    %v1672 = vunpack.c.h.b16 %v299
    %v1673 = vunpack.c.l.b16 %v300
    %v1674 = vunpack.c.h.b16 %v300
    %v1675 = vunpack.c.l.b16 %v301
    %v1676 = vunpack.c.h.b16 %v301
    %v1677 = vunpack.c.l.b16 %v302
    %v1678 = vunpack.c.h.b16 %v302
    %v1679 = vunpack.c.l.b16 %v303
    %v1680 = vunpack.c.h.b16 %v303
    %v1681 = vunpack.c.l.b16 %v304
    %v1682 = vunpack.c.h.b16 %v304
    %v1683 = vunpack.c.l.b16 %v305
    %v1684 = vunpack.c.h.b16 %v305
    %v1685 = vunpack.c.l.b16 %v306
    %v1686 = vunpack.c.h.b16 %v306
    %v1687 = vunpack.c.l.b16 %v307
    %v1688 = vunpack.c.h.b16 %v307
    %v1689 = vunpack.c.l.b16 %v308
    %v1690 = vunpack.c.h.b16 %v308
    %v1691 = vunpack.c.l.b16 %v309
    %v1692 = vunpack.c.h.b16 %v309
    %v1693 = vunpack.c.l.b16 %v310
    %v1694 = vunpack.c.h.b16 %v310
    %v1695 = vunpack.c.l.b16 %v311
    %v1696 = vunpack.c.h.b16 %v311
    %v1697 = vunpack.c.l.b16 %v312
    %v1698 = vunpack.c.h.b16 %v312
    %v1699 = vunpack.c.l.b16 %v313
    %v1700 = vunpack.c.h.b16 %v313
    %v1701 = vunpack.c.l.b16 %v314
    %v1702 = vunpack.c.h.b16 %v314
    %v1703 = vunpack.c.l.b16 %v315
    %v1704 = vunpack.c.h.b16 %v315
    %v1705 = vunpack.c.l.b16 %v316
    %v1706 = vunpack.c.h.b16 %v316
    %v1707 = vunpack.c.l.b16 %v317
    %v1708 = vunpack.c.h.b16 %v317
    %v1709 = vunpack.c.l.b16 %v318
    %v1710 = vunpack.c.h.b16 %v318
    %v1711 = vunpack.c.l.b16 %v319
    %v1712 = vunpack.c.h.b16 %v319
    %v1713 = vunpack.c.l.b16 %v320
    %v1714 = vunpack.c.h.b16 %v320
    %v1715 = vunpack.c.l.b16 %v321
    %v1716 = vunpack.c.h.b16 %v321
    %v1717 = vunpack.c.l.b16 %v322
    %v1718 = vunpack.c.h.b16 %v322
    %v1719 = vunpack.c.l.b16 %v323
    %v1720 = vunpack.c.h.b16 %v323
    %v1721 = vunpack.c.l.b16 %v324
    %v1722 = vunpack.c.h.b16 %v324
    %v1723 = vunpack.c.l.b16 %v325
    %v1724 = vunpack.c.h.b16 %v325
    %v1725 = vunpack.c.l.b16 %v326
    %v1726 = vunpack.c.h.b16 %v326
    %v1727 = vunpack.c.l.b16 %v327
    %v1728 = vunpack.c.h.b16 %v327
    %v1729 = vunpack.c.l.b16 %v328
    %v1730 = vunpack.c.h.b16 %v328
    %v1731 = vunpack.c.l.b16 %v329
    %v1732 = vunpack.c.h.b16 %v329
    %v1733 = vunpack.c.l.b16 %v330
    %v1734 = vunpack.c.h.b16 %v330
    %v1735 = vunpack.c.l.b16 %v331
    %v1736 = vunpack.c.h.b16 %v331
    %v1737 = vunpack.c.l.b16 %v332
    %v1738 = vunpack.c.h.b16 %v332
    %v1739 = vunpack.c.l.b16 %v333
    %v1740 = vunpack.c.h.b16 %v333
    %v1741 = vunpack.c.l.b16 %v334
    %v1742 = vunpack.c.h.b16 %v334
    %v1743 = vunpack.c.l.b16 %v335
    %v1744 = vunpack.c.h.b16 %v335
    %v1745 = vunpack.c.l.b16 %v336
    %v1746 = vunpack.c.h.b16 %v336
    %v1747 = vunpack.c.l.b16 %v337
    %v1748 = vunpack.c.h.b16 %v337
    %v1749 = vunpack.c.l.b16 %v338
    %v1750 = vunpack.c.h.b16 %v338
    %v1751 = vunpack.c.l.b16 %v339
    %v1752 = vunpack.c.h.b16 %v339
    %v1753 = vunpack.c.l.b16 %v340
    %v1754 = vunpack.c.h.b16 %v340
    %v1755 = vunpack.c.l.b16 %v341
    %v1756 = vunpack.c.h.b16 %v341
    %v1757 = vunpack.c.l.b16 %v342
    %v1758 = vunpack.c.h.b16 %v342
    %v1759 = vunpack.c.l.b16 %v343
    %v1760 = vunpack.c.h.b16 %v343
    %v1761 = vunpack.c.l.b16 %v344
    %v1762 = vunpack.c.h.b16 %v344
    %v1763 = vunpack.c.l.b16 %v345
    %v1764 = vunpack.c.h.b16 %v345
    %v1765 = vunpack.c.l.b16 %v346
    %v1766 = vunpack.c.h.b16 %v346
    %v1767 = vunpack.c.l.b16 %v347
    %v1768 = vunpack.c.h.b16 %v347
    %v1769 = vunpack.c.l.b16 %v348
    %v1770 = vunpack.c.h.b16 %v348
    %v1771 = vunpack.c.l.b16 %v349
    %v1772 = vunpack.c.h.b16 %v349
    %v1773 = vunpack.c.l.b16 %v350
    %v1774 = vunpack.c.h.b16 %v350
    %v1775 = vunpack.c.l.b16 %v351
    %v1776 = vunpack.c.h.b16 %v351
    %v1777 = vunpack.c.l.b16 %v352
    %v1778 = vunpack.c.h.b16 %v352
    %v1779 = vunpack.c.l.b16 %v353
    %v1780 = vunpack.c.h.b16 %v353
    %v1781 = vpack.c.b16 %v1533, %v1525
    %v1782 = vpack.c.b16 %v1534, %v1526
    %v1783 = vpack.c.b16 %v1535, %v1527
    %v1784 = vpack.c.b16 %v1536, %v1528
    %v1785 = vpack.c.b16 %v1537, %v1529
    %v1786 = vpack.c.b16 %v1538, %v1530
    %v1787 = vpack.c.b16 %v1539, %v1531
    %v1788 = vpack.c.b16 %v1540, %v1532
    %v1789 = vpack.c.b16 %v1549, %v1541
    %v1790 = vpack.c.b16 %v1550, %v1542
    %v1791 = vpack.c.b16 %v1551, %v1543
    %v1792 = vpack.c.b16 %v1552, %v1544
    %v1793 = vpack.c.b16 %v1553, %v1545
    %v1794 = vpack.c.b16 %v1554, %v1546
    %v1795 = vpack.c.b16 %v1555, %v1547
    %v1796 = vpack.c.b16 %v1556, %v1548
    %v1797 = vpack.c.b16 %v1565, %v1557
    %v1798 = vpack.c.b16 %v1566, %v1558
    %v1799 = vpack.c.b16 %v1567, %v1559
    %v1800 = vpack.c.b16 %v1568, %v1560
    %v1801 = vpack.c.b16 %v1569, %v1561
    %v1802 = vpack.c.b16 %v1570, %v1562
    %v1803 = vpack.c.b16 %v1571, %v1563
    %v1804 = vpack.c.b16 %v1572, %v1564
    %v1805 = vpack.c.b16 %v1581, %v1573
    %v1806 = vpack.c.b16 %v1582, %v1574
    %v1807 = vpack.c.b16 %v1583, %v1575
    %v1808 = vpack.c.b16 %v1584, %v1576
    %v1809 = vpack.c.b16 %v1585, %v1577
    %v1810 = vpack.c.b16 %v1586, %v1578
    %v1811 = vpack.c.b16 %v1587, %v1579
    %v1812 = vpack.c.b16 %v1588, %v1580
    %v1813 = vpack.c.b16 %v1597, %v1589
    %v1814 = vpack.c.b16 %v1598, %v1590
    %v1815 = vpack.c.b16 %v1599, %v1591
    %v1816 = vpack.c.b16 %v1600, %v1592
    %v1817 = vpack.c.b16 %v1601, %v1593
    %v1818 = vpack.c.b16 %v1602, %v1594
    %v1819 = vpack.c.b16 %v1603, %v1595
    %v1820 = vpack.c.b16 %v1604, %v1596
    %v1821 = vpack.c.b16 %v1613, %v1605
    %v1822 = vpack.c.b16 %v1614, %v1606
    %v1823 = vpack.c.b16 %v1615, %v1607
    %v1824 = vpack.c.b16 %v1616, %v1608
    %v1825 = vpack.c.b16 %v1617, %v1609
    %v1826 = vpack.c.b16 %v1618, %v1610
    %v1827 = vpack.c.b16 %v1619, %v1611
    %v1828 = vpack.c.b16 %v1620, %v1612
    %v1829 = vpack.c.b16 %v1629, %v1621
    %v1830 = vpack.c.b16 %v1630, %v1622
    %v1831 = vpack.c.b16 %v1631, %v1623
    %v1832 = vpack.c.b16 %v1632, %v1624
    %v1833 = vpack.c.b16 %v1633, %v1625
    %v1834 = vpack.c.b16 %v1634, %v1626
    %v1835 = vpack.c.b16 %v1635, %v1627
    %v1836 = vpack.c.b16 %v1636, %v1628
    %v1837 = vpack.c.b16 %v1645, %v1637
    %v1838 = vpack.c.b16 %v1646, %v1638
    %v1839 = vpack.c.b16 %v1647, %v1639
    %v1840 = vpack.c.b16 %v1648, %v1640
    %v1841 = vpack.c.b16 %v1649, %v1641
    %v1842 = vpack.c.b16 %v1650, %v1642
    %v1843 = vpack.c.b16 %v1651, %v1643
    %v1844 = vpack.c.b16 %v1652, %v1644
    %v1845 = vpack.c.b16 %v1661, %v1653
    %v1846 = vpack.c.b16 %v1662, %v1654
    %v1847 = vpack.c.b16 %v1663, %v1655
    %v1848 = vpack.c.b16 %v1664, %v1656
    %v1849 = vpack.c.b16 %v1665, %v1657
    %v1850 = vpack.c.b16 %v1666, %v1658
    %v1851 = vpack.c.b16 %v1667, %v1659
    %v1852 = vpack.c.b16 %v1668, %v1660
    %v1853 = vpack.c.b16 %v1677, %v1669
    %v1854 = vpack.c.b16 %v1678, %v1670
    %v1855 = vpack.c.b16 %v1679, %v1671
    %v1856 = vpack.c.b16 %v1680, %v1672
    %v1857 = vpack.c.b16 %v1681, %v1673
    %v1858 = vpack.c.b16 %v1682, %v1674
    %v1859 = vpack.c.b16 %v1683, %v1675
    %v1860 = vpack.c.b16 %v1684, %v1676
    %v1861 = vpack.c.b16 %v1693, %v1685
    %v1862 = vpack.c.b16 %v1694, %v1686
    %v1863 = vpack.c.b16 %v1695, %v1687
    %v1864 = vpack.c.b16 %v1696, %v1688
    %v1865 = vpack.c.b16 %v1697, %v1689
    %v1866 = vpack.c.b16 %v1698, %v1690
    %v1867 = vpack.c.b16 %v1699, %v1691
    %v1868 = vpack.c.b16 %v1700, %v1692
    %v1869 = vpack.c.b16 %v1709, %v1701
    %v1870 = vpack.c.b16 %v1710, %v1702
    %v1871 = vpack.c.b16 %v1711, %v1703
    %v1872 = vpack.c.b16 %v1712, %v1704
    %v1873 = vpack.c.b16 %v1713, %v1705
    %v1874 = vpack.c.b16 %v1714, %v1706
    %v1875 = vpack.c.b16 %v1715, %v1707
    %v1876 = vpack.c.b16 %v1716, %v1708
    %v1877 = vpack.c.b16 %v1725, %v1717
    %v1878 = vpack.c.b16 %v1726, %v1718
    %v1879 = vpack.c.b16 %v1727, %v1719
    %v1880 = vpack.c.b16 %v1728, %v1720
    %v1881 = vpack.c.b16 %v1729, %v1721
    %v1882 = vpack.c.b16 %v1730, %v1722
    %v1883 = vpack.c.b16 %v1731, %v1723
    %v1884 = vpack.c.b16 %v1732, %v1724
    %v1885 = vpack.c.b16 %v1741, %v1733
    %v1886 = vpack.c.b16 %v1742, %v1734
    %v1887 = vpack.c.b16 %v1743, %v1735
    %v1888 = vpack.c.b16 %v1744, %v1736
    %v1889 = vpack.c.b16 %v1745, %v1737
    %v1890 = vpack.c.b16 %v1746, %v1738
    %v1891 = vpack.c.b16 %v1747, %v1739
    %v1892 = vpack.c.b16 %v1748, %v1740
    %v1893 = vpack.c.b16 %v1757, %v1749
    %v1894 = vpack.c.b16 %v1758, %v1750
    %v1895 = vpack.c.b16 %v1759, %v1751
    %v1896 = vpack.c.b16 %v1760, %v1752
    %v1897 = vpack.c.b16 %v1761, %v1753
    %v1898 = vpack.c.b16 %v1762, %v1754
    %v1899 = vpack.c.b16 %v1763, %v1755
    %v1900 = vpack.c.b16 %v1764, %v1756
    %v1901 = vpack.c.b16 %v1773, %v1765
    %v1902 = vpack.c.b16 %v1774, %v1766
    %v1903 = vpack.c.b16 %v1775, %v1767
    %v1904 = vpack.c.b16 %v1776, %v1768
    %v1905 = vpack.c.b16 %v1777, %v1769
    %v1906 = vpack.c.b16 %v1778, %v1770
    %v1907 = vpack.c.b16 %v1779, %v1771
    %v1908 = vpack.c.b16 %v1780, %v1772
    %2037 = vmatprep.subr.bf16.mxu0 %v1782
    %2038 = vmatpush1.bf16.msra.mxu0 %v1781
    %2039 = vmatprep.subr.bf16.mxu0 %v1790
    %2040 = vmatpush1.bf16.msra.mxu0 %v1789
    %2041 = vmatprep.subr.bf16.mxu0 %v1798
    %2042 = vmatpush1.bf16.msra.mxu0 %v1797
    %2043 = vmatprep.subr.bf16.mxu0 %v1806
    %2044 = vmatpush1.bf16.msra.mxu0 %v1805
    %2045 = vmatprep.subr.bf16.mxu0 %v1814
    %2046 = vmatpush1.bf16.msra.mxu0 %v1813
    %2047 = vmatprep.subr.bf16.mxu0 %v1822
    %2048 = vmatpush1.bf16.msra.mxu0 %v1821
    %2049 = vmatprep.subr.bf16.mxu0 %v1830
    %2050 = vmatpush1.bf16.msra.mxu0 %v1829
    %2051 = vmatprep.subr.bf16.mxu0 %v1838
    %2052 = vmatpush1.bf16.msra.mxu0 %v1837
    %2053 = vmatprep.subr.bf16.mxu0 %v1846
    %2054 = vmatpush1.bf16.msra.mxu0 %v1845
    %2055 = vmatprep.subr.bf16.mxu0 %v1854
    %2056 = vmatpush1.bf16.msra.mxu0 %v1853
    %2057 = vmatprep.subr.bf16.mxu0 %v1862
    %2058 = vmatpush1.bf16.msra.mxu0 %v1861
    %2059 = vmatprep.subr.bf16.mxu0 %v1870
    %2060 = vmatpush1.bf16.msra.mxu0 %v1869
    %2061 = vmatprep.subr.bf16.mxu0 %v1878
    %2062 = vmatpush1.bf16.msra.mxu0 %v1877
    %2063 = vmatprep.subr.bf16.mxu0 %v1886
    %2064 = vmatpush1.bf16.msra.mxu0 %v1885
    %2065 = vmatprep.subr.bf16.mxu0 %v1894
    %2066 = vmatpush1.bf16.msra.mxu0 %v1893
    %2067 = vmatprep.subr.bf16.mxu0 %v1902
    %2068 = vmatpush1.bf16.msra.mxu0 %v1901
    %2069 = vmatprep.mubr.bf16.mxu0 %v225
    %2070 = vmatmul.mubr.bf16.gmra.mrb[0].mxu0 %v224
    %v2071 = vpop.f32.mrb[0].mxu0
    %v2072 = vadd.f32 %v1260, %v2071
    %v2073 = vpop.f32.mrb[0].mxu0
    %v2074 = vadd.f32 %v1262, %v2073
    %v2075 = vpop.f32.mrb[0].mxu0
    %v2076 = vadd.f32 %v1264, %v2075
    %v2077 = vpop.f32.mrb[0].mxu0
    %v2078 = vadd.f32 %v1266, %v2077
    %2079 = vdwg.mxu0
    %2080 = vmatprep.subr.bf16.mxu0 %v1784
    %2081 = vmatpush1.bf16.msra.mxu0 %v1783
    %2082 = vmatprep.subr.bf16.mxu0 %v1792
    %2083 = vmatpush1.bf16.msra.mxu0 %v1791
    %2084 = vmatprep.subr.bf16.mxu0 %v1800
    %2085 = vmatpush1.bf16.msra.mxu0 %v1799
    %2086 = vmatprep.subr.bf16.mxu0 %v1808
    %2087 = vmatpush1.bf16.msra.mxu0 %v1807
    %2088 = vmatprep.subr.bf16.mxu0 %v1816
    %2089 = vmatpush1.bf16.msra.mxu0 %v1815
    %2090 = vmatprep.subr.bf16.mxu0 %v1824
    %2091 = vmatpush1.bf16.msra.mxu0 %v1823
    %2092 = vmatprep.subr.bf16.mxu0 %v1832
    %2093 = vmatpush1.bf16.msra.mxu0 %v1831
    %2094 = vmatprep.subr.bf16.mxu0 %v1840
    %2095 = vmatpush1.bf16.msra.mxu0 %v1839
    %2096 = vmatprep.subr.bf16.mxu0 %v1848
    %2097 = vmatpush1.bf16.msra.mxu0 %v1847
    %2098 = vmatprep.subr.bf16.mxu0 %v1856
    %2099 = vmatpush1.bf16.msra.mxu0 %v1855
    %2100 = vmatprep.subr.bf16.mxu0 %v1864
    %2101 = vmatpush1.bf16.msra.mxu0 %v1863
    %2102 = vmatprep.subr.bf16.mxu0 %v1872
    %2103 = vmatpush1.bf16.msra.mxu0 %v1871
    %2104 = vmatprep.subr.bf16.mxu0 %v1880
    %2105 = vmatpush1.bf16.msra.mxu0 %v1879
    %2106 = vmatprep.subr.bf16.mxu0 %v1888
    %2107 = vmatpush1.bf16.msra.mxu0 %v1887
    %2108 = vmatprep.subr.bf16.mxu0 %v1896
    %2109 = vmatpush1.bf16.msra.mxu0 %v1895
    %2110 = vmatprep.subr.bf16.mxu0 %v1904
    %2111 = vmatpush1.bf16.msra.mxu0 %v1903
    %2112 = vmatprep.mubr.bf16.mxu0 %v225
    %2113 = vmatmul.mubr.bf16.gmra.mrb[0].mxu0 %v224
    %v2114 = vpop.f32.mrb[0].mxu0
    %v2115 = vadd.f32 %v1303, %v2114
    %v2116 = vpop.f32.mrb[0].mxu0
    %v2117 = vadd.f32 %v1305, %v2116
    %v2118 = vpop.f32.mrb[0].mxu0
    %v2119 = vadd.f32 %v1307, %v2118
    %v2120 = vpop.f32.mrb[0].mxu0
    %v2121 = vadd.f32 %v1309, %v2120
    %2122 = vdwg.mxu0
    %2123 = vmatprep.subr.bf16.mxu0 %v1786
    %2124 = vmatpush1.bf16.msra.mxu0 %v1785
    %2125 = vmatprep.subr.bf16.mxu0 %v1794
    %2126 = vmatpush1.bf16.msra.mxu0 %v1793
    %2127 = vmatprep.subr.bf16.mxu0 %v1802
    %2128 = vmatpush1.bf16.msra.mxu0 %v1801
    %2129 = vmatprep.subr.bf16.mxu0 %v1810
    %2130 = vmatpush1.bf16.msra.mxu0 %v1809
    %2131 = vmatprep.subr.bf16.mxu0 %v1818
    %2132 = vmatpush1.bf16.msra.mxu0 %v1817
    %2133 = vmatprep.subr.bf16.mxu0 %v1826
    %2134 = vmatpush1.bf16.msra.mxu0 %v1825
    %2135 = vmatprep.subr.bf16.mxu0 %v1834
    %2136 = vmatpush1.bf16.msra.mxu0 %v1833
    %2137 = vmatprep.subr.bf16.mxu0 %v1842
    %2138 = vmatpush1.bf16.msra.mxu0 %v1841
    %2139 = vmatprep.subr.bf16.mxu0 %v1850
    %2140 = vmatpush1.bf16.msra.mxu0 %v1849
    %2141 = vmatprep.subr.bf16.mxu0 %v1858
    %2142 = vmatpush1.bf16.msra.mxu0 %v1857
    %2143 = vmatprep.subr.bf16.mxu0 %v1866
    %2144 = vmatpush1.bf16.msra.mxu0 %v1865
    %2145 = vmatprep.subr.bf16.mxu0 %v1874
    %2146 = vmatpush1.bf16.msra.mxu0 %v1873
    %2147 = vmatprep.subr.bf16.mxu0 %v1882
    %2148 = vmatpush1.bf16.msra.mxu0 %v1881
    %2149 = vmatprep.subr.bf16.mxu0 %v1890
    %2150 = vmatpush1.bf16.msra.mxu0 %v1889
    %2151 = vmatprep.subr.bf16.mxu0 %v1898
    %2152 = vmatpush1.bf16.msra.mxu0 %v1897
    %2153 = vmatprep.subr.bf16.mxu0 %v1906
    %2154 = vmatpush1.bf16.msra.mxu0 %v1905
    %2155 = vmatprep.mubr.bf16.mxu0 %v225
    %2156 = vmatmul.mubr.bf16.gmra.mrb[0].mxu0 %v224
    %v2157 = vpop.f32.mrb[0].mxu0
    %v2158 = vadd.f32 %v1346, %v2157
    %v2159 = vpop.f32.mrb[0].mxu0
    %v2160 = vadd.f32 %v1348, %v2159
    %v2161 = vpop.f32.mrb[0].mxu0
    %v2162 = vadd.f32 %v1350, %v2161
    %v2163 = vpop.f32.mrb[0].mxu0
    %v2164 = vadd.f32 %v1352, %v2163
    %2165 = vdwg.mxu0
    %2166 = vmatprep.subr.bf16.mxu0 %v1788
    %2167 = vmatpush1.bf16.msra.mxu0 %v1787
    %2168 = vmatprep.subr.bf16.mxu0 %v1796
    %2169 = vmatpush1.bf16.msra.mxu0 %v1795
    %2170 = vmatprep.subr.bf16.mxu0 %v1804
    %2171 = vmatpush1.bf16.msra.mxu0 %v1803
    %2172 = vmatprep.subr.bf16.mxu0 %v1812
    %2173 = vmatpush1.bf16.msra.mxu0 %v1811
    %2174 = vmatprep.subr.bf16.mxu0 %v1820
    %2175 = vmatpush1.bf16.msra.mxu0 %v1819
    %2176 = vmatprep.subr.bf16.mxu0 %v1828
    %2177 = vmatpush1.bf16.msra.mxu0 %v1827
    %2178 = vmatprep.subr.bf16.mxu0 %v1836
    %2179 = vmatpush1.bf16.msra.mxu0 %v1835
    %2180 = vmatprep.subr.bf16.mxu0 %v1844
    %2181 = vmatpush1.bf16.msra.mxu0 %v1843
    %2182 = vmatprep.subr.bf16.mxu0 %v1852
    %2183 = vmatpush1.bf16.msra.mxu0 %v1851
    %2184 = vmatprep.subr.bf16.mxu0 %v1860
    %2185 = vmatpush1.bf16.msra.mxu0 %v1859
    %2186 = vmatprep.subr.bf16.mxu0 %v1868
    %2187 = vmatpush1.bf16.msra.mxu0 %v1867
    %2188 = vmatprep.subr.bf16.mxu0 %v1876
    %2189 = vmatpush1.bf16.msra.mxu0 %v1875
    %2190 = vmatprep.subr.bf16.mxu0 %v1884
    %2191 = vmatpush1.bf16.msra.mxu0 %v1883
    %2192 = vmatprep.subr.bf16.mxu0 %v1892
    %2193 = vmatpush1.bf16.msra.mxu0 %v1891
    %2194 = vmatprep.subr.bf16.mxu0 %v1900
    %2195 = vmatpush1.bf16.msra.mxu0 %v1899
    %2196 = vmatprep.subr.bf16.mxu0 %v1908
    %2197 = vmatpush1.bf16.msra.mxu0 %v1907
    %2198 = vmatprep.mubr.bf16.mxu0 %v225
    %2199 = vmatmul.mubr.bf16.gmra.mrb[0].mxu0 %v224
    %v2200 = vpop.f32.mrb[0].mxu0
    %v2201 = vadd.f32 %v1389, %v2200
    %v2202 = vpop.f32.mrb[0].mxu0
    %v2203 = vadd.f32 %v1391, %v2202
    %v2204 = vpop.f32.mrb[0].mxu0
    %v2205 = vadd.f32 %v1393, %v2204
    %v2206 = vpop.f32.mrb[0].mxu0
    %v2207 = vadd.f32 %v1395, %v2206
    %2208 = vdwg.mxu0
    %v2209 = vld [vmem:[#allocation5 + $0x20] sm:$0xff]
    %v2210 = vld [vmem:[#allocation5 + $0x28] sm:$0xff]
    %v2211 = vld [vmem:[#allocation5 + $0x60] sm:$0xff]
    %v2212 = vld [vmem:[#allocation5 + $0x68] sm:$0xff]
    %v2213 = vld [vmem:[#allocation5 + $0xa0] sm:$0xff]
    %v2214 = vld [vmem:[#allocation5 + $0xa8] sm:$0xff]
    %v2215 = vld [vmem:[#allocation5 + $0xe0] sm:$0xff]
    %v2216 = vld [vmem:[#allocation5 + $0xe8] sm:$0xff]
    %v2217 = vld [vmem:[#allocation7 + $0x4] sm:$0x3]
    %v2219 = vlaneseq
    %v2220 = vshrl.u32 %v2219, 7
    %v2221 = vsub.s32 0, %v2220
    %v2222 = vrot.slane %v2217, %v2221
    %v2223 = vlaneseq
    %v2224 = vshrl.u32 %v2223, 7
    %v2225 = vsub.s32 1, %v2224
    %v2226 = vrot.slane %v2217, %v2225
    %2229 = vmatprep.subr.mxu0 %v2210
    %2230 = vmatpush1.msra.mxu0 %v2209
    %2231 = vmatprep.subr.mxu0 %v2212
    %2232 = vmatpush1.msra.mxu0 %v2211
    %2233 = vmatprep.subr.mxu0 %v2214
    %2234 = vmatpush1.msra.mxu0 %v2213
    %2235 = vmatprep.subr.mxu0 %v2216
    %2236 = vmatpush1.msra.mxu0 %v2215
    %2237 = vmatprep.subr.mxu0 0.0
    %2238 = vmatpush1.msra.mxu0 0.0
    %2239 = vmatprep.subr.mxu0 0.0
    %2240 = vmatpush1.msra.mxu0 0.0
    %2241 = vmatprep.subr.mxu0 0.0
    %2242 = vmatpush1.msra.mxu0 0.0
    %2243 = vmatprep.subr.mxu0 0.0
    %2244 = vmatpush1.msra.mxu0 0.0
    %2245 = vmatprep.subr.mxu0 0.0
    %2246 = vmatpush1.msra.mxu0 0.0
    %2247 = vmatprep.subr.mxu0 0.0
    %2248 = vmatpush1.msra.mxu0 0.0
    %2249 = vmatprep.subr.mxu0 0.0
    %2250 = vmatpush1.msra.mxu0 0.0
    %2251 = vmatprep.subr.mxu0 0.0
    %2252 = vmatpush1.msra.mxu0 0.0
    %2253 = vmatprep.subr.mxu0 0.0
    %2254 = vmatpush1.msra.mxu0 0.0
    %2255 = vmatprep.subr.mxu0 0.0
    %2256 = vmatpush1.msra.mxu0 0.0
    %2257 = vmatprep.subr.mxu0 0.0
    %2258 = vmatpush1.msra.mxu0 0.0
    %2259 = vmatprep.subr.mxu0 0.0
    %2260 = vmatpush1.msra.mxu0 0.0
    %2261 = vmatprep.subr.mxu0 0.0
    %2262 = vmatpush1.msra.mxu0 0.0
    %2263 = vmatprep.subr.mxu0 0.0
    %2264 = vmatpush1.msra.mxu0 0.0
    %2265 = vmatprep.subr.mxu0 0.0
    %2266 = vmatpush1.msra.mxu0 0.0
    %2267 = vmatprep.subr.mxu0 0.0
    %2268 = vmatpush1.msra.mxu0 0.0
    %2269 = vmatprep.subr.mxu0 0.0
    %2270 = vmatpush1.msra.mxu0 0.0
    %2271 = vmatprep.subr.mxu0 0.0
    %2272 = vmatpush1.msra.mxu0 0.0
    %2273 = vmatprep.subr.mxu0 0.0
    %2274 = vmatpush1.msra.mxu0 0.0
    %2275 = vmatprep.subr.mxu0 0.0
    %2276 = vmatpush1.msra.mxu0 0.0
    %2277 = vmatprep.subr.mxu0 0.0
    %2278 = vmatpush1.msra.mxu0 0.0
    %2279 = vmatprep.subr.mxu0 0.0
    %2280 = vmatpush1.msra.mxu0 0.0
    %2281 = vmatprep.subr.mxu0 0.0
    %2282 = vmatpush1.msra.mxu0 0.0
    %2283 = vmatprep.subr.mxu0 0.0
    %2284 = vmatpush1.msra.mxu0 0.0
    %2285 = vmatprep.subr.mxu0 0.0
    %2286 = vmatpush1.msra.mxu0 0.0
    %2287 = vmatprep.subr.mxu0 0.0
    %2288 = vmatpush1.msra.mxu0 0.0
    %2289 = vmatprep.subr.mxu0 0.0
    %2290 = vmatpush1.msra.mxu0 0.0
    %2291 = vmatprep.subr.mxu0 0.0
    %2292 = vmatpush1.msra.mxu0 0.0
    %2293 = vmatprep.mubr.f32.mxu0 0.0
    %2294 = vmatmul.mubr.f32.gmra.mrb[0].mxu0 %v138
    %v2295 = vpop.f32.mrb[0].mxu0
    %v2296 = vadd.f32 %v2222, %v2295
    %v2297 = vpop.f32.mrb[0].mxu0
    %v2298 = vadd.f32 %v2226, %v2297
    %2299 = vmatprep.mubr.f32.mxu0 0.0
    %2300 = vmatmul.mubr.f32.gmra.mrb[0].mxu0 %v141
    %v2301 = vpop.f32.mrb[0].mxu0
    %v2302 = vadd.f32 %v2222, %v2301
    %v2303 = vpop.f32.mrb[0].mxu0
    %v2304 = vadd.f32 %v2226, %v2303
    %2305 = vdwg.mxu0
    %v2306 = vmax.f32 %v2296, 0.0
    %v2307 = vmax.f32 %v2298, 0.0
    %v2308 = vmax.f32 %v2302, 0.0
    %v2309 = vmax.f32 %v2304, 0.0
    %v2310 = vpack.c.bf16 %v2308, %v2306
    %v2311 = vpack.c.bf16 %v2309, %v2307
    %v2312 = vld [vmem:[#allocation8 + $0x800] sm:$0xff]
    %v2313 = vld [vmem:[#allocation8 + $0x808] sm:$0xff]
    %v2314 = vld [vmem:[#allocation8 + $0x810] sm:$0xff]
    %v2315 = vld [vmem:[#allocation8 + $0x818] sm:$0xff]
    %v2316 = vld [vmem:[#allocation8 + $0x820] sm:$0xff]
    %v2317 = vld [vmem:[#allocation8 + $0x828] sm:$0xff]
    %v2318 = vld [vmem:[#allocation8 + $0x830] sm:$0xff]
    %v2319 = vld [vmem:[#allocation8 + $0x838] sm:$0xff]
    %v2320 = vld [vmem:[#allocation8 + $0x840] sm:$0xff]
    %v2321 = vld [vmem:[#allocation8 + $0x848] sm:$0xff]
    %v2322 = vld [vmem:[#allocation8 + $0x850] sm:$0xff]
    %v2323 = vld [vmem:[#allocation8 + $0x858] sm:$0xff]
    %v2324 = vld [vmem:[#allocation8 + $0x860] sm:$0xff]
    %v2325 = vld [vmem:[#allocation8 + $0x868] sm:$0xff]
    %v2326 = vld [vmem:[#allocation8 + $0x870] sm:$0xff]
    %v2327 = vld [vmem:[#allocation8 + $0x878] sm:$0xff]
    %v2328 = vld [vmem:[#allocation8 + $0x880] sm:$0xff]
    %v2329 = vld [vmem:[#allocation8 + $0x888] sm:$0xff]
    %v2330 = vld [vmem:[#allocation8 + $0x890] sm:$0xff]
    %v2331 = vld [vmem:[#allocation8 + $0x898] sm:$0xff]
    %v2332 = vld [vmem:[#allocation8 + $0x8a0] sm:$0xff]
    %v2333 = vld [vmem:[#allocation8 + $0x8a8] sm:$0xff]
    %v2334 = vld [vmem:[#allocation8 + $0x8b0] sm:$0xff]
    %v2335 = vld [vmem:[#allocation8 + $0x8b8] sm:$0xff]
    %v2336 = vld [vmem:[#allocation8 + $0x8c0] sm:$0xff]
    %v2337 = vld [vmem:[#allocation8 + $0x8c8] sm:$0xff]
    %v2338 = vld [vmem:[#allocation8 + $0x8d0] sm:$0xff]
    %v2339 = vld [vmem:[#allocation8 + $0x8d8] sm:$0xff]
    %v2340 = vld [vmem:[#allocation8 + $0x8e0] sm:$0xff]
    %v2341 = vld [vmem:[#allocation8 + $0x8e8] sm:$0xff]
    %v2342 = vld [vmem:[#allocation8 + $0x8f0] sm:$0xff]
    %v2343 = vld [vmem:[#allocation8 + $0x8f8] sm:$0xff]
    %v2344 = vld [vmem:[#allocation8 + $0x900] sm:$0xff]
    %v2345 = vld [vmem:[#allocation8 + $0x908] sm:$0xff]
    %v2346 = vld [vmem:[#allocation8 + $0x910] sm:$0xff]
    %v2347 = vld [vmem:[#allocation8 + $0x918] sm:$0xff]
    %v2348 = vld [vmem:[#allocation8 + $0x920] sm:$0xff]
    %v2349 = vld [vmem:[#allocation8 + $0x928] sm:$0xff]
    %v2350 = vld [vmem:[#allocation8 + $0x930] sm:$0xff]
    %v2351 = vld [vmem:[#allocation8 + $0x938] sm:$0xff]
    %v2352 = vld [vmem:[#allocation8 + $0x940] sm:$0xff]
    %v2353 = vld [vmem:[#allocation8 + $0x948] sm:$0xff]
    %v2354 = vld [vmem:[#allocation8 + $0x950] sm:$0xff]
    %v2355 = vld [vmem:[#allocation8 + $0x958] sm:$0xff]
    %v2356 = vld [vmem:[#allocation8 + $0x960] sm:$0xff]
    %v2357 = vld [vmem:[#allocation8 + $0x968] sm:$0xff]
    %v2358 = vld [vmem:[#allocation8 + $0x970] sm:$0xff]
    %v2359 = vld [vmem:[#allocation8 + $0x978] sm:$0xff]
    %v2360 = vld [vmem:[#allocation8 + $0x980] sm:$0xff]
    %v2361 = vld [vmem:[#allocation8 + $0x988] sm:$0xff]
    %v2362 = vld [vmem:[#allocation8 + $0x990] sm:$0xff]
    %v2363 = vld [vmem:[#allocation8 + $0x998] sm:$0xff]
    %v2364 = vld [vmem:[#allocation8 + $0x9a0] sm:$0xff]
    %v2365 = vld [vmem:[#allocation8 + $0x9a8] sm:$0xff]
    %v2366 = vld [vmem:[#allocation8 + $0x9b0] sm:$0xff]
    %v2367 = vld [vmem:[#allocation8 + $0x9b8] sm:$0xff]
    %v2368 = vld [vmem:[#allocation8 + $0x9c0] sm:$0xff]
    %v2369 = vld [vmem:[#allocation8 + $0x9c8] sm:$0xff]
    %v2370 = vld [vmem:[#allocation8 + $0x9d0] sm:$0xff]
    %v2371 = vld [vmem:[#allocation8 + $0x9d8] sm:$0xff]
    %v2372 = vld [vmem:[#allocation8 + $0x9e0] sm:$0xff]
    %v2373 = vld [vmem:[#allocation8 + $0x9e8] sm:$0xff]
    %v2374 = vld [vmem:[#allocation8 + $0x9f0] sm:$0xff]
    %v2375 = vld [vmem:[#allocation8 + $0x9f8] sm:$0xff]
    %v2376 = vld [vmem:[#allocation8 + $0xa00] sm:$0xff]
    %v2377 = vld [vmem:[#allocation8 + $0xa08] sm:$0xff]
    %v2378 = vld [vmem:[#allocation8 + $0xa10] sm:$0xff]
    %v2379 = vld [vmem:[#allocation8 + $0xa18] sm:$0xff]
    %v2380 = vld [vmem:[#allocation8 + $0xa20] sm:$0xff]
    %v2381 = vld [vmem:[#allocation8 + $0xa28] sm:$0xff]
    %v2382 = vld [vmem:[#allocation8 + $0xa30] sm:$0xff]
    %v2383 = vld [vmem:[#allocation8 + $0xa38] sm:$0xff]
    %v2384 = vld [vmem:[#allocation8 + $0xa40] sm:$0xff]
    %v2385 = vld [vmem:[#allocation8 + $0xa48] sm:$0xff]
    %v2386 = vld [vmem:[#allocation8 + $0xa50] sm:$0xff]
    %v2387 = vld [vmem:[#allocation8 + $0xa58] sm:$0xff]
    %v2388 = vld [vmem:[#allocation8 + $0xa60] sm:$0xff]
    %v2389 = vld [vmem:[#allocation8 + $0xa68] sm:$0xff]
    %v2390 = vld [vmem:[#allocation8 + $0xa70] sm:$0xff]
    %v2391 = vld [vmem:[#allocation8 + $0xa78] sm:$0xff]
    %v2392 = vld [vmem:[#allocation8 + $0xa80] sm:$0xff]
    %v2393 = vld [vmem:[#allocation8 + $0xa88] sm:$0xff]
    %v2394 = vld [vmem:[#allocation8 + $0xa90] sm:$0xff]
    %v2395 = vld [vmem:[#allocation8 + $0xa98] sm:$0xff]
    %v2396 = vld [vmem:[#allocation8 + $0xaa0] sm:$0xff]
    %v2397 = vld [vmem:[#allocation8 + $0xaa8] sm:$0xff]
    %v2398 = vld [vmem:[#allocation8 + $0xab0] sm:$0xff]
    %v2399 = vld [vmem:[#allocation8 + $0xab8] sm:$0xff]
    %v2400 = vld [vmem:[#allocation8 + $0xac0] sm:$0xff]
    %v2401 = vld [vmem:[#allocation8 + $0xac8] sm:$0xff]
    %v2402 = vld [vmem:[#allocation8 + $0xad0] sm:$0xff]
    %v2403 = vld [vmem:[#allocation8 + $0xad8] sm:$0xff]
    %v2404 = vld [vmem:[#allocation8 + $0xae0] sm:$0xff]
    %v2405 = vld [vmem:[#allocation8 + $0xae8] sm:$0xff]
    %v2406 = vld [vmem:[#allocation8 + $0xaf0] sm:$0xff]
    %v2407 = vld [vmem:[#allocation8 + $0xaf8] sm:$0xff]
    %v2408 = vld [vmem:[#allocation8 + $0xb00] sm:$0xff]
    %v2409 = vld [vmem:[#allocation8 + $0xb08] sm:$0xff]
    %v2410 = vld [vmem:[#allocation8 + $0xb10] sm:$0xff]
    %v2411 = vld [vmem:[#allocation8 + $0xb18] sm:$0xff]
    %v2412 = vld [vmem:[#allocation8 + $0xb20] sm:$0xff]
    %v2413 = vld [vmem:[#allocation8 + $0xb28] sm:$0xff]
    %v2414 = vld [vmem:[#allocation8 + $0xb30] sm:$0xff]
    %v2415 = vld [vmem:[#allocation8 + $0xb38] sm:$0xff]
    %v2416 = vld [vmem:[#allocation8 + $0xb40] sm:$0xff]
    %v2417 = vld [vmem:[#allocation8 + $0xb48] sm:$0xff]
    %v2418 = vld [vmem:[#allocation8 + $0xb50] sm:$0xff]
    %v2419 = vld [vmem:[#allocation8 + $0xb58] sm:$0xff]
    %v2420 = vld [vmem:[#allocation8 + $0xb60] sm:$0xff]
    %v2421 = vld [vmem:[#allocation8 + $0xb68] sm:$0xff]
    %v2422 = vld [vmem:[#allocation8 + $0xb70] sm:$0xff]
    %v2423 = vld [vmem:[#allocation8 + $0xb78] sm:$0xff]
    %v2424 = vld [vmem:[#allocation8 + $0xb80] sm:$0xff]
    %v2425 = vld [vmem:[#allocation8 + $0xb88] sm:$0xff]
    %v2426 = vld [vmem:[#allocation8 + $0xb90] sm:$0xff]
    %v2427 = vld [vmem:[#allocation8 + $0xb98] sm:$0xff]
    %v2428 = vld [vmem:[#allocation8 + $0xba0] sm:$0xff]
    %v2429 = vld [vmem:[#allocation8 + $0xba8] sm:$0xff]
    %v2430 = vld [vmem:[#allocation8 + $0xbb0] sm:$0xff]
    %v2431 = vld [vmem:[#allocation8 + $0xbb8] sm:$0xff]
    %v2432 = vld [vmem:[#allocation8 + $0xbc0] sm:$0xff]
    %v2433 = vld [vmem:[#allocation8 + $0xbc8] sm:$0xff]
    %v2434 = vld [vmem:[#allocation8 + $0xbd0] sm:$0xff]
    %v2435 = vld [vmem:[#allocation8 + $0xbd8] sm:$0xff]
    %v2436 = vld [vmem:[#allocation8 + $0xbe0] sm:$0xff]
    %v2437 = vld [vmem:[#allocation8 + $0xbe8] sm:$0xff]
    %v2438 = vld [vmem:[#allocation8 + $0xbf0] sm:$0xff]
    %v2439 = vld [vmem:[#allocation8 + $0xbf8] sm:$0xff]
    %v2568 = vunpack.c.l.b16 %v2312
    %v2569 = vunpack.c.h.b16 %v2312
    %v2570 = vunpack.c.l.b16 %v2313
    %v2571 = vunpack.c.h.b16 %v2313
    %v2572 = vunpack.c.l.b16 %v2314
    %v2573 = vunpack.c.h.b16 %v2314
    %v2574 = vunpack.c.l.b16 %v2315
    %v2575 = vunpack.c.h.b16 %v2315
    %v2576 = vunpack.c.l.b16 %v2316
    %v2577 = vunpack.c.h.b16 %v2316
    %v2578 = vunpack.c.l.b16 %v2317
    %v2579 = vunpack.c.h.b16 %v2317
    %v2580 = vunpack.c.l.b16 %v2318
    %v2581 = vunpack.c.h.b16 %v2318
    %v2582 = vunpack.c.l.b16 %v2319
    %v2583 = vunpack.c.h.b16 %v2319
    %v2584 = vunpack.c.l.b16 %v2320
    %v2585 = vunpack.c.h.b16 %v2320
    %v2586 = vunpack.c.l.b16 %v2321
    %v2587 = vunpack.c.h.b16 %v2321
    %v2588 = vunpack.c.l.b16 %v2322
    %v2589 = vunpack.c.h.b16 %v2322
    %v2590 = vunpack.c.l.b16 %v2323
    %v2591 = vunpack.c.h.b16 %v2323
    %v2592 = vunpack.c.l.b16 %v2324
    %v2593 = vunpack.c.h.b16 %v2324
    %v2594 = vunpack.c.l.b16 %v2325
    %v2595 = vunpack.c.h.b16 %v2325
    %v2596 = vunpack.c.l.b16 %v2326
    %v2597 = vunpack.c.h.b16 %v2326
    %v2598 = vunpack.c.l.b16 %v2327
    %v2599 = vunpack.c.h.b16 %v2327
    %v2600 = vunpack.c.l.b16 %v2328
    %v2601 = vunpack.c.h.b16 %v2328
    %v2602 = vunpack.c.l.b16 %v2329
    %v2603 = vunpack.c.h.b16 %v2329
    %v2604 = vunpack.c.l.b16 %v2330
    %v2605 = vunpack.c.h.b16 %v2330
    %v2606 = vunpack.c.l.b16 %v2331
    %v2607 = vunpack.c.h.b16 %v2331
    %v2608 = vunpack.c.l.b16 %v2332
    %v2609 = vunpack.c.h.b16 %v2332
    %v2610 = vunpack.c.l.b16 %v2333
    %v2611 = vunpack.c.h.b16 %v2333
    %v2612 = vunpack.c.l.b16 %v2334
    %v2613 = vunpack.c.h.b16 %v2334
    %v2614 = vunpack.c.l.b16 %v2335
    %v2615 = vunpack.c.h.b16 %v2335
    %v2616 = vunpack.c.l.b16 %v2336
    %v2617 = vunpack.c.h.b16 %v2336
    %v2618 = vunpack.c.l.b16 %v2337
    %v2619 = vunpack.c.h.b16 %v2337
    %v2620 = vunpack.c.l.b16 %v2338
    %v2621 = vunpack.c.h.b16 %v2338
    %v2622 = vunpack.c.l.b16 %v2339
    %v2623 = vunpack.c.h.b16 %v2339
    %v2624 = vunpack.c.l.b16 %v2340
    %v2625 = vunpack.c.h.b16 %v2340
    %v2626 = vunpack.c.l.b16 %v2341
    %v2627 = vunpack.c.h.b16 %v2341
    %v2628 = vunpack.c.l.b16 %v2342
    %v2629 = vunpack.c.h.b16 %v2342
    %v2630 = vunpack.c.l.b16 %v2343
    %v2631 = vunpack.c.h.b16 %v2343
    %v2632 = vunpack.c.l.b16 %v2344
    %v2633 = vunpack.c.h.b16 %v2344
    %v2634 = vunpack.c.l.b16 %v2345
    %v2635 = vunpack.c.h.b16 %v2345
    %v2636 = vunpack.c.l.b16 %v2346
    %v2637 = vunpack.c.h.b16 %v2346
    %v2638 = vunpack.c.l.b16 %v2347
    %v2639 = vunpack.c.h.b16 %v2347
    %v2640 = vunpack.c.l.b16 %v2348
    %v2641 = vunpack.c.h.b16 %v2348
    %v2642 = vunpack.c.l.b16 %v2349
    %v2643 = vunpack.c.h.b16 %v2349
    %v2644 = vunpack.c.l.b16 %v2350
    %v2645 = vunpack.c.h.b16 %v2350
    %v2646 = vunpack.c.l.b16 %v2351
    %v2647 = vunpack.c.h.b16 %v2351
    %v2648 = vunpack.c.l.b16 %v2352
    %v2649 = vunpack.c.h.b16 %v2352
    %v2650 = vunpack.c.l.b16 %v2353
    %v2651 = vunpack.c.h.b16 %v2353
    %v2652 = vunpack.c.l.b16 %v2354
    %v2653 = vunpack.c.h.b16 %v2354
    %v2654 = vunpack.c.l.b16 %v2355
    %v2655 = vunpack.c.h.b16 %v2355
    %v2656 = vunpack.c.l.b16 %v2356
    %v2657 = vunpack.c.h.b16 %v2356
    %v2658 = vunpack.c.l.b16 %v2357
    %v2659 = vunpack.c.h.b16 %v2357
    %v2660 = vunpack.c.l.b16 %v2358
    %v2661 = vunpack.c.h.b16 %v2358
    %v2662 = vunpack.c.l.b16 %v2359
    %v2663 = vunpack.c.h.b16 %v2359
    %v2664 = vunpack.c.l.b16 %v2360
    %v2665 = vunpack.c.h.b16 %v2360
    %v2666 = vunpack.c.l.b16 %v2361
    %v2667 = vunpack.c.h.b16 %v2361
    %v2668 = vunpack.c.l.b16 %v2362
    %v2669 = vunpack.c.h.b16 %v2362
    %v2670 = vunpack.c.l.b16 %v2363
    %v2671 = vunpack.c.h.b16 %v2363
    %v2672 = vunpack.c.l.b16 %v2364
    %v2673 = vunpack.c.h.b16 %v2364
    %v2674 = vunpack.c.l.b16 %v2365
    %v2675 = vunpack.c.h.b16 %v2365
    %v2676 = vunpack.c.l.b16 %v2366
    %v2677 = vunpack.c.h.b16 %v2366
    %v2678 = vunpack.c.l.b16 %v2367
    %v2679 = vunpack.c.h.b16 %v2367
    %v2680 = vunpack.c.l.b16 %v2368
    %v2681 = vunpack.c.h.b16 %v2368
    %v2682 = vunpack.c.l.b16 %v2369
    %v2683 = vunpack.c.h.b16 %v2369
    %v2684 = vunpack.c.l.b16 %v2370
    %v2685 = vunpack.c.h.b16 %v2370
    %v2686 = vunpack.c.l.b16 %v2371
    %v2687 = vunpack.c.h.b16 %v2371
    %v2688 = vunpack.c.l.b16 %v2372
    %v2689 = vunpack.c.h.b16 %v2372
    %v2690 = vunpack.c.l.b16 %v2373
    %v2691 = vunpack.c.h.b16 %v2373
    %v2692 = vunpack.c.l.b16 %v2374
    %v2693 = vunpack.c.h.b16 %v2374
    %v2694 = vunpack.c.l.b16 %v2375
    %v2695 = vunpack.c.h.b16 %v2375
    %v2696 = vunpack.c.l.b16 %v2376
    %v2697 = vunpack.c.h.b16 %v2376
    %v2698 = vunpack.c.l.b16 %v2377
    %v2699 = vunpack.c.h.b16 %v2377
    %v2700 = vunpack.c.l.b16 %v2378
    %v2701 = vunpack.c.h.b16 %v2378
    %v2702 = vunpack.c.l.b16 %v2379
    %v2703 = vunpack.c.h.b16 %v2379
    %v2704 = vunpack.c.l.b16 %v2380
    %v2705 = vunpack.c.h.b16 %v2380
    %v2706 = vunpack.c.l.b16 %v2381
    %v2707 = vunpack.c.h.b16 %v2381
    %v2708 = vunpack.c.l.b16 %v2382
    %v2709 = vunpack.c.h.b16 %v2382
    %v2710 = vunpack.c.l.b16 %v2383
    %v2711 = vunpack.c.h.b16 %v2383
    %v2712 = vunpack.c.l.b16 %v2384
    %v2713 = vunpack.c.h.b16 %v2384
    %v2714 = vunpack.c.l.b16 %v2385
    %v2715 = vunpack.c.h.b16 %v2385
    %v2716 = vunpack.c.l.b16 %v2386
    %v2717 = vunpack.c.h.b16 %v2386
    %v2718 = vunpack.c.l.b16 %v2387
    %v2719 = vunpack.c.h.b16 %v2387
    %v2720 = vunpack.c.l.b16 %v2388
    %v2721 = vunpack.c.h.b16 %v2388
    %v2722 = vunpack.c.l.b16 %v2389
    %v2723 = vunpack.c.h.b16 %v2389
    %v2724 = vunpack.c.l.b16 %v2390
    %v2725 = vunpack.c.h.b16 %v2390
    %v2726 = vunpack.c.l.b16 %v2391
    %v2727 = vunpack.c.h.b16 %v2391
    %v2728 = vunpack.c.l.b16 %v2392
    %v2729 = vunpack.c.h.b16 %v2392
    %v2730 = vunpack.c.l.b16 %v2393
    %v2731 = vunpack.c.h.b16 %v2393
    %v2732 = vunpack.c.l.b16 %v2394
    %v2733 = vunpack.c.h.b16 %v2394
    %v2734 = vunpack.c.l.b16 %v2395
    %v2735 = vunpack.c.h.b16 %v2395
    %v2736 = vunpack.c.l.b16 %v2396
    %v2737 = vunpack.c.h.b16 %v2396
    %v2738 = vunpack.c.l.b16 %v2397
    %v2739 = vunpack.c.h.b16 %v2397
    %v2740 = vunpack.c.l.b16 %v2398
    %v2741 = vunpack.c.h.b16 %v2398
    %v2742 = vunpack.c.l.b16 %v2399
    %v2743 = vunpack.c.h.b16 %v2399
    %v2744 = vunpack.c.l.b16 %v2400
    %v2745 = vunpack.c.h.b16 %v2400
    %v2746 = vunpack.c.l.b16 %v2401
    %v2747 = vunpack.c.h.b16 %v2401
    %v2748 = vunpack.c.l.b16 %v2402
    %v2749 = vunpack.c.h.b16 %v2402
    %v2750 = vunpack.c.l.b16 %v2403
    %v2751 = vunpack.c.h.b16 %v2403
    %v2752 = vunpack.c.l.b16 %v2404
    %v2753 = vunpack.c.h.b16 %v2404
    %v2754 = vunpack.c.l.b16 %v2405
    %v2755 = vunpack.c.h.b16 %v2405
    %v2756 = vunpack.c.l.b16 %v2406
    %v2757 = vunpack.c.h.b16 %v2406
    %v2758 = vunpack.c.l.b16 %v2407
    %v2759 = vunpack.c.h.b16 %v2407
    %v2760 = vunpack.c.l.b16 %v2408
    %v2761 = vunpack.c.h.b16 %v2408
    %v2762 = vunpack.c.l.b16 %v2409
    %v2763 = vunpack.c.h.b16 %v2409
    %v2764 = vunpack.c.l.b16 %v2410
    %v2765 = vunpack.c.h.b16 %v2410
    %v2766 = vunpack.c.l.b16 %v2411
    %v2767 = vunpack.c.h.b16 %v2411
    %v2768 = vunpack.c.l.b16 %v2412
    %v2769 = vunpack.c.h.b16 %v2412
    %v2770 = vunpack.c.l.b16 %v2413
    %v2771 = vunpack.c.h.b16 %v2413
    %v2772 = vunpack.c.l.b16 %v2414
    %v2773 = vunpack.c.h.b16 %v2414
    %v2774 = vunpack.c.l.b16 %v2415
    %v2775 = vunpack.c.h.b16 %v2415
    %v2776 = vunpack.c.l.b16 %v2416
    %v2777 = vunpack.c.h.b16 %v2416
    %v2778 = vunpack.c.l.b16 %v2417
    %v2779 = vunpack.c.h.b16 %v2417
    %v2780 = vunpack.c.l.b16 %v2418
    %v2781 = vunpack.c.h.b16 %v2418
    %v2782 = vunpack.c.l.b16 %v2419
    %v2783 = vunpack.c.h.b16 %v2419
    %v2784 = vunpack.c.l.b16 %v2420
    %v2785 = vunpack.c.h.b16 %v2420
    %v2786 = vunpack.c.l.b16 %v2421
    %v2787 = vunpack.c.h.b16 %v2421
    %v2788 = vunpack.c.l.b16 %v2422
    %v2789 = vunpack.c.h.b16 %v2422
    %v2790 = vunpack.c.l.b16 %v2423
    %v2791 = vunpack.c.h.b16 %v2423
    %v2792 = vunpack.c.l.b16 %v2424
    %v2793 = vunpack.c.h.b16 %v2424
    %v2794 = vunpack.c.l.b16 %v2425
    %v2795 = vunpack.c.h.b16 %v2425
    %v2796 = vunpack.c.l.b16 %v2426
    %v2797 = vunpack.c.h.b16 %v2426
    %v2798 = vunpack.c.l.b16 %v2427
    %v2799 = vunpack.c.h.b16 %v2427
    %v2800 = vunpack.c.l.b16 %v2428
    %v2801 = vunpack.c.h.b16 %v2428
    %v2802 = vunpack.c.l.b16 %v2429
    %v2803 = vunpack.c.h.b16 %v2429
    %v2804 = vunpack.c.l.b16 %v2430
    %v2805 = vunpack.c.h.b16 %v2430
    %v2806 = vunpack.c.l.b16 %v2431
    %v2807 = vunpack.c.h.b16 %v2431
    %v2808 = vunpack.c.l.b16 %v2432
    %v2809 = vunpack.c.h.b16 %v2432
    %v2810 = vunpack.c.l.b16 %v2433
    %v2811 = vunpack.c.h.b16 %v2433
    %v2812 = vunpack.c.l.b16 %v2434
    %v2813 = vunpack.c.h.b16 %v2434
    %v2814 = vunpack.c.l.b16 %v2435
    %v2815 = vunpack.c.h.b16 %v2435
    %v2816 = vunpack.c.l.b16 %v2436
    %v2817 = vunpack.c.h.b16 %v2436
    %v2818 = vunpack.c.l.b16 %v2437
    %v2819 = vunpack.c.h.b16 %v2437
    %v2820 = vunpack.c.l.b16 %v2438
    %v2821 = vunpack.c.h.b16 %v2438
    %v2822 = vunpack.c.l.b16 %v2439
    %v2823 = vunpack.c.h.b16 %v2439
    %v2824 = vpack.c.b16 %v2576, %v2568
    %v2825 = vpack.c.b16 %v2577, %v2569
    %v2826 = vpack.c.b16 %v2578, %v2570
    %v2827 = vpack.c.b16 %v2579, %v2571
    %v2828 = vpack.c.b16 %v2580, %v2572
    %v2829 = vpack.c.b16 %v2581, %v2573
    %v2830 = vpack.c.b16 %v2582, %v2574
    %v2831 = vpack.c.b16 %v2583, %v2575
    %v2832 = vpack.c.b16 %v2592, %v2584
    %v2833 = vpack.c.b16 %v2593, %v2585
    %v2834 = vpack.c.b16 %v2594, %v2586
    %v2835 = vpack.c.b16 %v2595, %v2587
    %v2836 = vpack.c.b16 %v2596, %v2588
    %v2837 = vpack.c.b16 %v2597, %v2589
    %v2838 = vpack.c.b16 %v2598, %v2590
    %v2839 = vpack.c.b16 %v2599, %v2591
    %v2840 = vpack.c.b16 %v2608, %v2600
    %v2841 = vpack.c.b16 %v2609, %v2601
    %v2842 = vpack.c.b16 %v2610, %v2602
    %v2843 = vpack.c.b16 %v2611, %v2603
    %v2844 = vpack.c.b16 %v2612, %v2604
    %v2845 = vpack.c.b16 %v2613, %v2605
    %v2846 = vpack.c.b16 %v2614, %v2606
    %v2847 = vpack.c.b16 %v2615, %v2607
    %v2848 = vpack.c.b16 %v2624, %v2616
    %v2849 = vpack.c.b16 %v2625, %v2617
    %v2850 = vpack.c.b16 %v2626, %v2618
    %v2851 = vpack.c.b16 %v2627, %v2619
    %v2852 = vpack.c.b16 %v2628, %v2620
    %v2853 = vpack.c.b16 %v2629, %v2621
    %v2854 = vpack.c.b16 %v2630, %v2622
    %v2855 = vpack.c.b16 %v2631, %v2623
    %v2856 = vpack.c.b16 %v2640, %v2632
    %v2857 = vpack.c.b16 %v2641, %v2633
    %v2858 = vpack.c.b16 %v2642, %v2634
    %v2859 = vpack.c.b16 %v2643, %v2635
    %v2860 = vpack.c.b16 %v2644, %v2636
    %v2861 = vpack.c.b16 %v2645, %v2637
    %v2862 = vpack.c.b16 %v2646, %v2638
    %v2863 = vpack.c.b16 %v2647, %v2639
    %v2864 = vpack.c.b16 %v2656, %v2648
    %v2865 = vpack.c.b16 %v2657, %v2649
    %v2866 = vpack.c.b16 %v2658, %v2650
    %v2867 = vpack.c.b16 %v2659, %v2651
    %v2868 = vpack.c.b16 %v2660, %v2652
    %v2869 = vpack.c.b16 %v2661, %v2653
    %v2870 = vpack.c.b16 %v2662, %v2654
    %v2871 = vpack.c.b16 %v2663, %v2655
    %v2872 = vpack.c.b16 %v2672, %v2664
    %v2873 = vpack.c.b16 %v2673, %v2665
    %v2874 = vpack.c.b16 %v2674, %v2666
    %v2875 = vpack.c.b16 %v2675, %v2667
    %v2876 = vpack.c.b16 %v2676, %v2668
    %v2877 = vpack.c.b16 %v2677, %v2669
    %v2878 = vpack.c.b16 %v2678, %v2670
    %v2879 = vpack.c.b16 %v2679, %v2671
    %v2880 = vpack.c.b16 %v2688, %v2680
    %v2881 = vpack.c.b16 %v2689, %v2681
    %v2882 = vpack.c.b16 %v2690, %v2682
    %v2883 = vpack.c.b16 %v2691, %v2683
    %v2884 = vpack.c.b16 %v2692, %v2684
    %v2885 = vpack.c.b16 %v2693, %v2685
    %v2886 = vpack.c.b16 %v2694, %v2686
    %v2887 = vpack.c.b16 %v2695, %v2687
    %v2888 = vpack.c.b16 %v2704, %v2696
    %v2889 = vpack.c.b16 %v2705, %v2697
    %v2890 = vpack.c.b16 %v2706, %v2698
    %v2891 = vpack.c.b16 %v2707, %v2699
    %v2892 = vpack.c.b16 %v2708, %v2700
    %v2893 = vpack.c.b16 %v2709, %v2701
    %v2894 = vpack.c.b16 %v2710, %v2702
    %v2895 = vpack.c.b16 %v2711, %v2703
    %v2896 = vpack.c.b16 %v2720, %v2712
    %v2897 = vpack.c.b16 %v2721, %v2713
    %v2898 = vpack.c.b16 %v2722, %v2714
    %v2899 = vpack.c.b16 %v2723, %v2715
    %v2900 = vpack.c.b16 %v2724, %v2716
    %v2901 = vpack.c.b16 %v2725, %v2717
    %v2902 = vpack.c.b16 %v2726, %v2718
    %v2903 = vpack.c.b16 %v2727, %v2719
    %v2904 = vpack.c.b16 %v2736, %v2728
    %v2905 = vpack.c.b16 %v2737, %v2729
    %v2906 = vpack.c.b16 %v2738, %v2730
    %v2907 = vpack.c.b16 %v2739, %v2731
    %v2908 = vpack.c.b16 %v2740, %v2732
    %v2909 = vpack.c.b16 %v2741, %v2733
    %v2910 = vpack.c.b16 %v2742, %v2734
    %v2911 = vpack.c.b16 %v2743, %v2735
    %v2912 = vpack.c.b16 %v2752, %v2744
    %v2913 = vpack.c.b16 %v2753, %v2745
    %v2914 = vpack.c.b16 %v2754, %v2746
    %v2915 = vpack.c.b16 %v2755, %v2747
    %v2916 = vpack.c.b16 %v2756, %v2748
    %v2917 = vpack.c.b16 %v2757, %v2749
    %v2918 = vpack.c.b16 %v2758, %v2750
    %v2919 = vpack.c.b16 %v2759, %v2751
    %v2920 = vpack.c.b16 %v2768, %v2760
    %v2921 = vpack.c.b16 %v2769, %v2761
    %v2922 = vpack.c.b16 %v2770, %v2762
    %v2923 = vpack.c.b16 %v2771, %v2763
    %v2924 = vpack.c.b16 %v2772, %v2764
    %v2925 = vpack.c.b16 %v2773, %v2765
    %v2926 = vpack.c.b16 %v2774, %v2766
    %v2927 = vpack.c.b16 %v2775, %v2767
    %v2928 = vpack.c.b16 %v2784, %v2776
    %v2929 = vpack.c.b16 %v2785, %v2777
    %v2930 = vpack.c.b16 %v2786, %v2778
    %v2931 = vpack.c.b16 %v2787, %v2779
    %v2932 = vpack.c.b16 %v2788, %v2780
    %v2933 = vpack.c.b16 %v2789, %v2781
    %v2934 = vpack.c.b16 %v2790, %v2782
    %v2935 = vpack.c.b16 %v2791, %v2783
    %v2936 = vpack.c.b16 %v2800, %v2792
    %v2937 = vpack.c.b16 %v2801, %v2793
    %v2938 = vpack.c.b16 %v2802, %v2794
    %v2939 = vpack.c.b16 %v2803, %v2795
    %v2940 = vpack.c.b16 %v2804, %v2796
    %v2941 = vpack.c.b16 %v2805, %v2797
    %v2942 = vpack.c.b16 %v2806, %v2798
    %v2943 = vpack.c.b16 %v2807, %v2799
    %v2944 = vpack.c.b16 %v2816, %v2808
    %v2945 = vpack.c.b16 %v2817, %v2809
    %v2946 = vpack.c.b16 %v2818, %v2810
    %v2947 = vpack.c.b16 %v2819, %v2811
    %v2948 = vpack.c.b16 %v2820, %v2812
    %v2949 = vpack.c.b16 %v2821, %v2813
    %v2950 = vpack.c.b16 %v2822, %v2814
    %v2951 = vpack.c.b16 %v2823, %v2815
    %3080 = vmatprep.subr.bf16.mxu0 %v2825
    %3081 = vmatpush1.bf16.msra.mxu0 %v2824
    %3082 = vmatprep.subr.bf16.mxu0 %v2833
    %3083 = vmatpush1.bf16.msra.mxu0 %v2832
    %3084 = vmatprep.subr.bf16.mxu0 %v2841
    %3085 = vmatpush1.bf16.msra.mxu0 %v2840
    %3086 = vmatprep.subr.bf16.mxu0 %v2849
    %3087 = vmatpush1.bf16.msra.mxu0 %v2848
    %3088 = vmatprep.subr.bf16.mxu0 %v2857
    %3089 = vmatpush1.bf16.msra.mxu0 %v2856
    %3090 = vmatprep.subr.bf16.mxu0 %v2865
    %3091 = vmatpush1.bf16.msra.mxu0 %v2864
    %3092 = vmatprep.subr.bf16.mxu0 %v2873
    %3093 = vmatpush1.bf16.msra.mxu0 %v2872
    %3094 = vmatprep.subr.bf16.mxu0 %v2881
    %3095 = vmatpush1.bf16.msra.mxu0 %v2880
    %3096 = vmatprep.subr.bf16.mxu0 %v2889
    %3097 = vmatpush1.bf16.msra.mxu0 %v2888
    %3098 = vmatprep.subr.bf16.mxu0 %v2897
    %3099 = vmatpush1.bf16.msra.mxu0 %v2896
    %3100 = vmatprep.subr.bf16.mxu0 %v2905
    %3101 = vmatpush1.bf16.msra.mxu0 %v2904
    %3102 = vmatprep.subr.bf16.mxu0 %v2913
    %3103 = vmatpush1.bf16.msra.mxu0 %v2912
    %3104 = vmatprep.subr.bf16.mxu0 %v2921
    %3105 = vmatpush1.bf16.msra.mxu0 %v2920
    %3106 = vmatprep.subr.bf16.mxu0 %v2929
    %3107 = vmatpush1.bf16.msra.mxu0 %v2928
    %3108 = vmatprep.subr.bf16.mxu0 %v2937
    %3109 = vmatpush1.bf16.msra.mxu0 %v2936
    %3110 = vmatprep.subr.bf16.mxu0 %v2945
    %3111 = vmatpush1.bf16.msra.mxu0 %v2944
    %3112 = vmatprep.mubr.bf16.mxu0 %v2311
    %3113 = vmatmul.mubr.bf16.gmra.mrb[0].mxu0 %v2310
    %v3114 = vpop.f32.mrb[0].mxu0
    %v3115 = vadd.f32 0.0, %v3114
    %v3116 = vpop.f32.mrb[0].mxu0
    %v3117 = vadd.f32 0.0, %v3116
    %v3118 = vpop.f32.mrb[0].mxu0
    %v3119 = vadd.f32 0.0, %v3118
    %v3120 = vpop.f32.mrb[0].mxu0
    %v3121 = vadd.f32 0.0, %v3120
    %3122 = vdwg.mxu0
    %3123 = vmatprep.subr.bf16.mxu0 %v2827
    %3124 = vmatpush1.bf16.msra.mxu0 %v2826
    %3125 = vmatprep.subr.bf16.mxu0 %v2835
    %3126 = vmatpush1.bf16.msra.mxu0 %v2834
    %3127 = vmatprep.subr.bf16.mxu0 %v2843
    %3128 = vmatpush1.bf16.msra.mxu0 %v2842
    %3129 = vmatprep.subr.bf16.mxu0 %v2851
    %3130 = vmatpush1.bf16.msra.mxu0 %v2850
    %3131 = vmatprep.subr.bf16.mxu0 %v2859
    %3132 = vmatpush1.bf16.msra.mxu0 %v2858
    %3133 = vmatprep.subr.bf16.mxu0 %v2867
    %3134 = vmatpush1.bf16.msra.mxu0 %v2866
    %3135 = vmatprep.subr.bf16.mxu0 %v2875
    %3136 = vmatpush1.bf16.msra.mxu0 %v2874
    %3137 = vmatprep.subr.bf16.mxu0 %v2883
    %3138 = vmatpush1.bf16.msra.mxu0 %v2882
    %3139 = vmatprep.subr.bf16.mxu0 %v2891
    %3140 = vmatpush1.bf16.msra.mxu0 %v2890
    %3141 = vmatprep.subr.bf16.mxu0 %v2899
    %3142 = vmatpush1.bf16.msra.mxu0 %v2898
    %3143 = vmatprep.subr.bf16.mxu0 %v2907
    %3144 = vmatpush1.bf16.msra.mxu0 %v2906
    %3145 = vmatprep.subr.bf16.mxu0 %v2915
    %3146 = vmatpush1.bf16.msra.mxu0 %v2914
    %3147 = vmatprep.subr.bf16.mxu0 %v2923
    %3148 = vmatpush1.bf16.msra.mxu0 %v2922
    %3149 = vmatprep.subr.bf16.mxu0 %v2931
    %3150 = vmatpush1.bf16.msra.mxu0 %v2930
    %3151 = vmatprep.subr.bf16.mxu0 %v2939
    %3152 = vmatpush1.bf16.msra.mxu0 %v2938
    %3153 = vmatprep.subr.bf16.mxu0 %v2947
    %3154 = vmatpush1.bf16.msra.mxu0 %v2946
    %3155 = vmatprep.mubr.bf16.mxu0 %v2311
    %3156 = vmatmul.mubr.bf16.gmra.mrb[0].mxu0 %v2310
    %v3157 = vpop.f32.mrb[0].mxu0
    %v3158 = vadd.f32 0.0, %v3157
    %v3159 = vpop.f32.mrb[0].mxu0
    %v3160 = vadd.f32 0.0, %v3159
    %v3161 = vpop.f32.mrb[0].mxu0
    %v3162 = vadd.f32 0.0, %v3161
    %v3163 = vpop.f32.mrb[0].mxu0
    %v3164 = vadd.f32 0.0, %v3163
    %3165 = vdwg.mxu0
    %3166 = vmatprep.subr.bf16.mxu0 %v2829
    %3167 = vmatpush1.bf16.msra.mxu0 %v2828
    %3168 = vmatprep.subr.bf16.mxu0 %v2837
    %3169 = vmatpush1.bf16.msra.mxu0 %v2836
    %3170 = vmatprep.subr.bf16.mxu0 %v2845
    %3171 = vmatpush1.bf16.msra.mxu0 %v2844
    %3172 = vmatprep.subr.bf16.mxu0 %v2853
    %3173 = vmatpush1.bf16.msra.mxu0 %v2852
    %3174 = vmatprep.subr.bf16.mxu0 %v2861
    %3175 = vmatpush1.bf16.msra.mxu0 %v2860
    %3176 = vmatprep.subr.bf16.mxu0 %v2869
    %3177 = vmatpush1.bf16.msra.mxu0 %v2868
    %3178 = vmatprep.subr.bf16.mxu0 %v2877
    %3179 = vmatpush1.bf16.msra.mxu0 %v2876
    %3180 = vmatprep.subr.bf16.mxu0 %v2885
    %3181 = vmatpush1.bf16.msra.mxu0 %v2884
    %3182 = vmatprep.subr.bf16.mxu0 %v2893
    %3183 = vmatpush1.bf16.msra.mxu0 %v2892
    %3184 = vmatprep.subr.bf16.mxu0 %v2901
    %3185 = vmatpush1.bf16.msra.mxu0 %v2900
    %3186 = vmatprep.subr.bf16.mxu0 %v2909
    %3187 = vmatpush1.bf16.msra.mxu0 %v2908
    %3188 = vmatprep.subr.bf16.mxu0 %v2917
    %3189 = vmatpush1.bf16.msra.mxu0 %v2916
    %3190 = vmatprep.subr.bf16.mxu0 %v2925
    %3191 = vmatpush1.bf16.msra.mxu0 %v2924
    %3192 = vmatprep.subr.bf16.mxu0 %v2933
    %3193 = vmatpush1.bf16.msra.mxu0 %v2932
    %3194 = vmatprep.subr.bf16.mxu0 %v2941
    %3195 = vmatpush1.bf16.msra.mxu0 %v2940
    %3196 = vmatprep.subr.bf16.mxu0 %v2949
    %3197 = vmatpush1.bf16.msra.mxu0 %v2948
    %3198 = vmatprep.mubr.bf16.mxu0 %v2311
    %3199 = vmatmul.mubr.bf16.gmra.mrb[0].mxu0 %v2310
    %v3200 = vpop.f32.mrb[0].mxu0
    %v3201 = vadd.f32 0.0, %v3200
    %v3202 = vpop.f32.mrb[0].mxu0
    %v3203 = vadd.f32 0.0, %v3202
    %v3204 = vpop.f32.mrb[0].mxu0
    %v3205 = vadd.f32 0.0, %v3204
    %v3206 = vpop.f32.mrb[0].mxu0
    %v3207 = vadd.f32 0.0, %v3206
    %3208 = vdwg.mxu0
    %3209 = vmatprep.subr.bf16.mxu0 %v2831
    %3210 = vmatpush1.bf16.msra.mxu0 %v2830
    %3211 = vmatprep.subr.bf16.mxu0 %v2839
    %3212 = vmatpush1.bf16.msra.mxu0 %v2838
    %3213 = vmatprep.subr.bf16.mxu0 %v2847
    %3214 = vmatpush1.bf16.msra.mxu0 %v2846
    %3215 = vmatprep.subr.bf16.mxu0 %v2855
    %3216 = vmatpush1.bf16.msra.mxu0 %v2854
    %3217 = vmatprep.subr.bf16.mxu0 %v2863
    %3218 = vmatpush1.bf16.msra.mxu0 %v2862
    %3219 = vmatprep.subr.bf16.mxu0 %v2871
    %3220 = vmatpush1.bf16.msra.mxu0 %v2870
    %3221 = vmatprep.subr.bf16.mxu0 %v2879
    %3222 = vmatpush1.bf16.msra.mxu0 %v2878
    %3223 = vmatprep.subr.bf16.mxu0 %v2887
    %3224 = vmatpush1.bf16.msra.mxu0 %v2886
    %3225 = vmatprep.subr.bf16.mxu0 %v2895
    %3226 = vmatpush1.bf16.msra.mxu0 %v2894
    %3227 = vmatprep.subr.bf16.mxu0 %v2903
    %3228 = vmatpush1.bf16.msra.mxu0 %v2902
    %3229 = vmatprep.subr.bf16.mxu0 %v2911
    %3230 = vmatpush1.bf16.msra.mxu0 %v2910
    %3231 = vmatprep.subr.bf16.mxu0 %v2919
    %3232 = vmatpush1.bf16.msra.mxu0 %v2918
    %3233 = vmatprep.subr.bf16.mxu0 %v2927
    %3234 = vmatpush1.bf16.msra.mxu0 %v2926
    %3235 = vmatprep.subr.bf16.mxu0 %v2935
    %3236 = vmatpush1.bf16.msra.mxu0 %v2934
    %3237 = vmatprep.subr.bf16.mxu0 %v2943
    %3238 = vmatpush1.bf16.msra.mxu0 %v2942
    %3239 = vmatprep.subr.bf16.mxu0 %v2951
    %3240 = vmatpush1.bf16.msra.mxu0 %v2950
    %3241 = vmatprep.mubr.bf16.mxu0 %v2311
    %3242 = vmatmul.mubr.bf16.gmra.mrb[0].mxu0 %v2310
    %v3243 = vpop.f32.mrb[0].mxu0
    %v3244 = vadd.f32 0.0, %v3243
    %v3245 = vpop.f32.mrb[0].mxu0
    %v3246 = vadd.f32 0.0, %v3245
    %v3247 = vpop.f32.mrb[0].mxu0
    %v3248 = vadd.f32 0.0, %v3247
    %v3249 = vpop.f32.mrb[0].mxu0
    %v3250 = vadd.f32 0.0, %v3249
    %3251 = vdwg.mxu0
    %v3252 = vadd.f32 %v2072, %v3115
    %v3253 = vadd.f32 %v2074, %v3117
    %v3254 = vadd.f32 %v2115, %v3158
    %v3255 = vadd.f32 %v2117, %v3160
    %v3256 = vadd.f32 %v2158, %v3201
    %v3257 = vadd.f32 %v2160, %v3203
    %v3258 = vadd.f32 %v2201, %v3244
    %v3259 = vadd.f32 %v2203, %v3246
    %v3260 = vadd.f32 %v2076, %v3119
    %v3261 = vadd.f32 %v2078, %v3121
    %v3262 = vadd.f32 %v2119, %v3162
    %v3263 = vadd.f32 %v2121, %v3164
    %v3264 = vadd.f32 %v2162, %v3205
    %v3265 = vadd.f32 %v2164, %v3207
    %v3266 = vadd.f32 %v2205, %v3248
    %v3267 = vadd.f32 %v2207, %v3250
    %v3268 = vld [vmem:[#allocation5 + $0x30] sm:$0xff]
    %v3269 = vld [vmem:[#allocation5 + $0x38] sm:$0xff]
    %v3270 = vld [vmem:[#allocation5 + $0x70] sm:$0xff]
    %v3271 = vld [vmem:[#allocation5 + $0x78] sm:$0xff]
    %v3272 = vld [vmem:[#allocation5 + $0xb0] sm:$0xff]
    %v3273 = vld [vmem:[#allocation5 + $0xb8] sm:$0xff]
    %v3274 = vld [vmem:[#allocation5 + $0xf0] sm:$0xff]
    %v3275 = vld [vmem:[#allocation5 + $0xf8] sm:$0xff]
    %v3276 = vld [vmem:[#allocation7 + $0x6] sm:$0x3]
    %v3278 = vlaneseq
    %v3279 = vshrl.u32 %v3278, 7
    %v3280 = vsub.s32 0, %v3279
    %v3281 = vrot.slane %v3276, %v3280
    %v3282 = vlaneseq
    %v3283 = vshrl.u32 %v3282, 7
    %v3284 = vsub.s32 1, %v3283
    %v3285 = vrot.slane %v3276, %v3284
    %3288 = vmatprep.subr.mxu0 %v3269
    %3289 = vmatpush1.msra.mxu0 %v3268
    %3290 = vmatprep.subr.mxu0 %v3271
    %3291 = vmatpush1.msra.mxu0 %v3270
    %3292 = vmatprep.subr.mxu0 %v3273
    %3293 = vmatpush1.msra.mxu0 %v3272
    %3294 = vmatprep.subr.mxu0 %v3275
    %3295 = vmatpush1.msra.mxu0 %v3274
    %3296 = vmatprep.subr.mxu0 0.0
    %3297 = vmatpush1.msra.mxu0 0.0
    %3298 = vmatprep.subr.mxu0 0.0
    %3299 = vmatpush1.msra.mxu0 0.0
    %3300 = vmatprep.subr.mxu0 0.0
    %3301 = vmatpush1.msra.mxu0 0.0
    %3302 = vmatprep.subr.mxu0 0.0
    %3303 = vmatpush1.msra.mxu0 0.0
    %3304 = vmatprep.subr.mxu0 0.0
    %3305 = vmatpush1.msra.mxu0 0.0
    %3306 = vmatprep.subr.mxu0 0.0
    %3307 = vmatpush1.msra.mxu0 0.0
    %3308 = vmatprep.subr.mxu0 0.0
    %3309 = vmatpush1.msra.mxu0 0.0
    %3310 = vmatprep.subr.mxu0 0.0
    %3311 = vmatpush1.msra.mxu0 0.0
    %3312 = vmatprep.subr.mxu0 0.0
    %3313 = vmatpush1.msra.mxu0 0.0
    %3314 = vmatprep.subr.mxu0 0.0
    %3315 = vmatpush1.msra.mxu0 0.0
    %3316 = vmatprep.subr.mxu0 0.0
    %3317 = vmatpush1.msra.mxu0 0.0
    %3318 = vmatprep.subr.mxu0 0.0
    %3319 = vmatpush1.msra.mxu0 0.0
    %3320 = vmatprep.subr.mxu0 0.0
    %3321 = vmatpush1.msra.mxu0 0.0
    %3322 = vmatprep.subr.mxu0 0.0
    %3323 = vmatpush1.msra.mxu0 0.0
    %3324 = vmatprep.subr.mxu0 0.0
    %3325 = vmatpush1.msra.mxu0 0.0
    %3326 = vmatprep.subr.mxu0 0.0
    %3327 = vmatpush1.msra.mxu0 0.0
    %3328 = vmatprep.subr.mxu0 0.0
    %3329 = vmatpush1.msra.mxu0 0.0
    %3330 = vmatprep.subr.mxu0 0.0
    %3331 = vmatpush1.msra.mxu0 0.0
    %3332 = vmatprep.subr.mxu0 0.0
    %3333 = vmatpush1.msra.mxu0 0.0
    %3334 = vmatprep.subr.mxu0 0.0
    %3335 = vmatpush1.msra.mxu0 0.0
    %3336 = vmatprep.subr.mxu0 0.0
    %3337 = vmatpush1.msra.mxu0 0.0
    %3338 = vmatprep.subr.mxu0 0.0
    %3339 = vmatpush1.msra.mxu0 0.0
    %3340 = vmatprep.subr.mxu0 0.0
    %3341 = vmatpush1.msra.mxu0 0.0
    %3342 = vmatprep.subr.mxu0 0.0
    %3343 = vmatpush1.msra.mxu0 0.0
    %3344 = vmatprep.subr.mxu0 0.0
    %3345 = vmatpush1.msra.mxu0 0.0
    %3346 = vmatprep.subr.mxu0 0.0
    %3347 = vmatpush1.msra.mxu0 0.0
    %3348 = vmatprep.subr.mxu0 0.0
    %3349 = vmatpush1.msra.mxu0 0.0
    %3350 = vmatprep.subr.mxu0 0.0
    %3351 = vmatpush1.msra.mxu0 0.0
    %3352 = vmatprep.mubr.f32.mxu0 0.0
    %3353 = vmatmul.mubr.f32.gmra.mrb[0].mxu0 %v138
    %v3354 = vpop.f32.mrb[0].mxu0
    %v3355 = vadd.f32 %v3281, %v3354
    %v3356 = vpop.f32.mrb[0].mxu0
    %v3357 = vadd.f32 %v3285, %v3356
    %3358 = vmatprep.mubr.f32.mxu0 0.0
    %3359 = vmatmul.mubr.f32.gmra.mrb[0].mxu0 %v141
    %v3360 = vpop.f32.mrb[0].mxu0
    %v3361 = vadd.f32 %v3281, %v3360
    %v3362 = vpop.f32.mrb[0].mxu0
    %v3363 = vadd.f32 %v3285, %v3362
    %3364 = vdwg.mxu0
    %v3365 = vmax.f32 %v3355, 0.0
    %v3366 = vmax.f32 %v3357, 0.0
    %v3367 = vmax.f32 %v3361, 0.0
    %v3368 = vmax.f32 %v3363, 0.0
    %v3369 = vpack.c.bf16 %v3367, %v3365
    %v3370 = vpack.c.bf16 %v3368, %v3366
    %v3371 = vld [vmem:[#allocation8 + $0xc00] sm:$0xff]
    %v3372 = vld [vmem:[#allocation8 + $0xc08] sm:$0xff]
    %v3373 = vld [vmem:[#allocation8 + $0xc10] sm:$0xff]
    %v3374 = vld [vmem:[#allocation8 + $0xc18] sm:$0xff]
    %v3375 = vld [vmem:[#allocation8 + $0xc20] sm:$0xff]
    %v3376 = vld [vmem:[#allocation8 + $0xc28] sm:$0xff]
    %v3377 = vld [vmem:[#allocation8 + $0xc30] sm:$0xff]
    %v3378 = vld [vmem:[#allocation8 + $0xc38] sm:$0xff]
    %v3379 = vld [vmem:[#allocation8 + $0xc40] sm:$0xff]
    %v3380 = vld [vmem:[#allocation8 + $0xc48] sm:$0xff]
    %v3381 = vld [vmem:[#allocation8 + $0xc50] sm:$0xff]
    %v3382 = vld [vmem:[#allocation8 + $0xc58] sm:$0xff]
    %v3383 = vld [vmem:[#allocation8 + $0xc60] sm:$0xff]
    %v3384 = vld [vmem:[#allocation8 + $0xc68] sm:$0xff]
    %v3385 = vld [vmem:[#allocation8 + $0xc70] sm:$0xff]
    %v3386 = vld [vmem:[#allocation8 + $0xc78] sm:$0xff]
    %v3387 = vld [vmem:[#allocation8 + $0xc80] sm:$0xff]
    %v3388 = vld [vmem:[#allocation8 + $0xc88] sm:$0xff]
    %v3389 = vld [vmem:[#allocation8 + $0xc90] sm:$0xff]
    %v3390 = vld [vmem:[#allocation8 + $0xc98] sm:$0xff]
    %v3391 = vld [vmem:[#allocation8 + $0xca0] sm:$0xff]
    %v3392 = vld [vmem:[#allocation8 + $0xca8] sm:$0xff]
    %v3393 = vld [vmem:[#allocation8 + $0xcb0] sm:$0xff]
    %v3394 = vld [vmem:[#allocation8 + $0xcb8] sm:$0xff]
    %v3395 = vld [vmem:[#allocation8 + $0xcc0] sm:$0xff]
    %v3396 = vld [vmem:[#allocation8 + $0xcc8] sm:$0xff]
    %v3397 = vld [vmem:[#allocation8 + $0xcd0] sm:$0xff]
    %v3398 = vld [vmem:[#allocation8 + $0xcd8] sm:$0xff]
    %v3399 = vld [vmem:[#allocation8 + $0xce0] sm:$0xff]
    %v3400 = vld [vmem:[#allocation8 + $0xce8] sm:$0xff]
    %v3401 = vld [vmem:[#allocation8 + $0xcf0] sm:$0xff]
    %v3402 = vld [vmem:[#allocation8 + $0xcf8] sm:$0xff]
    %v3403 = vld [vmem:[#allocation8 + $0xd00] sm:$0xff]
    %v3404 = vld [vmem:[#allocation8 + $0xd08] sm:$0xff]
    %v3405 = vld [vmem:[#allocation8 + $0xd10] sm:$0xff]
    %v3406 = vld [vmem:[#allocation8 + $0xd18] sm:$0xff]
    %v3407 = vld [vmem:[#allocation8 + $0xd20] sm:$0xff]
    %v3408 = vld [vmem:[#allocation8 + $0xd28] sm:$0xff]
    %v3409 = vld [vmem:[#allocation8 + $0xd30] sm:$0xff]
    %v3410 = vld [vmem:[#allocation8 + $0xd38] sm:$0xff]
    %v3411 = vld [vmem:[#allocation8 + $0xd40] sm:$0xff]
    %v3412 = vld [vmem:[#allocation8 + $0xd48] sm:$0xff]
    %v3413 = vld [vmem:[#allocation8 + $0xd50] sm:$0xff]
    %v3414 = vld [vmem:[#allocation8 + $0xd58] sm:$0xff]
    %v3415 = vld [vmem:[#allocation8 + $0xd60] sm:$0xff]
    %v3416 = vld [vmem:[#allocation8 + $0xd68] sm:$0xff]
    %v3417 = vld [vmem:[#allocation8 + $0xd70] sm:$0xff]
    %v3418 = vld [vmem:[#allocation8 + $0xd78] sm:$0xff]
    %v3419 = vld [vmem:[#allocation8 + $0xd80] sm:$0xff]
    %v3420 = vld [vmem:[#allocation8 + $0xd88] sm:$0xff]
    %v3421 = vld [vmem:[#allocation8 + $0xd90] sm:$0xff]
    %v3422 = vld [vmem:[#allocation8 + $0xd98] sm:$0xff]
    %v3423 = vld [vmem:[#allocation8 + $0xda0] sm:$0xff]
    %v3424 = vld [vmem:[#allocation8 + $0xda8] sm:$0xff]
    %v3425 = vld [vmem:[#allocation8 + $0xdb0] sm:$0xff]
    %v3426 = vld [vmem:[#allocation8 + $0xdb8] sm:$0xff]
    %v3427 = vld [vmem:[#allocation8 + $0xdc0] sm:$0xff]
    %v3428 = vld [vmem:[#allocation8 + $0xdc8] sm:$0xff]
    %v3429 = vld [vmem:[#allocation8 + $0xdd0] sm:$0xff]
    %v3430 = vld [vmem:[#allocation8 + $0xdd8] sm:$0xff]
    %v3431 = vld [vmem:[#allocation8 + $0xde0] sm:$0xff]
    %v3432 = vld [vmem:[#allocation8 + $0xde8] sm:$0xff]
    %v3433 = vld [vmem:[#allocation8 + $0xdf0] sm:$0xff]
    %v3434 = vld [vmem:[#allocation8 + $0xdf8] sm:$0xff]
    %v3435 = vld [vmem:[#allocation8 + $0xe00] sm:$0xff]
    %v3436 = vld [vmem:[#allocation8 + $0xe08] sm:$0xff]
    %v3437 = vld [vmem:[#allocation8 + $0xe10] sm:$0xff]
    %v3438 = vld [vmem:[#allocation8 + $0xe18] sm:$0xff]
    %v3439 = vld [vmem:[#allocation8 + $0xe20] sm:$0xff]
    %v3440 = vld [vmem:[#allocation8 + $0xe28] sm:$0xff]
    %v3441 = vld [vmem:[#allocation8 + $0xe30] sm:$0xff]
    %v3442 = vld [vmem:[#allocation8 + $0xe38] sm:$0xff]
    %v3443 = vld [vmem:[#allocation8 + $0xe40] sm:$0xff]
    %v3444 = vld [vmem:[#allocation8 + $0xe48] sm:$0xff]
    %v3445 = vld [vmem:[#allocation8 + $0xe50] sm:$0xff]
    %v3446 = vld [vmem:[#allocation8 + $0xe58] sm:$0xff]
    %v3447 = vld [vmem:[#allocation8 + $0xe60] sm:$0xff]
    %v3448 = vld [vmem:[#allocation8 + $0xe68] sm:$0xff]
    %v3449 = vld [vmem:[#allocation8 + $0xe70] sm:$0xff]
    %v3450 = vld [vmem:[#allocation8 + $0xe78] sm:$0xff]
    %v3451 = vld [vmem:[#allocation8 + $0xe80] sm:$0xff]
    %v3452 = vld [vmem:[#allocation8 + $0xe88] sm:$0xff]
    %v3453 = vld [vmem:[#allocation8 + $0xe90] sm:$0xff]
    %v3454 = vld [vmem:[#allocation8 + $0xe98] sm:$0xff]
    %v3455 = vld [vmem:[#allocation8 + $0xea0] sm:$0xff]
    %v3456 = vld [vmem:[#allocation8 + $0xea8] sm:$0xff]
    %v3457 = vld [vmem:[#allocation8 + $0xeb0] sm:$0xff]
    %v3458 = vld [vmem:[#allocation8 + $0xeb8] sm:$0xff]
    %v3459 = vld [vmem:[#allocation8 + $0xec0] sm:$0xff]
    %v3460 = vld [vmem:[#allocation8 + $0xec8] sm:$0xff]
    %v3461 = vld [vmem:[#allocation8 + $0xed0] sm:$0xff]
    %v3462 = vld [vmem:[#allocation8 + $0xed8] sm:$0xff]
    %v3463 = vld [vmem:[#allocation8 + $0xee0] sm:$0xff]
    %v3464 = vld [vmem:[#allocation8 + $0xee8] sm:$0xff]
    %v3465 = vld [vmem:[#allocation8 + $0xef0] sm:$0xff]
    %v3466 = vld [vmem:[#allocation8 + $0xef8] sm:$0xff]
    %v3467 = vld [vmem:[#allocation8 + $0xf00] sm:$0xff]
    %v3468 = vld [vmem:[#allocation8 + $0xf08] sm:$0xff]
    %v3469 = vld [vmem:[#allocation8 + $0xf10] sm:$0xff]
    %v3470 = vld [vmem:[#allocation8 + $0xf18] sm:$0xff]
    %v3471 = vld [vmem:[#allocation8 + $0xf20] sm:$0xff]
    %v3472 = vld [vmem:[#allocation8 + $0xf28] sm:$0xff]
    %v3473 = vld [vmem:[#allocation8 + $0xf30] sm:$0xff]
    %v3474 = vld [vmem:[#allocation8 + $0xf38] sm:$0xff]
    %v3475 = vld [vmem:[#allocation8 + $0xf40] sm:$0xff]
    %v3476 = vld [vmem:[#allocation8 + $0xf48] sm:$0xff]
    %v3477 = vld [vmem:[#allocation8 + $0xf50] sm:$0xff]
    %v3478 = vld [vmem:[#allocation8 + $0xf58] sm:$0xff]
    %v3479 = vld [vmem:[#allocation8 + $0xf60] sm:$0xff]
    %v3480 = vld [vmem:[#allocation8 + $0xf68] sm:$0xff]
    %v3481 = vld [vmem:[#allocation8 + $0xf70] sm:$0xff]
    %v3482 = vld [vmem:[#allocation8 + $0xf78] sm:$0xff]
    %v3483 = vld [vmem:[#allocation8 + $0xf80] sm:$0xff]
    %v3484 = vld [vmem:[#allocation8 + $0xf88] sm:$0xff]
    %v3485 = vld [vmem:[#allocation8 + $0xf90] sm:$0xff]
    %v3486 = vld [vmem:[#allocation8 + $0xf98] sm:$0xff]
    %v3487 = vld [vmem:[#allocation8 + $0xfa0] sm:$0xff]
    %v3488 = vld [vmem:[#allocation8 + $0xfa8] sm:$0xff]
    %v3489 = vld [vmem:[#allocation8 + $0xfb0] sm:$0xff]
    %v3490 = vld [vmem:[#allocation8 + $0xfb8] sm:$0xff]
    %v3491 = vld [vmem:[#allocation8 + $0xfc0] sm:$0xff]
    %v3492 = vld [vmem:[#allocation8 + $0xfc8] sm:$0xff]
    %v3493 = vld [vmem:[#allocation8 + $0xfd0] sm:$0xff]
    %v3494 = vld [vmem:[#allocation8 + $0xfd8] sm:$0xff]
    %v3495 = vld [vmem:[#allocation8 + $0xfe0] sm:$0xff]
    %v3496 = vld [vmem:[#allocation8 + $0xfe8] sm:$0xff]
    %v3497 = vld [vmem:[#allocation8 + $0xff0] sm:$0xff]
    %v3498 = vld [vmem:[#allocation8 + $0xff8] sm:$0xff]
    %v3627 = vunpack.c.l.b16 %v3371
    %v3628 = vunpack.c.h.b16 %v3371
    %v3629 = vunpack.c.l.b16 %v3372
    %v3630 = vunpack.c.h.b16 %v3372
    %v3631 = vunpack.c.l.b16 %v3373
    %v3632 = vunpack.c.h.b16 %v3373
    %v3633 = vunpack.c.l.b16 %v3374
    %v3634 = vunpack.c.h.b16 %v3374
    %v3635 = vunpack.c.l.b16 %v3375
    %v3636 = vunpack.c.h.b16 %v3375
    %v3637 = vunpack.c.l.b16 %v3376
    %v3638 = vunpack.c.h.b16 %v3376
    %v3639 = vunpack.c.l.b16 %v3377
    %v3640 = vunpack.c.h.b16 %v3377
    %v3641 = vunpack.c.l.b16 %v3378
    %v3642 = vunpack.c.h.b16 %v3378
    %v3643 = vunpack.c.l.b16 %v3379
    %v3644 = vunpack.c.h.b16 %v3379
    %v3645 = vunpack.c.l.b16 %v3380
    %v3646 = vunpack.c.h.b16 %v3380
    %v3647 = vunpack.c.l.b16 %v3381
    %v3648 = vunpack.c.h.b16 %v3381
    %v3649 = vunpack.c.l.b16 %v3382
    %v3650 = vunpack.c.h.b16 %v3382
    %v3651 = vunpack.c.l.b16 %v3383
    %v3652 = vunpack.c.h.b16 %v3383
    %v3653 = vunpack.c.l.b16 %v3384
    %v3654 = vunpack.c.h.b16 %v3384
    %v3655 = vunpack.c.l.b16 %v3385
    %v3656 = vunpack.c.h.b16 %v3385
    %v3657 = vunpack.c.l.b16 %v3386
    %v3658 = vunpack.c.h.b16 %v3386
    %v3659 = vunpack.c.l.b16 %v3387
    %v3660 = vunpack.c.h.b16 %v3387
    %v3661 = vunpack.c.l.b16 %v3388
    %v3662 = vunpack.c.h.b16 %v3388
    %v3663 = vunpack.c.l.b16 %v3389
    %v3664 = vunpack.c.h.b16 %v3389
    %v3665 = vunpack.c.l.b16 %v3390
    %v3666 = vunpack.c.h.b16 %v3390
    %v3667 = vunpack.c.l.b16 %v3391
    %v3668 = vunpack.c.h.b16 %v3391
    %v3669 = vunpack.c.l.b16 %v3392
    %v3670 = vunpack.c.h.b16 %v3392
    %v3671 = vunpack.c.l.b16 %v3393
    %v3672 = vunpack.c.h.b16 %v3393
    %v3673 = vunpack.c.l.b16 %v3394
    %v3674 = vunpack.c.h.b16 %v3394
    %v3675 = vunpack.c.l.b16 %v3395
    %v3676 = vunpack.c.h.b16 %v3395
    %v3677 = vunpack.c.l.b16 %v3396
    %v3678 = vunpack.c.h.b16 %v3396
    %v3679 = vunpack.c.l.b16 %v3397
    %v3680 = vunpack.c.h.b16 %v3397
    %v3681 = vunpack.c.l.b16 %v3398
    %v3682 = vunpack.c.h.b16 %v3398
    %v3683 = vunpack.c.l.b16 %v3399
    %v3684 = vunpack.c.h.b16 %v3399
    %v3685 = vunpack.c.l.b16 %v3400
    %v3686 = vunpack.c.h.b16 %v3400
    %v3687 = vunpack.c.l.b16 %v3401
    %v3688 = vunpack.c.h.b16 %v3401
    %v3689 = vunpack.c.l.b16 %v3402
    %v3690 = vunpack.c.h.b16 %v3402
    %v3691 = vunpack.c.l.b16 %v3403
    %v3692 = vunpack.c.h.b16 %v3403
    %v3693 = vunpack.c.l.b16 %v3404
    %v3694 = vunpack.c.h.b16 %v3404
    %v3695 = vunpack.c.l.b16 %v3405
    %v3696 = vunpack.c.h.b16 %v3405
    %v3697 = vunpack.c.l.b16 %v3406
    %v3698 = vunpack.c.h.b16 %v3406
    %v3699 = vunpack.c.l.b16 %v3407
    %v3700 = vunpack.c.h.b16 %v3407
    %v3701 = vunpack.c.l.b16 %v3408
    %v3702 = vunpack.c.h.b16 %v3408
    %v3703 = vunpack.c.l.b16 %v3409
    %v3704 = vunpack.c.h.b16 %v3409
    %v3705 = vunpack.c.l.b16 %v3410
    %v3706 = vunpack.c.h.b16 %v3410
    %v3707 = vunpack.c.l.b16 %v3411
    %v3708 = vunpack.c.h.b16 %v3411
    %v3709 = vunpack.c.l.b16 %v3412
    %v3710 = vunpack.c.h.b16 %v3412
    %v3711 = vunpack.c.l.b16 %v3413
    %v3712 = vunpack.c.h.b16 %v3413
    %v3713 = vunpack.c.l.b16 %v3414
    %v3714 = vunpack.c.h.b16 %v3414
    %v3715 = vunpack.c.l.b16 %v3415
    %v3716 = vunpack.c.h.b16 %v3415
    %v3717 = vunpack.c.l.b16 %v3416
    %v3718 = vunpack.c.h.b16 %v3416
    %v3719 = vunpack.c.l.b16 %v3417
    %v3720 = vunpack.c.h.b16 %v3417
    %v3721 = vunpack.c.l.b16 %v3418
    %v3722 = vunpack.c.h.b16 %v3418
    %v3723 = vunpack.c.l.b16 %v3419
    %v3724 = vunpack.c.h.b16 %v3419
    %v3725 = vunpack.c.l.b16 %v3420
    %v3726 = vunpack.c.h.b16 %v3420
    %v3727 = vunpack.c.l.b16 %v3421
    %v3728 = vunpack.c.h.b16 %v3421
    %v3729 = vunpack.c.l.b16 %v3422
    %v3730 = vunpack.c.h.b16 %v3422
    %v3731 = vunpack.c.l.b16 %v3423
    %v3732 = vunpack.c.h.b16 %v3423
    %v3733 = vunpack.c.l.b16 %v3424
    %v3734 = vunpack.c.h.b16 %v3424
    %v3735 = vunpack.c.l.b16 %v3425
    %v3736 = vunpack.c.h.b16 %v3425
    %v3737 = vunpack.c.l.b16 %v3426
    %v3738 = vunpack.c.h.b16 %v3426
    %v3739 = vunpack.c.l.b16 %v3427
    %v3740 = vunpack.c.h.b16 %v3427
    %v3741 = vunpack.c.l.b16 %v3428
    %v3742 = vunpack.c.h.b16 %v3428
    %v3743 = vunpack.c.l.b16 %v3429
    %v3744 = vunpack.c.h.b16 %v3429
    %v3745 = vunpack.c.l.b16 %v3430
    %v3746 = vunpack.c.h.b16 %v3430
    %v3747 = vunpack.c.l.b16 %v3431
    %v3748 = vunpack.c.h.b16 %v3431
    %v3749 = vunpack.c.l.b16 %v3432
    %v3750 = vunpack.c.h.b16 %v3432
    %v3751 = vunpack.c.l.b16 %v3433
    %v3752 = vunpack.c.h.b16 %v3433
    %v3753 = vunpack.c.l.b16 %v3434
    %v3754 = vunpack.c.h.b16 %v3434
    %v3755 = vunpack.c.l.b16 %v3435
    %v3756 = vunpack.c.h.b16 %v3435
    %v3757 = vunpack.c.l.b16 %v3436
    %v3758 = vunpack.c.h.b16 %v3436
    %v3759 = vunpack.c.l.b16 %v3437
    %v3760 = vunpack.c.h.b16 %v3437
    %v3761 = vunpack.c.l.b16 %v3438
    %v3762 = vunpack.c.h.b16 %v3438
    %v3763 = vunpack.c.l.b16 %v3439
    %v3764 = vunpack.c.h.b16 %v3439
    %v3765 = vunpack.c.l.b16 %v3440
    %v3766 = vunpack.c.h.b16 %v3440
    %v3767 = vunpack.c.l.b16 %v3441
    %v3768 = vunpack.c.h.b16 %v3441
    %v3769 = vunpack.c.l.b16 %v3442
    %v3770 = vunpack.c.h.b16 %v3442
    %v3771 = vunpack.c.l.b16 %v3443
    %v3772 = vunpack.c.h.b16 %v3443
    %v3773 = vunpack.c.l.b16 %v3444
    %v3774 = vunpack.c.h.b16 %v3444
    %v3775 = vunpack.c.l.b16 %v3445
    %v3776 = vunpack.c.h.b16 %v3445
    %v3777 = vunpack.c.l.b16 %v3446
    %v3778 = vunpack.c.h.b16 %v3446
    %v3779 = vunpack.c.l.b16 %v3447
    %v3780 = vunpack.c.h.b16 %v3447
    %v3781 = vunpack.c.l.b16 %v3448
    %v3782 = vunpack.c.h.b16 %v3448
    %v3783 = vunpack.c.l.b16 %v3449
    %v3784 = vunpack.c.h.b16 %v3449
    %v3785 = vunpack.c.l.b16 %v3450
    %v3786 = vunpack.c.h.b16 %v3450
    %v3787 = vunpack.c.l.b16 %v3451
    %v3788 = vunpack.c.h.b16 %v3451
    %v3789 = vunpack.c.l.b16 %v3452
    %v3790 = vunpack.c.h.b16 %v3452
    %v3791 = vunpack.c.l.b16 %v3453
    %v3792 = vunpack.c.h.b16 %v3453
    %v3793 = vunpack.c.l.b16 %v3454
    %v3794 = vunpack.c.h.b16 %v3454
    %v3795 = vunpack.c.l.b16 %v3455
    %v3796 = vunpack.c.h.b16 %v3455
    %v3797 = vunpack.c.l.b16 %v3456
    %v3798 = vunpack.c.h.b16 %v3456
    %v3799 = vunpack.c.l.b16 %v3457
    %v3800 = vunpack.c.h.b16 %v3457
    %v3801 = vunpack.c.l.b16 %v3458
    %v3802 = vunpack.c.h.b16 %v3458
    %v3803 = vunpack.c.l.b16 %v3459
    %v3804 = vunpack.c.h.b16 %v3459
    %v3805 = vunpack.c.l.b16 %v3460
    %v3806 = vunpack.c.h.b16 %v3460
    %v3807 = vunpack.c.l.b16 %v3461
    %v3808 = vunpack.c.h.b16 %v3461
    %v3809 = vunpack.c.l.b16 %v3462
    %v3810 = vunpack.c.h.b16 %v3462
    %v3811 = vunpack.c.l.b16 %v3463
    %v3812 = vunpack.c.h.b16 %v3463
    %v3813 = vunpack.c.l.b16 %v3464
    %v3814 = vunpack.c.h.b16 %v3464
    %v3815 = vunpack.c.l.b16 %v3465
    %v3816 = vunpack.c.h.b16 %v3465
    %v3817 = vunpack.c.l.b16 %v3466
    %v3818 = vunpack.c.h.b16 %v3466
    %v3819 = vunpack.c.l.b16 %v3467
    %v3820 = vunpack.c.h.b16 %v3467
    %v3821 = vunpack.c.l.b16 %v3468
    %v3822 = vunpack.c.h.b16 %v3468
    %v3823 = vunpack.c.l.b16 %v3469
    %v3824 = vunpack.c.h.b16 %v3469
    %v3825 = vunpack.c.l.b16 %v3470
    %v3826 = vunpack.c.h.b16 %v3470
    %v3827 = vunpack.c.l.b16 %v3471
    %v3828 = vunpack.c.h.b16 %v3471
    %v3829 = vunpack.c.l.b16 %v3472
    %v3830 = vunpack.c.h.b16 %v3472
    %v3831 = vunpack.c.l.b16 %v3473
    %v3832 = vunpack.c.h.b16 %v3473
    %v3833 = vunpack.c.l.b16 %v3474
    %v3834 = vunpack.c.h.b16 %v3474
    %v3835 = vunpack.c.l.b16 %v3475
    %v3836 = vunpack.c.h.b16 %v3475
    %v3837 = vunpack.c.l.b16 %v3476
    %v3838 = vunpack.c.h.b16 %v3476
    %v3839 = vunpack.c.l.b16 %v3477
    %v3840 = vunpack.c.h.b16 %v3477
    %v3841 = vunpack.c.l.b16 %v3478
    %v3842 = vunpack.c.h.b16 %v3478
    %v3843 = vunpack.c.l.b16 %v3479
    %v3844 = vunpack.c.h.b16 %v3479
    %v3845 = vunpack.c.l.b16 %v3480
    %v3846 = vunpack.c.h.b16 %v3480
    %v3847 = vunpack.c.l.b16 %v3481
    %v3848 = vunpack.c.h.b16 %v3481
    %v3849 = vunpack.c.l.b16 %v3482
    %v3850 = vunpack.c.h.b16 %v3482
    %v3851 = vunpack.c.l.b16 %v3483
    %v3852 = vunpack.c.h.b16 %v3483
    %v3853 = vunpack.c.l.b16 %v3484
    %v3854 = vunpack.c.h.b16 %v3484
    %v3855 = vunpack.c.l.b16 %v3485
    %v3856 = vunpack.c.h.b16 %v3485
    %v3857 = vunpack.c.l.b16 %v3486
    %v3858 = vunpack.c.h.b16 %v3486
    %v3859 = vunpack.c.l.b16 %v3487
    %v3860 = vunpack.c.h.b16 %v3487
    %v3861 = vunpack.c.l.b16 %v3488
    %v3862 = vunpack.c.h.b16 %v3488
    %v3863 = vunpack.c.l.b16 %v3489
    %v3864 = vunpack.c.h.b16 %v3489
    %v3865 = vunpack.c.l.b16 %v3490
    %v3866 = vunpack.c.h.b16 %v3490
    %v3867 = vunpack.c.l.b16 %v3491
    %v3868 = vunpack.c.h.b16 %v3491
    %v3869 = vunpack.c.l.b16 %v3492
    %v3870 = vunpack.c.h.b16 %v3492
    %v3871 = vunpack.c.l.b16 %v3493
    %v3872 = vunpack.c.h.b16 %v3493
    %v3873 = vunpack.c.l.b16 %v3494
    %v3874 = vunpack.c.h.b16 %v3494
    %v3875 = vunpack.c.l.b16 %v3495
    %v3876 = vunpack.c.h.b16 %v3495
    %v3877 = vunpack.c.l.b16 %v3496
    %v3878 = vunpack.c.h.b16 %v3496
    %v3879 = vunpack.c.l.b16 %v3497
    %v3880 = vunpack.c.h.b16 %v3497
    %v3881 = vunpack.c.l.b16 %v3498
    %v3882 = vunpack.c.h.b16 %v3498
    %v3883 = vpack.c.b16 %v3635, %v3627
    %v3884 = vpack.c.b16 %v3636, %v3628
    %v3885 = vpack.c.b16 %v3637, %v3629
    %v3886 = vpack.c.b16 %v3638, %v3630
    %v3887 = vpack.c.b16 %v3639, %v3631
    %v3888 = vpack.c.b16 %v3640, %v3632
    %v3889 = vpack.c.b16 %v3641, %v3633
    %v3890 = vpack.c.b16 %v3642, %v3634
    %v3891 = vpack.c.b16 %v3651, %v3643
    %v3892 = vpack.c.b16 %v3652, %v3644
    %v3893 = vpack.c.b16 %v3653, %v3645
    %v3894 = vpack.c.b16 %v3654, %v3646
    %v3895 = vpack.c.b16 %v3655, %v3647
    %v3896 = vpack.c.b16 %v3656, %v3648
    %v3897 = vpack.c.b16 %v3657, %v3649
    %v3898 = vpack.c.b16 %v3658, %v3650
    %v3899 = vpack.c.b16 %v3667, %v3659
    %v3900 = vpack.c.b16 %v3668, %v3660
    %v3901 = vpack.c.b16 %v3669, %v3661
    %v3902 = vpack.c.b16 %v3670, %v3662
    %v3903 = vpack.c.b16 %v3671, %v3663
    %v3904 = vpack.c.b16 %v3672, %v3664
    %v3905 = vpack.c.b16 %v3673, %v3665
    %v3906 = vpack.c.b16 %v3674, %v3666
    %v3907 = vpack.c.b16 %v3683, %v3675
    %v3908 = vpack.c.b16 %v3684, %v3676
    %v3909 = vpack.c.b16 %v3685, %v3677
    %v3910 = vpack.c.b16 %v3686, %v3678
    %v3911 = vpack.c.b16 %v3687, %v3679
    %v3912 = vpack.c.b16 %v3688, %v3680
    %v3913 = vpack.c.b16 %v3689, %v3681
    %v3914 = vpack.c.b16 %v3690, %v3682
    %v3915 = vpack.c.b16 %v3699, %v3691
    %v3916 = vpack.c.b16 %v3700, %v3692
    %v3917 = vpack.c.b16 %v3701, %v3693
    %v3918 = vpack.c.b16 %v3702, %v3694
    %v3919 = vpack.c.b16 %v3703, %v3695
    %v3920 = vpack.c.b16 %v3704, %v3696
    %v3921 = vpack.c.b16 %v3705, %v3697
    %v3922 = vpack.c.b16 %v3706, %v3698
    %v3923 = vpack.c.b16 %v3715, %v3707
    %v3924 = vpack.c.b16 %v3716, %v3708
    %v3925 = vpack.c.b16 %v3717, %v3709
    %v3926 = vpack.c.b16 %v3718, %v3710
    %v3927 = vpack.c.b16 %v3719, %v3711
    %v3928 = vpack.c.b16 %v3720, %v3712
    %v3929 = vpack.c.b16 %v3721, %v3713
    %v3930 = vpack.c.b16 %v3722, %v3714
    %v3931 = vpack.c.b16 %v3731, %v3723
    %v3932 = vpack.c.b16 %v3732, %v3724
    %v3933 = vpack.c.b16 %v3733, %v3725
    %v3934 = vpack.c.b16 %v3734, %v3726
    %v3935 = vpack.c.b16 %v3735, %v3727
    %v3936 = vpack.c.b16 %v3736, %v3728
    %v3937 = vpack.c.b16 %v3737, %v3729
    %v3938 = vpack.c.b16 %v3738, %v3730
    %v3939 = vpack.c.b16 %v3747, %v3739
    %v3940 = vpack.c.b16 %v3748, %v3740
    %v3941 = vpack.c.b16 %v3749, %v3741
    %v3942 = vpack.c.b16 %v3750, %v3742
    %v3943 = vpack.c.b16 %v3751, %v3743
    %v3944 = vpack.c.b16 %v3752, %v3744
    %v3945 = vpack.c.b16 %v3753, %v3745
    %v3946 = vpack.c.b16 %v3754, %v3746
    %v3947 = vpack.c.b16 %v3763, %v3755
    %v3948 = vpack.c.b16 %v3764, %v3756
    %v3949 = vpack.c.b16 %v3765, %v3757
    %v3950 = vpack.c.b16 %v3766, %v3758
    %v3951 = vpack.c.b16 %v3767, %v3759
    %v3952 = vpack.c.b16 %v3768, %v3760
    %v3953 = vpack.c.b16 %v3769, %v3761
    %v3954 = vpack.c.b16 %v3770, %v3762
    %v3955 = vpack.c.b16 %v3779, %v3771
    %v3956 = vpack.c.b16 %v3780, %v3772
    %v3957 = vpack.c.b16 %v3781, %v3773
    %v3958 = vpack.c.b16 %v3782, %v3774
    %v3959 = vpack.c.b16 %v3783, %v3775
    %v3960 = vpack.c.b16 %v3784, %v3776
    %v3961 = vpack.c.b16 %v3785, %v3777
    %v3962 = vpack.c.b16 %v3786, %v3778
    %v3963 = vpack.c.b16 %v3795, %v3787
    %v3964 = vpack.c.b16 %v3796, %v3788
    %v3965 = vpack.c.b16 %v3797, %v3789
    %v3966 = vpack.c.b16 %v3798, %v3790
    %v3967 = vpack.c.b16 %v3799, %v3791
    %v3968 = vpack.c.b16 %v3800, %v3792
    %v3969 = vpack.c.b16 %v3801, %v3793
    %v3970 = vpack.c.b16 %v3802, %v3794
    %v3971 = vpack.c.b16 %v3811, %v3803
    %v3972 = vpack.c.b16 %v3812, %v3804
    %v3973 = vpack.c.b16 %v3813, %v3805
    %v3974 = vpack.c.b16 %v3814, %v3806
    %v3975 = vpack.c.b16 %v3815, %v3807
    %v3976 = vpack.c.b16 %v3816, %v3808
    %v3977 = vpack.c.b16 %v3817, %v3809
    %v3978 = vpack.c.b16 %v3818, %v3810
    %v3979 = vpack.c.b16 %v3827, %v3819
    %v3980 = vpack.c.b16 %v3828, %v3820
    %v3981 = vpack.c.b16 %v3829, %v3821
    %v3982 = vpack.c.b16 %v3830, %v3822
    %v3983 = vpack.c.b16 %v3831, %v3823
    %v3984 = vpack.c.b16 %v3832, %v3824
    %v3985 = vpack.c.b16 %v3833, %v3825
    %v3986 = vpack.c.b16 %v3834, %v3826
    %v3987 = vpack.c.b16 %v3843, %v3835
    %v3988 = vpack.c.b16 %v3844, %v3836
    %v3989 = vpack.c.b16 %v3845, %v3837
    %v3990 = vpack.c.b16 %v3846, %v3838
    %v3991 = vpack.c.b16 %v3847, %v3839
    %v3992 = vpack.c.b16 %v3848, %v3840
    %v3993 = vpack.c.b16 %v3849, %v3841
    %v3994 = vpack.c.b16 %v3850, %v3842
    %v3995 = vpack.c.b16 %v3859, %v3851
    %v3996 = vpack.c.b16 %v3860, %v3852
    %v3997 = vpack.c.b16 %v3861, %v3853
    %v3998 = vpack.c.b16 %v3862, %v3854
    %v3999 = vpack.c.b16 %v3863, %v3855
    %v4000 = vpack.c.b16 %v3864, %v3856
    %v4001 = vpack.c.b16 %v3865, %v3857
    %v4002 = vpack.c.b16 %v3866, %v3858
    %v4003 = vpack.c.b16 %v3875, %v3867
    %v4004 = vpack.c.b16 %v3876, %v3868
    %v4005 = vpack.c.b16 %v3877, %v3869
    %v4006 = vpack.c.b16 %v3878, %v3870
    %v4007 = vpack.c.b16 %v3879, %v3871
    %v4008 = vpack.c.b16 %v3880, %v3872
    %v4009 = vpack.c.b16 %v3881, %v3873
    %v4010 = vpack.c.b16 %v3882, %v3874
    %4139 = vmatprep.subr.bf16.mxu0 %v3884
    %4140 = vmatpush1.bf16.msra.mxu0 %v3883
    %4141 = vmatprep.subr.bf16.mxu0 %v3892
    %4142 = vmatpush1.bf16.msra.mxu0 %v3891
    %4143 = vmatprep.subr.bf16.mxu0 %v3900
    %4144 = vmatpush1.bf16.msra.mxu0 %v3899
    %4145 = vmatprep.subr.bf16.mxu0 %v3908
    %4146 = vmatpush1.bf16.msra.mxu0 %v3907
    %4147 = vmatprep.subr.bf16.mxu0 %v3916
    %4148 = vmatpush1.bf16.msra.mxu0 %v3915
    %4149 = vmatprep.subr.bf16.mxu0 %v3924
    %4150 = vmatpush1.bf16.msra.mxu0 %v3923
    %4151 = vmatprep.subr.bf16.mxu0 %v3932
    %4152 = vmatpush1.bf16.msra.mxu0 %v3931
    %4153 = vmatprep.subr.bf16.mxu0 %v3940
    %4154 = vmatpush1.bf16.msra.mxu0 %v3939
    %4155 = vmatprep.subr.bf16.mxu0 %v3948
    %4156 = vmatpush1.bf16.msra.mxu0 %v3947
    %4157 = vmatprep.subr.bf16.mxu0 %v3956
    %4158 = vmatpush1.bf16.msra.mxu0 %v3955
    %4159 = vmatprep.subr.bf16.mxu0 %v3964
    %4160 = vmatpush1.bf16.msra.mxu0 %v3963
    %4161 = vmatprep.subr.bf16.mxu0 %v3972
    %4162 = vmatpush1.bf16.msra.mxu0 %v3971
    %4163 = vmatprep.subr.bf16.mxu0 %v3980
    %4164 = vmatpush1.bf16.msra.mxu0 %v3979
    %4165 = vmatprep.subr.bf16.mxu0 %v3988
    %4166 = vmatpush1.bf16.msra.mxu0 %v3987
    %4167 = vmatprep.subr.bf16.mxu0 %v3996
    %4168 = vmatpush1.bf16.msra.mxu0 %v3995
    %4169 = vmatprep.subr.bf16.mxu0 %v4004
    %4170 = vmatpush1.bf16.msra.mxu0 %v4003
    %4171 = vmatprep.mubr.bf16.mxu0 %v3370
    %4172 = vmatmul.mubr.bf16.gmra.mrb[0].mxu0 %v3369
    %v4173 = vpop.f32.mrb[0].mxu0
    %v4174 = vadd.f32 0.0, %v4173
    %v4175 = vpop.f32.mrb[0].mxu0
    %v4176 = vadd.f32 0.0, %v4175
    %v4177 = vpop.f32.mrb[0].mxu0
    %v4178 = vadd.f32 0.0, %v4177
    %v4179 = vpop.f32.mrb[0].mxu0
    %v4180 = vadd.f32 0.0, %v4179
    %4181 = vdwg.mxu0
    %4182 = vmatprep.subr.bf16.mxu0 %v3886
    %4183 = vmatpush1.bf16.msra.mxu0 %v3885
    %4184 = vmatprep.subr.bf16.mxu0 %v3894
    %4185 = vmatpush1.bf16.msra.mxu0 %v3893
    %4186 = vmatprep.subr.bf16.mxu0 %v3902
    %4187 = vmatpush1.bf16.msra.mxu0 %v3901
    %4188 = vmatprep.subr.bf16.mxu0 %v3910
    %4189 = vmatpush1.bf16.msra.mxu0 %v3909
    %4190 = vmatprep.subr.bf16.mxu0 %v3918
    %4191 = vmatpush1.bf16.msra.mxu0 %v3917
    %4192 = vmatprep.subr.bf16.mxu0 %v3926
    %4193 = vmatpush1.bf16.msra.mxu0 %v3925
    %4194 = vmatprep.subr.bf16.mxu0 %v3934
    %4195 = vmatpush1.bf16.msra.mxu0 %v3933
    %4196 = vmatprep.subr.bf16.mxu0 %v3942
    %4197 = vmatpush1.bf16.msra.mxu0 %v3941
    %4198 = vmatprep.subr.bf16.mxu0 %v3950
    %4199 = vmatpush1.bf16.msra.mxu0 %v3949
    %4200 = vmatprep.subr.bf16.mxu0 %v3958
    %4201 = vmatpush1.bf16.msra.mxu0 %v3957
    %4202 = vmatprep.subr.bf16.mxu0 %v3966
    %4203 = vmatpush1.bf16.msra.mxu0 %v3965
    %4204 = vmatprep.subr.bf16.mxu0 %v3974
    %4205 = vmatpush1.bf16.msra.mxu0 %v3973
    %4206 = vmatprep.subr.bf16.mxu0 %v3982
    %4207 = vmatpush1.bf16.msra.mxu0 %v3981
    %4208 = vmatprep.subr.bf16.mxu0 %v3990
    %4209 = vmatpush1.bf16.msra.mxu0 %v3989
    %4210 = vmatprep.subr.bf16.mxu0 %v3998
    %4211 = vmatpush1.bf16.msra.mxu0 %v3997
    %4212 = vmatprep.subr.bf16.mxu0 %v4006
    %4213 = vmatpush1.bf16.msra.mxu0 %v4005
    %4214 = vmatprep.mubr.bf16.mxu0 %v3370
    %4215 = vmatmul.mubr.bf16.gmra.mrb[0].mxu0 %v3369
    %v4216 = vpop.f32.mrb[0].mxu0
    %v4217 = vadd.f32 0.0, %v4216
    %v4218 = vpop.f32.mrb[0].mxu0
    %v4219 = vadd.f32 0.0, %v4218
    %v4220 = vpop.f32.mrb[0].mxu0
    %v4221 = vadd.f32 0.0, %v4220
    %v4222 = vpop.f32.mrb[0].mxu0
    %v4223 = vadd.f32 0.0, %v4222
    %4224 = vdwg.mxu0
    %4225 = vmatprep.subr.bf16.mxu0 %v3888
    %4226 = vmatpush1.bf16.msra.mxu0 %v3887
    %4227 = vmatprep.subr.bf16.mxu0 %v3896
    %4228 = vmatpush1.bf16.msra.mxu0 %v3895
    %4229 = vmatprep.subr.bf16.mxu0 %v3904
    %4230 = vmatpush1.bf16.msra.mxu0 %v3903
    %4231 = vmatprep.subr.bf16.mxu0 %v3912
    %4232 = vmatpush1.bf16.msra.mxu0 %v3911
    %4233 = vmatprep.subr.bf16.mxu0 %v3920
    %4234 = vmatpush1.bf16.msra.mxu0 %v3919
    %4235 = vmatprep.subr.bf16.mxu0 %v3928
    %4236 = vmatpush1.bf16.msra.mxu0 %v3927
    %4237 = vmatprep.subr.bf16.mxu0 %v3936
    %4238 = vmatpush1.bf16.msra.mxu0 %v3935
    %4239 = vmatprep.subr.bf16.mxu0 %v3944
    %4240 = vmatpush1.bf16.msra.mxu0 %v3943
    %4241 = vmatprep.subr.bf16.mxu0 %v3952
    %4242 = vmatpush1.bf16.msra.mxu0 %v3951
    %4243 = vmatprep.subr.bf16.mxu0 %v3960
    %4244 = vmatpush1.bf16.msra.mxu0 %v3959
    %4245 = vmatprep.subr.bf16.mxu0 %v3968
    %4246 = vmatpush1.bf16.msra.mxu0 %v3967
    %4247 = vmatprep.subr.bf16.mxu0 %v3976
    %4248 = vmatpush1.bf16.msra.mxu0 %v3975
    %4249 = vmatprep.subr.bf16.mxu0 %v3984
    %4250 = vmatpush1.bf16.msra.mxu0 %v3983
    %4251 = vmatprep.subr.bf16.mxu0 %v3992
    %4252 = vmatpush1.bf16.msra.mxu0 %v3991
    %4253 = vmatprep.subr.bf16.mxu0 %v4000
    %4254 = vmatpush1.bf16.msra.mxu0 %v3999
    %4255 = vmatprep.subr.bf16.mxu0 %v4008
    %4256 = vmatpush1.bf16.msra.mxu0 %v4007
    %4257 = vmatprep.mubr.bf16.mxu0 %v3370
    %4258 = vmatmul.mubr.bf16.gmra.mrb[0].mxu0 %v3369
    %v4259 = vpop.f32.mrb[0].mxu0
    %v4260 = vadd.f32 0.0, %v4259
    %v4261 = vpop.f32.mrb[0].mxu0
    %v4262 = vadd.f32 0.0, %v4261
    %v4263 = vpop.f32.mrb[0].mxu0
    %v4264 = vadd.f32 0.0, %v4263
    %v4265 = vpop.f32.mrb[0].mxu0
    %v4266 = vadd.f32 0.0, %v4265
    %4267 = vdwg.mxu0
    %4268 = vmatprep.subr.bf16.mxu0 %v3890
    %4269 = vmatpush1.bf16.msra.mxu0 %v3889
    %4270 = vmatprep.subr.bf16.mxu0 %v3898
    %4271 = vmatpush1.bf16.msra.mxu0 %v3897
    %4272 = vmatprep.subr.bf16.mxu0 %v3906
    %4273 = vmatpush1.bf16.msra.mxu0 %v3905
    %4274 = vmatprep.subr.bf16.mxu0 %v3914
    %4275 = vmatpush1.bf16.msra.mxu0 %v3913
    %4276 = vmatprep.subr.bf16.mxu0 %v3922
    %4277 = vmatpush1.bf16.msra.mxu0 %v3921
    %4278 = vmatprep.subr.bf16.mxu0 %v3930
    %4279 = vmatpush1.bf16.msra.mxu0 %v3929
    %4280 = vmatprep.subr.bf16.mxu0 %v3938
    %4281 = vmatpush1.bf16.msra.mxu0 %v3937
    %4282 = vmatprep.subr.bf16.mxu0 %v3946
    %4283 = vmatpush1.bf16.msra.mxu0 %v3945
    %4284 = vmatprep.subr.bf16.mxu0 %v3954
    %4285 = vmatpush1.bf16.msra.mxu0 %v3953
    %4286 = vmatprep.subr.bf16.mxu0 %v3962
    %4287 = vmatpush1.bf16.msra.mxu0 %v3961
    %4288 = vmatprep.subr.bf16.mxu0 %v3970
    %4289 = vmatpush1.bf16.msra.mxu0 %v3969
    %4290 = vmatprep.subr.bf16.mxu0 %v3978
    %4291 = vmatpush1.bf16.msra.mxu0 %v3977
    %4292 = vmatprep.subr.bf16.mxu0 %v3986
    %4293 = vmatpush1.bf16.msra.mxu0 %v3985
    %4294 = vmatprep.subr.bf16.mxu0 %v3994
    %4295 = vmatpush1.bf16.msra.mxu0 %v3993
    %4296 = vmatprep.subr.bf16.mxu0 %v4002
    %4297 = vmatpush1.bf16.msra.mxu0 %v4001
    %4298 = vmatprep.subr.bf16.mxu0 %v4010
    %4299 = vmatpush1.bf16.msra.mxu0 %v4009
    %4300 = vmatprep.mubr.bf16.mxu0 %v3370
    %4301 = vmatmul.mubr.bf16.gmra.mrb[0].mxu0 %v3369
    %v4302 = vpop.f32.mrb[0].mxu0
    %v4303 = vadd.f32 0.0, %v4302
    %v4304 = vpop.f32.mrb[0].mxu0
    %v4305 = vadd.f32 0.0, %v4304
    %v4306 = vpop.f32.mrb[0].mxu0
    %v4307 = vadd.f32 0.0, %v4306
    %v4308 = vpop.f32.mrb[0].mxu0
    %v4309 = vadd.f32 0.0, %v4308
    %4310 = vdwg.mxu0
    %v4311 = vadd.f32 %v3252, %v4174
    %v4312 = vadd.f32 %v3253, %v4176
    %v4313 = vadd.f32 %v3254, %v4217
    %v4314 = vadd.f32 %v3255, %v4219
    %v4315 = vadd.f32 %v3256, %v4260
    %v4316 = vadd.f32 %v3257, %v4262
    %v4317 = vadd.f32 %v3258, %v4303
    %v4318 = vadd.f32 %v3259, %v4305
    %v4319 = vadd.f32 %v3260, %v4178
    %v4320 = vadd.f32 %v3261, %v4180
    %v4321 = vadd.f32 %v3262, %v4221
    %v4322 = vadd.f32 %v3263, %v4223
    %v4323 = vadd.f32 %v3264, %v4264
    %v4324 = vadd.f32 %v3265, %v4266
    %v4325 = vadd.f32 %v3266, %v4307
    %v4326 = vadd.f32 %v3267, %v4309
    %v4327 = vld [vmem:[#allocation10] sm:$0xff]
    %v4329 = vlaneseq
    %v4330 = vshrl.u32 %v4329, 7
    %v4331 = vsub.s32 0, %v4330
    %v4332 = vrot.slane %v4327, %v4331
    %v4333 = vlaneseq
    %v4334 = vshrl.u32 %v4333, 7
    %v4335 = vsub.s32 1, %v4334
    %v4336 = vrot.slane %v4327, %v4335
    %v4337 = vlaneseq
    %v4338 = vshrl.u32 %v4337, 7
    %v4339 = vsub.s32 2, %v4338
    %v4340 = vrot.slane %v4327, %v4339
    %v4341 = vlaneseq
    %v4342 = vshrl.u32 %v4341, 7
    %v4343 = vsub.s32 3, %v4342
    %v4344 = vrot.slane %v4327, %v4343
    %v4345 = vlaneseq
    %v4346 = vshrl.u32 %v4345, 7
    %v4347 = vsub.s32 4, %v4346
    %v4348 = vrot.slane %v4327, %v4347
    %v4349 = vlaneseq
    %v4350 = vshrl.u32 %v4349, 7
    %v4351 = vsub.s32 5, %v4350
    %v4352 = vrot.slane %v4327, %v4351
    %v4353 = vlaneseq
    %v4354 = vshrl.u32 %v4353, 7
    %v4355 = vsub.s32 6, %v4354
    %v4356 = vrot.slane %v4327, %v4355
    %v4357 = vlaneseq
    %v4358 = vshrl.u32 %v4357, 7
    %v4359 = vsub.s32 7, %v4358
    %v4360 = vrot.slane %v4327, %v4359
    %v4369 = vadd.f32 %v4311, %v4332
    %v4370 = vadd.f32 %v4312, %v4336
    %v4371 = vadd.f32 %v4313, %v4340
    %v4372 = vadd.f32 %v4314, %v4344
    %v4373 = vadd.f32 %v4315, %v4348
    %v4374 = vadd.f32 %v4316, %v4352
    %v4375 = vadd.f32 %v4317, %v4356
    %v4376 = vadd.f32 %v4318, %v4360
    %v4377 = vadd.f32 %v4319, %v4332
    %v4378 = vadd.f32 %v4320, %v4336
    %v4379 = vadd.f32 %v4321, %v4340
    %v4380 = vadd.f32 %v4322, %v4344
    %v4381 = vadd.f32 %v4323, %v4348
    %v4382 = vadd.f32 %v4324, %v4352
    %v4383 = vadd.f32 %v4325, %v4356
    %v4384 = vadd.f32 %v4326, %v4360
    %v4385 = vmax.f32 %v4369, 0.0
    %v4386 = vmax.f32 %v4370, 0.0
    %v4387 = vmax.f32 %v4371, 0.0
    %v4388 = vmax.f32 %v4372, 0.0
    %v4389 = vmax.f32 %v4373, 0.0
    %v4390 = vmax.f32 %v4374, 0.0
    %v4391 = vmax.f32 %v4375, 0.0
    %v4392 = vmax.f32 %v4376, 0.0
    %v4393 = vmax.f32 %v4377, 0.0
    %v4394 = vmax.f32 %v4378, 0.0
    %v4395 = vmax.f32 %v4379, 0.0
    %v4396 = vmax.f32 %v4380, 0.0
    %v4397 = vmax.f32 %v4381, 0.0
    %v4398 = vmax.f32 %v4382, 0.0
    %v4399 = vmax.f32 %v4383, 0.0
    %v4400 = vmax.f32 %v4384, 0.0
    %v4401 = vld [vmem:[#allocation11] sm:$0xff]
    %v4403 = vlaneseq
    %v4404 = vshrl.u32 %v4403, 7
    %v4405 = vsub.s32 0, %v4404
    %v4406 = vrot.slane %v4401, %v4405
    %v4407 = vlaneseq
    %v4408 = vshrl.u32 %v4407, 7
    %v4409 = vsub.s32 1, %v4408
    %v4410 = vrot.slane %v4401, %v4409
    %v4411 = vlaneseq
    %v4412 = vshrl.u32 %v4411, 7
    %v4413 = vsub.s32 2, %v4412
    %v4414 = vrot.slane %v4401, %v4413
    %v4415 = vlaneseq
    %v4416 = vshrl.u32 %v4415, 7
    %v4417 = vsub.s32 3, %v4416
    %v4418 = vrot.slane %v4401, %v4417
    %v4419 = vlaneseq
    %v4420 = vshrl.u32 %v4419, 7
    %v4421 = vsub.s32 4, %v4420
    %v4422 = vrot.slane %v4401, %v4421
    %v4423 = vlaneseq
    %v4424 = vshrl.u32 %v4423, 7
    %v4425 = vsub.s32 5, %v4424
    %v4426 = vrot.slane %v4401, %v4425
    %v4427 = vlaneseq
    %v4428 = vshrl.u32 %v4427, 7
    %v4429 = vsub.s32 6, %v4428
    %v4430 = vrot.slane %v4401, %v4429
    %v4431 = vlaneseq
    %v4432 = vshrl.u32 %v4431, 7
    %v4433 = vsub.s32 7, %v4432
    %v4434 = vrot.slane %v4401, %v4433
    %v4443 = vmul.f32 %v4385, %v4406
    %v4444 = vmul.f32 %v4386, %v4410
    %v4445 = vmul.f32 %v4387, %v4414
    %v4446 = vmul.f32 %v4388, %v4418
    %v4447 = vmul.f32 %v4389, %v4422
    %v4448 = vmul.f32 %v4390, %v4426
    %v4449 = vmul.f32 %v4391, %v4430
    %v4450 = vmul.f32 %v4392, %v4434
    %v4451 = vmul.f32 %v4393, %v4406
    %v4452 = vmul.f32 %v4394, %v4410
    %v4453 = vmul.f32 %v4395, %v4414
    %v4454 = vmul.f32 %v4396, %v4418
    %v4455 = vmul.f32 %v4397, %v4422
    %v4456 = vmul.f32 %v4398, %v4426
    %v4457 = vmul.f32 %v4399, %v4430
    %v4458 = vmul.f32 %v4400, %v4434
    %v4459 = vadd.f32 %v4443, %v4444
    %v4460 = vadd.f32 %v4451, %v4452
    %v4461 = vadd.f32 %v4459, %v4445
    %v4462 = vadd.f32 %v4460, %v4453
    %v4463 = vadd.f32 %v4461, %v4446
    %v4464 = vadd.f32 %v4462, %v4454
    %v4465 = vadd.f32 %v4463, %v4447
    %v4466 = vadd.f32 %v4464, %v4455
    %v4467 = vadd.f32 %v4465, %v4448
    %v4468 = vadd.f32 %v4466, %v4456
    %v4469 = vadd.f32 %v4467, %v4449
    %v4470 = vadd.f32 %v4468, %v4457
    %v4471 = vadd.f32 %v4469, %v4450
    %v4472 = vadd.f32 %v4470, %v4458
    %v4473 = vld [vmem:[#allocation13] sm:$0x1]
    %v4475 = vlaneseq
    %v4476 = vshrl.u32 %v4475, 7
    %v4477 = vsub.s32 0, %v4476
    %v4478 = vrot.slane %v4473, %v4477
    %v4480 = vmul.f32 %v114, %v4478
    %v4481 = vmul.f32 %v115, %v4478
    %v4482 = vsel %vm136, %v4480, 0.0
    %4483 = vadd.xlane.f32.xlu0 %v4482
    %v4484 = vpop.xlane.xlu0 %4483
    %v4485 = vsel %vm136, %v4481, 0.0
    %4486 = vadd.xlane.f32.xlu0 %v4485
    %v4487 = vpop.xlane.xlu0 %4486
    %v4488 = vlaneseq
    %v4489 = vand.u32 %v4488, 127
    %vm4490 = vcmp.eq.s32.totalorder %v4489, 0
    %v4491 = vsel %vm4490, %v4484, 0.0
    %v4492 = vsel %vm4490, %v4487, 0.0
    %v4493 = vadd.f32 %v4471, %v4491
    %v4494 = vadd.f32 %v4472, %v4492
    %4495 = vst [vmem:[#allocation14] sm:$0xff] %v4493
    %4496 = vst [vmem:[#allocation14 + $0x8] sm:$0xff] %v4494
    // Predicated region
    $region58: #{tpu_custom_call.1} parent=1 // pred_check
      _
    $region59: #{tpu_custom_call.1} parent=1 // pred_check_branch
      %4498 = sbr.rel (0) target = $region61
    $region60: #{tpu_custom_call.1} parent=1 // pred_region
      %s4500 = ssub.s32 256, 256
      %4501 = vsyncadd [#allocation4], %s4500
      %s4502 = sshll.u32 [#allocation14], 4
      %s4503 = int_to_ptr.vmem [resolvable:$true] %s4502
      %4508 = dma.vmem_to_hbm [thread:$0]  %s4503, 256, %s7, [#allocation4], 128, 128, 8
    $region61: #{tpu_custom_call.1} parent=1 // pred_fallthru
      _
    // Predicated region
    $region62: #{tpu_custom_call.1} parent=1 // pred_check
      _
    $region63: #{tpu_custom_call.1} parent=1 // pred_check_branch
      %4510 = sbr.rel (0) target = $region65
    $region64: #{tpu_custom_call.1} parent=1 // pred_region
      %4511 = dma.done [#allocation4], 256
    $region65: #{tpu_custom_call.1} parent=1 // pred_fallthru
      _
    %4512 = vsyncpa [#allocation3], 1
    %4513 = vsyncpa [#allocation6], 1
    %4514 = vsyncpa [#allocation9], 1
    %4515 = vsyncpa [#allocation12], 1
    %4516 = vsyncpa [#allocation4], 1

</llo_original>
